<compile_context>
chip_gen: v6e
topology: v6e:2x2x1
jax: 0.10.0
libtpu: 0.0.40
codegen_flags: <defaults>
</compile_context>

<pallas_src>
import functools

import jax
import jax.numpy as jnp
from jax.experimental import pallas as pl
from jax.experimental.pallas import tpu as pltpu


_LANE = 128
_BN_EPS = 1e-5


def _round_up(x, m):
    return (x + m - 1) // m * m


def _pick_tile_h(H, W, cin, cout):
    """Output-row tile height.

    Sized so double-buffered input/output blocks + the halo'd f32 scratch +
    the f32 accumulator stay a few MiB per step (well inside v7x's 64 MiB
    physical VMEM even at 512 channels) while blocks remain large enough to
    amortize the ~0.35 us/step grid overhead at realistic widths.
    # TODO(synk): derive per-generation via pltpu.get_tpu_info() instead of a
    # fixed byte budget.
    """
    budget = 6 << 20
    per_row = W * (cin + 2 * cout) * 4 * 2   # in + out blocks, double-buffered
    th = max(1, min(H, 8, budget // max(per_row, 1)))
    while H % th:
        th -= 1
    return th


# --------------------------- conv3x3 (+bias) stage ----------------------------
# One grid step = TH output rows of one batch element.
#   * optional fused pre-normalization (previous stage's BN + ReLU) applied to
#     the input rows as they are read,
#   * 3x3 conv as 9 MXU matmuls over a (TH+2, W+2, C) halo tile assembled in a
#     VMEM scratch,
#   * emits the raw conv+bias output plus per-tile per-channel sum / sum-of-
#     squares so BatchNorm stats can be reduced across tiles in the wrapper.
def _conv_stage_kernel(xb_ref, xt_ref, xbo_ref, w_ref, b_ref, sc_ref, sh_ref,
                       y_ref, s_ref, ss_ref, xpad_ref, *, apply_prenorm):
    TH, W, Cin = xb_ref.shape[1], xb_ref.shape[2], xb_ref.shape[3]
    Cout = y_ref.shape[3]
    i = pl.program_id(1)
    n_h_tiles = pl.num_programs(1)

    def prenorm(v):
        v = v.astype(jnp.float32)
        if apply_prenorm:
            v = jnp.maximum(v * sc_ref[...].astype(jnp.float32)
                            + sh_ref[...].astype(jnp.float32), 0.0)
        return v

    body = prenorm(xb_ref[0])                       # (TH, W, Cin)
    top = prenorm(xt_ref[0])                        # (1, W, Cin)
    bot = prenorm(xbo_ref[0])                       # (1, W, Cin)
    # Rows outside the image are conv zero-padding, not (normalized) data.
    top = jnp.where(i > 0, top, 0.0)
    bot = jnp.where(i < n_h_tiles - 1, bot, 0.0)

    # Assemble the spatially padded halo tile in VMEM. The zero W-padding
    # columns are rewritten every step so each grid step is self-contained
    # (safe under megacore "parallel" sharding).
    zcol = jnp.zeros((TH + 2, 1, Cin), jnp.float32)
    xpad_ref[:, 0:1, :] = zcol
    xpad_ref[:, W + 1:W + 2, :] = zcol
    xpad_ref[0:1, 1:W + 1, :] = top
    xpad_ref[TH + 1:TH + 2, 1:W + 1, :] = bot
    xpad_ref[1:TH + 1, 1:W + 1, :] = body

    # 3x3 conv = 9 shifted matmuls. Only 3 sublane-shifted loads (one per kx);
    # the ky shift is a cheap leading-dim slice; the reshape is layout-free
    # when W is a multiple of 8.
    acc = jnp.zeros((TH * W, Cout), jnp.float32)
    for kx in range(3):
        xsh = xpad_ref[:, kx:kx + W, :]             # (TH+2, W, Cin)
        for ky in range(3):
            patch = xsh[ky:ky + TH].reshape(TH * W, Cin)
            acc += jnp.dot(patch, w_ref[ky, kx].astype(jnp.float32),
                           preferred_element_type=jnp.float32)
    acc += b_ref[...].astype(jnp.float32)

    y_ref[...] = acc.reshape(1, TH, W, Cout).astype(y_ref.dtype)
    s_ref[...] = jnp.sum(acc, axis=0, keepdims=True).reshape(1, 1, 1, Cout)
    ss_ref[...] = jnp.sum(acc * acc, axis=0, keepdims=True).reshape(1, 1, 1, Cout)


def _conv_stage(x, w, b, scale_in, shift_in, *, apply_prenorm, tile_h):
    N, H, W, Cin = x.shape
    Cout = w.shape[-1]
    TH = tile_h
    HT = H // TH

    kernel = functools.partial(_conv_stage_kernel, apply_prenorm=apply_prenorm)
    cost = pl.CostEstimate(
        flops=2 * 9 * N * H * W * Cin * Cout,
        transcendentals=0,
        bytes_accessed=4 * (N * H * W * (Cin + Cout) + 9 * Cin * Cout
                            + 2 * N * HT * Cout))

    return pl.pallas_call(
        kernel,
        grid=(N, HT),
        in_specs=[
            # main TH-row block + 1-row top/bottom halos (clamped at borders,
            # masked inside the kernel)
            pl.BlockSpec((1, TH, W, Cin), lambda n, i: (n, i, 0, 0)),
            pl.BlockSpec((1, 1, W, Cin),
                         lambda n, i: (n, jnp.maximum(i * TH - 1, 0), 0, 0)),
            pl.BlockSpec((1, 1, W, Cin),
                         lambda n, i: (n, jnp.minimum(i * TH + TH, H - 1), 0, 0)),
            # parameters: constant index maps -> DMA'd once, stay resident
            pl.BlockSpec((3, 3, Cin, Cout), lambda n, i: (0, 0, 0, 0)),
            pl.BlockSpec((1, Cout), lambda n, i: (0, 0)),
            pl.BlockSpec((1, Cin), lambda n, i: (0, 0)),
            pl.BlockSpec((1, Cin), lambda n, i: (0, 0)),
        ],
        out_specs=(
            pl.BlockSpec((1, TH, W, Cout), lambda n, i: (n, i, 0, 0)),
            pl.BlockSpec((1, 1, 1, Cout), lambda n, i: (n, i, 0, 0)),
            pl.BlockSpec((1, 1, 1, Cout), lambda n, i: (n, i, 0, 0)),
        ),
        out_shape=(
            jax.ShapeDtypeStruct((N, H, W, Cout), jnp.float32),
            jax.ShapeDtypeStruct((N, HT, 1, Cout), jnp.float32),
            jax.ShapeDtypeStruct((N, HT, 1, Cout), jnp.float32),
        ),
        scratch_shapes=[pltpu.VMEM((TH + 2, W + 2, Cin), jnp.float32)],
        compiler_params=pltpu.CompilerParams(
            dimension_semantics=("parallel", "parallel"),
            vmem_limit_bytes=48 * 1024 * 1024),
        cost_estimate=cost,
    )(x, x, x, w, b, scale_in, shift_in)


# ------------------------- BN finalize + fused epilogue ------------------------
def _bn_scale_shift(s, ss, gamma, beta, count):
    """Finalize BatchNorm batch statistics from per-tile partial sums and fold
    them with the affine params into a per-channel (scale, shift) pair."""
    total = jnp.sum(s, axis=(0, 1, 2))
    total_sq = jnp.sum(ss, axis=(0, 1, 2))
    mean = total / count
    var = total_sq / count - mean * mean
    scale = gamma * jax.lax.rsqrt(var + _BN_EPS)
    shift = beta - mean * scale
    return scale.reshape(1, -1), shift.reshape(1, -1)


def _bn_relu_kernel(y_ref, sc_ref, sh_ref, o_ref):
    y = y_ref[...].astype(jnp.float32)
    o_ref[...] = jnp.maximum(
        y * sc_ref[...].astype(jnp.float32) + sh_ref[...].astype(jnp.float32),
        0.0).astype(o_ref.dtype)


def _bn_relu(y, scale, shift, *, tile_h):
    N, H, W, C = y.shape
    TH = tile_h
    HT = H // TH
    return pl.pallas_call(
        _bn_relu_kernel,
        grid=(N, HT),
        in_specs=[
            pl.BlockSpec((1, TH, W, C), lambda n, i: (n, i, 0, 0)),
            pl.BlockSpec((1, C), lambda n, i: (0, 0)),
            pl.BlockSpec((1, C), lambda n, i: (0, 0)),
        ],
        out_specs=pl.BlockSpec((1, TH, W, C), lambda n, i: (n, i, 0, 0)),
        out_shape=jax.ShapeDtypeStruct((N, H, W, C), jnp.float32),
        compiler_params=pltpu.CompilerParams(
            dimension_semantics=("parallel", "parallel"),
            vmem_limit_bytes=48 * 1024 * 1024),
    )(y, scale, shift)


# --------------------------------- full block ----------------------------------
def unet_double_conv_block(x_nchw, params):
    """UnetDoubleConvBlock forward (mode='default'), NCHW in/out like PyTorch."""
    (w1, b1, g1, be1), (w2, b2, g2, be2) = params
    N, Cin, H, W = x_nchw.shape
    Cout = w1.shape[-1]
    cin_p = _round_up(Cin, _LANE)
    cout_p = _round_up(Cout, _LANE)

    # NCHW -> NHWC (channels on the 128-lane axis) + lane padding so matmuls /
    # stores are lane-dense.  These transposes are boundary glue for the
    # PyTorch layout; a surrounding NHWC model would drop them entirely.
    x = jnp.transpose(x_nchw, (0, 2, 3, 1)).astype(jnp.float32)
    x = jnp.pad(x, ((0, 0), (0, 0), (0, 0), (0, cin_p - Cin)))

    w1p = jnp.pad(w1, ((0, 0), (0, 0), (0, cin_p - Cin), (0, cout_p - Cout)))
    w2p = jnp.pad(w2, ((0, 0), (0, 0), (0, cout_p - Cout), (0, cout_p - Cout)))
    b1p = jnp.pad(b1, (0, cout_p - Cout)).reshape(1, -1)
    b2p = jnp.pad(b2, (0, cout_p - Cout)).reshape(1, -1)
    g1p = jnp.pad(g1, (0, cout_p - Cout))
    g2p = jnp.pad(g2, (0, cout_p - Cout))
    be1p = jnp.pad(be1, (0, cout_p - Cout))
    be2p = jnp.pad(be2, (0, cout_p - Cout))

    tile_h = _pick_tile_h(H, W, cin_p, cout_p)
    count = N * H * W

    # Stage 1: conv1 + bias (raw, pre-BN) + partial BN stats.
    one = jnp.ones((1, cin_p), jnp.float32)
    zero = jnp.zeros((1, cin_p), jnp.float32)
    y1, s1, ss1 = _conv_stage(x, w1p, b1p, one, zero,
                              apply_prenorm=False, tile_h=tile_h)
    sc1, sh1 = _bn_scale_shift(s1, ss1, g1p, be1p, count)

    # Stage 2: BN1 + ReLU1 fused into this kernel's input read (no extra HBM
    # pass over the activation), then conv2 + bias + partial BN stats.
    y2, s2, ss2 = _conv_stage(y1, w2p, b2p, sc1, sh1,
                              apply_prenorm=True, tile_h=tile_h)
    sc2, sh2 = _bn_scale_shift(s2, ss2, g2p, be2p, count)

    # Final BN2 + ReLU2.
    out = _bn_relu(y2, sc2, sh2, tile_h=tile_h)

    # TODO(synk): keep intermediates in bf16 (f32 accumulate) to halve HBM
    # traffic on v6e/v7x once the surrounding model tolerates it.
    out = out[..., :Cout]                        # drop lane padding
    return jnp.transpose(out, (0, 3, 1, 2))      # NHWC -> NCHW


# ----------------------------- pure-JAX reference -----------------------------
def _ref_stage(x_nchw, w_hwio, bias, gamma, beta):
    w_oihw = jnp.transpose(w_hwio, (3, 2, 0, 1))
    y = jax.lax.conv_general_dilated(
        x_nchw, w_oihw, window_strides=(1, 1), padding=((1, 1), (1, 1)),
        dimension_numbers=('NCHW', 'OIHW', 'NCHW'))
    y = y + bias.reshape(1, -1, 1, 1)
    mean = jnp.mean(y, axis=(0, 2, 3), keepdims=True)
    var = jnp.mean((y - mean) ** 2, axis=(0, 2, 3), keepdims=True)
    y = (y - mean) * jax.lax.rsqrt(var + _BN_EPS)
    y = y * gamma.reshape(1, -1, 1, 1) + beta.reshape(1, -1, 1, 1)
    return jnp.maximum(y, 0.0)


def _ref_block(x_nchw, params):
    (w1, b1, g1, be1), (w2, b2, g2, be2) = params
    y = _ref_stage(x_nchw, w1, b1, g1, be1)
    return _ref_stage(y, w2, b2, g2, be2)


# ------------------------------------ main ------------------------------------
if __name__ == "__main__":
    N, Cin, Cout, H, W = 2, 4, 8, 16, 16

    key = jax.random.PRNGKey(0)
    k_x, k_w1, k_b1, k_w2, k_b2 = jax.random.split(key, 5)

    x = jax.random.normal(k_x, (N, Cin, H, W), dtype=jnp.float32)

    # Conv weights stored HWIO; biases; BN affine params (gamma=1, beta=0)
    w1 = jax.random.normal(k_w1, (3, 3, Cin, Cout), jnp.float32) * 0.1
    b1 = jax.random.normal(k_b1, (Cout,), jnp.float32) * 0.1
    g1 = jnp.ones((Cout,), jnp.float32)
    be1 = jnp.zeros((Cout,), jnp.float32)

    w2 = jax.random.normal(k_w2, (3, 3, Cout, Cout), jnp.float32) * 0.1
    b2 = jax.random.normal(k_b2, (Cout,), jnp.float32) * 0.1
    g2 = jnp.ones((Cout,), jnp.float32)
    be2 = jnp.zeros((Cout,), jnp.float32)

    params = ((w1, b1, g1, be1), (w2, b2, g2, be2))

    block = jax.jit(unet_double_conv_block)
    out = jax.block_until_ready(block(x, params))
    ref = jax.block_until_ready(_ref_block(x, params))

    assert out.shape == (N, Cout, H, W), out.shape
    err = jnp.max(jnp.abs(out - ref))
    assert jnp.allclose(out, ref, atol=1e-4, rtol=1e-4), f"max err {err}"

    print("KERNEL_OK")
</pallas_src>

<mosaic_0001>
module attributes {stable_mosaic.version = 11 : i64} {
  func.func @_conv_stage_kernel(%arg0: i32, %arg1: i32, %arg2: memref<1x8x16x128xf32, #tpu.memory_space<vmem>>, %arg3: memref<1x1x16x128xf32, #tpu.memory_space<vmem>>, %arg4: memref<1x1x16x128xf32, #tpu.memory_space<vmem>>, %arg5: memref<3x3x128x128xf32, #tpu.memory_space<vmem>>, %arg6: memref<1x128xf32, #tpu.memory_space<vmem>>, %arg7: memref<1x128xf32, #tpu.memory_space<vmem>>, %arg8: memref<1x128xf32, #tpu.memory_space<vmem>>, %arg9: memref<1x8x16x128xf32, #tpu.memory_space<vmem>>, %arg10: memref<1x1x1x128xf32, #tpu.memory_space<vmem>>, %arg11: memref<1x1x1x128xf32, #tpu.memory_space<vmem>>, %arg12: memref<10x18x128xf32, #tpu.memory_space<vmem>>) attributes {dimension_semantics = [#tpu.dimension_semantics<parallel>, #tpu.dimension_semantics<parallel>], iteration_bounds = array<i64: 2, 2>, scalar_prefetch = 0 : i64, scratch_operands = 1 : i64, tpu.core_type = #tpu.core_type<tc>, window_params = [{transform_indices = @transform_0, window_bounds = array<i64: 1, 8, 16, 128>}, {transform_indices = @transform_1, window_bounds = array<i64: 1, 1, 16, 128>}, {transform_indices = @transform_2, window_bounds = array<i64: 1, 1, 16, 128>}, {pipeline_mode = #tpu.pipeline_mode<synchronous>, transform_indices = @transform_3, window_bounds = array<i64: 3, 3, 128, 128>}, {pipeline_mode = #tpu.pipeline_mode<synchronous>, transform_indices = @transform_4, window_bounds = array<i64: 1, 128>}, {pipeline_mode = #tpu.pipeline_mode<synchronous>, transform_indices = @transform_5, window_bounds = array<i64: 1, 128>}, {pipeline_mode = #tpu.pipeline_mode<synchronous>, transform_indices = @transform_6, window_bounds = array<i64: 1, 128>}, {transform_indices = @transform_7, window_bounds = array<i64: 1, 8, 16, 128>}, {transform_indices = @transform_8, window_bounds = array<i64: 1, 1, 1, 128>}, {transform_indices = @transform_9, window_bounds = array<i64: 1, 1, 1, 128>}]} {
    %c0 = arith.constant 0 : index
    %c0_0 = arith.constant 0 : index
    %c0_1 = arith.constant 0 : index
    %c0_2 = arith.constant 0 : index
    %0 = vector.load %arg2[%c0, %c0_0, %c0_1, %c0_2] : memref<1x8x16x128xf32, #tpu.memory_space<vmem>>, vector<1x8x16x128xf32>
    %1 = vector.shape_cast %0 : vector<1x8x16x128xf32> to vector<8x16x128xf32>
    %c0_3 = arith.constant 0 : index
    %c0_4 = arith.constant 0 : index
    %c0_5 = arith.constant 0 : index
    %c0_6 = arith.constant 0 : index
    %2 = vector.load %arg3[%c0_3, %c0_4, %c0_5, %c0_6] : memref<1x1x16x128xf32, #tpu.memory_space<vmem>>, vector<1x1x16x128xf32>
    %3 = vector.shape_cast %2 : vector<1x1x16x128xf32> to vector<1x16x128xf32>
    %c0_7 = arith.constant 0 : index
    %c0_8 = arith.constant 0 : index
    %c0_9 = arith.constant 0 : index
    %c0_10 = arith.constant 0 : index
    %4 = vector.load %arg4[%c0_7, %c0_8, %c0_9, %c0_10] : memref<1x1x16x128xf32, #tpu.memory_space<vmem>>, vector<1x1x16x128xf32>
    %5 = vector.shape_cast %4 : vector<1x1x16x128xf32> to vector<1x16x128xf32>
    %c0_i32 = arith.constant 0 : i32
    %6 = arith.cmpi sgt, %arg1, %c0_i32 : i32
    %cst = arith.constant 0.000000e+00 : f32
    %7 = vector.broadcast %cst : f32 to vector<1x16x128xf32>
    %8 = arith.select %6, %3, %7 : vector<1x16x128xf32>
    %c1_i32 = arith.constant 1 : i32
    %9 = arith.cmpi slt, %arg1, %c1_i32 : i32
    %cst_11 = arith.constant 0.000000e+00 : f32
    %10 = vector.broadcast %cst_11 : f32 to vector<1x16x128xf32>
    %11 = arith.select %9, %5, %10 : vector<1x16x128xf32>
    %cst_12 = arith.constant 0.000000e+00 : f32
    %12 = vector.broadcast %cst_12 : f32 to vector<10x1x128xf32>
    %c0_13 = arith.constant 0 : index
    %c0_14 = arith.constant 0 : index
    %c0_15 = arith.constant 0 : index
    %13 = vector.load %arg12[%c0_13, %c0_14, %c0_15] : memref<10x18x128xf32, #tpu.memory_space<vmem>>, vector<10x1x128xf32>
    tpu.vector_store %arg12[%c0_13, %c0_14, %c0_15], %12 {strides = array<i32>} : memref<10x18x128xf32, #tpu.memory_space<vmem>>, vector<10x1x128xf32>,
    %c0_16 = arith.constant 0 : index
    %c17 = arith.constant 17 : index
    %c0_17 = arith.constant 0 : index
    %14 = vector.load %arg12[%c0_16, %c17, %c0_17] : memref<10x18x128xf32, #tpu.memory_space<vmem>>, vector<10x1x128xf32>
    tpu.vector_store %arg12[%c0_16, %c17, %c0_17], %12 {strides = array<i32>} : memref<10x18x128xf32, #tpu.memory_space<vmem>>, vector<10x1x128xf32>,
    %c0_18 = arith.constant 0 : index
    %c1 = arith.constant 1 : index
    %c0_19 = arith.constant 0 : index
    %15 = vector.load %arg12[%c0_18, %c1, %c0_19] : memref<10x18x128xf32, #tpu.memory_space<vmem>>, vector<1x16x128xf32>
    tpu.vector_store %arg12[%c0_18, %c1, %c0_19], %8 {strides = array<i32>} : memref<10x18x128xf32, #tpu.memory_space<vmem>>, vector<1x16x128xf32>,
    %c9 = arith.constant 9 : index
    %c1_20 = arith.constant 1 : index
    %c0_21 = arith.constant 0 : index
    %16 = vector.load %arg12[%c9, %c1_20, %c0_21] : memref<10x18x128xf32, #tpu.memory_space<vmem>>, vector<1x16x128xf32>
    tpu.vector_store %arg12[%c9, %c1_20, %c0_21], %11 {strides = array<i32>} : memref<10x18x128xf32, #tpu.memory_space<vmem>>, vector<1x16x128xf32>,
    %c1_22 = arith.constant 1 : index
    %c1_23 = arith.constant 1 : index
    %c0_24 = arith.constant 0 : index
    %17 = vector.load %arg12[%c1_22, %c1_23, %c0_24] : memref<10x18x128xf32, #tpu.memory_space<vmem>>, vector<8x16x128xf32>
    tpu.vector_store %arg12[%c1_22, %c1_23, %c0_24], %1 {strides = array<i32>} : memref<10x18x128xf32, #tpu.memory_space<vmem>>, vector<8x16x128xf32>,
    %cst_25 = arith.constant 0.000000e+00 : f32
    %18 = vector.broadcast %cst_25 : f32 to vector<128x128xf32>
    %c0_26 = arith.constant 0 : index
    %c0_27 = arith.constant 0 : index
    %c0_28 = arith.constant 0 : index
    %19 = vector.load %arg12[%c0_26, %c0_27, %c0_28] : memref<10x18x128xf32, #tpu.memory_space<vmem>>, vector<10x16x128xf32>
    %20 = vector.extract_strided_slice %19 {offsets = [0, 0, 0], sizes = [8, 16, 128], strides = [1, 1, 1]} : vector<10x16x128xf32> to vector<8x16x128xf32>
    %21 = vector.shape_cast %20 : vector<8x16x128xf32> to vector<128x128xf32>
    %c0_29 = arith.constant 0 : index
    %c0_30 = arith.constant 0 : index
    %c0_31 = arith.constant 0 : index
    %c0_32 = arith.constant 0 : index
    %22 = vector.load %arg5[%c0_29, %c0_30, %c0_31, %c0_32] : memref<3x3x128x128xf32, #tpu.memory_space<vmem>>, vector<1x1x128x128xf32>
    %23 = vector.shape_cast %22 : vector<1x1x128x128xf32> to vector<128x128xf32>
    %cst_33 = arith.constant dense<0.000000e+00> : vector<128x128xf32>
    %24 = tpu.matmul %21, %23, %cst_33 {dimension_numbers = #tpu.dot_dimension_numbers<[1], [0], [0], [1], [0, 0, 1, 1], [], []>} : vector<128x128xf32>, vector<128x128xf32>, vector<128x128xf32> -> vector<128x128xf32>
    %25 = arith.addf %18, %24 : vector<128x128xf32>
    %26 = vector.extract_strided_slice %19 {offsets = [1, 0, 0], sizes = [8, 16, 128], strides = [1, 1, 1]} : vector<10x16x128xf32> to vector<8x16x128xf32>
    %27 = vector.shape_cast %26 : vector<8x16x128xf32> to vector<128x128xf32>
    %c1_34 = arith.constant 1 : index
    %c0_35 = arith.constant 0 : index
    %c0_36 = arith.constant 0 : index
    %c0_37 = arith.constant 0 : index
    %28 = vector.load %arg5[%c1_34, %c0_35, %c0_36, %c0_37] : memref<3x3x128x128xf32, #tpu.memory_space<vmem>>, vector<1x1x128x128xf32>
    %29 = vector.shape_cast %28 : vector<1x1x128x128xf32> to vector<128x128xf32>
    %cst_38 = arith.constant dense<0.000000e+00> : vector<128x128xf32>
    %30 = tpu.matmul %27, %29, %cst_38 {dimension_numbers = #tpu.dot_dimension_numbers<[1], [0], [0], [1], [0, 0, 1, 1], [], []>} : vector<128x128xf32>, vector<128x128xf32>, vector<128x128xf32> -> vector<128x128xf32>
    %31 = arith.addf %25, %30 : vector<128x128xf32>
    %32 = vector.extract_strided_slice %19 {offsets = [2, 0, 0], sizes = [8, 16, 128], strides = [1, 1, 1]} : vector<10x16x128xf32> to vector<8x16x128xf32>
    %33 = vector.shape_cast %32 : vector<8x16x128xf32> to vector<128x128xf32>
    %c2 = arith.constant 2 : index
    %c0_39 = arith.constant 0 : index
    %c0_40 = arith.constant 0 : index
    %c0_41 = arith.constant 0 : index
    %34 = vector.load %arg5[%c2, %c0_39, %c0_40, %c0_41] : memref<3x3x128x128xf32, #tpu.memory_space<vmem>>, vector<1x1x128x128xf32>
    %35 = vector.shape_cast %34 : vector<1x1x128x128xf32> to vector<128x128xf32>
    %cst_42 = arith.constant dense<0.000000e+00> : vector<128x128xf32>
    %36 = tpu.matmul %33, %35, %cst_42 {dimension_numbers = #tpu.dot_dimension_numbers<[1], [0], [0], [1], [0, 0, 1, 1], [], []>} : vector<128x128xf32>, vector<128x128xf32>, vector<128x128xf32> -> vector<128x128xf32>
    %37 = arith.addf %31, %36 : vector<128x128xf32>
    %c0_43 = arith.constant 0 : index
    %c1_44 = arith.constant 1 : index
    %c0_45 = arith.constant 0 : index
    %38 = vector.load %arg12[%c0_43, %c1_44, %c0_45] : memref<10x18x128xf32, #tpu.memory_space<vmem>>, vector<10x16x128xf32>
    %39 = vector.extract_strided_slice %38 {offsets = [0, 0, 0], sizes = [8, 16, 128], strides = [1, 1, 1]} : vector<10x16x128xf32> to vector<8x16x128xf32>
    %40 = vector.shape_cast %39 : vector<8x16x128xf32> to vector<128x128xf32>
    %c0_46 = arith.constant 0 : index
    %c1_47 = arith.constant 1 : index
    %c0_48 = arith.constant 0 : index
    %c0_49 = arith.constant 0 : index
    %41 = vector.load %arg5[%c0_46, %c1_47, %c0_48, %c0_49] : memref<3x3x128x128xf32, #tpu.memory_space<vmem>>, vector<1x1x128x128xf32>
    %42 = vector.shape_cast %41 : vector<1x1x128x128xf32> to vector<128x128xf32>
    %cst_50 = arith.constant dense<0.000000e+00> : vector<128x128xf32>
    %43 = tpu.matmul %40, %42, %cst_50 {dimension_numbers = #tpu.dot_dimension_numbers<[1], [0], [0], [1], [0, 0, 1, 1], [], []>} : vector<128x128xf32>, vector<128x128xf32>, vector<128x128xf32> -> vector<128x128xf32>
    %44 = arith.addf %37, %43 : vector<128x128xf32>
    %45 = vector.extract_strided_slice %38 {offsets = [1, 0, 0], sizes = [8, 16, 128], strides = [1, 1, 1]} : vector<10x16x128xf32> to vector<8x16x128xf32>
    %46 = vector.shape_cast %45 : vector<8x16x128xf32> to vector<128x128xf32>
    %c1_51 = arith.constant 1 : index
    %c1_52 = arith.constant 1 : index
    %c0_53 = arith.constant 0 : index
    %c0_54 = arith.constant 0 : index
    %47 = vector.load %arg5[%c1_51, %c1_52, %c0_53, %c0_54] : memref<3x3x128x128xf32, #tpu.memory_space<vmem>>, vector<1x1x128x128xf32>
    %48 = vector.shape_cast %47 : vector<1x1x128x128xf32> to vector<128x128xf32>
    %cst_55 = arith.constant dense<0.000000e+00> : vector<128x128xf32>
    %49 = tpu.matmul %46, %48, %cst_55 {dimension_numbers = #tpu.dot_dimension_numbers<[1], [0], [0], [1], [0, 0, 1, 1], [], []>} : vector<128x128xf32>, vector<128x128xf32>, vector<128x128xf32> -> vector<128x128xf32>
    %50 = arith.addf %44, %49 : vector<128x128xf32>
    %51 = vector.extract_strided_slice %38 {offsets = [2, 0, 0], sizes = [8, 16, 128], strides = [1, 1, 1]} : vector<10x16x128xf32> to vector<8x16x128xf32>
    %52 = vector.shape_cast %51 : vector<8x16x128xf32> to vector<128x128xf32>
    %c2_56 = arith.constant 2 : index
    %c1_57 = arith.constant 1 : index
    %c0_58 = arith.constant 0 : index
    %c0_59 = arith.constant 0 : index
    %53 = vector.load %arg5[%c2_56, %c1_57, %c0_58, %c0_59] : memref<3x3x128x128xf32, #tpu.memory_space<vmem>>, vector<1x1x128x128xf32>
    %54 = vector.shape_cast %53 : vector<1x1x128x128xf32> to vector<128x128xf32>
    %cst_60 = arith.constant dense<0.000000e+00> : vector<128x128xf32>
    %55 = tpu.matmul %52, %54, %cst_60 {dimension_numbers = #tpu.dot_dimension_numbers<[1], [0], [0], [1], [0, 0, 1, 1], [], []>} : vector<128x128xf32>, vector<128x128xf32>, vector<128x128xf32> -> vector<128x128xf32>
    %56 = arith.addf %50, %55 : vector<128x128xf32>
    %c0_61 = arith.constant 0 : index
    %c2_62 = arith.constant 2 : index
    %c0_63 = arith.constant 0 : index
    %57 = vector.load %arg12[%c0_61, %c2_62, %c0_63] : memref<10x18x128xf32, #tpu.memory_space<vmem>>, vector<10x16x128xf32>
    %58 = vector.extract_strided_slice %57 {offsets = [0, 0, 0], sizes = [8, 16, 128], strides = [1, 1, 1]} : vector<10x16x128xf32> to vector<8x16x128xf32>
    %59 = vector.shape_cast %58 : vector<8x16x128xf32> to vector<128x128xf32>
    %c0_64 = arith.constant 0 : index
    %c2_65 = arith.constant 2 : index
    %c0_66 = arith.constant 0 : index
    %c0_67 = arith.constant 0 : index
    %60 = vector.load %arg5[%c0_64, %c2_65, %c0_66, %c0_67] : memref<3x3x128x128xf32, #tpu.memory_space<vmem>>, vector<1x1x128x128xf32>
    %61 = vector.shape_cast %60 : vector<1x1x128x128xf32> to vector<128x128xf32>
    %cst_68 = arith.constant dense<0.000000e+00> : vector<128x128xf32>
    %62 = tpu.matmul %59, %61, %cst_68 {dimension_numbers = #tpu.dot_dimension_numbers<[1], [0], [0], [1], [0, 0, 1, 1], [], []>} : vector<128x128xf32>, vector<128x128xf32>, vector<128x128xf32> -> vector<128x128xf32>
    %63 = arith.addf %56, %62 : vector<128x128xf32>
    %64 = vector.extract_strided_slice %57 {offsets = [1, 0, 0], sizes = [8, 16, 128], strides = [1, 1, 1]} : vector<10x16x128xf32> to vector<8x16x128xf32>
    %65 = vector.shape_cast %64 : vector<8x16x128xf32> to vector<128x128xf32>
    %c1_69 = arith.constant 1 : index
    %c2_70 = arith.constant 2 : index
    %c0_71 = arith.constant 0 : index
    %c0_72 = arith.constant 0 : index
    %66 = vector.load %arg5[%c1_69, %c2_70, %c0_71, %c0_72] : memref<3x3x128x128xf32, #tpu.memory_space<vmem>>, vector<1x1x128x128xf32>
    %67 = vector.shape_cast %66 : vector<1x1x128x128xf32> to vector<128x128xf32>
    %cst_73 = arith.constant dense<0.000000e+00> : vector<128x128xf32>
    %68 = tpu.matmul %65, %67, %cst_73 {dimension_numbers = #tpu.dot_dimension_numbers<[1], [0], [0], [1], [0, 0, 1, 1], [], []>} : vector<128x128xf32>, vector<128x128xf32>, vector<128x128xf32> -> vector<128x128xf32>
    %69 = arith.addf %63, %68 : vector<128x128xf32>
    %70 = vector.extract_strided_slice %57 {offsets = [2, 0, 0], sizes = [8, 16, 128], strides = [1, 1, 1]} : vector<10x16x128xf32> to vector<8x16x128xf32>
    %71 = vector.shape_cast %70 : vector<8x16x128xf32> to vector<128x128xf32>
    %c2_74 = arith.constant 2 : index
    %c2_75 = arith.constant 2 : index
    %c0_76 = arith.constant 0 : index
    %c0_77 = arith.constant 0 : index
    %72 = vector.load %arg5[%c2_74, %c2_75, %c0_76, %c0_77] : memref<3x3x128x128xf32, #tpu.memory_space<vmem>>, vector<1x1x128x128xf32>
    %73 = vector.shape_cast %72 : vector<1x1x128x128xf32> to vector<128x128xf32>
    %cst_78 = arith.constant dense<0.000000e+00> : vector<128x128xf32>
    %74 = tpu.matmul %71, %73, %cst_78 {dimension_numbers = #tpu.dot_dimension_numbers<[1], [0], [0], [1], [0, 0, 1, 1], [], []>} : vector<128x128xf32>, vector<128x128xf32>, vector<128x128xf32> -> vector<128x128xf32>
    %75 = arith.addf %69, %74 : vector<128x128xf32>
    %c0_79 = arith.constant 0 : index
    %c0_80 = arith.constant 0 : index
    %76 = vector.load %arg6[%c0_79, %c0_80] : memref<1x128xf32, #tpu.memory_space<vmem>>, vector<1x128xf32>
    %77 = vector.broadcast %76 : vector<1x128xf32> to vector<128x128xf32>
    %78 = arith.addf %75, %77 : vector<128x128xf32>
    %79 = vector.shape_cast %78 : vector<128x128xf32> to vector<1x8x16x128xf32>
    %c0_81 = arith.constant 0 : index
    %c0_82 = arith.constant 0 : index
    %c0_83 = arith.constant 0 : index
    %c0_84 = arith.constant 0 : index
    %80 = vector.load %arg9[%c0_81, %c0_82, %c0_83, %c0_84] : memref<1x8x16x128xf32, #tpu.memory_space<vmem>>, vector<1x8x16x128xf32>
    tpu.vector_store %arg9[%c0_81, %c0_82, %c0_83, %c0_84], %79 {strides = array<i32>} : memref<1x8x16x128xf32, #tpu.memory_space<vmem>>, vector<1x8x16x128xf32>,
    %cst_85 = arith.constant dense<0.000000e+00> : vector<128xf32>
    %81 = vector.multi_reduction <add>, %78, %cst_85 [0] : vector<128x128xf32> to vector<128xf32>
    %82 = vector.shape_cast %81 : vector<128xf32> to vector<1x128xf32>
    %83 = vector.shape_cast %82 : vector<1x128xf32> to vector<1x1x1x128xf32>
    %c0_86 = arith.constant 0 : index
    %c0_87 = arith.constant 0 : index
    %c0_88 = arith.constant 0 : index
    %c0_89 = arith.constant 0 : index
    %84 = vector.load %arg10[%c0_86, %c0_87, %c0_88, %c0_89] : memref<1x1x1x128xf32, #tpu.memory_space<vmem>>, vector<1x1x1x128xf32>
    tpu.vector_store %arg10[%c0_86, %c0_87, %c0_88, %c0_89], %83 {strides = array<i32>} : memref<1x1x1x128xf32, #tpu.memory_space<vmem>>, vector<1x1x1x128xf32>,
    %85 = arith.mulf %78, %78 : vector<128x128xf32>
    %cst_90 = arith.constant dense<0.000000e+00> : vector<128xf32>
    %86 = vector.multi_reduction <add>, %85, %cst_90 [0] : vector<128x128xf32> to vector<128xf32>
    %87 = vector.shape_cast %86 : vector<128xf32> to vector<1x128xf32>
    %88 = vector.shape_cast %87 : vector<1x128xf32> to vector<1x1x1x128xf32>
    %c0_91 = arith.constant 0 : index
    %c0_92 = arith.constant 0 : index
    %c0_93 = arith.constant 0 : index
    %c0_94 = arith.constant 0 : index
    %89 = vector.load %arg11[%c0_91, %c0_92, %c0_93, %c0_94] : memref<1x1x1x128xf32, #tpu.memory_space<vmem>>, vector<1x1x1x128xf32>
    tpu.vector_store %arg11[%c0_91, %c0_92, %c0_93, %c0_94], %88 {strides = array<i32>} : memref<1x1x1x128xf32, #tpu.memory_space<vmem>>, vector<1x1x1x128xf32>,
    return
  }
  func.func @transform_0(%arg0: i32, %arg1: i32) -> (i32, i32, i32, i32) {
    %c0_i32 = arith.constant 0 : i32
    %c0_i32_0 = arith.constant 0 : i32
    %c0_i32_1 = arith.constant 0 : i32
    return %arg0, %arg1, %c0_i32, %c0_i32_0 : i32, i32, i32, i32
  }
  func.func @transform_1(%arg0: i32, %arg1: i32) -> (i32, i32, i32, i32) {
    %c8_i32 = arith.constant 8 : i32
    %0 = arith.muli %arg1, %c8_i32 : i32
    %c1_i32 = arith.constant 1 : i32
    %1 = arith.subi %0, %c1_i32 : i32
    %c0_i32 = arith.constant 0 : i32
    %2 = arith.maxsi %1, %c0_i32 : i32
    %c0_i32_0 = arith.constant 0 : i32
    %c0_i32_1 = arith.constant 0 : i32
    %c0_i32_2 = arith.constant 0 : i32
    return %arg0, %2, %c0_i32_0, %c0_i32_1 : i32, i32, i32, i32
  }
  func.func @transform_2(%arg0: i32, %arg1: i32) -> (i32, i32, i32, i32) {
    %c8_i32 = arith.constant 8 : i32
    %0 = arith.muli %arg1, %c8_i32 : i32
    %c8_i32_0 = arith.constant 8 : i32
    %1 = arith.addi %0, %c8_i32_0 : i32
    %c15_i32 = arith.constant 15 : i32
    %2 = arith.minsi %1, %c15_i32 : i32
    %c0_i32 = arith.constant 0 : i32
    %c0_i32_1 = arith.constant 0 : i32
    %c0_i32_2 = arith.constant 0 : i32
    return %arg0, %2, %c0_i32, %c0_i32_1 : i32, i32, i32, i32
  }
  func.func @transform_3(%arg0: i32, %arg1: i32) -> (i32, i32, i32, i32) {
    %c0_i32 = arith.constant 0 : i32
    %c0_i32_0 = arith.constant 0 : i32
    %c0_i32_1 = arith.constant 0 : i32
    %c0_i32_2 = arith.constant 0 : i32
    %c0_i32_3 = arith.constant 0 : i32
    return %c0_i32, %c0_i32_0, %c0_i32_1, %c0_i32_2 : i32, i32, i32, i32
  }
  func.func @transform_4(%arg0: i32, %arg1: i32) -> (i32, i32) {
    %c0_i32 = arith.constant 0 : i32
    %c0_i32_0 = arith.constant 0 : i32
    %c0_i32_1 = arith.constant 0 : i32
    return %c0_i32, %c0_i32_0 : i32, i32
  }
  func.func @transform_5(%arg0: i32, %arg1: i32) -> (i32, i32) {
    %c0_i32 = arith.constant 0 : i32
    %c0_i32_0 = arith.constant 0 : i32
    %c0_i32_1 = arith.constant 0 : i32
    return %c0_i32, %c0_i32_0 : i32, i32
  }
  func.func @transform_6(%arg0: i32, %arg1: i32) -> (i32, i32) {
    %c0_i32 = arith.constant 0 : i32
    %c0_i32_0 = arith.constant 0 : i32
    %c0_i32_1 = arith.constant 0 : i32
    return %c0_i32, %c0_i32_0 : i32, i32
  }
  func.func @transform_7(%arg0: i32, %arg1: i32) -> (i32, i32, i32, i32) {
    %c0_i32 = arith.constant 0 : i32
    %c0_i32_0 = arith.constant 0 : i32
    %c0_i32_1 = arith.constant 0 : i32
    return %arg0, %arg1, %c0_i32, %c0_i32_0 : i32, i32, i32, i32
  }
  func.func @transform_8(%arg0: i32, %arg1: i32) -> (i32, i32, i32, i32) {
    %c0_i32 = arith.constant 0 : i32
    %c0_i32_0 = arith.constant 0 : i32
    %c0_i32_1 = arith.constant 0 : i32
    return %arg0, %arg1, %c0_i32, %c0_i32_0 : i32, i32, i32, i32
  }
  func.func @transform_9(%arg0: i32, %arg1: i32) -> (i32, i32, i32, i32) {
    %c0_i32 = arith.constant 0 : i32
    %c0_i32_0 = arith.constant 0 : i32
    %c0_i32_1 = arith.constant 0 : i32
    return %arg0, %arg1, %c0_i32, %c0_i32_0 : i32, i32, i32, i32
  }
}

module attributes {stable_mosaic.version = 11 : i64} {
  func.func @_bn_relu_kernel(%arg0: i32, %arg1: i32, %arg2: memref<1x8x16x128xf32, #tpu.memory_space<vmem>>, %arg3: memref<1x128xf32, #tpu.memory_space<vmem>>, %arg4: memref<1x128xf32, #tpu.memory_space<vmem>>, %arg5: memref<1x8x16x128xf32, #tpu.memory_space<vmem>>) attributes {dimension_semantics = [#tpu.dimension_semantics<parallel>, #tpu.dimension_semantics<parallel>], iteration_bounds = array<i64: 2, 2>, scalar_prefetch = 0 : i64, scratch_operands = 0 : i64, tpu.core_type = #tpu.core_type<tc>, window_params = [{transform_indices = @transform_0, window_bounds = array<i64: 1, 8, 16, 128>}, {pipeline_mode = #tpu.pipeline_mode<synchronous>, transform_indices = @transform_1, window_bounds = array<i64: 1, 128>}, {pipeline_mode = #tpu.pipeline_mode<synchronous>, transform_indices = @transform_2, window_bounds = array<i64: 1, 128>}, {transform_indices = @transform_3, window_bounds = array<i64: 1, 8, 16, 128>}]} {
    %c0 = arith.constant 0 : index
    %c0_0 = arith.constant 0 : index
    %c0_1 = arith.constant 0 : index
    %c0_2 = arith.constant 0 : index
    %0 = vector.load %arg2[%c0, %c0_0, %c0_1, %c0_2] : memref<1x8x16x128xf32, #tpu.memory_space<vmem>>, vector<1x8x16x128xf32>
    %c0_3 = arith.constant 0 : index
    %c0_4 = arith.constant 0 : index
    %1 = vector.load %arg3[%c0_3, %c0_4] : memref<1x128xf32, #tpu.memory_space<vmem>>, vector<1x128xf32>
    %2 = vector.shape_cast %1 : vector<1x128xf32> to vector<1x1x1x128xf32>
    %3 = vector.broadcast %2 : vector<1x1x1x128xf32> to vector<1x8x16x128xf32>
    %4 = arith.mulf %0, %3 : vector<1x8x16x128xf32>
    %c0_5 = arith.constant 0 : index
    %c0_6 = arith.constant 0 : index
    %5 = vector.load %arg4[%c0_5, %c0_6] : memref<1x128xf32, #tpu.memory_space<vmem>>, vector<1x128xf32>
    %6 = vector.shape_cast %5 : vector<1x128xf32> to vector<1x1x1x128xf32>
    %7 = vector.broadcast %6 : vector<1x1x1x128xf32> to vector<1x8x16x128xf32>
    %8 = arith.addf %4, %7 : vector<1x8x16x128xf32>
    %cst = arith.constant 0.000000e+00 : f32
    %9 = vector.broadcast %cst : f32 to vector<1x8x16x128xf32>
    %10 = arith.maximumf %8, %9 : vector<1x8x16x128xf32>
    %c0_7 = arith.constant 0 : index
    %c0_8 = arith.constant 0 : index
    %c0_9 = arith.constant 0 : index
    %c0_10 = arith.constant 0 : index
    %11 = vector.load %arg5[%c0_7, %c0_8, %c0_9, %c0_10] : memref<1x8x16x128xf32, #tpu.memory_space<vmem>>, vector<1x8x16x128xf32>
    tpu.vector_store %arg5[%c0_7, %c0_8, %c0_9, %c0_10], %10 {strides = array<i32>} : memref<1x8x16x128xf32, #tpu.memory_space<vmem>>, vector<1x8x16x128xf32>,
    return
  }
  func.func @transform_0(%arg0: i32, %arg1: i32) -> (i32, i32, i32, i32) {
    %c0_i32 = arith.constant 0 : i32
    %c0_i32_0 = arith.constant 0 : i32
    %c0_i32_1 = arith.constant 0 : i32
    return %arg0, %arg1, %c0_i32, %c0_i32_0 : i32, i32, i32, i32
  }
  func.func @transform_1(%arg0: i32, %arg1: i32) -> (i32, i32) {
    %c0_i32 = arith.constant 0 : i32
    %c0_i32_0 = arith.constant 0 : i32
    %c0_i32_1 = arith.constant 0 : i32
    return %c0_i32, %c0_i32_0 : i32, i32
  }
  func.func @transform_2(%arg0: i32, %arg1: i32) -> (i32, i32) {
    %c0_i32 = arith.constant 0 : i32
    %c0_i32_0 = arith.constant 0 : i32
    %c0_i32_1 = arith.constant 0 : i32
    return %c0_i32, %c0_i32_0 : i32, i32
  }
  func.func @transform_3(%arg0: i32, %arg1: i32) -> (i32, i32, i32, i32) {
    %c0_i32 = arith.constant 0 : i32
    %c0_i32_0 = arith.constant 0 : i32
    %c0_i32_1 = arith.constant 0 : i32
    return %arg0, %arg1, %c0_i32, %c0_i32_0 : i32, i32, i32, i32
  }
}

module attributes {stable_mosaic.version = 11 : i64} {
  func.func @_conv_stage_kernel(%arg0: i32, %arg1: i32, %arg2: memref<1x8x16x128xf32, #tpu.memory_space<vmem>>, %arg3: memref<1x1x16x128xf32, #tpu.memory_space<vmem>>, %arg4: memref<1x1x16x128xf32, #tpu.memory_space<vmem>>, %arg5: memref<3x3x128x128xf32, #tpu.memory_space<vmem>>, %arg6: memref<1x128xf32, #tpu.memory_space<vmem>>, %arg7: memref<1x128xf32, #tpu.memory_space<vmem>>, %arg8: memref<1x128xf32, #tpu.memory_space<vmem>>, %arg9: memref<1x8x16x128xf32, #tpu.memory_space<vmem>>, %arg10: memref<1x1x1x128xf32, #tpu.memory_space<vmem>>, %arg11: memref<1x1x1x128xf32, #tpu.memory_space<vmem>>, %arg12: memref<10x18x128xf32, #tpu.memory_space<vmem>>) attributes {dimension_semantics = [#tpu.dimension_semantics<parallel>, #tpu.dimension_semantics<parallel>], iteration_bounds = array<i64: 2, 2>, scalar_prefetch = 0 : i64, scratch_operands = 1 : i64, tpu.core_type = #tpu.core_type<tc>, window_params = [{transform_indices = @transform_0, window_bounds = array<i64: 1, 8, 16, 128>}, {transform_indices = @transform_1, window_bounds = array<i64: 1, 1, 16, 128>}, {transform_indices = @transform_2, window_bounds = array<i64: 1, 1, 16, 128>}, {pipeline_mode = #tpu.pipeline_mode<synchronous>, transform_indices = @transform_3, window_bounds = array<i64: 3, 3, 128, 128>}, {pipeline_mode = #tpu.pipeline_mode<synchronous>, transform_indices = @transform_4, window_bounds = array<i64: 1, 128>}, {pipeline_mode = #tpu.pipeline_mode<synchronous>, transform_indices = @transform_5, window_bounds = array<i64: 1, 128>}, {pipeline_mode = #tpu.pipeline_mode<synchronous>, transform_indices = @transform_6, window_bounds = array<i64: 1, 128>}, {transform_indices = @transform_7, window_bounds = array<i64: 1, 8, 16, 128>}, {transform_indices = @transform_8, window_bounds = array<i64: 1, 1, 1, 128>}, {transform_indices = @transform_9, window_bounds = array<i64: 1, 1, 1, 128>}]} {
    %c0 = arith.constant 0 : index
    %c0_0 = arith.constant 0 : index
    %c0_1 = arith.constant 0 : index
    %c0_2 = arith.constant 0 : index
    %0 = vector.load %arg2[%c0, %c0_0, %c0_1, %c0_2] : memref<1x8x16x128xf32, #tpu.memory_space<vmem>>, vector<1x8x16x128xf32>
    %1 = vector.shape_cast %0 : vector<1x8x16x128xf32> to vector<8x16x128xf32>
    %c0_3 = arith.constant 0 : index
    %c0_4 = arith.constant 0 : index
    %2 = vector.load %arg7[%c0_3, %c0_4] : memref<1x128xf32, #tpu.memory_space<vmem>>, vector<1x128xf32>
    %3 = vector.shape_cast %2 : vector<1x128xf32> to vector<1x1x128xf32>
    %4 = vector.broadcast %3 : vector<1x1x128xf32> to vector<8x16x128xf32>
    %5 = arith.mulf %1, %4 : vector<8x16x128xf32>
    %c0_5 = arith.constant 0 : index
    %c0_6 = arith.constant 0 : index
    %6 = vector.load %arg8[%c0_5, %c0_6] : memref<1x128xf32, #tpu.memory_space<vmem>>, vector<1x128xf32>
    %7 = vector.shape_cast %6 : vector<1x128xf32> to vector<1x1x128xf32>
    %8 = vector.broadcast %7 : vector<1x1x128xf32> to vector<8x16x128xf32>
    %9 = arith.addf %5, %8 : vector<8x16x128xf32>
    %cst = arith.constant 0.000000e+00 : f32
    %10 = vector.broadcast %cst : f32 to vector<8x16x128xf32>
    %11 = arith.maximumf %9, %10 : vector<8x16x128xf32>
    %c0_7 = arith.constant 0 : index
    %c0_8 = arith.constant 0 : index
    %c0_9 = arith.constant 0 : index
    %c0_10 = arith.constant 0 : index
    %12 = vector.load %arg3[%c0_7, %c0_8, %c0_9, %c0_10] : memref<1x1x16x128xf32, #tpu.memory_space<vmem>>, vector<1x1x16x128xf32>
    %13 = vector.shape_cast %12 : vector<1x1x16x128xf32> to vector<1x16x128xf32>
    %c0_11 = arith.constant 0 : index
    %c0_12 = arith.constant 0 : index
    %14 = vector.load %arg7[%c0_11, %c0_12] : memref<1x128xf32, #tpu.memory_space<vmem>>, vector<1x128xf32>
    %15 = vector.shape_cast %14 : vector<1x128xf32> to vector<1x1x128xf32>
    %16 = vector.broadcast %15 : vector<1x1x128xf32> to vector<1x16x128xf32>
    %17 = arith.mulf %13, %16 : vector<1x16x128xf32>
    %c0_13 = arith.constant 0 : index
    %c0_14 = arith.constant 0 : index
    %18 = vector.load %arg8[%c0_13, %c0_14] : memref<1x128xf32, #tpu.memory_space<vmem>>, vector<1x128xf32>
    %19 = vector.shape_cast %18 : vector<1x128xf32> to vector<1x1x128xf32>
    %20 = vector.broadcast %19 : vector<1x1x128xf32> to vector<1x16x128xf32>
    %21 = arith.addf %17, %20 : vector<1x16x128xf32>
    %cst_15 = arith.constant 0.000000e+00 : f32
    %22 = vector.broadcast %cst_15 : f32 to vector<1x16x128xf32>
    %23 = arith.maximumf %21, %22 : vector<1x16x128xf32>
    %c0_16 = arith.constant 0 : index
    %c0_17 = arith.constant 0 : index
    %c0_18 = arith.constant 0 : index
    %c0_19 = arith.constant 0 : index
    %24 = vector.load %arg4[%c0_16, %c0_17, %c0_18, %c0_19] : memref<1x1x16x128xf32, #tpu.memory_space<vmem>>, vector<1x1x16x128xf32>
    %25 = vector.shape_cast %24 : vector<1x1x16x128xf32> to vector<1x16x128xf32>
    %c0_20 = arith.constant 0 : index
    %c0_21 = arith.constant 0 : index
    %26 = vector.load %arg7[%c0_20, %c0_21] : memref<1x128xf32, #tpu.memory_space<vmem>>, vector<1x128xf32>
    %27 = vector.shape_cast %26 : vector<1x128xf32> to vector<1x1x128xf32>
    %28 = vector.broadcast %27 : vector<1x1x128xf32> to vector<1x16x128xf32>
    %29 = arith.mulf %25, %28 : vector<1x16x128xf32>
    %c0_22 = arith.constant 0 : index
    %c0_23 = arith.constant 0 : index
    %30 = vector.load %arg8[%c0_22, %c0_23] : memref<1x128xf32, #tpu.memory_space<vmem>>, vector<1x128xf32>
    %31 = vector.shape_cast %30 : vector<1x128xf32> to vector<1x1x128xf32>
    %32 = vector.broadcast %31 : vector<1x1x128xf32> to vector<1x16x128xf32>
    %33 = arith.addf %29, %32 : vector<1x16x128xf32>
    %cst_24 = arith.constant 0.000000e+00 : f32
    %34 = vector.broadcast %cst_24 : f32 to vector<1x16x128xf32>
    %35 = arith.maximumf %33, %34 : vector<1x16x128xf32>
    %c0_i32 = arith.constant 0 : i32
    %36 = arith.cmpi sgt, %arg1, %c0_i32 : i32
    %cst_25 = arith.constant 0.000000e+00 : f32
    %37 = vector.broadcast %cst_25 : f32 to vector<1x16x128xf32>
    %38 = arith.select %36, %23, %37 : vector<1x16x128xf32>
    %c1_i32 = arith.constant 1 : i32
    %39 = arith.cmpi slt, %arg1, %c1_i32 : i32
    %cst_26 = arith.constant 0.000000e+00 : f32
    %40 = vector.broadcast %cst_26 : f32 to vector<1x16x128xf32>
    %41 = arith.select %39, %35, %40 : vector<1x16x128xf32>
    %cst_27 = arith.constant 0.000000e+00 : f32
    %42 = vector.broadcast %cst_27 : f32 to vector<10x1x128xf32>
    %c0_28 = arith.constant 0 : index
    %c0_29 = arith.constant 0 : index
    %c0_30 = arith.constant 0 : index
    %43 = vector.load %arg12[%c0_28, %c0_29, %c0_30] : memref<10x18x128xf32, #tpu.memory_space<vmem>>, vector<10x1x128xf32>
    tpu.vector_store %arg12[%c0_28, %c0_29, %c0_30], %42 {strides = array<i32>} : memref<10x18x128xf32, #tpu.memory_space<vmem>>, vector<10x1x128xf32>,
    %c0_31 = arith.constant 0 : index
    %c17 = arith.constant 17 : index
    %c0_32 = arith.constant 0 : index
    %44 = vector.load %arg12[%c0_31, %c17, %c0_32] : memref<10x18x128xf32, #tpu.memory_space<vmem>>, vector<10x1x128xf32>
    tpu.vector_store %arg12[%c0_31, %c17, %c0_32], %42 {strides = array<i32>} : memref<10x18x128xf32, #tpu.memory_space<vmem>>, vector<10x1x128xf32>,
    %c0_33 = arith.constant 0 : index
    %c1 = arith.constant 1 : index
    %c0_34 = arith.constant 0 : index
    %45 = vector.load %arg12[%c0_33, %c1, %c0_34] : memref<10x18x128xf32, #tpu.memory_space<vmem>>, vector<1x16x128xf32>
    tpu.vector_store %arg12[%c0_33, %c1, %c0_34], %38 {strides = array<i32>} : memref<10x18x128xf32, #tpu.memory_space<vmem>>, vector<1x16x128xf32>,
    %c9 = arith.constant 9 : index
    %c1_35 = arith.constant 1 : index
    %c0_36 = arith.constant 0 : index
    %46 = vector.load %arg12[%c9, %c1_35, %c0_36] : memref<10x18x128xf32, #tpu.memory_space<vmem>>, vector<1x16x128xf32>
    tpu.vector_store %arg12[%c9, %c1_35, %c0_36], %41 {strides = array<i32>} : memref<10x18x128xf32, #tpu.memory_space<vmem>>, vector<1x16x128xf32>,
    %c1_37 = arith.constant 1 : index
    %c1_38 = arith.constant 1 : index
    %c0_39 = arith.constant 0 : index
    %47 = vector.load %arg12[%c1_37, %c1_38, %c0_39] : memref<10x18x128xf32, #tpu.memory_space<vmem>>, vector<8x16x128xf32>
    tpu.vector_store %arg12[%c1_37, %c1_38, %c0_39], %11 {strides = array<i32>} : memref<10x18x128xf32, #tpu.memory_space<vmem>>, vector<8x16x128xf32>,
    %cst_40 = arith.constant 0.000000e+00 : f32
    %48 = vector.broadcast %cst_40 : f32 to vector<128x128xf32>
    %c0_41 = arith.constant 0 : index
    %c0_42 = arith.constant 0 : index
    %c0_43 = arith.constant 0 : index
    %49 = vector.load %arg12[%c0_41, %c0_42, %c0_43] : memref<10x18x128xf32, #tpu.memory_space<vmem>>, vector<10x16x128xf32>
    %50 = vector.extract_strided_slice %49 {offsets = [0, 0, 0], sizes = [8, 16, 128], strides = [1, 1, 1]} : vector<10x16x128xf32> to vector<8x16x128xf32>
    %51 = vector.shape_cast %50 : vector<8x16x128xf32> to vector<128x128xf32>
    %c0_44 = arith.constant 0 : index
    %c0_45 = arith.constant 0 : index
    %c0_46 = arith.constant 0 : index
    %c0_47 = arith.constant 0 : index
    %52 = vector.load %arg5[%c0_44, %c0_45, %c0_46, %c0_47] : memref<3x3x128x128xf32, #tpu.memory_space<vmem>>, vector<1x1x128x128xf32>
    %53 = vector.shape_cast %52 : vector<1x1x128x128xf32> to vector<128x128xf32>
    %cst_48 = arith.constant dense<0.000000e+00> : vector<128x128xf32>
    %54 = tpu.matmul %51, %53, %cst_48 {dimension_numbers = #tpu.dot_dimension_numbers<[1], [0], [0], [1], [0, 0, 1, 1], [], []>} : vector<128x128xf32>, vector<128x128xf32>, vector<128x128xf32> -> vector<128x128xf32>
    %55 = arith.addf %48, %54 : vector<128x128xf32>
    %56 = vector.extract_strided_slice %49 {offsets = [1, 0, 0], sizes = [8, 16, 128], strides = [1, 1, 1]} : vector<10x16x128xf32> to vector<8x16x128xf32>
    %57 = vector.shape_cast %56 : vector<8x16x128xf32> to vector<128x128xf32>
    %c1_49 = arith.constant 1 : index
    %c0_50 = arith.constant 0 : index
    %c0_51 = arith.constant 0 : index
    %c0_52 = arith.constant 0 : index
    %58 = vector.load %arg5[%c1_49, %c0_50, %c0_51, %c0_52] : memref<3x3x128x128xf32, #tpu.memory_space<vmem>>, vector<1x1x128x128xf32>
    %59 = vector.shape_cast %58 : vector<1x1x128x128xf32> to vector<128x128xf32>
    %cst_53 = arith.constant dense<0.000000e+00> : vector<128x128xf32>
    %60 = tpu.matmul %57, %59, %cst_53 {dimension_numbers = #tpu.dot_dimension_numbers<[1], [0], [0], [1], [0, 0, 1, 1], [], []>} : vector<128x128xf32>, vector<128x128xf32>, vector<128x128xf32> -> vector<128x128xf32>
    %61 = arith.addf %55, %60 : vector<128x128xf32>
    %62 = vector.extract_strided_slice %49 {offsets = [2, 0, 0], sizes = [8, 16, 128], strides = [1, 1, 1]} : vector<10x16x128xf32> to vector<8x16x128xf32>
    %63 = vector.shape_cast %62 : vector<8x16x128xf32> to vector<128x128xf32>
    %c2 = arith.constant 2 : index
    %c0_54 = arith.constant 0 : index
    %c0_55 = arith.constant 0 : index
    %c0_56 = arith.constant 0 : index
    %64 = vector.load %arg5[%c2, %c0_54, %c0_55, %c0_56] : memref<3x3x128x128xf32, #tpu.memory_space<vmem>>, vector<1x1x128x128xf32>
    %65 = vector.shape_cast %64 : vector<1x1x128x128xf32> to vector<128x128xf32>
    %cst_57 = arith.constant dense<0.000000e+00> : vector<128x128xf32>
    %66 = tpu.matmul %63, %65, %cst_57 {dimension_numbers = #tpu.dot_dimension_numbers<[1], [0], [0], [1], [0, 0, 1, 1], [], []>} : vector<128x128xf32>, vector<128x128xf32>, vector<128x128xf32> -> vector<128x128xf32>
    %67 = arith.addf %61, %66 : vector<128x128xf32>
    %c0_58 = arith.constant 0 : index
    %c1_59 = arith.constant 1 : index
    %c0_60 = arith.constant 0 : index
    %68 = vector.load %arg12[%c0_58, %c1_59, %c0_60] : memref<10x18x128xf32, #tpu.memory_space<vmem>>, vector<10x16x128xf32>
    %69 = vector.extract_strided_slice %68 {offsets = [0, 0, 0], sizes = [8, 16, 128], strides = [1, 1, 1]} : vector<10x16x128xf32> to vector<8x16x128xf32>
    %70 = vector.shape_cast %69 : vector<8x16x128xf32> to vector<128x128xf32>
    %c0_61 = arith.constant 0 : index
    %c1_62 = arith.constant 1 : index
    %c0_63 = arith.constant 0 : index
    %c0_64 = arith.constant 0 : index
    %71 = vector.load %arg5[%c0_61, %c1_62, %c0_63, %c0_64] : memref<3x3x128x128xf32, #tpu.memory_space<vmem>>, vector<1x1x128x128xf32>
    %72 = vector.shape_cast %71 : vector<1x1x128x128xf32> to vector<128x128xf32>
    %cst_65 = arith.constant dense<0.000000e+00> : vector<128x128xf32>
    %73 = tpu.matmul %70, %72, %cst_65 {dimension_numbers = #tpu.dot_dimension_numbers<[1], [0], [0], [1], [0, 0, 1, 1], [], []>} : vector<128x128xf32>, vector<128x128xf32>, vector<128x128xf32> -> vector<128x128xf32>
    %74 = arith.addf %67, %73 : vector<128x128xf32>
    %75 = vector.extract_strided_slice %68 {offsets = [1, 0, 0], sizes = [8, 16, 128], strides = [1, 1, 1]} : vector<10x16x128xf32> to vector<8x16x128xf32>
    %76 = vector.shape_cast %75 : vector<8x16x128xf32> to vector<128x128xf32>
    %c1_66 = arith.constant 1 : index
    %c1_67 = arith.constant 1 : index
    %c0_68 = arith.constant 0 : index
    %c0_69 = arith.constant 0 : index
    %77 = vector.load %arg5[%c1_66, %c1_67, %c0_68, %c0_69] : memref<3x3x128x128xf32, #tpu.memory_space<vmem>>, vector<1x1x128x128xf32>
    %78 = vector.shape_cast %77 : vector<1x1x128x128xf32> to vector<128x128xf32>
    %cst_70 = arith.constant dense<0.000000e+00> : vector<128x128xf32>
    %79 = tpu.matmul %76, %78, %cst_70 {dimension_numbers = #tpu.dot_dimension_numbers<[1], [0], [0], [1], [0, 0, 1, 1], [], []>} : vector<128x128xf32>, vector<128x128xf32>, vector<128x128xf32> -> vector<128x128xf32>
    %80 = arith.addf %74, %79 : vector<128x128xf32>
    %81 = vector.extract_strided_slice %68 {offsets = [2, 0, 0], sizes = [8, 16, 128], strides = [1, 1, 1]} : vector<10x16x128xf32> to vector<8x16x128xf32>
    %82 = vector.shape_cast %81 : vector<8x16x128xf32> to vector<128x128xf32>
    %c2_71 = arith.constant 2 : index
    %c1_72 = arith.constant 1 : index
    %c0_73 = arith.constant 0 : index
    %c0_74 = arith.constant 0 : index
    %83 = vector.load %arg5[%c2_71, %c1_72, %c0_73, %c0_74] : memref<3x3x128x128xf32, #tpu.memory_space<vmem>>, vector<1x1x128x128xf32>
    %84 = vector.shape_cast %83 : vector<1x1x128x128xf32> to vector<128x128xf32>
    %cst_75 = arith.constant dense<0.000000e+00> : vector<128x128xf32>
    %85 = tpu.matmul %82, %84, %cst_75 {dimension_numbers = #tpu.dot_dimension_numbers<[1], [0], [0], [1], [0, 0, 1, 1], [], []>} : vector<128x128xf32>, vector<128x128xf32>, vector<128x128xf32> -> vector<128x128xf32>
    %86 = arith.addf %80, %85 : vector<128x128xf32>
    %c0_76 = arith.constant 0 : index
    %c2_77 = arith.constant 2 : index
    %c0_78 = arith.constant 0 : index
    %87 = vector.load %arg12[%c0_76, %c2_77, %c0_78] : memref<10x18x128xf32, #tpu.memory_space<vmem>>, vector<10x16x128xf32>
    %88 = vector.extract_strided_slice %87 {offsets = [0, 0, 0], sizes = [8, 16, 128], strides = [1, 1, 1]} : vector<10x16x128xf32> to vector<8x16x128xf32>
    %89 = vector.shape_cast %88 : vector<8x16x128xf32> to vector<128x128xf32>
    %c0_79 = arith.constant 0 : index
    %c2_80 = arith.constant 2 : index
    %c0_81 = arith.constant 0 : index
    %c0_82 = arith.constant 0 : index
    %90 = vector.load %arg5[%c0_79, %c2_80, %c0_81, %c0_82] : memref<3x3x128x128xf32, #tpu.memory_space<vmem>>, vector<1x1x128x128xf32>
    %91 = vector.shape_cast %90 : vector<1x1x128x128xf32> to vector<128x128xf32>
    %cst_83 = arith.constant dense<0.000000e+00> : vector<128x128xf32>
    %92 = tpu.matmul %89, %91, %cst_83 {dimension_numbers = #tpu.dot_dimension_numbers<[1], [0], [0], [1], [0, 0, 1, 1], [], []>} : vector<128x128xf32>, vector<128x128xf32>, vector<128x128xf32> -> vector<128x128xf32>
    %93 = arith.addf %86, %92 : vector<128x128xf32>
    %94 = vector.extract_strided_slice %87 {offsets = [1, 0, 0], sizes = [8, 16, 128], strides = [1, 1, 1]} : vector<10x16x128xf32> to vector<8x16x128xf32>
    %95 = vector.shape_cast %94 : vector<8x16x128xf32> to vector<128x128xf32>
    %c1_84 = arith.constant 1 : index
    %c2_85 = arith.constant 2 : index
    %c0_86 = arith.constant 0 : index
    %c0_87 = arith.constant 0 : index
    %96 = vector.load %arg5[%c1_84, %c2_85, %c0_86, %c0_87] : memref<3x3x128x128xf32, #tpu.memory_space<vmem>>, vector<1x1x128x128xf32>
    %97 = vector.shape_cast %96 : vector<1x1x128x128xf32> to vector<128x128xf32>
    %cst_88 = arith.constant dense<0.000000e+00> : vector<128x128xf32>
    %98 = tpu.matmul %95, %97, %cst_88 {dimension_numbers = #tpu.dot_dimension_numbers<[1], [0], [0], [1], [0, 0, 1, 1], [], []>} : vector<128x128xf32>, vector<128x128xf32>, vector<128x128xf32> -> vector<128x128xf32>
    %99 = arith.addf %93, %98 : vector<128x128xf32>
    %100 = vector.extract_strided_slice %87 {offsets = [2, 0, 0], sizes = [8, 16, 128], strides = [1, 1, 1]} : vector<10x16x128xf32> to vector<8x16x128xf32>
    %101 = vector.shape_cast %100 : vector<8x16x128xf32> to vector<128x128xf32>
    %c2_89 = arith.constant 2 : index
    %c2_90 = arith.constant 2 : index
    %c0_91 = arith.constant 0 : index
    %c0_92 = arith.constant 0 : index
    %102 = vector.load %arg5[%c2_89, %c2_90, %c0_91, %c0_92] : memref<3x3x128x128xf32, #tpu.memory_space<vmem>>, vector<1x1x128x128xf32>
    %103 = vector.shape_cast %102 : vector<1x1x128x128xf32> to vector<128x128xf32>
    %cst_93 = arith.constant dense<0.000000e+00> : vector<128x128xf32>
    %104 = tpu.matmul %101, %103, %cst_93 {dimension_numbers = #tpu.dot_dimension_numbers<[1], [0], [0], [1], [0, 0, 1, 1], [], []>} : vector<128x128xf32>, vector<128x128xf32>, vector<128x128xf32> -> vector<128x128xf32>
    %105 = arith.addf %99, %104 : vector<128x128xf32>
    %c0_94 = arith.constant 0 : index
    %c0_95 = arith.constant 0 : index
    %106 = vector.load %arg6[%c0_94, %c0_95] : memref<1x128xf32, #tpu.memory_space<vmem>>, vector<1x128xf32>
    %107 = vector.broadcast %106 : vector<1x128xf32> to vector<128x128xf32>
    %108 = arith.addf %105, %107 : vector<128x128xf32>
    %109 = vector.shape_cast %108 : vector<128x128xf32> to vector<1x8x16x128xf32>
    %c0_96 = arith.constant 0 : index
    %c0_97 = arith.constant 0 : index
    %c0_98 = arith.constant 0 : index
    %c0_99 = arith.constant 0 : index
    %110 = vector.load %arg9[%c0_96, %c0_97, %c0_98, %c0_99] : memref<1x8x16x128xf32, #tpu.memory_space<vmem>>, vector<1x8x16x128xf32>
    tpu.vector_store %arg9[%c0_96, %c0_97, %c0_98, %c0_99], %109 {strides = array<i32>} : memref<1x8x16x128xf32, #tpu.memory_space<vmem>>, vector<1x8x16x128xf32>,
    %cst_100 = arith.constant dense<0.000000e+00> : vector<128xf32>
    %111 = vector.multi_reduction <add>, %108, %cst_100 [0] : vector<128x128xf32> to vector<128xf32>
    %112 = vector.shape_cast %111 : vector<128xf32> to vector<1x128xf32>
    %113 = vector.shape_cast %112 : vector<1x128xf32> to vector<1x1x1x128xf32>
    %c0_101 = arith.constant 0 : index
    %c0_102 = arith.constant 0 : index
    %c0_103 = arith.constant 0 : index
    %c0_104 = arith.constant 0 : index
    %114 = vector.load %arg10[%c0_101, %c0_102, %c0_103, %c0_104] : memref<1x1x1x128xf32, #tpu.memory_space<vmem>>, vector<1x1x1x128xf32>
    tpu.vector_store %arg10[%c0_101, %c0_102, %c0_103, %c0_104], %113 {strides = array<i32>} : memref<1x1x1x128xf32, #tpu.memory_space<vmem>>, vector<1x1x1x128xf32>,
    %115 = arith.mulf %108, %108 : vector<128x128xf32>
    %cst_105 = arith.constant dense<0.000000e+00> : vector<128xf32>
    %116 = vector.multi_reduction <add>, %115, %cst_105 [0] : vector<128x128xf32> to vector<128xf32>
    %117 = vector.shape_cast %116 : vector<128xf32> to vector<1x128xf32>
    %118 = vector.shape_cast %117 : vector<1x128xf32> to vector<1x1x1x128xf32>
    %c0_106 = arith.constant 0 : index
    %c0_107 = arith.constant 0 : index
    %c0_108 = arith.constant 0 : index
    %c0_109 = arith.constant 0 : index
    %119 = vector.load %arg11[%c0_106, %c0_107, %c0_108, %c0_109] : memref<1x1x1x128xf32, #tpu.memory_space<vmem>>, vector<1x1x1x128xf32>
    tpu.vector_store %arg11[%c0_106, %c0_107, %c0_108, %c0_109], %118 {strides = array<i32>} : memref<1x1x1x128xf32, #tpu.memory_space<vmem>>, vector<1x1x1x128xf32>,
    return
  }
  func.func @transform_0(%arg0: i32, %arg1: i32) -> (i32, i32, i32, i32) {
    %c0_i32 = arith.constant 0 : i32
    %c0_i32_0 = arith.constant 0 : i32
    %c0_i32_1 = arith.constant 0 : i32
    return %arg0, %arg1, %c0_i32, %c0_i32_0 : i32, i32, i32, i32
  }
  func.func @transform_1(%arg0: i32, %arg1: i32) -> (i32, i32, i32, i32) {
    %c8_i32 = arith.constant 8 : i32
    %0 = arith.muli %arg1, %c8_i32 : i32
    %c1_i32 = arith.constant 1 : i32
    %1 = arith.subi %0, %c1_i32 : i32
    %c0_i32 = arith.constant 0 : i32
    %2 = arith.maxsi %1, %c0_i32 : i32
    %c0_i32_0 = arith.constant 0 : i32
    %c0_i32_1 = arith.constant 0 : i32
    %c0_i32_2 = arith.constant 0 : i32
    return %arg0, %2, %c0_i32_0, %c0_i32_1 : i32, i32, i32, i32
  }
  func.func @transform_2(%arg0: i32, %arg1: i32) -> (i32, i32, i32, i32) {
    %c8_i32 = arith.constant 8 : i32
    %0 = arith.muli %arg1, %c8_i32 : i32
    %c8_i32_0 = arith.constant 8 : i32
    %1 = arith.addi %0, %c8_i32_0 : i32
    %c15_i32 = arith.constant 15 : i32
    %2 = arith.minsi %1, %c15_i32 : i32
    %c0_i32 = arith.constant 0 : i32
    %c0_i32_1 = arith.constant 0 : i32
    %c0_i32_2 = arith.constant 0 : i32
    return %arg0, %2, %c0_i32, %c0_i32_1 : i32, i32, i32, i32
  }
  func.func @transform_3(%arg0: i32, %arg1: i32) -> (i32, i32, i32, i32) {
    %c0_i32 = arith.constant 0 : i32
    %c0_i32_0 = arith.constant 0 : i32
    %c0_i32_1 = arith.constant 0 : i32
    %c0_i32_2 = arith.constant 0 : i32
    %c0_i32_3 = arith.constant 0 : i32
    return %c0_i32, %c0_i32_0, %c0_i32_1, %c0_i32_2 : i32, i32, i32, i32
  }
  func.func @transform_4(%arg0: i32, %arg1: i32) -> (i32, i32) {
    %c0_i32 = arith.constant 0 : i32
    %c0_i32_0 = arith.constant 0 : i32
    %c0_i32_1 = arith.constant 0 : i32
    return %c0_i32, %c0_i32_0 : i32, i32
  }
  func.func @transform_5(%arg0: i32, %arg1: i32) -> (i32, i32) {
    %c0_i32 = arith.constant 0 : i32
    %c0_i32_0 = arith.constant 0 : i32
    %c0_i32_1 = arith.constant 0 : i32
    return %c0_i32, %c0_i32_0 : i32, i32
  }
  func.func @transform_6(%arg0: i32, %arg1: i32) -> (i32, i32) {
    %c0_i32 = arith.constant 0 : i32
    %c0_i32_0 = arith.constant 0 : i32
    %c0_i32_1 = arith.constant 0 : i32
    return %c0_i32, %c0_i32_0 : i32, i32
  }
  func.func @transform_7(%arg0: i32, %arg1: i32) -> (i32, i32, i32, i32) {
    %c0_i32 = arith.constant 0 : i32
    %c0_i32_0 = arith.constant 0 : i32
    %c0_i32_1 = arith.constant 0 : i32
    return %arg0, %arg1, %c0_i32, %c0_i32_0 : i32, i32, i32, i32
  }
  func.func @transform_8(%arg0: i32, %arg1: i32) -> (i32, i32, i32, i32) {
    %c0_i32 = arith.constant 0 : i32
    %c0_i32_0 = arith.constant 0 : i32
    %c0_i32_1 = arith.constant 0 : i32
    return %arg0, %arg1, %c0_i32, %c0_i32_0 : i32, i32, i32, i32
  }
  func.func @transform_9(%arg0: i32, %arg1: i32) -> (i32, i32, i32, i32) {
    %c0_i32 = arith.constant 0 : i32
    %c0_i32_0 = arith.constant 0 : i32
    %c0_i32_1 = arith.constant 0 : i32
    return %arg0, %arg1, %c0_i32, %c0_i32_0 : i32, i32, i32, i32
  }
}

</mosaic_0001>

<llo_original>
// kernel: unet_double_conv_block.5
$region0: #{unet_double_conv_block.5}
  #allocation0 [shape = 'u32[]', space=smem, size = 0x4, offset = 0x4, fixed_abs, tag = 'smem constant byte address 0x4 - core index']
  #allocation1 [shape = 'u32[144,128]{1,0:T(1,128)}', space=vmem, size = 0x12000, scoped, tag = 'internal scratch']
  %s0 = inlined_call_operand.vmem [shape: f32[2,16,16,128], index: 0, kind: input, shape index: {}]
  %s1 = inlined_call_operand.vmem [shape: f32[1,128], index: 1, kind: input, shape index: {}]
  %s2 = inlined_call_operand.vmem [shape: f32[1,128], index: 2, kind: input, shape index: {}]
  %s3 = inlined_call_operand.vmem [shape: f32[2,16,16,128], index: 3, kind: output, shape index: {}]
  %s4 = sld [smem:[#allocation0]]
  $region45: #{unet_double_conv_block.5} parent=0
    _
  %s6 = ssub.s32 1, %s4
  %s7 = scalar_select 0, %s6, %s4
  loop: start=0, step=1, limit=6
  $region2: #{unet_double_conv_block.5} parent=0 // loop_pre_header
    _
  $region3: #{unet_double_conv_block.5} parent=0 // loop_header
    %s9 = sphi 0, %s13
    %p10 = scmp.ge.s32.totalorder %s9, 6
    %s16 = sphi 0, %s28
    %s17 = sphi 0, %s24
    %s18 = sphi 0, %s16
    %s19 = sphi 0, %s17
    %s20 = sphi 0, %s18
    %s21 = sphi 0, %s19
    %s33 = sphi 0, %s35
    %s36 = sphi 0, %s33
    %s37 = sphi 0, %s36
    %s53 = sphi 0, %s37
    %s57 = sphi 0, %s57
    %s59 = sphi 0, %s57
    %s60 = sphi 0, %s59
    %s74 = sphi 0, %s60
    %s78 = sphi 0, %s78
    %s80 = sphi 0, %s78
    %s81 = sphi 0, %s80
    %s95 = sphi 0, %s81
    %s103 = sphi 0, %s105
    %s106 = sphi 0, %s103
    %s107 = sphi 0, %s106
    %s123 = sphi 0, %s107
  $region4: #{unet_double_conv_block.5} parent=0 // loop_header_branch
    %12 = sbr.rel (%p10) target = $region8
  $region5: #{unet_double_conv_block.5} parent=0 // loop_body
    %s14 = ssub.s32 %s9, 1
    %s15 = ssub.s32 %s9, 2
    %s22 = sadd.s32 1, %s17
    %p23 = scmp.ge.s32.totalorder %s22, 2
    %s24 = scalar_select %p23, 0, %s22
    %s25 = sadd.s32 1, %s16
    %s26 = scalar_select %p23, %s25, %s16
    %p27 = scmp.ge.s32.totalorder %s26, 2
    %s28 = scalar_select %p27, 0, %s26
    %s29 = ssub.s32 %s16, %s28
    %s30 = ssub.s32 %s17, %s24
    %s31 = sor.u32 %s29, %s30
    %p32 = scmp.eq.s32.totalorder %s31, 0
    %s34 = sadd.s32 %s33, 1
    %s35 = scalar_select %p32, %s33, %s34
    %p38 = pneg %p32
    %p39 = scmp.eq.s32.totalorder %s9, 3
    %p40 = por %p38, %p39
    %p41 = scmp.ne.s32.totalorder %s33, %s36
    %p42 = scmp.eq.s32.totalorder %s9, 0
    %p43 = por %p41, %p42
    %p44 = scmp.ne.s32.totalorder %s33, %s36
    %p45 = scmp.eq.s32.totalorder %s14, 3
    %p46 = por %p44, %p45
    %p47 = scmp.ne.s32.totalorder %s36, %s37
    %p48 = scmp.eq.s32.totalorder %s14, 0
    %p49 = por %p47, %p48
    %p50 = scmp.ne.s32.totalorder %s36, %s37
    %p51 = scmp.eq.s32.totalorder %s15, 3
    %p52 = por %p50, %p51
    %p54 = scmp.ne.s32.totalorder %s37, %s53
    %p55 = scmp.eq.s32.totalorder %s15, 0
    %p56 = por %p54, %p55
    %s58 = sadd.s32 %s57, 1
    %p61 = scmp.eq.s32.totalorder %s9, 3
    %p62 = scmp.ne.s32.totalorder %s57, %s59
    %p63 = scmp.eq.s32.totalorder %s9, 0
    %p64 = por %p62, %p63
    %p65 = scmp.ne.s32.totalorder %s57, %s59
    %p66 = scmp.eq.s32.totalorder %s14, 3
    %p67 = por %p65, %p66
    %p68 = scmp.ne.s32.totalorder %s59, %s60
    %p69 = scmp.eq.s32.totalorder %s14, 0
    %p70 = por %p68, %p69
    %p71 = scmp.ne.s32.totalorder %s59, %s60
    %p72 = scmp.eq.s32.totalorder %s15, 3
    %p73 = por %p71, %p72
    %p75 = scmp.ne.s32.totalorder %s60, %s74
    %p76 = scmp.eq.s32.totalorder %s15, 0
    %p77 = por %p75, %p76
    %s79 = sadd.s32 %s78, 1
    %p82 = scmp.eq.s32.totalorder %s9, 3
    %p83 = scmp.ne.s32.totalorder %s78, %s80
    %p84 = scmp.eq.s32.totalorder %s9, 0
    %p85 = por %p83, %p84
    %p86 = scmp.ne.s32.totalorder %s78, %s80
    %p87 = scmp.eq.s32.totalorder %s14, 3
    %p88 = por %p86, %p87
    %p89 = scmp.ne.s32.totalorder %s80, %s81
    %p90 = scmp.eq.s32.totalorder %s14, 0
    %p91 = por %p89, %p90
    %p92 = scmp.ne.s32.totalorder %s80, %s81
    %p93 = scmp.eq.s32.totalorder %s15, 3
    %p94 = por %p92, %p93
    %p96 = scmp.ne.s32.totalorder %s81, %s95
    %p97 = scmp.eq.s32.totalorder %s15, 0
    %p98 = por %p96, %p97
    %s99 = ssub.s32 %s16, %s28
    %s100 = ssub.s32 %s17, %s24
    %s101 = sor.u32 %s99, %s100
    %p102 = scmp.eq.s32.totalorder %s101, 0
    %s104 = sadd.s32 %s103, 1
    %s105 = scalar_select %p102, %s103, %s104
    %p108 = pneg %p102
    %p109 = scmp.eq.s32.totalorder %s9, 3
    %p110 = por %p108, %p109
    %p111 = scmp.ne.s32.totalorder %s103, %s106
    %p112 = scmp.eq.s32.totalorder %s9, 0
    %p113 = por %p111, %p112
    %p114 = scmp.ne.s32.totalorder %s103, %s106
    %p115 = scmp.eq.s32.totalorder %s14, 3
    %p116 = por %p114, %p115
    %p117 = scmp.ne.s32.totalorder %s106, %s107
    %p118 = scmp.eq.s32.totalorder %s14, 0
    %p119 = por %p117, %p118
    %p120 = scmp.ne.s32.totalorder %s106, %s107
    %p121 = scmp.eq.s32.totalorder %s15, 3
    %p122 = por %p120, %p121
    %p124 = scmp.ne.s32.totalorder %s107, %s123
    %p125 = scmp.eq.s32.totalorder %s15, 0
    %p126 = por %p124, %p125
    %p127 = scmp.le.s32.totalorder 1, %s9
    %p128 = scmp.lt.s32.totalorder %s9, 5
    %p129 = pnand %p127, %p128
    %p130 = pneg %p129
    // Predicated region
    $region9: #{unet_double_conv_block.5} parent=5 // pred_check
      _
    $region10: #{unet_double_conv_block.5} parent=5 // pred_check_branch
      %132 = sbr.rel (%p129) target = $region12
    $region11: #{unet_double_conv_block.5} parent=5 // pred_region
      %s133 = ssub.s32 %s9, 1
      // Predicated region
      $region13: #{unet_double_conv_block.5} parent=11 // pred_check
        %p134 = pneg %p70
      $region14: #{unet_double_conv_block.5} parent=11 // pred_check_branch
        %136 = sbr.rel (%p134) target = $region16
      $region15: #{unet_double_conv_block.5} parent=11 // pred_region
        _
      $region16: #{unet_double_conv_block.5} parent=11 // pred_fallthru
        _
      // Predicated region
      $region17: #{unet_double_conv_block.5} parent=11 // pred_check
        %p137 = pneg %p91
      $region18: #{unet_double_conv_block.5} parent=11 // pred_check_branch
        %139 = sbr.rel (%p137) target = $region20
      $region19: #{unet_double_conv_block.5} parent=11 // pred_region
        _
      $region20: #{unet_double_conv_block.5} parent=11 // pred_fallthru
        _
    $region12: #{unet_double_conv_block.5} parent=5 // pred_fallthru
      _
    %p140 = scmp.lt.s32.totalorder %s9, 4
    // Predicated region
    $region21: #{unet_double_conv_block.5} parent=5 // pred_check
      %p141 = pneg %p140
    $region22: #{unet_double_conv_block.5} parent=5 // pred_check_branch
      %143 = sbr.rel (%p141) target = $region24
    $region23: #{unet_double_conv_block.5} parent=5 // pred_region
      // Predicated region
      $region25: #{unet_double_conv_block.5} parent=23 // pred_check
        %p144 = pneg %p43
      $region26: #{unet_double_conv_block.5} parent=23 // pred_check_branch
        %146 = sbr.rel (%p144) target = $region28
      $region27: #{unet_double_conv_block.5} parent=23 // pred_region
        %s147 = smul.u32 8, %s17
        %p148 = scmp.lt.s32.totalorder %s16, 1
        %s149 = scalar_select %p148, %s16, 1
        %p150 = scmp.lt.s32.totalorder %s147, 15
        %s151 = scalar_select %p150, %s147, 15
        %s152 = smul.addr %s151, 2
        %s153 = smul.addr %s149, 32
        %s154 = sadd.s32 %s152, %s153
        %s155 = smul.addr %s154, 8
        %s156 = scalar_lea.vmem %s0, %s155
        %s157 = smul.u32 8, %s17
      $region28: #{unet_double_conv_block.5} parent=23 // pred_fallthru
        _
    $region24: #{unet_double_conv_block.5} parent=5 // pred_fallthru
      _
    %p158 = scmp.le.s32.totalorder 1, %s9
    %p159 = scmp.lt.s32.totalorder %s9, 5
    %p160 = pnand %p158, %p159
    %p161 = pneg %p160
    // Predicated region
    $region29: #{unet_double_conv_block.5} parent=5 // pred_check
      _
    $region30: #{unet_double_conv_block.5} parent=5 // pred_check_branch
      %163 = sbr.rel (%p160) target = $region32
    $region31: #{unet_double_conv_block.5} parent=5 // pred_region
      %s164 = ssub.s32 %s9, 1
      %s165 = smul.u32 8, %s19
      %p166 = scmp.lt.s32.totalorder %s18, 1
      %s167 = scalar_select %p166, %s18, 1
      %p168 = scmp.lt.s32.totalorder %s165, 15
      %s169 = scalar_select %p168, %s165, 15
      %s170 = smul.addr %s169, 2
      %s171 = smul.addr %s167, 32
      %s172 = sadd.s32 %s170, %s171
      %s173 = smul.addr %s172, 8
      %s174 = scalar_lea.vmem %s0, %s173
      %p175 = pneg %p49
      %p176 = pneg %p46
      %p177 = pneg %p70
      %p178 = pneg %p67
      %p179 = pneg %p91
      %p180 = pneg %p88
      %p181 = pneg %p119
      %p182 = pneg %p116
      %s183 = smul.u32 8, %s19
      %p184 = scmp.lt.s32.totalorder %s18, 1
      %s185 = scalar_select %p184, %s18, 1
      %p186 = scmp.lt.s32.totalorder %s183, 15
      %s187 = scalar_select %p186, %s183, 15
      %s188 = smul.addr %s187, 2
      %s189 = smul.addr %s185, 32
      %s190 = sadd.s32 %s188, %s189
      %s191 = smul.addr %s190, 8
      %s192 = scalar_lea.vmem %s3, %s191
      %s193 = smul.u32 8, %s19
      %p194 = scmp.lt.s32.totalorder %s18, 1
      %s195 = scalar_select %p194, %s18, 1
      %p196 = scmp.lt.s32.totalorder %s193, 15
      %s197 = scalar_select %p196, %s193, 15
      %s198 = smul.addr %s197, 2
      %s199 = smul.addr %s195, 32
      %s200 = sadd.s32 %s198, %s199
      %s201 = smul.addr %s200, 8
      %s202 = scalar_lea.vmem %s0, %s201
      %s203 = smul.u32 8, %s19
      %s204 = smul.u32 8, %s19
      %p205 = scmp.lt.s32.totalorder %s18, 1
      %s206 = scalar_select %p205, %s18, 1
      %p207 = scmp.lt.s32.totalorder %s204, 15
      %s208 = scalar_select %p207, %s204, 15
      %s209 = smul.addr %s208, 2
      %s210 = smul.addr %s206, 32
      %s211 = sadd.s32 %s209, %s210
      %s212 = smul.addr %s211, 8
      %s213 = scalar_lea.vmem %s3, %s212
      %s214 = smul.u32 8, %s19
      %v215 = vld [vmem:[%s202] sm:$0xff]
      %v216 = vld [vmem:[%s202 + $0x8] sm:$0xff]
      %v217 = vld [vmem:[%s202 + $0x10] sm:$0xff]
      %v218 = vld [vmem:[%s202 + $0x18] sm:$0xff]
      %v219 = vld [vmem:[%s202 + $0x20] sm:$0xff]
      %v220 = vld [vmem:[%s202 + $0x28] sm:$0xff]
      %v221 = vld [vmem:[%s202 + $0x30] sm:$0xff]
      %v222 = vld [vmem:[%s202 + $0x38] sm:$0xff]
      %v223 = vld [vmem:[%s202 + $0x40] sm:$0xff]
      %v224 = vld [vmem:[%s202 + $0x48] sm:$0xff]
      %v225 = vld [vmem:[%s202 + $0x50] sm:$0xff]
      %v226 = vld [vmem:[%s202 + $0x58] sm:$0xff]
      %v227 = vld [vmem:[%s202 + $0x60] sm:$0xff]
      %v228 = vld [vmem:[%s202 + $0x68] sm:$0xff]
      %v229 = vld [vmem:[%s202 + $0x70] sm:$0xff]
      %v230 = vld [vmem:[%s202 + $0x78] sm:$0xff]
      %v231 = vld [vmem:[%s1] sm:$0x1]
      %v233 = vlaneseq
      %v234 = vshrl.u32 %v233, 7
      %v235 = vsub.s32 0, %v234
      %v236 = vrot.slane %v231, %v235
      %v238 = vmul.f32 %v215, %v236
      %v239 = vmul.f32 %v216, %v236
      %v240 = vmul.f32 %v217, %v236
      %v241 = vmul.f32 %v218, %v236
      %v242 = vmul.f32 %v219, %v236
      %v243 = vmul.f32 %v220, %v236
      %v244 = vmul.f32 %v221, %v236
      %v245 = vmul.f32 %v222, %v236
      %v246 = vmul.f32 %v223, %v236
      %v247 = vmul.f32 %v224, %v236
      %v248 = vmul.f32 %v225, %v236
      %v249 = vmul.f32 %v226, %v236
      %v250 = vmul.f32 %v227, %v236
      %v251 = vmul.f32 %v228, %v236
      %v252 = vmul.f32 %v229, %v236
      %v253 = vmul.f32 %v230, %v236
      %v254 = vld [vmem:[%s2] sm:$0x1]
      %v256 = vlaneseq
      %v257 = vshrl.u32 %v256, 7
      %v258 = vsub.s32 0, %v257
      %v259 = vrot.slane %v254, %v258
      %v261 = vadd.f32 %v238, %v259
      %v262 = vadd.f32 %v239, %v259
      %v263 = vadd.f32 %v240, %v259
      %v264 = vadd.f32 %v241, %v259
      %v265 = vadd.f32 %v242, %v259
      %v266 = vadd.f32 %v243, %v259
      %v267 = vadd.f32 %v244, %v259
      %v268 = vadd.f32 %v245, %v259
      %v269 = vadd.f32 %v246, %v259
      %v270 = vadd.f32 %v247, %v259
      %v271 = vadd.f32 %v248, %v259
      %v272 = vadd.f32 %v249, %v259
      %v273 = vadd.f32 %v250, %v259
      %v274 = vadd.f32 %v251, %v259
      %v275 = vadd.f32 %v252, %v259
      %v276 = vadd.f32 %v253, %v259
      %v277 = vmax.f32 %v261, 0.0
      %v278 = vmax.f32 %v262, 0.0
      %v279 = vmax.f32 %v263, 0.0
      %v280 = vmax.f32 %v264, 0.0
      %v281 = vmax.f32 %v265, 0.0
      %v282 = vmax.f32 %v266, 0.0
      %v283 = vmax.f32 %v267, 0.0
      %v284 = vmax.f32 %v268, 0.0
      %v285 = vmax.f32 %v269, 0.0
      %v286 = vmax.f32 %v270, 0.0
      %v287 = vmax.f32 %v271, 0.0
      %v288 = vmax.f32 %v272, 0.0
      %v289 = vmax.f32 %v273, 0.0
      %v290 = vmax.f32 %v274, 0.0
      %v291 = vmax.f32 %v275, 0.0
      %v292 = vmax.f32 %v276, 0.0
      %293 = vst [vmem:[%s213] sm:$0xff] %v277
      %294 = vst [vmem:[%s213 + $0x8] sm:$0xff] %v278
      %295 = vst [vmem:[%s213 + $0x10] sm:$0xff] %v279
      %296 = vst [vmem:[%s213 + $0x18] sm:$0xff] %v280
      %297 = vst [vmem:[%s213 + $0x20] sm:$0xff] %v281
      %298 = vst [vmem:[%s213 + $0x28] sm:$0xff] %v282
      %299 = vst [vmem:[%s213 + $0x30] sm:$0xff] %v283
      %300 = vst [vmem:[%s213 + $0x38] sm:$0xff] %v284
      %301 = vst [vmem:[%s213 + $0x40] sm:$0xff] %v285
      %302 = vst [vmem:[%s213 + $0x48] sm:$0xff] %v286
      %303 = vst [vmem:[%s213 + $0x50] sm:$0xff] %v287
      %304 = vst [vmem:[%s213 + $0x58] sm:$0xff] %v288
      %305 = vst [vmem:[%s213 + $0x60] sm:$0xff] %v289
      %306 = vst [vmem:[%s213 + $0x68] sm:$0xff] %v290
      %307 = vst [vmem:[%s213 + $0x70] sm:$0xff] %v291
      %308 = vst [vmem:[%s213 + $0x78] sm:$0xff] %v292
      %s309 = smul.u32 8, %s19
      %p310 = scmp.lt.s32.totalorder %s18, 1
      %s311 = scalar_select %p310, %s18, 1
      %p312 = scmp.lt.s32.totalorder %s309, 15
      %s313 = scalar_select %p312, %s309, 15
      %s314 = smul.addr %s313, 2
      %s315 = smul.addr %s311, 32
      %s316 = sadd.s32 %s314, %s315
      %s317 = smul.addr %s316, 8
      %s318 = scalar_lea.vmem %s3, %s317
      // Predicated region
      $region33: #{unet_double_conv_block.5} parent=31 // pred_check
        %p319 = pneg %p116
      $region34: #{unet_double_conv_block.5} parent=31 // pred_check_branch
        %321 = sbr.rel (%p319) target = $region36
      $region35: #{unet_double_conv_block.5} parent=31 // pred_region
        %s322 = smul.u32 8, %s19
      $region36: #{unet_double_conv_block.5} parent=31 // pred_fallthru
        _
    $region32: #{unet_double_conv_block.5} parent=5 // pred_fallthru
      _
    %p323 = scmp.le.s32.totalorder 2, %s9
    // Predicated region
    $region37: #{unet_double_conv_block.5} parent=5 // pred_check
      %p324 = pneg %p323
    $region38: #{unet_double_conv_block.5} parent=5 // pred_check_branch
      %326 = sbr.rel (%p324) target = $region40
    $region39: #{unet_double_conv_block.5} parent=5 // pred_region
      %s327 = ssub.s32 %s9, 2
      // Predicated region
      $region41: #{unet_double_conv_block.5} parent=39 // pred_check
        %p328 = pneg %p122
      $region42: #{unet_double_conv_block.5} parent=39 // pred_check_branch
        %330 = sbr.rel (%p328) target = $region44
      $region43: #{unet_double_conv_block.5} parent=39 // pred_region
        %s331 = smul.u32 8, %s21
        %p332 = scmp.lt.s32.totalorder %s20, 1
        %s333 = scalar_select %p332, %s20, 1
        %p334 = scmp.lt.s32.totalorder %s331, 15
        %s335 = scalar_select %p334, %s331, 15
        %s336 = smul.addr %s335, 2
        %s337 = smul.addr %s333, 32
        %s338 = sadd.s32 %s336, %s337
        %s339 = smul.addr %s338, 8
        %s340 = scalar_lea.vmem %s3, %s339
      $region44: #{unet_double_conv_block.5} parent=39 // pred_fallthru
        _
    $region40: #{unet_double_conv_block.5} parent=5 // pred_fallthru
      _
  $region6: #{unet_double_conv_block.5} parent=0 // loop_footer
    %s13 = sadd.s32 1, %s9
  $region7: #{unet_double_conv_block.5} parent=0 // loop_footer_branch
    %8 = sbr.rel target = $region3
  $region8: #{unet_double_conv_block.5} parent=0 // loop_exit
    _

// kernel: unet_double_conv_block.3
$region0: #{unet_double_conv_block.3}
  #allocation0 [shape = 'u32[]', space=smem, size = 0x4, offset = 0x4, fixed_abs, tag = 'smem constant byte address 0x4 - core index']
  #allocation1 [shape = 'u32[144,128]{1,0:T(1,128)}', space=vmem, size = 0x12000, scoped, tag = 'internal scratch']
  #allocation2 [shape = 'f32[10,18,128]{2,1,0:T(8,128)}', space=vmem, size = 0x1e000, scoped, tag = 'scratch operand']
  %s0 = inlined_call_operand.vmem [shape: f32[2,16,16,128], index: 0, kind: input, shape index: {}, may-alias: {0,1,2}]
  %s1 = inlined_call_operand.vmem [shape: f32[2,16,16,128], index: 1, kind: input, shape index: {}, may-alias: {0,1,2}]
  %s2 = inlined_call_operand.vmem [shape: f32[2,16,16,128], index: 2, kind: input, shape index: {}, may-alias: {0,1,2}]
  %s3 = inlined_call_operand.vmem [shape: f32[3,3,128,128], index: 3, kind: input, shape index: {}]
  %s4 = inlined_call_operand.vmem [shape: f32[1,128], index: 4, kind: input, shape index: {}]
  %s5 = inlined_call_operand.vmem [shape: f32[1,128], index: 5, kind: input, shape index: {}]
  %s6 = inlined_call_operand.vmem [shape: f32[1,128], index: 6, kind: input, shape index: {}]
  %s7 = inlined_call_operand.vmem [shape: f32[2,16,16,128], index: 7, kind: output, shape index: {0}]
  %s8 = inlined_call_operand.vmem [shape: f32[2,2,1,128], index: 8, kind: output, shape index: {1}]
  %s9 = inlined_call_operand.vmem [shape: f32[2,2,1,128], index: 9, kind: output, shape index: {2}]
  %10 = xla_tuple %s7, %s8, %s9
  %s11 = sld [smem:[#allocation0]]
  $region77: #{unet_double_conv_block.3} parent=0
    _
  %s13 = ssub.s32 1, %s11
  %s14 = scalar_select 0, %s13, %s11
  loop: start=0, step=1, limit=6
  $region2: #{unet_double_conv_block.3} parent=0 // loop_pre_header
    _
  $region3: #{unet_double_conv_block.3} parent=0 // loop_header
    %s16 = sphi 0, %s20
    %p17 = scmp.ge.s32.totalorder %s16, 6
    %s23 = sphi 0, %s35
    %s24 = sphi 0, %s31
    %s25 = sphi 0, %s23
    %s26 = sphi 0, %s24
    %s27 = sphi 0, %s25
    %s28 = sphi 0, %s26
    %s40 = sphi 0, %s42
    %s43 = sphi 0, %s40
    %s44 = sphi 0, %s43
    %s60 = sphi 0, %s44
    %s76 = sphi 0, %s78
    %s79 = sphi 0, %s76
    %s80 = sphi 0, %s79
    %s96 = sphi 0, %s80
    %s112 = sphi 0, %s114
    %s115 = sphi 0, %s112
    %s116 = sphi 0, %s115
    %s132 = sphi 0, %s116
    %s136 = sphi 0, %s136
    %s138 = sphi 0, %s136
    %s139 = sphi 0, %s138
    %s153 = sphi 0, %s139
    %s157 = sphi 0, %s157
    %s159 = sphi 0, %s157
    %s160 = sphi 0, %s159
    %s174 = sphi 0, %s160
    %s178 = sphi 0, %s178
    %s180 = sphi 0, %s178
    %s181 = sphi 0, %s180
    %s195 = sphi 0, %s181
    %s199 = sphi 0, %s199
    %s201 = sphi 0, %s199
    %s202 = sphi 0, %s201
    %s216 = sphi 0, %s202
    %s224 = sphi 0, %s226
    %s227 = sphi 0, %s224
    %s228 = sphi 0, %s227
    %s244 = sphi 0, %s228
    %s252 = sphi 0, %s254
    %s255 = sphi 0, %s252
    %s256 = sphi 0, %s255
    %s272 = sphi 0, %s256
    %s280 = sphi 0, %s282
    %s283 = sphi 0, %s280
    %s284 = sphi 0, %s283
    %s300 = sphi 0, %s284
  $region4: #{unet_double_conv_block.3} parent=0 // loop_header_branch
    %19 = sbr.rel (%p17) target = $region8
  $region5: #{unet_double_conv_block.3} parent=0 // loop_body
    %s21 = ssub.s32 %s16, 1
    %s22 = ssub.s32 %s16, 2
    %s29 = sadd.s32 1, %s24
    %p30 = scmp.ge.s32.totalorder %s29, 2
    %s31 = scalar_select %p30, 0, %s29
    %s32 = sadd.s32 1, %s23
    %s33 = scalar_select %p30, %s32, %s23
    %p34 = scmp.ge.s32.totalorder %s33, 2
    %s35 = scalar_select %p34, 0, %s33
    %s36 = ssub.s32 %s23, %s35
    %s37 = ssub.s32 %s24, %s31
    %s38 = sor.u32 %s36, %s37
    %p39 = scmp.eq.s32.totalorder %s38, 0
    %s41 = sadd.s32 %s40, 1
    %s42 = scalar_select %p39, %s40, %s41
    %p45 = pneg %p39
    %p46 = scmp.eq.s32.totalorder %s16, 3
    %p47 = por %p45, %p46
    %p48 = scmp.ne.s32.totalorder %s40, %s43
    %p49 = scmp.eq.s32.totalorder %s16, 0
    %p50 = por %p48, %p49
    %p51 = scmp.ne.s32.totalorder %s40, %s43
    %p52 = scmp.eq.s32.totalorder %s21, 3
    %p53 = por %p51, %p52
    %p54 = scmp.ne.s32.totalorder %s43, %s44
    %p55 = scmp.eq.s32.totalorder %s21, 0
    %p56 = por %p54, %p55
    %p57 = scmp.ne.s32.totalorder %s43, %s44
    %p58 = scmp.eq.s32.totalorder %s22, 3
    %p59 = por %p57, %p58
    %p61 = scmp.ne.s32.totalorder %s44, %s60
    %p62 = scmp.eq.s32.totalorder %s22, 0
    %p63 = por %p61, %p62
    %s64 = smul.u32 %s24, 8
    %s65 = ssub.s32 %s64, 1
    %p66 = scmp.gt.s32.totalorder %s65, 0
    %s67 = scalar_select %p66, %s65, 0
    %s68 = smul.u32 %s31, 8
    %s69 = ssub.s32 %s68, 1
    %p70 = scmp.gt.s32.totalorder %s69, 0
    %s71 = scalar_select %p70, %s69, 0
    %s72 = ssub.s32 %s23, %s35
    %s73 = ssub.s32 %s67, %s71
    %s74 = sor.u32 %s72, %s73
    %p75 = scmp.eq.s32.totalorder %s74, 0
    %s77 = sadd.s32 %s76, 1
    %s78 = scalar_select %p75, %s76, %s77
    %p81 = pneg %p75
    %p82 = scmp.eq.s32.totalorder %s16, 3
    %p83 = por %p81, %p82
    %p84 = scmp.ne.s32.totalorder %s76, %s79
    %p85 = scmp.eq.s32.totalorder %s16, 0
    %p86 = por %p84, %p85
    %p87 = scmp.ne.s32.totalorder %s76, %s79
    %p88 = scmp.eq.s32.totalorder %s21, 3
    %p89 = por %p87, %p88
    %p90 = scmp.ne.s32.totalorder %s79, %s80
    %p91 = scmp.eq.s32.totalorder %s21, 0
    %p92 = por %p90, %p91
    %p93 = scmp.ne.s32.totalorder %s79, %s80
    %p94 = scmp.eq.s32.totalorder %s22, 3
    %p95 = por %p93, %p94
    %p97 = scmp.ne.s32.totalorder %s80, %s96
    %p98 = scmp.eq.s32.totalorder %s22, 0
    %p99 = por %p97, %p98
    %s100 = smul.u32 %s24, 8
    %s101 = sadd.s32 %s100, 8
    %p102 = scmp.lt.s32.totalorder %s101, 15
    %s103 = scalar_select %p102, %s101, 15
    %s104 = smul.u32 %s31, 8
    %s105 = sadd.s32 %s104, 8
    %p106 = scmp.lt.s32.totalorder %s105, 15
    %s107 = scalar_select %p106, %s105, 15
    %s108 = ssub.s32 %s23, %s35
    %s109 = ssub.s32 %s103, %s107
    %s110 = sor.u32 %s108, %s109
    %p111 = scmp.eq.s32.totalorder %s110, 0
    %s113 = sadd.s32 %s112, 1
    %s114 = scalar_select %p111, %s112, %s113
    %p117 = pneg %p111
    %p118 = scmp.eq.s32.totalorder %s16, 3
    %p119 = por %p117, %p118
    %p120 = scmp.ne.s32.totalorder %s112, %s115
    %p121 = scmp.eq.s32.totalorder %s16, 0
    %p122 = por %p120, %p121
    %p123 = scmp.ne.s32.totalorder %s112, %s115
    %p124 = scmp.eq.s32.totalorder %s21, 3
    %p125 = por %p123, %p124
    %p126 = scmp.ne.s32.totalorder %s115, %s116
    %p127 = scmp.eq.s32.totalorder %s21, 0
    %p128 = por %p126, %p127
    %p129 = scmp.ne.s32.totalorder %s115, %s116
    %p130 = scmp.eq.s32.totalorder %s22, 3
    %p131 = por %p129, %p130
    %p133 = scmp.ne.s32.totalorder %s116, %s132
    %p134 = scmp.eq.s32.totalorder %s22, 0
    %p135 = por %p133, %p134
    %s137 = sadd.s32 %s136, 1
    %p140 = scmp.eq.s32.totalorder %s16, 3
    %p141 = scmp.ne.s32.totalorder %s136, %s138
    %p142 = scmp.eq.s32.totalorder %s16, 0
    %p143 = por %p141, %p142
    %p144 = scmp.ne.s32.totalorder %s136, %s138
    %p145 = scmp.eq.s32.totalorder %s21, 3
    %p146 = por %p144, %p145
    %p147 = scmp.ne.s32.totalorder %s138, %s139
    %p148 = scmp.eq.s32.totalorder %s21, 0
    %p149 = por %p147, %p148
    %p150 = scmp.ne.s32.totalorder %s138, %s139
    %p151 = scmp.eq.s32.totalorder %s22, 3
    %p152 = por %p150, %p151
    %p154 = scmp.ne.s32.totalorder %s139, %s153
    %p155 = scmp.eq.s32.totalorder %s22, 0
    %p156 = por %p154, %p155
    %s158 = sadd.s32 %s157, 1
    %p161 = scmp.eq.s32.totalorder %s16, 3
    %p162 = scmp.ne.s32.totalorder %s157, %s159
    %p163 = scmp.eq.s32.totalorder %s16, 0
    %p164 = por %p162, %p163
    %p165 = scmp.ne.s32.totalorder %s157, %s159
    %p166 = scmp.eq.s32.totalorder %s21, 3
    %p167 = por %p165, %p166
    %p168 = scmp.ne.s32.totalorder %s159, %s160
    %p169 = scmp.eq.s32.totalorder %s21, 0
    %p170 = por %p168, %p169
    %p171 = scmp.ne.s32.totalorder %s159, %s160
    %p172 = scmp.eq.s32.totalorder %s22, 3
    %p173 = por %p171, %p172
    %p175 = scmp.ne.s32.totalorder %s160, %s174
    %p176 = scmp.eq.s32.totalorder %s22, 0
    %p177 = por %p175, %p176
    %s179 = sadd.s32 %s178, 1
    %p182 = scmp.eq.s32.totalorder %s16, 3
    %p183 = scmp.ne.s32.totalorder %s178, %s180
    %p184 = scmp.eq.s32.totalorder %s16, 0
    %p185 = por %p183, %p184
    %p186 = scmp.ne.s32.totalorder %s178, %s180
    %p187 = scmp.eq.s32.totalorder %s21, 3
    %p188 = por %p186, %p187
    %p189 = scmp.ne.s32.totalorder %s180, %s181
    %p190 = scmp.eq.s32.totalorder %s21, 0
    %p191 = por %p189, %p190
    %p192 = scmp.ne.s32.totalorder %s180, %s181
    %p193 = scmp.eq.s32.totalorder %s22, 3
    %p194 = por %p192, %p193
    %p196 = scmp.ne.s32.totalorder %s181, %s195
    %p197 = scmp.eq.s32.totalorder %s22, 0
    %p198 = por %p196, %p197
    %s200 = sadd.s32 %s199, 1
    %p203 = scmp.eq.s32.totalorder %s16, 3
    %p204 = scmp.ne.s32.totalorder %s199, %s201
    %p205 = scmp.eq.s32.totalorder %s16, 0
    %p206 = por %p204, %p205
    %p207 = scmp.ne.s32.totalorder %s199, %s201
    %p208 = scmp.eq.s32.totalorder %s21, 3
    %p209 = por %p207, %p208
    %p210 = scmp.ne.s32.totalorder %s201, %s202
    %p211 = scmp.eq.s32.totalorder %s21, 0
    %p212 = por %p210, %p211
    %p213 = scmp.ne.s32.totalorder %s201, %s202
    %p214 = scmp.eq.s32.totalorder %s22, 3
    %p215 = por %p213, %p214
    %p217 = scmp.ne.s32.totalorder %s202, %s216
    %p218 = scmp.eq.s32.totalorder %s22, 0
    %p219 = por %p217, %p218
    %s220 = ssub.s32 %s23, %s35
    %s221 = ssub.s32 %s24, %s31
    %s222 = sor.u32 %s220, %s221
    %p223 = scmp.eq.s32.totalorder %s222, 0
    %s225 = sadd.s32 %s224, 1
    %s226 = scalar_select %p223, %s224, %s225
    %p229 = pneg %p223
    %p230 = scmp.eq.s32.totalorder %s16, 3
    %p231 = por %p229, %p230
    %p232 = scmp.ne.s32.totalorder %s224, %s227
    %p233 = scmp.eq.s32.totalorder %s16, 0
    %p234 = por %p232, %p233
    %p235 = scmp.ne.s32.totalorder %s224, %s227
    %p236 = scmp.eq.s32.totalorder %s21, 3
    %p237 = por %p235, %p236
    %p238 = scmp.ne.s32.totalorder %s227, %s228
    %p239 = scmp.eq.s32.totalorder %s21, 0
    %p240 = por %p238, %p239
    %p241 = scmp.ne.s32.totalorder %s227, %s228
    %p242 = scmp.eq.s32.totalorder %s22, 3
    %p243 = por %p241, %p242
    %p245 = scmp.ne.s32.totalorder %s228, %s244
    %p246 = scmp.eq.s32.totalorder %s22, 0
    %p247 = por %p245, %p246
    %s248 = ssub.s32 %s23, %s35
    %s249 = ssub.s32 %s24, %s31
    %s250 = sor.u32 %s248, %s249
    %p251 = scmp.eq.s32.totalorder %s250, 0
    %s253 = sadd.s32 %s252, 1
    %s254 = scalar_select %p251, %s252, %s253
    %p257 = pneg %p251
    %p258 = scmp.eq.s32.totalorder %s16, 3
    %p259 = por %p257, %p258
    %p260 = scmp.ne.s32.totalorder %s252, %s255
    %p261 = scmp.eq.s32.totalorder %s16, 0
    %p262 = por %p260, %p261
    %p263 = scmp.ne.s32.totalorder %s252, %s255
    %p264 = scmp.eq.s32.totalorder %s21, 3
    %p265 = por %p263, %p264
    %p266 = scmp.ne.s32.totalorder %s255, %s256
    %p267 = scmp.eq.s32.totalorder %s21, 0
    %p268 = por %p266, %p267
    %p269 = scmp.ne.s32.totalorder %s255, %s256
    %p270 = scmp.eq.s32.totalorder %s22, 3
    %p271 = por %p269, %p270
    %p273 = scmp.ne.s32.totalorder %s256, %s272
    %p274 = scmp.eq.s32.totalorder %s22, 0
    %p275 = por %p273, %p274
    %s276 = ssub.s32 %s23, %s35
    %s277 = ssub.s32 %s24, %s31
    %s278 = sor.u32 %s276, %s277
    %p279 = scmp.eq.s32.totalorder %s278, 0
    %s281 = sadd.s32 %s280, 1
    %s282 = scalar_select %p279, %s280, %s281
    %p285 = pneg %p279
    %p286 = scmp.eq.s32.totalorder %s16, 3
    %p287 = por %p285, %p286
    %p288 = scmp.ne.s32.totalorder %s280, %s283
    %p289 = scmp.eq.s32.totalorder %s16, 0
    %p290 = por %p288, %p289
    %p291 = scmp.ne.s32.totalorder %s280, %s283
    %p292 = scmp.eq.s32.totalorder %s21, 3
    %p293 = por %p291, %p292
    %p294 = scmp.ne.s32.totalorder %s283, %s284
    %p295 = scmp.eq.s32.totalorder %s21, 0
    %p296 = por %p294, %p295
    %p297 = scmp.ne.s32.totalorder %s283, %s284
    %p298 = scmp.eq.s32.totalorder %s22, 3
    %p299 = por %p297, %p298
    %p301 = scmp.ne.s32.totalorder %s284, %s300
    %p302 = scmp.eq.s32.totalorder %s22, 0
    %p303 = por %p301, %p302
    %p304 = scmp.le.s32.totalorder 1, %s16
    %p305 = scmp.lt.s32.totalorder %s16, 5
    %p306 = pnand %p304, %p305
    %p307 = pneg %p306
    // Predicated region
    $region9: #{unet_double_conv_block.3} parent=5 // pred_check
      _
    $region10: #{unet_double_conv_block.3} parent=5 // pred_check_branch
      %309 = sbr.rel (%p306) target = $region12
    $region11: #{unet_double_conv_block.3} parent=5 // pred_region
      %s310 = ssub.s32 %s16, 1
      // Predicated region
      $region13: #{unet_double_conv_block.3} parent=11 // pred_check
        %p311 = pneg %p149
      $region14: #{unet_double_conv_block.3} parent=11 // pred_check_branch
        %313 = sbr.rel (%p311) target = $region16
      $region15: #{unet_double_conv_block.3} parent=11 // pred_region
        _
      $region16: #{unet_double_conv_block.3} parent=11 // pred_fallthru
        _
      // Predicated region
      $region17: #{unet_double_conv_block.3} parent=11 // pred_check
        %p314 = pneg %p170
      $region18: #{unet_double_conv_block.3} parent=11 // pred_check_branch
        %316 = sbr.rel (%p314) target = $region20
      $region19: #{unet_double_conv_block.3} parent=11 // pred_region
        _
      $region20: #{unet_double_conv_block.3} parent=11 // pred_fallthru
        _
      // Predicated region
      $region21: #{unet_double_conv_block.3} parent=11 // pred_check
        %p317 = pneg %p191
      $region22: #{unet_double_conv_block.3} parent=11 // pred_check_branch
        %319 = sbr.rel (%p317) target = $region24
      $region23: #{unet_double_conv_block.3} parent=11 // pred_region
        _
      $region24: #{unet_double_conv_block.3} parent=11 // pred_fallthru
        _
      // Predicated region
      $region25: #{unet_double_conv_block.3} parent=11 // pred_check
        %p320 = pneg %p212
      $region26: #{unet_double_conv_block.3} parent=11 // pred_check_branch
        %322 = sbr.rel (%p320) target = $region28
      $region27: #{unet_double_conv_block.3} parent=11 // pred_region
        _
      $region28: #{unet_double_conv_block.3} parent=11 // pred_fallthru
        _
    $region12: #{unet_double_conv_block.3} parent=5 // pred_fallthru
      _
    %p323 = scmp.lt.s32.totalorder %s16, 4
    // Predicated region
    $region29: #{unet_double_conv_block.3} parent=5 // pred_check
      %p324 = pneg %p323
    $region30: #{unet_double_conv_block.3} parent=5 // pred_check_branch
      %326 = sbr.rel (%p324) target = $region32
    $region31: #{unet_double_conv_block.3} parent=5 // pred_region
      // Predicated region
      $region33: #{unet_double_conv_block.3} parent=31 // pred_check
        %p327 = pneg %p50
      $region34: #{unet_double_conv_block.3} parent=31 // pred_check_branch
        %329 = sbr.rel (%p327) target = $region36
      $region35: #{unet_double_conv_block.3} parent=31 // pred_region
        %s330 = smul.u32 8, %s24
        %p331 = scmp.lt.s32.totalorder %s23, 1
        %s332 = scalar_select %p331, %s23, 1
        %p333 = scmp.lt.s32.totalorder %s330, 15
        %s334 = scalar_select %p333, %s330, 15
        %s335 = smul.addr %s334, 2
        %s336 = smul.addr %s332, 32
        %s337 = sadd.s32 %s335, %s336
        %s338 = smul.addr %s337, 8
        %s339 = scalar_lea.vmem %s0, %s338
        %s340 = smul.u32 8, %s24
      $region36: #{unet_double_conv_block.3} parent=31 // pred_fallthru
        _
      // Predicated region
      $region37: #{unet_double_conv_block.3} parent=31 // pred_check
        %p341 = pneg %p86
      $region38: #{unet_double_conv_block.3} parent=31 // pred_check_branch
        %343 = sbr.rel (%p341) target = $region40
      $region39: #{unet_double_conv_block.3} parent=31 // pred_region
        %s344 = smul.u32 %s24, 8
        %s345 = ssub.s32 %s344, 1
        %p346 = scmp.gt.s32.totalorder %s345, 0
        %s347 = scalar_select %p346, %s345, 0
        %p348 = scmp.lt.s32.totalorder %s23, 1
        %s349 = scalar_select %p348, %s23, 1
        %p350 = scmp.lt.s32.totalorder %s347, 15
        %s351 = scalar_select %p350, %s347, 15
        %s352 = smul.addr %s351, 2
        %s353 = smul.addr %s349, 32
        %s354 = sadd.s32 %s352, %s353
        %s355 = smul.addr %s354, 8
        %s356 = scalar_lea.vmem %s1, %s355
        %s357 = smul.u32 %s24, 8
        %s358 = ssub.s32 %s357, 1
        %p359 = scmp.gt.s32.totalorder %s358, 0
        %s360 = scalar_select %p359, %s358, 0
      $region40: #{unet_double_conv_block.3} parent=31 // pred_fallthru
        _
      // Predicated region
      $region41: #{unet_double_conv_block.3} parent=31 // pred_check
        %p361 = pneg %p122
      $region42: #{unet_double_conv_block.3} parent=31 // pred_check_branch
        %363 = sbr.rel (%p361) target = $region44
      $region43: #{unet_double_conv_block.3} parent=31 // pred_region
        %s364 = smul.u32 %s24, 8
        %s365 = sadd.s32 %s364, 8
        %p366 = scmp.lt.s32.totalorder %s365, 15
        %s367 = scalar_select %p366, %s365, 15
        %p368 = scmp.lt.s32.totalorder %s23, 1
        %s369 = scalar_select %p368, %s23, 1
        %p370 = scmp.lt.s32.totalorder %s367, 15
        %s371 = scalar_select %p370, %s367, 15
        %s372 = smul.addr %s371, 2
        %s373 = smul.addr %s369, 32
        %s374 = sadd.s32 %s372, %s373
        %s375 = smul.addr %s374, 8
        %s376 = scalar_lea.vmem %s2, %s375
        %s377 = smul.u32 %s24, 8
        %s378 = sadd.s32 %s377, 8
        %p379 = scmp.lt.s32.totalorder %s378, 15
        %s380 = scalar_select %p379, %s378, 15
      $region44: #{unet_double_conv_block.3} parent=31 // pred_fallthru
        _
    $region32: #{unet_double_conv_block.3} parent=5 // pred_fallthru
      _
    %p381 = scmp.le.s32.totalorder 1, %s16
    %p382 = scmp.lt.s32.totalorder %s16, 5
    %p383 = pnand %p381, %p382
    %p384 = pneg %p383
    // Predicated region
    $region45: #{unet_double_conv_block.3} parent=5 // pred_check
      _
    $region46: #{unet_double_conv_block.3} parent=5 // pred_check_branch
      %386 = sbr.rel (%p383) target = $region48
    $region47: #{unet_double_conv_block.3} parent=5 // pred_region
      %s387 = ssub.s32 %s16, 1
      %s388 = smul.u32 8, %s26
      %p389 = scmp.lt.s32.totalorder %s25, 1
      %s390 = scalar_select %p389, %s25, 1
      %p391 = scmp.lt.s32.totalorder %s388, 15
      %s392 = scalar_select %p391, %s388, 15
      %s393 = smul.addr %s392, 2
      %s394 = smul.addr %s390, 32
      %s395 = sadd.s32 %s393, %s394
      %s396 = smul.addr %s395, 8
      %s397 = scalar_lea.vmem %s0, %s396
      %p398 = pneg %p56
      %p399 = pneg %p53
      %s400 = smul.u32 %s26, 8
      %s401 = ssub.s32 %s400, 1
      %p402 = scmp.gt.s32.totalorder %s401, 0
      %s403 = scalar_select %p402, %s401, 0
      %p404 = scmp.lt.s32.totalorder %s25, 1
      %s405 = scalar_select %p404, %s25, 1
      %p406 = scmp.lt.s32.totalorder %s403, 15
      %s407 = scalar_select %p406, %s403, 15
      %s408 = smul.addr %s407, 2
      %s409 = smul.addr %s405, 32
      %s410 = sadd.s32 %s408, %s409
      %s411 = smul.addr %s410, 8
      %s412 = scalar_lea.vmem %s1, %s411
      %p413 = pneg %p92
      %p414 = pneg %p89
      %s415 = smul.u32 %s26, 8
      %s416 = sadd.s32 %s415, 8
      %p417 = scmp.lt.s32.totalorder %s416, 15
      %s418 = scalar_select %p417, %s416, 15
      %p419 = scmp.lt.s32.totalorder %s25, 1
      %s420 = scalar_select %p419, %s25, 1
      %p421 = scmp.lt.s32.totalorder %s418, 15
      %s422 = scalar_select %p421, %s418, 15
      %s423 = smul.addr %s422, 2
      %s424 = smul.addr %s420, 32
      %s425 = sadd.s32 %s423, %s424
      %s426 = smul.addr %s425, 8
      %s427 = scalar_lea.vmem %s2, %s426
      %p428 = pneg %p128
      %p429 = pneg %p125
      %p430 = pneg %p149
      %p431 = pneg %p146
      %p432 = pneg %p170
      %p433 = pneg %p167
      %p434 = pneg %p191
      %p435 = pneg %p188
      %p436 = pneg %p212
      %p437 = pneg %p209
      %p438 = pneg %p240
      %p439 = pneg %p237
      %s440 = smul.u32 8, %s26
      %p441 = scmp.lt.s32.totalorder %s25, 1
      %s442 = scalar_select %p441, %s25, 1
      %p443 = scmp.lt.s32.totalorder %s440, 15
      %s444 = scalar_select %p443, %s440, 15
      %s445 = smul.addr %s444, 2
      %s446 = smul.addr %s442, 32
      %s447 = sadd.s32 %s445, %s446
      %s448 = smul.addr %s447, 8
      %s449 = scalar_lea.vmem %s7, %s448
      %p450 = pneg %p268
      %p451 = pneg %p265
      %p452 = scmp.lt.s32.totalorder %s25, 1
      %s453 = scalar_select %p452, %s25, 1
      %p454 = scmp.lt.s32.totalorder %s26, 1
      %s455 = scalar_select %p454, %s26, 1
      %s456 = smul.addr %s453, 2
      %s457 = sadd.s32 %s455, %s456
      %s458 = scalar_lea.vmem %s8, %s457
      %p459 = pneg %p296
      %p460 = pneg %p293
      %p461 = scmp.lt.s32.totalorder %s25, 1
      %s462 = scalar_select %p461, %s25, 1
      %p463 = scmp.lt.s32.totalorder %s26, 1
      %s464 = scalar_select %p463, %s26, 1
      %s465 = smul.addr %s462, 2
      %s466 = sadd.s32 %s464, %s465
      %s467 = scalar_lea.vmem %s9, %s466
      %s468 = smul.u32 8, %s26
      %p469 = scmp.lt.s32.totalorder %s25, 1
      %s470 = scalar_select %p469, %s25, 1
      %p471 = scmp.lt.s32.totalorder %s468, 15
      %s472 = scalar_select %p471, %s468, 15
      %s473 = smul.addr %s472, 2
      %s474 = smul.addr %s470, 32
      %s475 = sadd.s32 %s473, %s474
      %s476 = smul.addr %s475, 8
      %s477 = scalar_lea.vmem %s0, %s476
      %s478 = smul.u32 8, %s26
      %s479 = smul.u32 %s26, 8
      %s480 = ssub.s32 %s479, 1
      %p481 = scmp.gt.s32.totalorder %s480, 0
      %s482 = scalar_select %p481, %s480, 0
      %p483 = scmp.lt.s32.totalorder %s25, 1
      %s484 = scalar_select %p483, %s25, 1
      %p485 = scmp.lt.s32.totalorder %s482, 15
      %s486 = scalar_select %p485, %s482, 15
      %s487 = smul.addr %s486, 2
      %s488 = smul.addr %s484, 32
      %s489 = sadd.s32 %s487, %s488
      %s490 = smul.addr %s489, 8
      %s491 = scalar_lea.vmem %s1, %s490
      %s492 = smul.u32 %s26, 8
      %s493 = ssub.s32 %s492, 1
      %p494 = scmp.gt.s32.totalorder %s493, 0
      %s495 = scalar_select %p494, %s493, 0
      %s496 = smul.u32 %s26, 8
      %s497 = sadd.s32 %s496, 8
      %p498 = scmp.lt.s32.totalorder %s497, 15
      %s499 = scalar_select %p498, %s497, 15
      %p500 = scmp.lt.s32.totalorder %s25, 1
      %s501 = scalar_select %p500, %s25, 1
      %p502 = scmp.lt.s32.totalorder %s499, 15
      %s503 = scalar_select %p502, %s499, 15
      %s504 = smul.addr %s503, 2
      %s505 = smul.addr %s501, 32
      %s506 = sadd.s32 %s504, %s505
      %s507 = smul.addr %s506, 8
      %s508 = scalar_lea.vmem %s2, %s507
      %s509 = smul.u32 %s26, 8
      %s510 = sadd.s32 %s509, 8
      %p511 = scmp.lt.s32.totalorder %s510, 15
      %s512 = scalar_select %p511, %s510, 15
      %s513 = smul.u32 8, %s26
      %p514 = scmp.lt.s32.totalorder %s25, 1
      %s515 = scalar_select %p514, %s25, 1
      %p516 = scmp.lt.s32.totalorder %s513, 15
      %s517 = scalar_select %p516, %s513, 15
      %s518 = smul.addr %s517, 2
      %s519 = smul.addr %s515, 32
      %s520 = sadd.s32 %s518, %s519
      %s521 = smul.addr %s520, 8
      %s522 = scalar_lea.vmem %s7, %s521
      %s523 = smul.u32 8, %s26
      %p524 = scmp.lt.s32.totalorder %s25, 1
      %s525 = scalar_select %p524, %s25, 1
      %p526 = scmp.lt.s32.totalorder %s26, 1
      %s527 = scalar_select %p526, %s26, 1
      %s528 = smul.addr %s525, 2
      %s529 = sadd.s32 %s527, %s528
      %s530 = scalar_lea.vmem %s8, %s529
      %p531 = scmp.lt.s32.totalorder %s25, 1
      %s532 = scalar_select %p531, %s25, 1
      %p533 = scmp.lt.s32.totalorder %s26, 1
      %s534 = scalar_select %p533, %s26, 1
      %s535 = smul.addr %s532, 2
      %s536 = sadd.s32 %s534, %s535
      %s537 = scalar_lea.vmem %s9, %s536
      %v538 = vld [vmem:[%s477] sm:$0xff]
      %v539 = vld [vmem:[%s477 + $0x8] sm:$0xff]
      %v540 = vld [vmem:[%s477 + $0x10] sm:$0xff]
      %v541 = vld [vmem:[%s477 + $0x18] sm:$0xff]
      %v542 = vld [vmem:[%s477 + $0x20] sm:$0xff]
      %v543 = vld [vmem:[%s477 + $0x28] sm:$0xff]
      %v544 = vld [vmem:[%s477 + $0x30] sm:$0xff]
      %v545 = vld [vmem:[%s477 + $0x38] sm:$0xff]
      %v546 = vld [vmem:[%s477 + $0x40] sm:$0xff]
      %v547 = vld [vmem:[%s477 + $0x48] sm:$0xff]
      %v548 = vld [vmem:[%s477 + $0x50] sm:$0xff]
      %v549 = vld [vmem:[%s477 + $0x58] sm:$0xff]
      %v550 = vld [vmem:[%s477 + $0x60] sm:$0xff]
      %v551 = vld [vmem:[%s477 + $0x68] sm:$0xff]
      %v552 = vld [vmem:[%s477 + $0x70] sm:$0xff]
      %v553 = vld [vmem:[%s477 + $0x78] sm:$0xff]
      %v554 = vld [vmem:[%s491] sm:$0xff]
      %v555 = vld [vmem:[%s491 + $0x8] sm:$0xff]
      %v556 = vld [vmem:[%s508] sm:$0xff]
      %v557 = vld [vmem:[%s508 + $0x8] sm:$0xff]
      %p558 = scmp.gt.s32.totalorder %s26, 0
      %s559 = scalar_select %p558, 1, 0
      %v560 = vstv %s559
      %vm561 = vcmp.eq.s32.totalorder %v560, 1
      %v562 = vsel %vm561, %v554, 0.0
      %v563 = vsel %vm561, %v555, 0.0
      %p564 = scmp.lt.s32.totalorder %s26, 1
      %s565 = scalar_select %p564, 1, 0
      %v566 = vstv %s565
      %vm567 = vcmp.eq.s32.totalorder %v566, 1
      %v568 = vsel %vm567, %v556, 0.0
      %v569 = vsel %vm567, %v557, 0.0
      %570 = vst [vmem:[#allocation2] sm:$0x1] 0.0
      %571 = vst [vmem:[#allocation2 + $0x18] sm:$0x1] 0.0
      %572 = vst [vmem:[#allocation2 + $0x30] sm:$0x1] 0.0
      %573 = vst [vmem:[#allocation2 + $0x48] sm:$0x1] 0.0
      %574 = vst [vmem:[#allocation2 + $0x60] sm:$0x1] 0.0
      %575 = vst [vmem:[#allocation2 + $0x78] sm:$0x1] 0.0
      %576 = vst [vmem:[#allocation2 + $0x90] sm:$0x1] 0.0
      %577 = vst [vmem:[#allocation2 + $0xa8] sm:$0x1] 0.0
      %578 = vst [vmem:[#allocation2 + $0xc0] sm:$0x1] 0.0
      %579 = vst [vmem:[#allocation2 + $0xd8] sm:$0x1] 0.0
      %580 = vst [vmem:[#allocation2 + $0x11] sm:$0x1] 0.0
      %581 = vst [vmem:[#allocation2 + $0x29] sm:$0x1] 0.0
      %582 = vst [vmem:[#allocation2 + $0x41] sm:$0x1] 0.0
      %583 = vst [vmem:[#allocation2 + $0x59] sm:$0x1] 0.0
      %584 = vst [vmem:[#allocation2 + $0x71] sm:$0x1] 0.0
      %585 = vst [vmem:[#allocation2 + $0x89] sm:$0x1] 0.0
      %586 = vst [vmem:[#allocation2 + $0xa1] sm:$0x1] 0.0
      %587 = vst [vmem:[#allocation2 + $0xb9] sm:$0x1] 0.0
      %588 = vst [vmem:[#allocation2 + $0xd1] sm:$0x1] 0.0
      %589 = vst [vmem:[#allocation2 + $0xe9] sm:$0x1] 0.0
      %590 = vst [vmem:[#allocation2 + $0x1] sm:$0xff] %v562
      %591 = vst [vmem:[#allocation2 + $0x9] sm:$0xff] %v563
      %s592 = scalar_lea.vmem [#allocation2], 216
      %593 = vst [vmem:[%s592 + $0x1] sm:$0xff] %v568
      %594 = vst [vmem:[%s592 + $0x9] sm:$0xff] %v569
      %s595 = scalar_lea.vmem [#allocation2], 24
      %596 = vst [vmem:[%s595 + $0x1] sm:$0xff] %v538
      %597 = vst [vmem:[%s595 + $0x9] sm:$0xff] %v539
      %598 = vst [vmem:[%s595 + $0x19] sm:$0xff] %v540
      %599 = vst [vmem:[%s595 + $0x21] sm:$0xff] %v541
      %600 = vst [vmem:[%s595 + $0x31] sm:$0xff] %v542
      %601 = vst [vmem:[%s595 + $0x39] sm:$0xff] %v543
      %602 = vst [vmem:[%s595 + $0x49] sm:$0xff] %v544
      %603 = vst [vmem:[%s595 + $0x51] sm:$0xff] %v545
      %604 = vst [vmem:[%s595 + $0x61] sm:$0xff] %v546
      %605 = vst [vmem:[%s595 + $0x69] sm:$0xff] %v547
      %606 = vst [vmem:[%s595 + $0x79] sm:$0xff] %v548
      %607 = vst [vmem:[%s595 + $0x81] sm:$0xff] %v549
      %608 = vst [vmem:[%s595 + $0x91] sm:$0xff] %v550
      %609 = vst [vmem:[%s595 + $0x99] sm:$0xff] %v551
      %610 = vst [vmem:[%s595 + $0xa9] sm:$0xff] %v552
      %611 = vst [vmem:[%s595 + $0xb1] sm:$0xff] %v553
      %v612 = vld [vmem:[#allocation2] sm:$0xff]
      %v613 = vld [vmem:[#allocation2 + $0x8] sm:$0xff]
      %v614 = vld [vmem:[#allocation2 + $0x18] sm:$0xff]
      %v615 = vld [vmem:[#allocation2 + $0x20] sm:$0xff]
      %v616 = vld [vmem:[#allocation2 + $0x30] sm:$0xff]
      %v617 = vld [vmem:[#allocation2 + $0x38] sm:$0xff]
      %v618 = vld [vmem:[#allocation2 + $0x48] sm:$0xff]
      %v619 = vld [vmem:[#allocation2 + $0x50] sm:$0xff]
      %v620 = vld [vmem:[#allocation2 + $0x60] sm:$0xff]
      %v621 = vld [vmem:[#allocation2 + $0x68] sm:$0xff]
      %v622 = vld [vmem:[#allocation2 + $0x78] sm:$0xff]
      %v623 = vld [vmem:[#allocation2 + $0x80] sm:$0xff]
      %v624 = vld [vmem:[#allocation2 + $0x90] sm:$0xff]
      %v625 = vld [vmem:[#allocation2 + $0x98] sm:$0xff]
      %v626 = vld [vmem:[#allocation2 + $0xa8] sm:$0xff]
      %v627 = vld [vmem:[#allocation2 + $0xb0] sm:$0xff]
      %v628 = vld [vmem:[#allocation2 + $0xc0] sm:$0xff]
      %v629 = vld [vmem:[#allocation2 + $0xc8] sm:$0xff]
      %v630 = vld [vmem:[#allocation2 + $0xd8] sm:$0xff]
      %v631 = vld [vmem:[#allocation2 + $0xe0] sm:$0xff]
      %v632 = vld [vmem:[%s3] sm:$0xff]
      %v633 = vld [vmem:[%s3 + $0x8] sm:$0xff]
      %v634 = vld [vmem:[%s3 + $0x10] sm:$0xff]
      %v635 = vld [vmem:[%s3 + $0x18] sm:$0xff]
      %v636 = vld [vmem:[%s3 + $0x20] sm:$0xff]
      %v637 = vld [vmem:[%s3 + $0x28] sm:$0xff]
      %v638 = vld [vmem:[%s3 + $0x30] sm:$0xff]
      %v639 = vld [vmem:[%s3 + $0x38] sm:$0xff]
      %v640 = vld [vmem:[%s3 + $0x40] sm:$0xff]
      %v641 = vld [vmem:[%s3 + $0x48] sm:$0xff]
      %v642 = vld [vmem:[%s3 + $0x50] sm:$0xff]
      %v643 = vld [vmem:[%s3 + $0x58] sm:$0xff]
      %v644 = vld [vmem:[%s3 + $0x60] sm:$0xff]
      %v645 = vld [vmem:[%s3 + $0x68] sm:$0xff]
      %v646 = vld [vmem:[%s3 + $0x70] sm:$0xff]
      %v647 = vld [vmem:[%s3 + $0x78] sm:$0xff]
      %s648 = scalar_lea.vmem %s3, 384
      %v649 = vld [vmem:[%s648] sm:$0xff]
      %v650 = vld [vmem:[%s648 + $0x8] sm:$0xff]
      %v651 = vld [vmem:[%s648 + $0x10] sm:$0xff]
      %v652 = vld [vmem:[%s648 + $0x18] sm:$0xff]
      %v653 = vld [vmem:[%s648 + $0x20] sm:$0xff]
      %v654 = vld [vmem:[%s648 + $0x28] sm:$0xff]
      %v655 = vld [vmem:[%s648 + $0x30] sm:$0xff]
      %v656 = vld [vmem:[%s648 + $0x38] sm:$0xff]
      %v657 = vld [vmem:[%s648 + $0x40] sm:$0xff]
      %v658 = vld [vmem:[%s648 + $0x48] sm:$0xff]
      %v659 = vld [vmem:[%s648 + $0x50] sm:$0xff]
      %v660 = vld [vmem:[%s648 + $0x58] sm:$0xff]
      %v661 = vld [vmem:[%s648 + $0x60] sm:$0xff]
      %v662 = vld [vmem:[%s648 + $0x68] sm:$0xff]
      %v663 = vld [vmem:[%s648 + $0x70] sm:$0xff]
      %v664 = vld [vmem:[%s648 + $0x78] sm:$0xff]
      %665 = vmatprep.subr.mxu0 0.0
      %666 = vmatpush1.msra.mxu0 %v664
      %667 = vmatprep.subr.mxu0 0.0
      %668 = vmatpush1.msra.mxu0 %v663
      %669 = vmatprep.subr.mxu0 0.0
      %670 = vmatpush1.msra.mxu0 %v662
      %671 = vmatprep.subr.mxu0 0.0
      %672 = vmatpush1.msra.mxu0 %v661
      %673 = vmatprep.subr.mxu0 0.0
      %674 = vmatpush1.msra.mxu0 %v660
      %675 = vmatprep.subr.mxu0 0.0
      %676 = vmatpush1.msra.mxu0 %v659
      %677 = vmatprep.subr.mxu0 0.0
      %678 = vmatpush1.msra.mxu0 %v658
      %679 = vmatprep.subr.mxu0 0.0
      %680 = vmatpush1.msra.mxu0 %v657
      %681 = vmatprep.subr.mxu0 0.0
      %682 = vmatpush1.msra.mxu0 %v656
      %683 = vmatprep.subr.mxu0 0.0
      %684 = vmatpush1.msra.mxu0 %v655
      %685 = vmatprep.subr.mxu0 0.0
      %686 = vmatpush1.msra.mxu0 %v654
      %687 = vmatprep.subr.mxu0 0.0
      %688 = vmatpush1.msra.mxu0 %v653
      %689 = vmatprep.subr.mxu0 0.0
      %690 = vmatpush1.msra.mxu0 %v652
      %691 = vmatprep.subr.mxu0 0.0
      %692 = vmatpush1.msra.mxu0 %v651
      %693 = vmatprep.subr.mxu0 0.0
      %694 = vmatpush1.msra.mxu0 %v650
      %695 = vmatprep.subr.mxu0 0.0
      %696 = vmatpush1.msra.mxu0 %v649
      %697 = vmatprep.subr.mxu0 0.0
      %698 = vmatpush2.msra.mxu0 0.0
      %699 = vmatprep.subr.mxu0 0.0
      %700 = vmatpush2.msra.mxu0 0.0
      %701 = vmatprep.subr.mxu0 0.0
      %702 = vmatpush2.msra.mxu0 0.0
      %703 = vmatprep.subr.mxu0 0.0
      %704 = vmatpush2.msra.mxu0 0.0
      %705 = vmatprep.subr.mxu0 0.0
      %706 = vmatpush2.msra.mxu0 0.0
      %707 = vmatprep.subr.mxu0 0.0
      %708 = vmatpush2.msra.mxu0 0.0
      %709 = vmatprep.subr.mxu0 0.0
      %710 = vmatpush2.msra.mxu0 0.0
      %711 = vmatprep.subr.mxu0 0.0
      %712 = vmatpush2.msra.mxu0 0.0
      %713 = vmatprep.subr.mxu0 0.0
      %714 = vmatpush2.msra.mxu0 0.0
      %715 = vmatprep.subr.mxu0 0.0
      %716 = vmatpush2.msra.mxu0 0.0
      %717 = vmatprep.subr.mxu0 0.0
      %718 = vmatpush2.msra.mxu0 0.0
      %719 = vmatprep.subr.mxu0 0.0
      %720 = vmatpush2.msra.mxu0 0.0
      %721 = vmatprep.subr.mxu0 0.0
      %722 = vmatpush2.msra.mxu0 0.0
      %723 = vmatprep.subr.mxu0 0.0
      %724 = vmatpush2.msra.mxu0 0.0
      %725 = vmatprep.subr.mxu0 0.0
      %726 = vmatpush2.msra.mxu0 0.0
      %727 = vmatprep.subr.mxu0 0.0
      %728 = vmatpush2.msra.mxu0 0.0
      %729 = vmatprep.mubr.f32.mxu0 0.0
      %730 = vmatmul.mubr.f32.gmra.mxu0 %v614
      %v731 = vpop.f32.mrf.mxu0
      %v732 = vadd.f32 0.0, %v731
      %v733 = vpop.f32.mrf.mxu0
      %734 = vmatprep.mubr.f32.mxu0 0.0
      %735 = vmatmul.mubr.f32.gmra.mxu0 %v615
      %v736 = vpop.f32.mrf.mxu0
      %v737 = vadd.f32 0.0, %v736
      %v738 = vpop.f32.mrf.mxu0
      %739 = vmatprep.mubr.f32.mxu0 0.0
      %740 = vmatmul.mubr.f32.gmra.mxu0 %v616
      %v741 = vpop.f32.mrf.mxu0
      %v742 = vadd.f32 0.0, %v741
      %v743 = vpop.f32.mrf.mxu0
      %744 = vmatprep.mubr.f32.mxu0 0.0
      %745 = vmatmul.mubr.f32.gmra.mxu0 %v617
      %v746 = vpop.f32.mrf.mxu0
      %v747 = vadd.f32 0.0, %v746
      %v748 = vpop.f32.mrf.mxu0
      %749 = vmatprep.mubr.f32.mxu0 0.0
      %750 = vmatmul.mubr.f32.gmra.mxu0 %v618
      %v751 = vpop.f32.mrf.mxu0
      %v752 = vadd.f32 0.0, %v751
      %v753 = vpop.f32.mrf.mxu0
      %754 = vmatprep.mubr.f32.mxu0 0.0
      %755 = vmatmul.mubr.f32.gmra.mxu0 %v619
      %v756 = vpop.f32.mrf.mxu0
      %v757 = vadd.f32 0.0, %v756
      %v758 = vpop.f32.mrf.mxu0
      %759 = vmatprep.mubr.f32.mxu0 0.0
      %760 = vmatmul.mubr.f32.gmra.mxu0 %v620
      %v761 = vpop.f32.mrf.mxu0
      %v762 = vadd.f32 0.0, %v761
      %v763 = vpop.f32.mrf.mxu0
      %764 = vmatprep.mubr.f32.mxu0 0.0
      %765 = vmatmul.mubr.f32.gmra.mxu0 %v621
      %v766 = vpop.f32.mrf.mxu0
      %v767 = vadd.f32 0.0, %v766
      %v768 = vpop.f32.mrf.mxu0
      %769 = vmatprep.mubr.f32.mxu0 0.0
      %770 = vmatmul.mubr.f32.gmra.mxu0 %v622
      %v771 = vpop.f32.mrf.mxu0
      %v772 = vadd.f32 0.0, %v771
      %v773 = vpop.f32.mrf.mxu0
      %774 = vmatprep.mubr.f32.mxu0 0.0
      %775 = vmatmul.mubr.f32.gmra.mxu0 %v623
      %v776 = vpop.f32.mrf.mxu0
      %v777 = vadd.f32 0.0, %v776
      %v778 = vpop.f32.mrf.mxu0
      %779 = vmatprep.mubr.f32.mxu0 0.0
      %780 = vmatmul.mubr.f32.gmra.mxu0 %v624
      %v781 = vpop.f32.mrf.mxu0
      %v782 = vadd.f32 0.0, %v781
      %v783 = vpop.f32.mrf.mxu0
      %784 = vmatprep.mubr.f32.mxu0 0.0
      %785 = vmatmul.mubr.f32.gmra.mxu0 %v625
      %v786 = vpop.f32.mrf.mxu0
      %v787 = vadd.f32 0.0, %v786
      %v788 = vpop.f32.mrf.mxu0
      %789 = vmatprep.mubr.f32.mxu0 0.0
      %790 = vmatmul.mubr.f32.gmra.mxu0 %v626
      %v791 = vpop.f32.mrf.mxu0
      %v792 = vadd.f32 0.0, %v791
      %v793 = vpop.f32.mrf.mxu0
      %794 = vmatprep.mubr.f32.mxu0 0.0
      %795 = vmatmul.mubr.f32.gmra.mxu0 %v627
      %v796 = vpop.f32.mrf.mxu0
      %v797 = vadd.f32 0.0, %v796
      %v798 = vpop.f32.mrf.mxu0
      %799 = vmatprep.mubr.f32.mxu0 0.0
      %800 = vmatmul.mubr.f32.gmra.mxu0 %v628
      %v801 = vpop.f32.mrf.mxu0
      %v802 = vadd.f32 0.0, %v801
      %v803 = vpop.f32.mrf.mxu0
      %804 = vmatprep.mubr.f32.mxu0 0.0
      %805 = vmatmul.mubr.f32.gmra.mxu0 %v629
      %v806 = vpop.f32.mrf.mxu0
      %v807 = vadd.f32 0.0, %v806
      %v808 = vpop.f32.mrf.mxu0
      %809 = vdwg.mxu0
      %810 = vmatprep.subr.mxu0 0.0
      %811 = vmatpush1.msra.mxu0 %v647
      %812 = vmatprep.subr.mxu0 0.0
      %813 = vmatpush1.msra.mxu0 %v646
      %814 = vmatprep.subr.mxu0 0.0
      %815 = vmatpush1.msra.mxu0 %v645
      %816 = vmatprep.subr.mxu0 0.0
      %817 = vmatpush1.msra.mxu0 %v644
      %818 = vmatprep.subr.mxu0 0.0
      %819 = vmatpush1.msra.mxu0 %v643
      %820 = vmatprep.subr.mxu0 0.0
      %821 = vmatpush1.msra.mxu0 %v642
      %822 = vmatprep.subr.mxu0 0.0
      %823 = vmatpush1.msra.mxu0 %v641
      %824 = vmatprep.subr.mxu0 0.0
      %825 = vmatpush1.msra.mxu0 %v640
      %826 = vmatprep.subr.mxu0 0.0
      %827 = vmatpush1.msra.mxu0 %v639
      %828 = vmatprep.subr.mxu0 0.0
      %829 = vmatpush1.msra.mxu0 %v638
      %830 = vmatprep.subr.mxu0 0.0
      %831 = vmatpush1.msra.mxu0 %v637
      %832 = vmatprep.subr.mxu0 0.0
      %833 = vmatpush1.msra.mxu0 %v636
      %834 = vmatprep.subr.mxu0 0.0
      %835 = vmatpush1.msra.mxu0 %v635
      %836 = vmatprep.subr.mxu0 0.0
      %837 = vmatpush1.msra.mxu0 %v634
      %838 = vmatprep.subr.mxu0 0.0
      %839 = vmatpush1.msra.mxu0 %v633
      %840 = vmatprep.subr.mxu0 0.0
      %841 = vmatpush1.msra.mxu0 %v632
      %842 = vmatprep.subr.mxu0 0.0
      %843 = vmatpush2.msra.mxu0 0.0
      %844 = vmatprep.subr.mxu0 0.0
      %845 = vmatpush2.msra.mxu0 0.0
      %846 = vmatprep.subr.mxu0 0.0
      %847 = vmatpush2.msra.mxu0 0.0
      %848 = vmatprep.subr.mxu0 0.0
      %849 = vmatpush2.msra.mxu0 0.0
      %850 = vmatprep.subr.mxu0 0.0
      %851 = vmatpush2.msra.mxu0 0.0
      %852 = vmatprep.subr.mxu0 0.0
      %853 = vmatpush2.msra.mxu0 0.0
      %854 = vmatprep.subr.mxu0 0.0
      %855 = vmatpush2.msra.mxu0 0.0
      %856 = vmatprep.subr.mxu0 0.0
      %857 = vmatpush2.msra.mxu0 0.0
      %858 = vmatprep.subr.mxu0 0.0
      %859 = vmatpush2.msra.mxu0 0.0
      %860 = vmatprep.subr.mxu0 0.0
      %861 = vmatpush2.msra.mxu0 0.0
      %862 = vmatprep.subr.mxu0 0.0
      %863 = vmatpush2.msra.mxu0 0.0
      %864 = vmatprep.subr.mxu0 0.0
      %865 = vmatpush2.msra.mxu0 0.0
      %866 = vmatprep.subr.mxu0 0.0
      %867 = vmatpush2.msra.mxu0 0.0
      %868 = vmatprep.subr.mxu0 0.0
      %869 = vmatpush2.msra.mxu0 0.0
      %870 = vmatprep.subr.mxu0 0.0
      %871 = vmatpush2.msra.mxu0 0.0
      %872 = vmatprep.subr.mxu0 0.0
      %873 = vmatpush2.msra.mxu0 0.0
      %874 = vmatprep.mubr.f32.mxu0 0.0
      %875 = vmatmul.mubr.f32.gmra.mxu0 %v612
      %v876 = vpop.f32.mrf.mxu0
      %v877 = vadd.f32 %v732, %v876
      %v878 = vpop.f32.mrf.mxu0
      %879 = vmatprep.mubr.f32.mxu0 0.0
      %880 = vmatmul.mubr.f32.gmra.mxu0 %v613
      %v881 = vpop.f32.mrf.mxu0
      %v882 = vadd.f32 %v737, %v881
      %v883 = vpop.f32.mrf.mxu0
      %884 = vmatprep.mubr.f32.mxu0 0.0
      %885 = vmatmul.mubr.f32.gmra.mxu0 %v614
      %v886 = vpop.f32.mrf.mxu0
      %v887 = vadd.f32 %v742, %v886
      %v888 = vpop.f32.mrf.mxu0
      %889 = vmatprep.mubr.f32.mxu0 0.0
      %890 = vmatmul.mubr.f32.gmra.mxu0 %v615
      %v891 = vpop.f32.mrf.mxu0
      %v892 = vadd.f32 %v747, %v891
      %v893 = vpop.f32.mrf.mxu0
      %894 = vmatprep.mubr.f32.mxu0 0.0
      %895 = vmatmul.mubr.f32.gmra.mxu0 %v616
      %v896 = vpop.f32.mrf.mxu0
      %v897 = vadd.f32 %v752, %v896
      %v898 = vpop.f32.mrf.mxu0
      %899 = vmatprep.mubr.f32.mxu0 0.0
      %900 = vmatmul.mubr.f32.gmra.mxu0 %v617
      %v901 = vpop.f32.mrf.mxu0
      %v902 = vadd.f32 %v757, %v901
      %v903 = vpop.f32.mrf.mxu0
      %904 = vmatprep.mubr.f32.mxu0 0.0
      %905 = vmatmul.mubr.f32.gmra.mxu0 %v618
      %v906 = vpop.f32.mrf.mxu0
      %v907 = vadd.f32 %v762, %v906
      %v908 = vpop.f32.mrf.mxu0
      %909 = vmatprep.mubr.f32.mxu0 0.0
      %910 = vmatmul.mubr.f32.gmra.mxu0 %v619
      %v911 = vpop.f32.mrf.mxu0
      %v912 = vadd.f32 %v767, %v911
      %v913 = vpop.f32.mrf.mxu0
      %914 = vmatprep.mubr.f32.mxu0 0.0
      %915 = vmatmul.mubr.f32.gmra.mxu0 %v620
      %v916 = vpop.f32.mrf.mxu0
      %v917 = vadd.f32 %v772, %v916
      %v918 = vpop.f32.mrf.mxu0
      %919 = vmatprep.mubr.f32.mxu0 0.0
      %920 = vmatmul.mubr.f32.gmra.mxu0 %v621
      %v921 = vpop.f32.mrf.mxu0
      %v922 = vadd.f32 %v777, %v921
      %v923 = vpop.f32.mrf.mxu0
      %924 = vmatprep.mubr.f32.mxu0 0.0
      %925 = vmatmul.mubr.f32.gmra.mxu0 %v622
      %v926 = vpop.f32.mrf.mxu0
      %v927 = vadd.f32 %v782, %v926
      %v928 = vpop.f32.mrf.mxu0
      %929 = vmatprep.mubr.f32.mxu0 0.0
      %930 = vmatmul.mubr.f32.gmra.mxu0 %v623
      %v931 = vpop.f32.mrf.mxu0
      %v932 = vadd.f32 %v787, %v931
      %v933 = vpop.f32.mrf.mxu0
      %934 = vmatprep.mubr.f32.mxu0 0.0
      %935 = vmatmul.mubr.f32.gmra.mxu0 %v624
      %v936 = vpop.f32.mrf.mxu0
      %v937 = vadd.f32 %v792, %v936
      %v938 = vpop.f32.mrf.mxu0
      %939 = vmatprep.mubr.f32.mxu0 0.0
      %940 = vmatmul.mubr.f32.gmra.mxu0 %v625
      %v941 = vpop.f32.mrf.mxu0
      %v942 = vadd.f32 %v797, %v941
      %v943 = vpop.f32.mrf.mxu0
      %944 = vmatprep.mubr.f32.mxu0 0.0
      %945 = vmatmul.mubr.f32.gmra.mxu0 %v626
      %v946 = vpop.f32.mrf.mxu0
      %v947 = vadd.f32 %v802, %v946
      %v948 = vpop.f32.mrf.mxu0
      %949 = vmatprep.mubr.f32.mxu0 0.0
      %950 = vmatmul.mubr.f32.gmra.mxu0 %v627
      %v951 = vpop.f32.mrf.mxu0
      %v952 = vadd.f32 %v807, %v951
      %v953 = vpop.f32.mrf.mxu0
      %954 = vdwg.mxu0
      %s955 = scalar_lea.vmem %s3, 768
      %v956 = vld [vmem:[%s955] sm:$0xff]
      %v957 = vld [vmem:[%s955 + $0x8] sm:$0xff]
      %v958 = vld [vmem:[%s955 + $0x10] sm:$0xff]
      %v959 = vld [vmem:[%s955 + $0x18] sm:$0xff]
      %v960 = vld [vmem:[%s955 + $0x20] sm:$0xff]
      %v961 = vld [vmem:[%s955 + $0x28] sm:$0xff]
      %v962 = vld [vmem:[%s955 + $0x30] sm:$0xff]
      %v963 = vld [vmem:[%s955 + $0x38] sm:$0xff]
      %v964 = vld [vmem:[%s955 + $0x40] sm:$0xff]
      %v965 = vld [vmem:[%s955 + $0x48] sm:$0xff]
      %v966 = vld [vmem:[%s955 + $0x50] sm:$0xff]
      %v967 = vld [vmem:[%s955 + $0x58] sm:$0xff]
      %v968 = vld [vmem:[%s955 + $0x60] sm:$0xff]
      %v969 = vld [vmem:[%s955 + $0x68] sm:$0xff]
      %v970 = vld [vmem:[%s955 + $0x70] sm:$0xff]
      %v971 = vld [vmem:[%s955 + $0x78] sm:$0xff]
      %972 = vmatprep.subr.mxu0 0.0
      %973 = vmatpush1.msra.mxu0 %v971
      %974 = vmatprep.subr.mxu0 0.0
      %975 = vmatpush1.msra.mxu0 %v970
      %976 = vmatprep.subr.mxu0 0.0
      %977 = vmatpush1.msra.mxu0 %v969
      %978 = vmatprep.subr.mxu0 0.0
      %979 = vmatpush1.msra.mxu0 %v968
      %980 = vmatprep.subr.mxu0 0.0
      %981 = vmatpush1.msra.mxu0 %v967
      %982 = vmatprep.subr.mxu0 0.0
      %983 = vmatpush1.msra.mxu0 %v966
      %984 = vmatprep.subr.mxu0 0.0
      %985 = vmatpush1.msra.mxu0 %v965
      %986 = vmatprep.subr.mxu0 0.0
      %987 = vmatpush1.msra.mxu0 %v964
      %988 = vmatprep.subr.mxu0 0.0
      %989 = vmatpush1.msra.mxu0 %v963
      %990 = vmatprep.subr.mxu0 0.0
      %991 = vmatpush1.msra.mxu0 %v962
      %992 = vmatprep.subr.mxu0 0.0
      %993 = vmatpush1.msra.mxu0 %v961
      %994 = vmatprep.subr.mxu0 0.0
      %995 = vmatpush1.msra.mxu0 %v960
      %996 = vmatprep.subr.mxu0 0.0
      %997 = vmatpush1.msra.mxu0 %v959
      %998 = vmatprep.subr.mxu0 0.0
      %999 = vmatpush1.msra.mxu0 %v958
      %1000 = vmatprep.subr.mxu0 0.0
      %1001 = vmatpush1.msra.mxu0 %v957
      %1002 = vmatprep.subr.mxu0 0.0
      %1003 = vmatpush1.msra.mxu0 %v956
      %1004 = vmatprep.subr.mxu0 0.0
      %1005 = vmatpush2.msra.mxu0 0.0
      %1006 = vmatprep.subr.mxu0 0.0
      %1007 = vmatpush2.msra.mxu0 0.0
      %1008 = vmatprep.subr.mxu0 0.0
      %1009 = vmatpush2.msra.mxu0 0.0
      %1010 = vmatprep.subr.mxu0 0.0
      %1011 = vmatpush2.msra.mxu0 0.0
      %1012 = vmatprep.subr.mxu0 0.0
      %1013 = vmatpush2.msra.mxu0 0.0
      %1014 = vmatprep.subr.mxu0 0.0
      %1015 = vmatpush2.msra.mxu0 0.0
      %1016 = vmatprep.subr.mxu0 0.0
      %1017 = vmatpush2.msra.mxu0 0.0
      %1018 = vmatprep.subr.mxu0 0.0
      %1019 = vmatpush2.msra.mxu0 0.0
      %1020 = vmatprep.subr.mxu0 0.0
      %1021 = vmatpush2.msra.mxu0 0.0
      %1022 = vmatprep.subr.mxu0 0.0
      %1023 = vmatpush2.msra.mxu0 0.0
      %1024 = vmatprep.subr.mxu0 0.0
      %1025 = vmatpush2.msra.mxu0 0.0
      %1026 = vmatprep.subr.mxu0 0.0
      %1027 = vmatpush2.msra.mxu0 0.0
      %1028 = vmatprep.subr.mxu0 0.0
      %1029 = vmatpush2.msra.mxu0 0.0
      %1030 = vmatprep.subr.mxu0 0.0
      %1031 = vmatpush2.msra.mxu0 0.0
      %1032 = vmatprep.subr.mxu0 0.0
      %1033 = vmatpush2.msra.mxu0 0.0
      %1034 = vmatprep.subr.mxu0 0.0
      %1035 = vmatpush2.msra.mxu0 0.0
      %1036 = vmatprep.mubr.f32.mxu0 0.0
      %1037 = vmatmul.mubr.f32.gmra.mxu0 %v616
      %v1038 = vpop.f32.mrf.mxu0
      %v1039 = vadd.f32 0.0, %v1038
      %v1040 = vpop.f32.mrf.mxu0
      %1041 = vmatprep.mubr.f32.mxu0 0.0
      %1042 = vmatmul.mubr.f32.gmra.mxu0 %v617
      %v1043 = vpop.f32.mrf.mxu0
      %v1044 = vadd.f32 0.0, %v1043
      %v1045 = vpop.f32.mrf.mxu0
      %1046 = vmatprep.mubr.f32.mxu0 0.0
      %1047 = vmatmul.mubr.f32.gmra.mxu0 %v618
      %v1048 = vpop.f32.mrf.mxu0
      %v1049 = vadd.f32 0.0, %v1048
      %v1050 = vpop.f32.mrf.mxu0
      %1051 = vmatprep.mubr.f32.mxu0 0.0
      %1052 = vmatmul.mubr.f32.gmra.mxu0 %v619
      %v1053 = vpop.f32.mrf.mxu0
      %v1054 = vadd.f32 0.0, %v1053
      %v1055 = vpop.f32.mrf.mxu0
      %1056 = vmatprep.mubr.f32.mxu0 0.0
      %1057 = vmatmul.mubr.f32.gmra.mxu0 %v620
      %v1058 = vpop.f32.mrf.mxu0
      %v1059 = vadd.f32 0.0, %v1058
      %v1060 = vpop.f32.mrf.mxu0
      %1061 = vmatprep.mubr.f32.mxu0 0.0
      %1062 = vmatmul.mubr.f32.gmra.mxu0 %v621
      %v1063 = vpop.f32.mrf.mxu0
      %v1064 = vadd.f32 0.0, %v1063
      %v1065 = vpop.f32.mrf.mxu0
      %1066 = vmatprep.mubr.f32.mxu0 0.0
      %1067 = vmatmul.mubr.f32.gmra.mxu0 %v622
      %v1068 = vpop.f32.mrf.mxu0
      %v1069 = vadd.f32 0.0, %v1068
      %v1070 = vpop.f32.mrf.mxu0
      %1071 = vmatprep.mubr.f32.mxu0 0.0
      %1072 = vmatmul.mubr.f32.gmra.mxu0 %v623
      %v1073 = vpop.f32.mrf.mxu0
      %v1074 = vadd.f32 0.0, %v1073
      %v1075 = vpop.f32.mrf.mxu0
      %1076 = vmatprep.mubr.f32.mxu0 0.0
      %1077 = vmatmul.mubr.f32.gmra.mxu0 %v624
      %v1078 = vpop.f32.mrf.mxu0
      %v1079 = vadd.f32 0.0, %v1078
      %v1080 = vpop.f32.mrf.mxu0
      %1081 = vmatprep.mubr.f32.mxu0 0.0
      %1082 = vmatmul.mubr.f32.gmra.mxu0 %v625
      %v1083 = vpop.f32.mrf.mxu0
      %v1084 = vadd.f32 0.0, %v1083
      %v1085 = vpop.f32.mrf.mxu0
      %1086 = vmatprep.mubr.f32.mxu0 0.0
      %1087 = vmatmul.mubr.f32.gmra.mxu0 %v626
      %v1088 = vpop.f32.mrf.mxu0
      %v1089 = vadd.f32 0.0, %v1088
      %v1090 = vpop.f32.mrf.mxu0
      %1091 = vmatprep.mubr.f32.mxu0 0.0
      %1092 = vmatmul.mubr.f32.gmra.mxu0 %v627
      %v1093 = vpop.f32.mrf.mxu0
      %v1094 = vadd.f32 0.0, %v1093
      %v1095 = vpop.f32.mrf.mxu0
      %1096 = vmatprep.mubr.f32.mxu0 0.0
      %1097 = vmatmul.mubr.f32.gmra.mxu0 %v628
      %v1098 = vpop.f32.mrf.mxu0
      %v1099 = vadd.f32 0.0, %v1098
      %v1100 = vpop.f32.mrf.mxu0
      %1101 = vmatprep.mubr.f32.mxu0 0.0
      %1102 = vmatmul.mubr.f32.gmra.mxu0 %v629
      %v1103 = vpop.f32.mrf.mxu0
      %v1104 = vadd.f32 0.0, %v1103
      %v1105 = vpop.f32.mrf.mxu0
      %1106 = vmatprep.mubr.f32.mxu0 0.0
      %1107 = vmatmul.mubr.f32.gmra.mxu0 %v630
      %v1108 = vpop.f32.mrf.mxu0
      %v1109 = vadd.f32 0.0, %v1108
      %v1110 = vpop.f32.mrf.mxu0
      %1111 = vmatprep.mubr.f32.mxu0 0.0
      %1112 = vmatmul.mubr.f32.gmra.mxu0 %v631
      %v1113 = vpop.f32.mrf.mxu0
      %v1114 = vadd.f32 0.0, %v1113
      %v1115 = vpop.f32.mrf.mxu0
      %1116 = vdwg.mxu0
      %v1117 = vadd.f32 %v877, %v1039
      %v1118 = vadd.f32 %v882, %v1044
      %v1119 = vadd.f32 %v887, %v1049
      %v1120 = vadd.f32 %v892, %v1054
      %v1121 = vadd.f32 %v897, %v1059
      %v1122 = vadd.f32 %v902, %v1064
      %v1123 = vadd.f32 %v907, %v1069
      %v1124 = vadd.f32 %v912, %v1074
      %v1125 = vadd.f32 %v917, %v1079
      %v1126 = vadd.f32 %v922, %v1084
      %v1127 = vadd.f32 %v927, %v1089
      %v1128 = vadd.f32 %v932, %v1094
      %v1129 = vadd.f32 %v937, %v1099
      %v1130 = vadd.f32 %v942, %v1104
      %v1131 = vadd.f32 %v947, %v1109
      %v1132 = vadd.f32 %v952, %v1114
      %v1133 = vld [vmem:[#allocation2 + $0x1] sm:$0xff]
      %v1134 = vld [vmem:[#allocation2 + $0x9] sm:$0xff]
      %v1135 = vld [vmem:[#allocation2 + $0x19] sm:$0xff]
      %v1136 = vld [vmem:[#allocation2 + $0x21] sm:$0xff]
      %v1137 = vld [vmem:[#allocation2 + $0x31] sm:$0xff]
      %v1138 = vld [vmem:[#allocation2 + $0x39] sm:$0xff]
      %v1139 = vld [vmem:[#allocation2 + $0x49] sm:$0xff]
      %v1140 = vld [vmem:[#allocation2 + $0x51] sm:$0xff]
      %v1141 = vld [vmem:[#allocation2 + $0x61] sm:$0xff]
      %v1142 = vld [vmem:[#allocation2 + $0x69] sm:$0xff]
      %v1143 = vld [vmem:[#allocation2 + $0x79] sm:$0xff]
      %v1144 = vld [vmem:[#allocation2 + $0x81] sm:$0xff]
      %v1145 = vld [vmem:[#allocation2 + $0x91] sm:$0xff]
      %v1146 = vld [vmem:[#allocation2 + $0x99] sm:$0xff]
      %v1147 = vld [vmem:[#allocation2 + $0xa9] sm:$0xff]
      %v1148 = vld [vmem:[#allocation2 + $0xb1] sm:$0xff]
      %v1149 = vld [vmem:[#allocation2 + $0xc1] sm:$0xff]
      %v1150 = vld [vmem:[#allocation2 + $0xc9] sm:$0xff]
      %v1151 = vld [vmem:[#allocation2 + $0xd9] sm:$0xff]
      %v1152 = vld [vmem:[#allocation2 + $0xe1] sm:$0xff]
      %s1153 = scalar_lea.vmem %s3, 128
      %v1154 = vld [vmem:[%s1153] sm:$0xff]
      %v1155 = vld [vmem:[%s1153 + $0x8] sm:$0xff]
      %v1156 = vld [vmem:[%s1153 + $0x10] sm:$0xff]
      %v1157 = vld [vmem:[%s1153 + $0x18] sm:$0xff]
      %v1158 = vld [vmem:[%s1153 + $0x20] sm:$0xff]
      %v1159 = vld [vmem:[%s1153 + $0x28] sm:$0xff]
      %v1160 = vld [vmem:[%s1153 + $0x30] sm:$0xff]
      %v1161 = vld [vmem:[%s1153 + $0x38] sm:$0xff]
      %v1162 = vld [vmem:[%s1153 + $0x40] sm:$0xff]
      %v1163 = vld [vmem:[%s1153 + $0x48] sm:$0xff]
      %v1164 = vld [vmem:[%s1153 + $0x50] sm:$0xff]
      %v1165 = vld [vmem:[%s1153 + $0x58] sm:$0xff]
      %v1166 = vld [vmem:[%s1153 + $0x60] sm:$0xff]
      %v1167 = vld [vmem:[%s1153 + $0x68] sm:$0xff]
      %v1168 = vld [vmem:[%s1153 + $0x70] sm:$0xff]
      %v1169 = vld [vmem:[%s1153 + $0x78] sm:$0xff]
      %1170 = vmatprep.subr.mxu0 0.0
      %1171 = vmatpush1.msra.mxu0 %v1169
      %1172 = vmatprep.subr.mxu0 0.0
      %1173 = vmatpush1.msra.mxu0 %v1168
      %1174 = vmatprep.subr.mxu0 0.0
      %1175 = vmatpush1.msra.mxu0 %v1167
      %1176 = vmatprep.subr.mxu0 0.0
      %1177 = vmatpush1.msra.mxu0 %v1166
      %1178 = vmatprep.subr.mxu0 0.0
      %1179 = vmatpush1.msra.mxu0 %v1165
      %1180 = vmatprep.subr.mxu0 0.0
      %1181 = vmatpush1.msra.mxu0 %v1164
      %1182 = vmatprep.subr.mxu0 0.0
      %1183 = vmatpush1.msra.mxu0 %v1163
      %1184 = vmatprep.subr.mxu0 0.0
      %1185 = vmatpush1.msra.mxu0 %v1162
      %1186 = vmatprep.subr.mxu0 0.0
      %1187 = vmatpush1.msra.mxu0 %v1161
      %1188 = vmatprep.subr.mxu0 0.0
      %1189 = vmatpush1.msra.mxu0 %v1160
      %1190 = vmatprep.subr.mxu0 0.0
      %1191 = vmatpush1.msra.mxu0 %v1159
      %1192 = vmatprep.subr.mxu0 0.0
      %1193 = vmatpush1.msra.mxu0 %v1158
      %1194 = vmatprep.subr.mxu0 0.0
      %1195 = vmatpush1.msra.mxu0 %v1157
      %1196 = vmatprep.subr.mxu0 0.0
      %1197 = vmatpush1.msra.mxu0 %v1156
      %1198 = vmatprep.subr.mxu0 0.0
      %1199 = vmatpush1.msra.mxu0 %v1155
      %1200 = vmatprep.subr.mxu0 0.0
      %1201 = vmatpush1.msra.mxu0 %v1154
      %1202 = vmatprep.subr.mxu0 0.0
      %1203 = vmatpush2.msra.mxu0 0.0
      %1204 = vmatprep.subr.mxu0 0.0
      %1205 = vmatpush2.msra.mxu0 0.0
      %1206 = vmatprep.subr.mxu0 0.0
      %1207 = vmatpush2.msra.mxu0 0.0
      %1208 = vmatprep.subr.mxu0 0.0
      %1209 = vmatpush2.msra.mxu0 0.0
      %1210 = vmatprep.subr.mxu0 0.0
      %1211 = vmatpush2.msra.mxu0 0.0
      %1212 = vmatprep.subr.mxu0 0.0
      %1213 = vmatpush2.msra.mxu0 0.0
      %1214 = vmatprep.subr.mxu0 0.0
      %1215 = vmatpush2.msra.mxu0 0.0
      %1216 = vmatprep.subr.mxu0 0.0
      %1217 = vmatpush2.msra.mxu0 0.0
      %1218 = vmatprep.subr.mxu0 0.0
      %1219 = vmatpush2.msra.mxu0 0.0
      %1220 = vmatprep.subr.mxu0 0.0
      %1221 = vmatpush2.msra.mxu0 0.0
      %1222 = vmatprep.subr.mxu0 0.0
      %1223 = vmatpush2.msra.mxu0 0.0
      %1224 = vmatprep.subr.mxu0 0.0
      %1225 = vmatpush2.msra.mxu0 0.0
      %1226 = vmatprep.subr.mxu0 0.0
      %1227 = vmatpush2.msra.mxu0 0.0
      %1228 = vmatprep.subr.mxu0 0.0
      %1229 = vmatpush2.msra.mxu0 0.0
      %1230 = vmatprep.subr.mxu0 0.0
      %1231 = vmatpush2.msra.mxu0 0.0
      %1232 = vmatprep.subr.mxu0 0.0
      %1233 = vmatpush2.msra.mxu0 0.0
      %1234 = vmatprep.mubr.f32.mxu0 0.0
      %1235 = vmatmul.mubr.f32.gmra.mxu0 %v1133
      %v1236 = vpop.f32.mrf.mxu0
      %v1237 = vadd.f32 0.0, %v1236
      %v1238 = vpop.f32.mrf.mxu0
      %1239 = vmatprep.mubr.f32.mxu0 0.0
      %1240 = vmatmul.mubr.f32.gmra.mxu0 %v1134
      %v1241 = vpop.f32.mrf.mxu0
      %v1242 = vadd.f32 0.0, %v1241
      %v1243 = vpop.f32.mrf.mxu0
      %1244 = vmatprep.mubr.f32.mxu0 0.0
      %1245 = vmatmul.mubr.f32.gmra.mxu0 %v1135
      %v1246 = vpop.f32.mrf.mxu0
      %v1247 = vadd.f32 0.0, %v1246
      %v1248 = vpop.f32.mrf.mxu0
      %1249 = vmatprep.mubr.f32.mxu0 0.0
      %1250 = vmatmul.mubr.f32.gmra.mxu0 %v1136
      %v1251 = vpop.f32.mrf.mxu0
      %v1252 = vadd.f32 0.0, %v1251
      %v1253 = vpop.f32.mrf.mxu0
      %1254 = vmatprep.mubr.f32.mxu0 0.0
      %1255 = vmatmul.mubr.f32.gmra.mxu0 %v1137
      %v1256 = vpop.f32.mrf.mxu0
      %v1257 = vadd.f32 0.0, %v1256
      %v1258 = vpop.f32.mrf.mxu0
      %1259 = vmatprep.mubr.f32.mxu0 0.0
      %1260 = vmatmul.mubr.f32.gmra.mxu0 %v1138
      %v1261 = vpop.f32.mrf.mxu0
      %v1262 = vadd.f32 0.0, %v1261
      %v1263 = vpop.f32.mrf.mxu0
      %1264 = vmatprep.mubr.f32.mxu0 0.0
      %1265 = vmatmul.mubr.f32.gmra.mxu0 %v1139
      %v1266 = vpop.f32.mrf.mxu0
      %v1267 = vadd.f32 0.0, %v1266
      %v1268 = vpop.f32.mrf.mxu0
      %1269 = vmatprep.mubr.f32.mxu0 0.0
      %1270 = vmatmul.mubr.f32.gmra.mxu0 %v1140
      %v1271 = vpop.f32.mrf.mxu0
      %v1272 = vadd.f32 0.0, %v1271
      %v1273 = vpop.f32.mrf.mxu0
      %1274 = vmatprep.mubr.f32.mxu0 0.0
      %1275 = vmatmul.mubr.f32.gmra.mxu0 %v1141
      %v1276 = vpop.f32.mrf.mxu0
      %v1277 = vadd.f32 0.0, %v1276
      %v1278 = vpop.f32.mrf.mxu0
      %1279 = vmatprep.mubr.f32.mxu0 0.0
      %1280 = vmatmul.mubr.f32.gmra.mxu0 %v1142
      %v1281 = vpop.f32.mrf.mxu0
      %v1282 = vadd.f32 0.0, %v1281
      %v1283 = vpop.f32.mrf.mxu0
      %1284 = vmatprep.mubr.f32.mxu0 0.0
      %1285 = vmatmul.mubr.f32.gmra.mxu0 %v1143
      %v1286 = vpop.f32.mrf.mxu0
      %v1287 = vadd.f32 0.0, %v1286
      %v1288 = vpop.f32.mrf.mxu0
      %1289 = vmatprep.mubr.f32.mxu0 0.0
      %1290 = vmatmul.mubr.f32.gmra.mxu0 %v1144
      %v1291 = vpop.f32.mrf.mxu0
      %v1292 = vadd.f32 0.0, %v1291
      %v1293 = vpop.f32.mrf.mxu0
      %1294 = vmatprep.mubr.f32.mxu0 0.0
      %1295 = vmatmul.mubr.f32.gmra.mxu0 %v1145
      %v1296 = vpop.f32.mrf.mxu0
      %v1297 = vadd.f32 0.0, %v1296
      %v1298 = vpop.f32.mrf.mxu0
      %1299 = vmatprep.mubr.f32.mxu0 0.0
      %1300 = vmatmul.mubr.f32.gmra.mxu0 %v1146
      %v1301 = vpop.f32.mrf.mxu0
      %v1302 = vadd.f32 0.0, %v1301
      %v1303 = vpop.f32.mrf.mxu0
      %1304 = vmatprep.mubr.f32.mxu0 0.0
      %1305 = vmatmul.mubr.f32.gmra.mxu0 %v1147
      %v1306 = vpop.f32.mrf.mxu0
      %v1307 = vadd.f32 0.0, %v1306
      %v1308 = vpop.f32.mrf.mxu0
      %1309 = vmatprep.mubr.f32.mxu0 0.0
      %1310 = vmatmul.mubr.f32.gmra.mxu0 %v1148
      %v1311 = vpop.f32.mrf.mxu0
      %v1312 = vadd.f32 0.0, %v1311
      %v1313 = vpop.f32.mrf.mxu0
      %1314 = vdwg.mxu0
      %v1315 = vadd.f32 %v1117, %v1237
      %v1316 = vadd.f32 %v1118, %v1242
      %v1317 = vadd.f32 %v1119, %v1247
      %v1318 = vadd.f32 %v1120, %v1252
      %v1319 = vadd.f32 %v1121, %v1257
      %v1320 = vadd.f32 %v1122, %v1262
      %v1321 = vadd.f32 %v1123, %v1267
      %v1322 = vadd.f32 %v1124, %v1272
      %v1323 = vadd.f32 %v1125, %v1277
      %v1324 = vadd.f32 %v1126, %v1282
      %v1325 = vadd.f32 %v1127, %v1287
      %v1326 = vadd.f32 %v1128, %v1292
      %v1327 = vadd.f32 %v1129, %v1297
      %v1328 = vadd.f32 %v1130, %v1302
      %v1329 = vadd.f32 %v1131, %v1307
      %v1330 = vadd.f32 %v1132, %v1312
      %s1331 = scalar_lea.vmem %s3, 512
      %v1332 = vld [vmem:[%s1331] sm:$0xff]
      %v1333 = vld [vmem:[%s1331 + $0x8] sm:$0xff]
      %v1334 = vld [vmem:[%s1331 + $0x10] sm:$0xff]
      %v1335 = vld [vmem:[%s1331 + $0x18] sm:$0xff]
      %v1336 = vld [vmem:[%s1331 + $0x20] sm:$0xff]
      %v1337 = vld [vmem:[%s1331 + $0x28] sm:$0xff]
      %v1338 = vld [vmem:[%s1331 + $0x30] sm:$0xff]
      %v1339 = vld [vmem:[%s1331 + $0x38] sm:$0xff]
      %v1340 = vld [vmem:[%s1331 + $0x40] sm:$0xff]
      %v1341 = vld [vmem:[%s1331 + $0x48] sm:$0xff]
      %v1342 = vld [vmem:[%s1331 + $0x50] sm:$0xff]
      %v1343 = vld [vmem:[%s1331 + $0x58] sm:$0xff]
      %v1344 = vld [vmem:[%s1331 + $0x60] sm:$0xff]
      %v1345 = vld [vmem:[%s1331 + $0x68] sm:$0xff]
      %v1346 = vld [vmem:[%s1331 + $0x70] sm:$0xff]
      %v1347 = vld [vmem:[%s1331 + $0x78] sm:$0xff]
      %1348 = vmatprep.subr.mxu0 0.0
      %1349 = vmatpush1.msra.mxu0 %v1347
      %1350 = vmatprep.subr.mxu0 0.0
      %1351 = vmatpush1.msra.mxu0 %v1346
      %1352 = vmatprep.subr.mxu0 0.0
      %1353 = vmatpush1.msra.mxu0 %v1345
      %1354 = vmatprep.subr.mxu0 0.0
      %1355 = vmatpush1.msra.mxu0 %v1344
      %1356 = vmatprep.subr.mxu0 0.0
      %1357 = vmatpush1.msra.mxu0 %v1343
      %1358 = vmatprep.subr.mxu0 0.0
      %1359 = vmatpush1.msra.mxu0 %v1342
      %1360 = vmatprep.subr.mxu0 0.0
      %1361 = vmatpush1.msra.mxu0 %v1341
      %1362 = vmatprep.subr.mxu0 0.0
      %1363 = vmatpush1.msra.mxu0 %v1340
      %1364 = vmatprep.subr.mxu0 0.0
      %1365 = vmatpush1.msra.mxu0 %v1339
      %1366 = vmatprep.subr.mxu0 0.0
      %1367 = vmatpush1.msra.mxu0 %v1338
      %1368 = vmatprep.subr.mxu0 0.0
      %1369 = vmatpush1.msra.mxu0 %v1337
      %1370 = vmatprep.subr.mxu0 0.0
      %1371 = vmatpush1.msra.mxu0 %v1336
      %1372 = vmatprep.subr.mxu0 0.0
      %1373 = vmatpush1.msra.mxu0 %v1335
      %1374 = vmatprep.subr.mxu0 0.0
      %1375 = vmatpush1.msra.mxu0 %v1334
      %1376 = vmatprep.subr.mxu0 0.0
      %1377 = vmatpush1.msra.mxu0 %v1333
      %1378 = vmatprep.subr.mxu0 0.0
      %1379 = vmatpush1.msra.mxu0 %v1332
      %1380 = vmatprep.subr.mxu0 0.0
      %1381 = vmatpush2.msra.mxu0 0.0
      %1382 = vmatprep.subr.mxu0 0.0
      %1383 = vmatpush2.msra.mxu0 0.0
      %1384 = vmatprep.subr.mxu0 0.0
      %1385 = vmatpush2.msra.mxu0 0.0
      %1386 = vmatprep.subr.mxu0 0.0
      %1387 = vmatpush2.msra.mxu0 0.0
      %1388 = vmatprep.subr.mxu0 0.0
      %1389 = vmatpush2.msra.mxu0 0.0
      %1390 = vmatprep.subr.mxu0 0.0
      %1391 = vmatpush2.msra.mxu0 0.0
      %1392 = vmatprep.subr.mxu0 0.0
      %1393 = vmatpush2.msra.mxu0 0.0
      %1394 = vmatprep.subr.mxu0 0.0
      %1395 = vmatpush2.msra.mxu0 0.0
      %1396 = vmatprep.subr.mxu0 0.0
      %1397 = vmatpush2.msra.mxu0 0.0
      %1398 = vmatprep.subr.mxu0 0.0
      %1399 = vmatpush2.msra.mxu0 0.0
      %1400 = vmatprep.subr.mxu0 0.0
      %1401 = vmatpush2.msra.mxu0 0.0
      %1402 = vmatprep.subr.mxu0 0.0
      %1403 = vmatpush2.msra.mxu0 0.0
      %1404 = vmatprep.subr.mxu0 0.0
      %1405 = vmatpush2.msra.mxu0 0.0
      %1406 = vmatprep.subr.mxu0 0.0
      %1407 = vmatpush2.msra.mxu0 0.0
      %1408 = vmatprep.subr.mxu0 0.0
      %1409 = vmatpush2.msra.mxu0 0.0
      %1410 = vmatprep.subr.mxu0 0.0
      %1411 = vmatpush2.msra.mxu0 0.0
      %1412 = vmatprep.mubr.f32.mxu0 0.0
      %1413 = vmatmul.mubr.f32.gmra.mxu0 %v1135
      %v1414 = vpop.f32.mrf.mxu0
      %v1415 = vadd.f32 0.0, %v1414
      %v1416 = vpop.f32.mrf.mxu0
      %1417 = vmatprep.mubr.f32.mxu0 0.0
      %1418 = vmatmul.mubr.f32.gmra.mxu0 %v1136
      %v1419 = vpop.f32.mrf.mxu0
      %v1420 = vadd.f32 0.0, %v1419
      %v1421 = vpop.f32.mrf.mxu0
      %1422 = vmatprep.mubr.f32.mxu0 0.0
      %1423 = vmatmul.mubr.f32.gmra.mxu0 %v1137
      %v1424 = vpop.f32.mrf.mxu0
      %v1425 = vadd.f32 0.0, %v1424
      %v1426 = vpop.f32.mrf.mxu0
      %1427 = vmatprep.mubr.f32.mxu0 0.0
      %1428 = vmatmul.mubr.f32.gmra.mxu0 %v1138
      %v1429 = vpop.f32.mrf.mxu0
      %v1430 = vadd.f32 0.0, %v1429
      %v1431 = vpop.f32.mrf.mxu0
      %1432 = vmatprep.mubr.f32.mxu0 0.0
      %1433 = vmatmul.mubr.f32.gmra.mxu0 %v1139
      %v1434 = vpop.f32.mrf.mxu0
      %v1435 = vadd.f32 0.0, %v1434
      %v1436 = vpop.f32.mrf.mxu0
      %1437 = vmatprep.mubr.f32.mxu0 0.0
      %1438 = vmatmul.mubr.f32.gmra.mxu0 %v1140
      %v1439 = vpop.f32.mrf.mxu0
      %v1440 = vadd.f32 0.0, %v1439
      %v1441 = vpop.f32.mrf.mxu0
      %1442 = vmatprep.mubr.f32.mxu0 0.0
      %1443 = vmatmul.mubr.f32.gmra.mxu0 %v1141
      %v1444 = vpop.f32.mrf.mxu0
      %v1445 = vadd.f32 0.0, %v1444
      %v1446 = vpop.f32.mrf.mxu0
      %1447 = vmatprep.mubr.f32.mxu0 0.0
      %1448 = vmatmul.mubr.f32.gmra.mxu0 %v1142
      %v1449 = vpop.f32.mrf.mxu0
      %v1450 = vadd.f32 0.0, %v1449
      %v1451 = vpop.f32.mrf.mxu0
      %1452 = vmatprep.mubr.f32.mxu0 0.0
      %1453 = vmatmul.mubr.f32.gmra.mxu0 %v1143
      %v1454 = vpop.f32.mrf.mxu0
      %v1455 = vadd.f32 0.0, %v1454
      %v1456 = vpop.f32.mrf.mxu0
      %1457 = vmatprep.mubr.f32.mxu0 0.0
      %1458 = vmatmul.mubr.f32.gmra.mxu0 %v1144
      %v1459 = vpop.f32.mrf.mxu0
      %v1460 = vadd.f32 0.0, %v1459
      %v1461 = vpop.f32.mrf.mxu0
      %1462 = vmatprep.mubr.f32.mxu0 0.0
      %1463 = vmatmul.mubr.f32.gmra.mxu0 %v1145
      %v1464 = vpop.f32.mrf.mxu0
      %v1465 = vadd.f32 0.0, %v1464
      %v1466 = vpop.f32.mrf.mxu0
      %1467 = vmatprep.mubr.f32.mxu0 0.0
      %1468 = vmatmul.mubr.f32.gmra.mxu0 %v1146
      %v1469 = vpop.f32.mrf.mxu0
      %v1470 = vadd.f32 0.0, %v1469
      %v1471 = vpop.f32.mrf.mxu0
      %1472 = vmatprep.mubr.f32.mxu0 0.0
      %1473 = vmatmul.mubr.f32.gmra.mxu0 %v1147
      %v1474 = vpop.f32.mrf.mxu0
      %v1475 = vadd.f32 0.0, %v1474
      %v1476 = vpop.f32.mrf.mxu0
      %1477 = vmatprep.mubr.f32.mxu0 0.0
      %1478 = vmatmul.mubr.f32.gmra.mxu0 %v1148
      %v1479 = vpop.f32.mrf.mxu0
      %v1480 = vadd.f32 0.0, %v1479
      %v1481 = vpop.f32.mrf.mxu0
      %1482 = vmatprep.mubr.f32.mxu0 0.0
      %1483 = vmatmul.mubr.f32.gmra.mxu0 %v1149
      %v1484 = vpop.f32.mrf.mxu0
      %v1485 = vadd.f32 0.0, %v1484
      %v1486 = vpop.f32.mrf.mxu0
      %1487 = vmatprep.mubr.f32.mxu0 0.0
      %1488 = vmatmul.mubr.f32.gmra.mxu0 %v1150
      %v1489 = vpop.f32.mrf.mxu0
      %v1490 = vadd.f32 0.0, %v1489
      %v1491 = vpop.f32.mrf.mxu0
      %1492 = vdwg.mxu0
      %v1493 = vadd.f32 %v1315, %v1415
      %v1494 = vadd.f32 %v1316, %v1420
      %v1495 = vadd.f32 %v1317, %v1425
      %v1496 = vadd.f32 %v1318, %v1430
      %v1497 = vadd.f32 %v1319, %v1435
      %v1498 = vadd.f32 %v1320, %v1440
      %v1499 = vadd.f32 %v1321, %v1445
      %v1500 = vadd.f32 %v1322, %v1450
      %v1501 = vadd.f32 %v1323, %v1455
      %v1502 = vadd.f32 %v1324, %v1460
      %v1503 = vadd.f32 %v1325, %v1465
      %v1504 = vadd.f32 %v1326, %v1470
      %v1505 = vadd.f32 %v1327, %v1475
      %v1506 = vadd.f32 %v1328, %v1480
      %v1507 = vadd.f32 %v1329, %v1485
      %v1508 = vadd.f32 %v1330, %v1490
      %s1509 = scalar_lea.vmem %s3, 896
      %v1510 = vld [vmem:[%s1509] sm:$0xff]
      %v1511 = vld [vmem:[%s1509 + $0x8] sm:$0xff]
      %v1512 = vld [vmem:[%s1509 + $0x10] sm:$0xff]
      %v1513 = vld [vmem:[%s1509 + $0x18] sm:$0xff]
      %v1514 = vld [vmem:[%s1509 + $0x20] sm:$0xff]
      %v1515 = vld [vmem:[%s1509 + $0x28] sm:$0xff]
      %v1516 = vld [vmem:[%s1509 + $0x30] sm:$0xff]
      %v1517 = vld [vmem:[%s1509 + $0x38] sm:$0xff]
      %v1518 = vld [vmem:[%s1509 + $0x40] sm:$0xff]
      %v1519 = vld [vmem:[%s1509 + $0x48] sm:$0xff]
      %v1520 = vld [vmem:[%s1509 + $0x50] sm:$0xff]
      %v1521 = vld [vmem:[%s1509 + $0x58] sm:$0xff]
      %v1522 = vld [vmem:[%s1509 + $0x60] sm:$0xff]
      %v1523 = vld [vmem:[%s1509 + $0x68] sm:$0xff]
      %v1524 = vld [vmem:[%s1509 + $0x70] sm:$0xff]
      %v1525 = vld [vmem:[%s1509 + $0x78] sm:$0xff]
      %1526 = vmatprep.subr.mxu0 0.0
      %1527 = vmatpush1.msra.mxu0 %v1525
      %1528 = vmatprep.subr.mxu0 0.0
      %1529 = vmatpush1.msra.mxu0 %v1524
      %1530 = vmatprep.subr.mxu0 0.0
      %1531 = vmatpush1.msra.mxu0 %v1523
      %1532 = vmatprep.subr.mxu0 0.0
      %1533 = vmatpush1.msra.mxu0 %v1522
      %1534 = vmatprep.subr.mxu0 0.0
      %1535 = vmatpush1.msra.mxu0 %v1521
      %1536 = vmatprep.subr.mxu0 0.0
      %1537 = vmatpush1.msra.mxu0 %v1520
      %1538 = vmatprep.subr.mxu0 0.0
      %1539 = vmatpush1.msra.mxu0 %v1519
      %1540 = vmatprep.subr.mxu0 0.0
      %1541 = vmatpush1.msra.mxu0 %v1518
      %1542 = vmatprep.subr.mxu0 0.0
      %1543 = vmatpush1.msra.mxu0 %v1517
      %1544 = vmatprep.subr.mxu0 0.0
      %1545 = vmatpush1.msra.mxu0 %v1516
      %1546 = vmatprep.subr.mxu0 0.0
      %1547 = vmatpush1.msra.mxu0 %v1515
      %1548 = vmatprep.subr.mxu0 0.0
      %1549 = vmatpush1.msra.mxu0 %v1514
      %1550 = vmatprep.subr.mxu0 0.0
      %1551 = vmatpush1.msra.mxu0 %v1513
      %1552 = vmatprep.subr.mxu0 0.0
      %1553 = vmatpush1.msra.mxu0 %v1512
      %1554 = vmatprep.subr.mxu0 0.0
      %1555 = vmatpush1.msra.mxu0 %v1511
      %1556 = vmatprep.subr.mxu0 0.0
      %1557 = vmatpush1.msra.mxu0 %v1510
      %1558 = vmatprep.subr.mxu0 0.0
      %1559 = vmatpush2.msra.mxu0 0.0
      %1560 = vmatprep.subr.mxu0 0.0
      %1561 = vmatpush2.msra.mxu0 0.0
      %1562 = vmatprep.subr.mxu0 0.0
      %1563 = vmatpush2.msra.mxu0 0.0
      %1564 = vmatprep.subr.mxu0 0.0
      %1565 = vmatpush2.msra.mxu0 0.0
      %1566 = vmatprep.subr.mxu0 0.0
      %1567 = vmatpush2.msra.mxu0 0.0
      %1568 = vmatprep.subr.mxu0 0.0
      %1569 = vmatpush2.msra.mxu0 0.0
      %1570 = vmatprep.subr.mxu0 0.0
      %1571 = vmatpush2.msra.mxu0 0.0
      %1572 = vmatprep.subr.mxu0 0.0
      %1573 = vmatpush2.msra.mxu0 0.0
      %1574 = vmatprep.subr.mxu0 0.0
      %1575 = vmatpush2.msra.mxu0 0.0
      %1576 = vmatprep.subr.mxu0 0.0
      %1577 = vmatpush2.msra.mxu0 0.0
      %1578 = vmatprep.subr.mxu0 0.0
      %1579 = vmatpush2.msra.mxu0 0.0
      %1580 = vmatprep.subr.mxu0 0.0
      %1581 = vmatpush2.msra.mxu0 0.0
      %1582 = vmatprep.subr.mxu0 0.0
      %1583 = vmatpush2.msra.mxu0 0.0
      %1584 = vmatprep.subr.mxu0 0.0
      %1585 = vmatpush2.msra.mxu0 0.0
      %1586 = vmatprep.subr.mxu0 0.0
      %1587 = vmatpush2.msra.mxu0 0.0
      %1588 = vmatprep.subr.mxu0 0.0
      %1589 = vmatpush2.msra.mxu0 0.0
      %1590 = vmatprep.mubr.f32.mxu0 0.0
      %1591 = vmatmul.mubr.f32.gmra.mxu0 %v1137
      %v1592 = vpop.f32.mrf.mxu0
      %v1593 = vadd.f32 0.0, %v1592
      %v1594 = vpop.f32.mrf.mxu0
      %1595 = vmatprep.mubr.f32.mxu0 0.0
      %1596 = vmatmul.mubr.f32.gmra.mxu0 %v1138
      %v1597 = vpop.f32.mrf.mxu0
      %v1598 = vadd.f32 0.0, %v1597
      %v1599 = vpop.f32.mrf.mxu0
      %1600 = vmatprep.mubr.f32.mxu0 0.0
      %1601 = vmatmul.mubr.f32.gmra.mxu0 %v1139
      %v1602 = vpop.f32.mrf.mxu0
      %v1603 = vadd.f32 0.0, %v1602
      %v1604 = vpop.f32.mrf.mxu0
      %1605 = vmatprep.mubr.f32.mxu0 0.0
      %1606 = vmatmul.mubr.f32.gmra.mxu0 %v1140
      %v1607 = vpop.f32.mrf.mxu0
      %v1608 = vadd.f32 0.0, %v1607
      %v1609 = vpop.f32.mrf.mxu0
      %1610 = vmatprep.mubr.f32.mxu0 0.0
      %1611 = vmatmul.mubr.f32.gmra.mxu0 %v1141
      %v1612 = vpop.f32.mrf.mxu0
      %v1613 = vadd.f32 0.0, %v1612
      %v1614 = vpop.f32.mrf.mxu0
      %1615 = vmatprep.mubr.f32.mxu0 0.0
      %1616 = vmatmul.mubr.f32.gmra.mxu0 %v1142
      %v1617 = vpop.f32.mrf.mxu0
      %v1618 = vadd.f32 0.0, %v1617
      %v1619 = vpop.f32.mrf.mxu0
      %1620 = vmatprep.mubr.f32.mxu0 0.0
      %1621 = vmatmul.mubr.f32.gmra.mxu0 %v1143
      %v1622 = vpop.f32.mrf.mxu0
      %v1623 = vadd.f32 0.0, %v1622
      %v1624 = vpop.f32.mrf.mxu0
      %1625 = vmatprep.mubr.f32.mxu0 0.0
      %1626 = vmatmul.mubr.f32.gmra.mxu0 %v1144
      %v1627 = vpop.f32.mrf.mxu0
      %v1628 = vadd.f32 0.0, %v1627
      %v1629 = vpop.f32.mrf.mxu0
      %1630 = vmatprep.mubr.f32.mxu0 0.0
      %1631 = vmatmul.mubr.f32.gmra.mxu0 %v1145
      %v1632 = vpop.f32.mrf.mxu0
      %v1633 = vadd.f32 0.0, %v1632
      %v1634 = vpop.f32.mrf.mxu0
      %1635 = vmatprep.mubr.f32.mxu0 0.0
      %1636 = vmatmul.mubr.f32.gmra.mxu0 %v1146
      %v1637 = vpop.f32.mrf.mxu0
      %v1638 = vadd.f32 0.0, %v1637
      %v1639 = vpop.f32.mrf.mxu0
      %1640 = vmatprep.mubr.f32.mxu0 0.0
      %1641 = vmatmul.mubr.f32.gmra.mxu0 %v1147
      %v1642 = vpop.f32.mrf.mxu0
      %v1643 = vadd.f32 0.0, %v1642
      %v1644 = vpop.f32.mrf.mxu0
      %1645 = vmatprep.mubr.f32.mxu0 0.0
      %1646 = vmatmul.mubr.f32.gmra.mxu0 %v1148
      %v1647 = vpop.f32.mrf.mxu0
      %v1648 = vadd.f32 0.0, %v1647
      %v1649 = vpop.f32.mrf.mxu0
      %1650 = vmatprep.mubr.f32.mxu0 0.0
      %1651 = vmatmul.mubr.f32.gmra.mxu0 %v1149
      %v1652 = vpop.f32.mrf.mxu0
      %v1653 = vadd.f32 0.0, %v1652
      %v1654 = vpop.f32.mrf.mxu0
      %1655 = vmatprep.mubr.f32.mxu0 0.0
      %1656 = vmatmul.mubr.f32.gmra.mxu0 %v1150
      %v1657 = vpop.f32.mrf.mxu0
      %v1658 = vadd.f32 0.0, %v1657
      %v1659 = vpop.f32.mrf.mxu0
      %1660 = vmatprep.mubr.f32.mxu0 0.0
      %1661 = vmatmul.mubr.f32.gmra.mxu0 %v1151
      %v1662 = vpop.f32.mrf.mxu0
      %v1663 = vadd.f32 0.0, %v1662
      %v1664 = vpop.f32.mrf.mxu0
      %1665 = vmatprep.mubr.f32.mxu0 0.0
      %1666 = vmatmul.mubr.f32.gmra.mxu0 %v1152
      %v1667 = vpop.f32.mrf.mxu0
      %v1668 = vadd.f32 0.0, %v1667
      %v1669 = vpop.f32.mrf.mxu0
      %1670 = vdwg.mxu0
      %v1671 = vadd.f32 %v1493, %v1593
      %v1672 = vadd.f32 %v1494, %v1598
      %v1673 = vadd.f32 %v1495, %v1603
      %v1674 = vadd.f32 %v1496, %v1608
      %v1675 = vadd.f32 %v1497, %v1613
      %v1676 = vadd.f32 %v1498, %v1618
      %v1677 = vadd.f32 %v1499, %v1623
      %v1678 = vadd.f32 %v1500, %v1628
      %v1679 = vadd.f32 %v1501, %v1633
      %v1680 = vadd.f32 %v1502, %v1638
      %v1681 = vadd.f32 %v1503, %v1643
      %v1682 = vadd.f32 %v1504, %v1648
      %v1683 = vadd.f32 %v1505, %v1653
      %v1684 = vadd.f32 %v1506, %v1658
      %v1685 = vadd.f32 %v1507, %v1663
      %v1686 = vadd.f32 %v1508, %v1668
      %v1687 = vld [vmem:[#allocation2 + $0x2] sm:$0xff]
      %v1688 = vld [vmem:[#allocation2 + $0xa] sm:$0xff]
      %v1689 = vld [vmem:[#allocation2 + $0x1a] sm:$0xff]
      %v1690 = vld [vmem:[#allocation2 + $0x22] sm:$0xff]
      %v1691 = vld [vmem:[#allocation2 + $0x32] sm:$0xff]
      %v1692 = vld [vmem:[#allocation2 + $0x3a] sm:$0xff]
      %v1693 = vld [vmem:[#allocation2 + $0x4a] sm:$0xff]
      %v1694 = vld [vmem:[#allocation2 + $0x52] sm:$0xff]
      %v1695 = vld [vmem:[#allocation2 + $0x62] sm:$0xff]
      %v1696 = vld [vmem:[#allocation2 + $0x6a] sm:$0xff]
      %v1697 = vld [vmem:[#allocation2 + $0x7a] sm:$0xff]
      %v1698 = vld [vmem:[#allocation2 + $0x82] sm:$0xff]
      %v1699 = vld [vmem:[#allocation2 + $0x92] sm:$0xff]
      %v1700 = vld [vmem:[#allocation2 + $0x9a] sm:$0xff]
      %v1701 = vld [vmem:[#allocation2 + $0xaa] sm:$0xff]
      %v1702 = vld [vmem:[#allocation2 + $0xb2] sm:$0xff]
      %v1703 = vld [vmem:[#allocation2 + $0xc2] sm:$0xff]
      %v1704 = vld [vmem:[#allocation2 + $0xca] sm:$0xff]
      %v1705 = vld [vmem:[#allocation2 + $0xda] sm:$0xff]
      %v1706 = vld [vmem:[#allocation2 + $0xe2] sm:$0xff]
      %s1707 = scalar_lea.vmem %s3, 256
      %v1708 = vld [vmem:[%s1707] sm:$0xff]
      %v1709 = vld [vmem:[%s1707 + $0x8] sm:$0xff]
      %v1710 = vld [vmem:[%s1707 + $0x10] sm:$0xff]
      %v1711 = vld [vmem:[%s1707 + $0x18] sm:$0xff]
      %v1712 = vld [vmem:[%s1707 + $0x20] sm:$0xff]
      %v1713 = vld [vmem:[%s1707 + $0x28] sm:$0xff]
      %v1714 = vld [vmem:[%s1707 + $0x30] sm:$0xff]
      %v1715 = vld [vmem:[%s1707 + $0x38] sm:$0xff]
      %v1716 = vld [vmem:[%s1707 + $0x40] sm:$0xff]
      %v1717 = vld [vmem:[%s1707 + $0x48] sm:$0xff]
      %v1718 = vld [vmem:[%s1707 + $0x50] sm:$0xff]
      %v1719 = vld [vmem:[%s1707 + $0x58] sm:$0xff]
      %v1720 = vld [vmem:[%s1707 + $0x60] sm:$0xff]
      %v1721 = vld [vmem:[%s1707 + $0x68] sm:$0xff]
      %v1722 = vld [vmem:[%s1707 + $0x70] sm:$0xff]
      %v1723 = vld [vmem:[%s1707 + $0x78] sm:$0xff]
      %1724 = vmatprep.subr.mxu0 0.0
      %1725 = vmatpush1.msra.mxu0 %v1723
      %1726 = vmatprep.subr.mxu0 0.0
      %1727 = vmatpush1.msra.mxu0 %v1722
      %1728 = vmatprep.subr.mxu0 0.0
      %1729 = vmatpush1.msra.mxu0 %v1721
      %1730 = vmatprep.subr.mxu0 0.0
      %1731 = vmatpush1.msra.mxu0 %v1720
      %1732 = vmatprep.subr.mxu0 0.0
      %1733 = vmatpush1.msra.mxu0 %v1719
      %1734 = vmatprep.subr.mxu0 0.0
      %1735 = vmatpush1.msra.mxu0 %v1718
      %1736 = vmatprep.subr.mxu0 0.0
      %1737 = vmatpush1.msra.mxu0 %v1717
      %1738 = vmatprep.subr.mxu0 0.0
      %1739 = vmatpush1.msra.mxu0 %v1716
      %1740 = vmatprep.subr.mxu0 0.0
      %1741 = vmatpush1.msra.mxu0 %v1715
      %1742 = vmatprep.subr.mxu0 0.0
      %1743 = vmatpush1.msra.mxu0 %v1714
      %1744 = vmatprep.subr.mxu0 0.0
      %1745 = vmatpush1.msra.mxu0 %v1713
      %1746 = vmatprep.subr.mxu0 0.0
      %1747 = vmatpush1.msra.mxu0 %v1712
      %1748 = vmatprep.subr.mxu0 0.0
      %1749 = vmatpush1.msra.mxu0 %v1711
      %1750 = vmatprep.subr.mxu0 0.0
      %1751 = vmatpush1.msra.mxu0 %v1710
      %1752 = vmatprep.subr.mxu0 0.0
      %1753 = vmatpush1.msra.mxu0 %v1709
      %1754 = vmatprep.subr.mxu0 0.0
      %1755 = vmatpush1.msra.mxu0 %v1708
      %1756 = vmatprep.subr.mxu0 0.0
      %1757 = vmatpush2.msra.mxu0 0.0
      %1758 = vmatprep.subr.mxu0 0.0
      %1759 = vmatpush2.msra.mxu0 0.0
      %1760 = vmatprep.subr.mxu0 0.0
      %1761 = vmatpush2.msra.mxu0 0.0
      %1762 = vmatprep.subr.mxu0 0.0
      %1763 = vmatpush2.msra.mxu0 0.0
      %1764 = vmatprep.subr.mxu0 0.0
      %1765 = vmatpush2.msra.mxu0 0.0
      %1766 = vmatprep.subr.mxu0 0.0
      %1767 = vmatpush2.msra.mxu0 0.0
      %1768 = vmatprep.subr.mxu0 0.0
      %1769 = vmatpush2.msra.mxu0 0.0
      %1770 = vmatprep.subr.mxu0 0.0
      %1771 = vmatpush2.msra.mxu0 0.0
      %1772 = vmatprep.subr.mxu0 0.0
      %1773 = vmatpush2.msra.mxu0 0.0
      %1774 = vmatprep.subr.mxu0 0.0
      %1775 = vmatpush2.msra.mxu0 0.0
      %1776 = vmatprep.subr.mxu0 0.0
      %1777 = vmatpush2.msra.mxu0 0.0
      %1778 = vmatprep.subr.mxu0 0.0
      %1779 = vmatpush2.msra.mxu0 0.0
      %1780 = vmatprep.subr.mxu0 0.0
      %1781 = vmatpush2.msra.mxu0 0.0
      %1782 = vmatprep.subr.mxu0 0.0
      %1783 = vmatpush2.msra.mxu0 0.0
      %1784 = vmatprep.subr.mxu0 0.0
      %1785 = vmatpush2.msra.mxu0 0.0
      %1786 = vmatprep.subr.mxu0 0.0
      %1787 = vmatpush2.msra.mxu0 0.0
      %1788 = vmatprep.mubr.f32.mxu0 0.0
      %1789 = vmatmul.mubr.f32.gmra.mxu0 %v1687
      %v1790 = vpop.f32.mrf.mxu0
      %v1791 = vadd.f32 0.0, %v1790
      %v1792 = vpop.f32.mrf.mxu0
      %1793 = vmatprep.mubr.f32.mxu0 0.0
      %1794 = vmatmul.mubr.f32.gmra.mxu0 %v1688
      %v1795 = vpop.f32.mrf.mxu0
      %v1796 = vadd.f32 0.0, %v1795
      %v1797 = vpop.f32.mrf.mxu0
      %1798 = vmatprep.mubr.f32.mxu0 0.0
      %1799 = vmatmul.mubr.f32.gmra.mxu0 %v1689
      %v1800 = vpop.f32.mrf.mxu0
      %v1801 = vadd.f32 0.0, %v1800
      %v1802 = vpop.f32.mrf.mxu0
      %1803 = vmatprep.mubr.f32.mxu0 0.0
      %1804 = vmatmul.mubr.f32.gmra.mxu0 %v1690
      %v1805 = vpop.f32.mrf.mxu0
      %v1806 = vadd.f32 0.0, %v1805
      %v1807 = vpop.f32.mrf.mxu0
      %1808 = vmatprep.mubr.f32.mxu0 0.0
      %1809 = vmatmul.mubr.f32.gmra.mxu0 %v1691
      %v1810 = vpop.f32.mrf.mxu0
      %v1811 = vadd.f32 0.0, %v1810
      %v1812 = vpop.f32.mrf.mxu0
      %1813 = vmatprep.mubr.f32.mxu0 0.0
      %1814 = vmatmul.mubr.f32.gmra.mxu0 %v1692
      %v1815 = vpop.f32.mrf.mxu0
      %v1816 = vadd.f32 0.0, %v1815
      %v1817 = vpop.f32.mrf.mxu0
      %1818 = vmatprep.mubr.f32.mxu0 0.0
      %1819 = vmatmul.mubr.f32.gmra.mxu0 %v1693
      %v1820 = vpop.f32.mrf.mxu0
      %v1821 = vadd.f32 0.0, %v1820
      %v1822 = vpop.f32.mrf.mxu0
      %1823 = vmatprep.mubr.f32.mxu0 0.0
      %1824 = vmatmul.mubr.f32.gmra.mxu0 %v1694
      %v1825 = vpop.f32.mrf.mxu0
      %v1826 = vadd.f32 0.0, %v1825
      %v1827 = vpop.f32.mrf.mxu0
      %1828 = vmatprep.mubr.f32.mxu0 0.0
      %1829 = vmatmul.mubr.f32.gmra.mxu0 %v1695
      %v1830 = vpop.f32.mrf.mxu0
      %v1831 = vadd.f32 0.0, %v1830
      %v1832 = vpop.f32.mrf.mxu0
      %1833 = vmatprep.mubr.f32.mxu0 0.0
      %1834 = vmatmul.mubr.f32.gmra.mxu0 %v1696
      %v1835 = vpop.f32.mrf.mxu0
      %v1836 = vadd.f32 0.0, %v1835
      %v1837 = vpop.f32.mrf.mxu0
      %1838 = vmatprep.mubr.f32.mxu0 0.0
      %1839 = vmatmul.mubr.f32.gmra.mxu0 %v1697
      %v1840 = vpop.f32.mrf.mxu0
      %v1841 = vadd.f32 0.0, %v1840
      %v1842 = vpop.f32.mrf.mxu0
      %1843 = vmatprep.mubr.f32.mxu0 0.0
      %1844 = vmatmul.mubr.f32.gmra.mxu0 %v1698
      %v1845 = vpop.f32.mrf.mxu0
      %v1846 = vadd.f32 0.0, %v1845
      %v1847 = vpop.f32.mrf.mxu0
      %1848 = vmatprep.mubr.f32.mxu0 0.0
      %1849 = vmatmul.mubr.f32.gmra.mxu0 %v1699
      %v1850 = vpop.f32.mrf.mxu0
      %v1851 = vadd.f32 0.0, %v1850
      %v1852 = vpop.f32.mrf.mxu0
      %1853 = vmatprep.mubr.f32.mxu0 0.0
      %1854 = vmatmul.mubr.f32.gmra.mxu0 %v1700
      %v1855 = vpop.f32.mrf.mxu0
      %v1856 = vadd.f32 0.0, %v1855
      %v1857 = vpop.f32.mrf.mxu0
      %1858 = vmatprep.mubr.f32.mxu0 0.0
      %1859 = vmatmul.mubr.f32.gmra.mxu0 %v1701
      %v1860 = vpop.f32.mrf.mxu0
      %v1861 = vadd.f32 0.0, %v1860
      %v1862 = vpop.f32.mrf.mxu0
      %1863 = vmatprep.mubr.f32.mxu0 0.0
      %1864 = vmatmul.mubr.f32.gmra.mxu0 %v1702
      %v1865 = vpop.f32.mrf.mxu0
      %v1866 = vadd.f32 0.0, %v1865
      %v1867 = vpop.f32.mrf.mxu0
      %1868 = vdwg.mxu0
      %v1869 = vadd.f32 %v1671, %v1791
      %v1870 = vadd.f32 %v1672, %v1796
      %v1871 = vadd.f32 %v1673, %v1801
      %v1872 = vadd.f32 %v1674, %v1806
      %v1873 = vadd.f32 %v1675, %v1811
      %v1874 = vadd.f32 %v1676, %v1816
      %v1875 = vadd.f32 %v1677, %v1821
      %v1876 = vadd.f32 %v1678, %v1826
      %v1877 = vadd.f32 %v1679, %v1831
      %v1878 = vadd.f32 %v1680, %v1836
      %v1879 = vadd.f32 %v1681, %v1841
      %v1880 = vadd.f32 %v1682, %v1846
      %v1881 = vadd.f32 %v1683, %v1851
      %v1882 = vadd.f32 %v1684, %v1856
      %v1883 = vadd.f32 %v1685, %v1861
      %v1884 = vadd.f32 %v1686, %v1866
      %s1885 = scalar_lea.vmem %s3, 640
      %v1886 = vld [vmem:[%s1885] sm:$0xff]
      %v1887 = vld [vmem:[%s1885 + $0x8] sm:$0xff]
      %v1888 = vld [vmem:[%s1885 + $0x10] sm:$0xff]
      %v1889 = vld [vmem:[%s1885 + $0x18] sm:$0xff]
      %v1890 = vld [vmem:[%s1885 + $0x20] sm:$0xff]
      %v1891 = vld [vmem:[%s1885 + $0x28] sm:$0xff]
      %v1892 = vld [vmem:[%s1885 + $0x30] sm:$0xff]
      %v1893 = vld [vmem:[%s1885 + $0x38] sm:$0xff]
      %v1894 = vld [vmem:[%s1885 + $0x40] sm:$0xff]
      %v1895 = vld [vmem:[%s1885 + $0x48] sm:$0xff]
      %v1896 = vld [vmem:[%s1885 + $0x50] sm:$0xff]
      %v1897 = vld [vmem:[%s1885 + $0x58] sm:$0xff]
      %v1898 = vld [vmem:[%s1885 + $0x60] sm:$0xff]
      %v1899 = vld [vmem:[%s1885 + $0x68] sm:$0xff]
      %v1900 = vld [vmem:[%s1885 + $0x70] sm:$0xff]
      %v1901 = vld [vmem:[%s1885 + $0x78] sm:$0xff]
      %1902 = vmatprep.subr.mxu0 0.0
      %1903 = vmatpush1.msra.mxu0 %v1901
      %1904 = vmatprep.subr.mxu0 0.0
      %1905 = vmatpush1.msra.mxu0 %v1900
      %1906 = vmatprep.subr.mxu0 0.0
      %1907 = vmatpush1.msra.mxu0 %v1899
      %1908 = vmatprep.subr.mxu0 0.0
      %1909 = vmatpush1.msra.mxu0 %v1898
      %1910 = vmatprep.subr.mxu0 0.0
      %1911 = vmatpush1.msra.mxu0 %v1897
      %1912 = vmatprep.subr.mxu0 0.0
      %1913 = vmatpush1.msra.mxu0 %v1896
      %1914 = vmatprep.subr.mxu0 0.0
      %1915 = vmatpush1.msra.mxu0 %v1895
      %1916 = vmatprep.subr.mxu0 0.0
      %1917 = vmatpush1.msra.mxu0 %v1894
      %1918 = vmatprep.subr.mxu0 0.0
      %1919 = vmatpush1.msra.mxu0 %v1893
      %1920 = vmatprep.subr.mxu0 0.0
      %1921 = vmatpush1.msra.mxu0 %v1892
      %1922 = vmatprep.subr.mxu0 0.0
      %1923 = vmatpush1.msra.mxu0 %v1891
      %1924 = vmatprep.subr.mxu0 0.0
      %1925 = vmatpush1.msra.mxu0 %v1890
      %1926 = vmatprep.subr.mxu0 0.0
      %1927 = vmatpush1.msra.mxu0 %v1889
      %1928 = vmatprep.subr.mxu0 0.0
      %1929 = vmatpush1.msra.mxu0 %v1888
      %1930 = vmatprep.subr.mxu0 0.0
      %1931 = vmatpush1.msra.mxu0 %v1887
      %1932 = vmatprep.subr.mxu0 0.0
      %1933 = vmatpush1.msra.mxu0 %v1886
      %1934 = vmatprep.subr.mxu0 0.0
      %1935 = vmatpush2.msra.mxu0 0.0
      %1936 = vmatprep.subr.mxu0 0.0
      %1937 = vmatpush2.msra.mxu0 0.0
      %1938 = vmatprep.subr.mxu0 0.0
      %1939 = vmatpush2.msra.mxu0 0.0
      %1940 = vmatprep.subr.mxu0 0.0
      %1941 = vmatpush2.msra.mxu0 0.0
      %1942 = vmatprep.subr.mxu0 0.0
      %1943 = vmatpush2.msra.mxu0 0.0
      %1944 = vmatprep.subr.mxu0 0.0
      %1945 = vmatpush2.msra.mxu0 0.0
      %1946 = vmatprep.subr.mxu0 0.0
      %1947 = vmatpush2.msra.mxu0 0.0
      %1948 = vmatprep.subr.mxu0 0.0
      %1949 = vmatpush2.msra.mxu0 0.0
      %1950 = vmatprep.subr.mxu0 0.0
      %1951 = vmatpush2.msra.mxu0 0.0
      %1952 = vmatprep.subr.mxu0 0.0
      %1953 = vmatpush2.msra.mxu0 0.0
      %1954 = vmatprep.subr.mxu0 0.0
      %1955 = vmatpush2.msra.mxu0 0.0
      %1956 = vmatprep.subr.mxu0 0.0
      %1957 = vmatpush2.msra.mxu0 0.0
      %1958 = vmatprep.subr.mxu0 0.0
      %1959 = vmatpush2.msra.mxu0 0.0
      %1960 = vmatprep.subr.mxu0 0.0
      %1961 = vmatpush2.msra.mxu0 0.0
      %1962 = vmatprep.subr.mxu0 0.0
      %1963 = vmatpush2.msra.mxu0 0.0
      %1964 = vmatprep.subr.mxu0 0.0
      %1965 = vmatpush2.msra.mxu0 0.0
      %1966 = vmatprep.mubr.f32.mxu0 0.0
      %1967 = vmatmul.mubr.f32.gmra.mxu0 %v1689
      %v1968 = vpop.f32.mrf.mxu0
      %v1969 = vadd.f32 0.0, %v1968
      %v1970 = vpop.f32.mrf.mxu0
      %1971 = vmatprep.mubr.f32.mxu0 0.0
      %1972 = vmatmul.mubr.f32.gmra.mxu0 %v1690
      %v1973 = vpop.f32.mrf.mxu0
      %v1974 = vadd.f32 0.0, %v1973
      %v1975 = vpop.f32.mrf.mxu0
      %1976 = vmatprep.mubr.f32.mxu0 0.0
      %1977 = vmatmul.mubr.f32.gmra.mxu0 %v1691
      %v1978 = vpop.f32.mrf.mxu0
      %v1979 = vadd.f32 0.0, %v1978
      %v1980 = vpop.f32.mrf.mxu0
      %1981 = vmatprep.mubr.f32.mxu0 0.0
      %1982 = vmatmul.mubr.f32.gmra.mxu0 %v1692
      %v1983 = vpop.f32.mrf.mxu0
      %v1984 = vadd.f32 0.0, %v1983
      %v1985 = vpop.f32.mrf.mxu0
      %1986 = vmatprep.mubr.f32.mxu0 0.0
      %1987 = vmatmul.mubr.f32.gmra.mxu0 %v1693
      %v1988 = vpop.f32.mrf.mxu0
      %v1989 = vadd.f32 0.0, %v1988
      %v1990 = vpop.f32.mrf.mxu0
      %1991 = vmatprep.mubr.f32.mxu0 0.0
      %1992 = vmatmul.mubr.f32.gmra.mxu0 %v1694
      %v1993 = vpop.f32.mrf.mxu0
      %v1994 = vadd.f32 0.0, %v1993
      %v1995 = vpop.f32.mrf.mxu0
      %1996 = vmatprep.mubr.f32.mxu0 0.0
      %1997 = vmatmul.mubr.f32.gmra.mxu0 %v1695
      %v1998 = vpop.f32.mrf.mxu0
      %v1999 = vadd.f32 0.0, %v1998
      %v2000 = vpop.f32.mrf.mxu0
      %2001 = vmatprep.mubr.f32.mxu0 0.0
      %2002 = vmatmul.mubr.f32.gmra.mxu0 %v1696
      %v2003 = vpop.f32.mrf.mxu0
      %v2004 = vadd.f32 0.0, %v2003
      %v2005 = vpop.f32.mrf.mxu0
      %2006 = vmatprep.mubr.f32.mxu0 0.0
      %2007 = vmatmul.mubr.f32.gmra.mxu0 %v1697
      %v2008 = vpop.f32.mrf.mxu0
      %v2009 = vadd.f32 0.0, %v2008
      %v2010 = vpop.f32.mrf.mxu0
      %2011 = vmatprep.mubr.f32.mxu0 0.0
      %2012 = vmatmul.mubr.f32.gmra.mxu0 %v1698
      %v2013 = vpop.f32.mrf.mxu0
      %v2014 = vadd.f32 0.0, %v2013
      %v2015 = vpop.f32.mrf.mxu0
      %2016 = vmatprep.mubr.f32.mxu0 0.0
      %2017 = vmatmul.mubr.f32.gmra.mxu0 %v1699
      %v2018 = vpop.f32.mrf.mxu0
      %v2019 = vadd.f32 0.0, %v2018
      %v2020 = vpop.f32.mrf.mxu0
      %2021 = vmatprep.mubr.f32.mxu0 0.0
      %2022 = vmatmul.mubr.f32.gmra.mxu0 %v1700
      %v2023 = vpop.f32.mrf.mxu0
      %v2024 = vadd.f32 0.0, %v2023
      %v2025 = vpop.f32.mrf.mxu0
      %2026 = vmatprep.mubr.f32.mxu0 0.0
      %2027 = vmatmul.mubr.f32.gmra.mxu0 %v1701
      %v2028 = vpop.f32.mrf.mxu0
      %v2029 = vadd.f32 0.0, %v2028
      %v2030 = vpop.f32.mrf.mxu0
      %2031 = vmatprep.mubr.f32.mxu0 0.0
      %2032 = vmatmul.mubr.f32.gmra.mxu0 %v1702
      %v2033 = vpop.f32.mrf.mxu0
      %v2034 = vadd.f32 0.0, %v2033
      %v2035 = vpop.f32.mrf.mxu0
      %2036 = vmatprep.mubr.f32.mxu0 0.0
      %2037 = vmatmul.mubr.f32.gmra.mxu0 %v1703
      %v2038 = vpop.f32.mrf.mxu0
      %v2039 = vadd.f32 0.0, %v2038
      %v2040 = vpop.f32.mrf.mxu0
      %2041 = vmatprep.mubr.f32.mxu0 0.0
      %2042 = vmatmul.mubr.f32.gmra.mxu0 %v1704
      %v2043 = vpop.f32.mrf.mxu0
      %v2044 = vadd.f32 0.0, %v2043
      %v2045 = vpop.f32.mrf.mxu0
      %2046 = vdwg.mxu0
      %v2047 = vadd.f32 %v1869, %v1969
      %v2048 = vadd.f32 %v1870, %v1974
      %v2049 = vadd.f32 %v1871, %v1979
      %v2050 = vadd.f32 %v1872, %v1984
      %v2051 = vadd.f32 %v1873, %v1989
      %v2052 = vadd.f32 %v1874, %v1994
      %v2053 = vadd.f32 %v1875, %v1999
      %v2054 = vadd.f32 %v1876, %v2004
      %v2055 = vadd.f32 %v1877, %v2009
      %v2056 = vadd.f32 %v1878, %v2014
      %v2057 = vadd.f32 %v1879, %v2019
      %v2058 = vadd.f32 %v1880, %v2024
      %v2059 = vadd.f32 %v1881, %v2029
      %v2060 = vadd.f32 %v1882, %v2034
      %v2061 = vadd.f32 %v1883, %v2039
      %v2062 = vadd.f32 %v1884, %v2044
      %s2063 = scalar_lea.vmem %s3, 1024
      %v2064 = vld [vmem:[%s2063] sm:$0xff]
      %v2065 = vld [vmem:[%s2063 + $0x8] sm:$0xff]
      %v2066 = vld [vmem:[%s2063 + $0x10] sm:$0xff]
      %v2067 = vld [vmem:[%s2063 + $0x18] sm:$0xff]
      %v2068 = vld [vmem:[%s2063 + $0x20] sm:$0xff]
      %v2069 = vld [vmem:[%s2063 + $0x28] sm:$0xff]
      %v2070 = vld [vmem:[%s2063 + $0x30] sm:$0xff]
      %v2071 = vld [vmem:[%s2063 + $0x38] sm:$0xff]
      %v2072 = vld [vmem:[%s2063 + $0x40] sm:$0xff]
      %v2073 = vld [vmem:[%s2063 + $0x48] sm:$0xff]
      %v2074 = vld [vmem:[%s2063 + $0x50] sm:$0xff]
      %v2075 = vld [vmem:[%s2063 + $0x58] sm:$0xff]
      %v2076 = vld [vmem:[%s2063 + $0x60] sm:$0xff]
      %v2077 = vld [vmem:[%s2063 + $0x68] sm:$0xff]
      %v2078 = vld [vmem:[%s2063 + $0x70] sm:$0xff]
      %v2079 = vld [vmem:[%s2063 + $0x78] sm:$0xff]
      %2080 = vmatprep.subr.mxu0 0.0
      %2081 = vmatpush1.msra.mxu0 %v2079
      %2082 = vmatprep.subr.mxu0 0.0
      %2083 = vmatpush1.msra.mxu0 %v2078
      %2084 = vmatprep.subr.mxu0 0.0
      %2085 = vmatpush1.msra.mxu0 %v2077
      %2086 = vmatprep.subr.mxu0 0.0
      %2087 = vmatpush1.msra.mxu0 %v2076
      %2088 = vmatprep.subr.mxu0 0.0
      %2089 = vmatpush1.msra.mxu0 %v2075
      %2090 = vmatprep.subr.mxu0 0.0
      %2091 = vmatpush1.msra.mxu0 %v2074
      %2092 = vmatprep.subr.mxu0 0.0
      %2093 = vmatpush1.msra.mxu0 %v2073
      %2094 = vmatprep.subr.mxu0 0.0
      %2095 = vmatpush1.msra.mxu0 %v2072
      %2096 = vmatprep.subr.mxu0 0.0
      %2097 = vmatpush1.msra.mxu0 %v2071
      %2098 = vmatprep.subr.mxu0 0.0
      %2099 = vmatpush1.msra.mxu0 %v2070
      %2100 = vmatprep.subr.mxu0 0.0
      %2101 = vmatpush1.msra.mxu0 %v2069
      %2102 = vmatprep.subr.mxu0 0.0
      %2103 = vmatpush1.msra.mxu0 %v2068
      %2104 = vmatprep.subr.mxu0 0.0
      %2105 = vmatpush1.msra.mxu0 %v2067
      %2106 = vmatprep.subr.mxu0 0.0
      %2107 = vmatpush1.msra.mxu0 %v2066
      %2108 = vmatprep.subr.mxu0 0.0
      %2109 = vmatpush1.msra.mxu0 %v2065
      %2110 = vmatprep.subr.mxu0 0.0
      %2111 = vmatpush1.msra.mxu0 %v2064
      %2112 = vmatprep.subr.mxu0 0.0
      %2113 = vmatpush2.msra.mxu0 0.0
      %2114 = vmatprep.subr.mxu0 0.0
      %2115 = vmatpush2.msra.mxu0 0.0
      %2116 = vmatprep.subr.mxu0 0.0
      %2117 = vmatpush2.msra.mxu0 0.0
      %2118 = vmatprep.subr.mxu0 0.0
      %2119 = vmatpush2.msra.mxu0 0.0
      %2120 = vmatprep.subr.mxu0 0.0
      %2121 = vmatpush2.msra.mxu0 0.0
      %2122 = vmatprep.subr.mxu0 0.0
      %2123 = vmatpush2.msra.mxu0 0.0
      %2124 = vmatprep.subr.mxu0 0.0
      %2125 = vmatpush2.msra.mxu0 0.0
      %2126 = vmatprep.subr.mxu0 0.0
      %2127 = vmatpush2.msra.mxu0 0.0
      %2128 = vmatprep.subr.mxu0 0.0
      %2129 = vmatpush2.msra.mxu0 0.0
      %2130 = vmatprep.subr.mxu0 0.0
      %2131 = vmatpush2.msra.mxu0 0.0
      %2132 = vmatprep.subr.mxu0 0.0
      %2133 = vmatpush2.msra.mxu0 0.0
      %2134 = vmatprep.subr.mxu0 0.0
      %2135 = vmatpush2.msra.mxu0 0.0
      %2136 = vmatprep.subr.mxu0 0.0
      %2137 = vmatpush2.msra.mxu0 0.0
      %2138 = vmatprep.subr.mxu0 0.0
      %2139 = vmatpush2.msra.mxu0 0.0
      %2140 = vmatprep.subr.mxu0 0.0
      %2141 = vmatpush2.msra.mxu0 0.0
      %2142 = vmatprep.subr.mxu0 0.0
      %2143 = vmatpush2.msra.mxu0 0.0
      %2144 = vmatprep.mubr.f32.mxu0 0.0
      %2145 = vmatmul.mubr.f32.gmra.mxu0 %v1691
      %v2146 = vpop.f32.mrf.mxu0
      %v2147 = vadd.f32 0.0, %v2146
      %v2148 = vpop.f32.mrf.mxu0
      %2149 = vmatprep.mubr.f32.mxu0 0.0
      %2150 = vmatmul.mubr.f32.gmra.mxu0 %v1692
      %v2151 = vpop.f32.mrf.mxu0
      %v2152 = vadd.f32 0.0, %v2151
      %v2153 = vpop.f32.mrf.mxu0
      %2154 = vmatprep.mubr.f32.mxu0 0.0
      %2155 = vmatmul.mubr.f32.gmra.mxu0 %v1693
      %v2156 = vpop.f32.mrf.mxu0
      %v2157 = vadd.f32 0.0, %v2156
      %v2158 = vpop.f32.mrf.mxu0
      %2159 = vmatprep.mubr.f32.mxu0 0.0
      %2160 = vmatmul.mubr.f32.gmra.mxu0 %v1694
      %v2161 = vpop.f32.mrf.mxu0
      %v2162 = vadd.f32 0.0, %v2161
      %v2163 = vpop.f32.mrf.mxu0
      %2164 = vmatprep.mubr.f32.mxu0 0.0
      %2165 = vmatmul.mubr.f32.gmra.mxu0 %v1695
      %v2166 = vpop.f32.mrf.mxu0
      %v2167 = vadd.f32 0.0, %v2166
      %v2168 = vpop.f32.mrf.mxu0
      %2169 = vmatprep.mubr.f32.mxu0 0.0
      %2170 = vmatmul.mubr.f32.gmra.mxu0 %v1696
      %v2171 = vpop.f32.mrf.mxu0
      %v2172 = vadd.f32 0.0, %v2171
      %v2173 = vpop.f32.mrf.mxu0
      %2174 = vmatprep.mubr.f32.mxu0 0.0
      %2175 = vmatmul.mubr.f32.gmra.mxu0 %v1697
      %v2176 = vpop.f32.mrf.mxu0
      %v2177 = vadd.f32 0.0, %v2176
      %v2178 = vpop.f32.mrf.mxu0
      %2179 = vmatprep.mubr.f32.mxu0 0.0
      %2180 = vmatmul.mubr.f32.gmra.mxu0 %v1698
      %v2181 = vpop.f32.mrf.mxu0
      %v2182 = vadd.f32 0.0, %v2181
      %v2183 = vpop.f32.mrf.mxu0
      %2184 = vmatprep.mubr.f32.mxu0 0.0
      %2185 = vmatmul.mubr.f32.gmra.mxu0 %v1699
      %v2186 = vpop.f32.mrf.mxu0
      %v2187 = vadd.f32 0.0, %v2186
      %v2188 = vpop.f32.mrf.mxu0
      %2189 = vmatprep.mubr.f32.mxu0 0.0
      %2190 = vmatmul.mubr.f32.gmra.mxu0 %v1700
      %v2191 = vpop.f32.mrf.mxu0
      %v2192 = vadd.f32 0.0, %v2191
      %v2193 = vpop.f32.mrf.mxu0
      %2194 = vmatprep.mubr.f32.mxu0 0.0
      %2195 = vmatmul.mubr.f32.gmra.mxu0 %v1701
      %v2196 = vpop.f32.mrf.mxu0
      %v2197 = vadd.f32 0.0, %v2196
      %v2198 = vpop.f32.mrf.mxu0
      %2199 = vmatprep.mubr.f32.mxu0 0.0
      %2200 = vmatmul.mubr.f32.gmra.mxu0 %v1702
      %v2201 = vpop.f32.mrf.mxu0
      %v2202 = vadd.f32 0.0, %v2201
      %v2203 = vpop.f32.mrf.mxu0
      %2204 = vmatprep.mubr.f32.mxu0 0.0
      %2205 = vmatmul.mubr.f32.gmra.mxu0 %v1703
      %v2206 = vpop.f32.mrf.mxu0
      %v2207 = vadd.f32 0.0, %v2206
      %v2208 = vpop.f32.mrf.mxu0
      %2209 = vmatprep.mubr.f32.mxu0 0.0
      %2210 = vmatmul.mubr.f32.gmra.mxu0 %v1704
      %v2211 = vpop.f32.mrf.mxu0
      %v2212 = vadd.f32 0.0, %v2211
      %v2213 = vpop.f32.mrf.mxu0
      %2214 = vmatprep.mubr.f32.mxu0 0.0
      %2215 = vmatmul.mubr.f32.gmra.mxu0 %v1705
      %v2216 = vpop.f32.mrf.mxu0
      %v2217 = vadd.f32 0.0, %v2216
      %v2218 = vpop.f32.mrf.mxu0
      %2219 = vmatprep.mubr.f32.mxu0 0.0
      %2220 = vmatmul.mubr.f32.gmra.mxu0 %v1706
      %v2221 = vpop.f32.mrf.mxu0
      %v2222 = vadd.f32 0.0, %v2221
      %v2223 = vpop.f32.mrf.mxu0
      %2224 = vdwg.mxu0
      %v2225 = vadd.f32 %v2047, %v2147
      %v2226 = vadd.f32 %v2048, %v2152
      %v2227 = vadd.f32 %v2049, %v2157
      %v2228 = vadd.f32 %v2050, %v2162
      %v2229 = vadd.f32 %v2051, %v2167
      %v2230 = vadd.f32 %v2052, %v2172
      %v2231 = vadd.f32 %v2053, %v2177
      %v2232 = vadd.f32 %v2054, %v2182
      %v2233 = vadd.f32 %v2055, %v2187
      %v2234 = vadd.f32 %v2056, %v2192
      %v2235 = vadd.f32 %v2057, %v2197
      %v2236 = vadd.f32 %v2058, %v2202
      %v2237 = vadd.f32 %v2059, %v2207
      %v2238 = vadd.f32 %v2060, %v2212
      %v2239 = vadd.f32 %v2061, %v2217
      %v2240 = vadd.f32 %v2062, %v2222
      %v2241 = vld [vmem:[%s4] sm:$0x1]
      %v2243 = vlaneseq
      %v2244 = vshrl.u32 %v2243, 7
      %v2245 = vsub.s32 0, %v2244
      %v2246 = vrot.slane %v2241, %v2245
      %v2248 = vadd.f32 %v2225, %v2246
      %v2249 = vadd.f32 %v2226, %v2246
      %v2250 = vadd.f32 %v2227, %v2246
      %v2251 = vadd.f32 %v2228, %v2246
      %v2252 = vadd.f32 %v2229, %v2246
      %v2253 = vadd.f32 %v2230, %v2246
      %v2254 = vadd.f32 %v2231, %v2246
      %v2255 = vadd.f32 %v2232, %v2246
      %v2256 = vadd.f32 %v2233, %v2246
      %v2257 = vadd.f32 %v2234, %v2246
      %v2258 = vadd.f32 %v2235, %v2246
      %v2259 = vadd.f32 %v2236, %v2246
      %v2260 = vadd.f32 %v2237, %v2246
      %v2261 = vadd.f32 %v2238, %v2246
      %v2262 = vadd.f32 %v2239, %v2246
      %v2263 = vadd.f32 %v2240, %v2246
      %2264 = vst [vmem:[%s522] sm:$0xff] %v2248
      %2265 = vst [vmem:[%s522 + $0x8] sm:$0xff] %v2249
      %2266 = vst [vmem:[%s522 + $0x10] sm:$0xff] %v2250
      %2267 = vst [vmem:[%s522 + $0x18] sm:$0xff] %v2251
      %2268 = vst [vmem:[%s522 + $0x20] sm:$0xff] %v2252
      %2269 = vst [vmem:[%s522 + $0x28] sm:$0xff] %v2253
      %2270 = vst [vmem:[%s522 + $0x30] sm:$0xff] %v2254
      %2271 = vst [vmem:[%s522 + $0x38] sm:$0xff] %v2255
      %2272 = vst [vmem:[%s522 + $0x40] sm:$0xff] %v2256
      %2273 = vst [vmem:[%s522 + $0x48] sm:$0xff] %v2257
      %2274 = vst [vmem:[%s522 + $0x50] sm:$0xff] %v2258
      %2275 = vst [vmem:[%s522 + $0x58] sm:$0xff] %v2259
      %2276 = vst [vmem:[%s522 + $0x60] sm:$0xff] %v2260
      %2277 = vst [vmem:[%s522 + $0x68] sm:$0xff] %v2261
      %2278 = vst [vmem:[%s522 + $0x70] sm:$0xff] %v2262
      %2279 = vst [vmem:[%s522 + $0x78] sm:$0xff] %v2263
      %v2280 = vadd.f32 %v2248, %v2249
      %v2281 = vadd.f32 %v2280, %v2250
      %v2282 = vadd.f32 %v2281, %v2251
      %v2283 = vadd.f32 %v2282, %v2252
      %v2284 = vadd.f32 %v2283, %v2253
      %v2285 = vadd.f32 %v2284, %v2254
      %v2286 = vadd.f32 %v2285, %v2255
      %v2287 = vadd.f32 %v2286, %v2256
      %v2288 = vadd.f32 %v2287, %v2257
      %v2289 = vadd.f32 %v2288, %v2258
      %v2290 = vadd.f32 %v2289, %v2259
      %v2291 = vadd.f32 %v2290, %v2260
      %v2292 = vadd.f32 %v2291, %v2261
      %v2293 = vadd.f32 %v2292, %v2262
      %v2294 = vadd.f32 %v2293, %v2263
      %v2295 = vrot.slane %v2294, 4
      %v2296 = vadd.f32 %v2294, %v2295
      %v2297 = vrot.slane %v2296, 2
      %v2298 = vadd.f32 %v2296, %v2297
      %v2299 = vrot.slane %v2298, 1
      %v2300 = vadd.f32 %v2298, %v2299
      %2301 = vst [vmem:[%s530] sm:$0x1] %v2300
      %v2302 = vmul.f32 %v2248, %v2248
      %v2303 = vmul.f32 %v2249, %v2249
      %v2304 = vmul.f32 %v2250, %v2250
      %v2305 = vmul.f32 %v2251, %v2251
      %v2306 = vmul.f32 %v2252, %v2252
      %v2307 = vmul.f32 %v2253, %v2253
      %v2308 = vmul.f32 %v2254, %v2254
      %v2309 = vmul.f32 %v2255, %v2255
      %v2310 = vmul.f32 %v2256, %v2256
      %v2311 = vmul.f32 %v2257, %v2257
      %v2312 = vmul.f32 %v2258, %v2258
      %v2313 = vmul.f32 %v2259, %v2259
      %v2314 = vmul.f32 %v2260, %v2260
      %v2315 = vmul.f32 %v2261, %v2261
      %v2316 = vmul.f32 %v2262, %v2262
      %v2317 = vmul.f32 %v2263, %v2263
      %v2318 = vadd.f32 %v2302, %v2303
      %v2319 = vadd.f32 %v2318, %v2304
      %v2320 = vadd.f32 %v2319, %v2305
      %v2321 = vadd.f32 %v2320, %v2306
      %v2322 = vadd.f32 %v2321, %v2307
      %v2323 = vadd.f32 %v2322, %v2308
      %v2324 = vadd.f32 %v2323, %v2309
      %v2325 = vadd.f32 %v2324, %v2310
      %v2326 = vadd.f32 %v2325, %v2311
      %v2327 = vadd.f32 %v2326, %v2312
      %v2328 = vadd.f32 %v2327, %v2313
      %v2329 = vadd.f32 %v2328, %v2314
      %v2330 = vadd.f32 %v2329, %v2315
      %v2331 = vadd.f32 %v2330, %v2316
      %v2332 = vadd.f32 %v2331, %v2317
      %v2333 = vrot.slane %v2332, 4
      %v2334 = vadd.f32 %v2332, %v2333
      %v2335 = vrot.slane %v2334, 2
      %v2336 = vadd.f32 %v2334, %v2335
      %v2337 = vrot.slane %v2336, 1
      %v2338 = vadd.f32 %v2336, %v2337
      %2339 = vst [vmem:[%s537] sm:$0x1] %v2338
      %s2340 = smul.u32 8, %s26
      %p2341 = scmp.lt.s32.totalorder %s25, 1
      %s2342 = scalar_select %p2341, %s25, 1
      %p2343 = scmp.lt.s32.totalorder %s2340, 15
      %s2344 = scalar_select %p2343, %s2340, 15
      %s2345 = smul.addr %s2344, 2
      %s2346 = smul.addr %s2342, 32
      %s2347 = sadd.s32 %s2345, %s2346
      %s2348 = smul.addr %s2347, 8
      %s2349 = scalar_lea.vmem %s7, %s2348
      %p2350 = scmp.lt.s32.totalorder %s25, 1
      %s2351 = scalar_select %p2350, %s25, 1
      %p2352 = scmp.lt.s32.totalorder %s26, 1
      %s2353 = scalar_select %p2352, %s26, 1
      %s2354 = smul.addr %s2351, 2
      %s2355 = sadd.s32 %s2353, %s2354
      %s2356 = scalar_lea.vmem %s8, %s2355
      %p2357 = scmp.lt.s32.totalorder %s25, 1
      %s2358 = scalar_select %p2357, %s25, 1
      %p2359 = scmp.lt.s32.totalorder %s26, 1
      %s2360 = scalar_select %p2359, %s26, 1
      %s2361 = smul.addr %s2358, 2
      %s2362 = sadd.s32 %s2360, %s2361
      %s2363 = scalar_lea.vmem %s9, %s2362
      // Predicated region
      $region49: #{unet_double_conv_block.3} parent=47 // pred_check
        %p2364 = pneg %p237
      $region50: #{unet_double_conv_block.3} parent=47 // pred_check_branch
        %2366 = sbr.rel (%p2364) target = $region52
      $region51: #{unet_double_conv_block.3} parent=47 // pred_region
        %s2367 = smul.u32 8, %s26
      $region52: #{unet_double_conv_block.3} parent=47 // pred_fallthru
        _
      // Predicated region
      $region53: #{unet_double_conv_block.3} parent=47 // pred_check
        %p2368 = pneg %p265
      $region54: #{unet_double_conv_block.3} parent=47 // pred_check_branch
        %2370 = sbr.rel (%p2368) target = $region56
      $region55: #{unet_double_conv_block.3} parent=47 // pred_region
        _
      $region56: #{unet_double_conv_block.3} parent=47 // pred_fallthru
        _
      // Predicated region
      $region57: #{unet_double_conv_block.3} parent=47 // pred_check
        %p2371 = pneg %p293
      $region58: #{unet_double_conv_block.3} parent=47 // pred_check_branch
        %2373 = sbr.rel (%p2371) target = $region60
      $region59: #{unet_double_conv_block.3} parent=47 // pred_region
        _
      $region60: #{unet_double_conv_block.3} parent=47 // pred_fallthru
        _
    $region48: #{unet_double_conv_block.3} parent=5 // pred_fallthru
      _
    %p2374 = scmp.le.s32.totalorder 2, %s16
    // Predicated region
    $region61: #{unet_double_conv_block.3} parent=5 // pred_check
      %p2375 = pneg %p2374
    $region62: #{unet_double_conv_block.3} parent=5 // pred_check_branch
      %2377 = sbr.rel (%p2375) target = $region64
    $region63: #{unet_double_conv_block.3} parent=5 // pred_region
      %s2378 = ssub.s32 %s16, 2
      // Predicated region
      $region65: #{unet_double_conv_block.3} parent=63 // pred_check
        %p2379 = pneg %p243
      $region66: #{unet_double_conv_block.3} parent=63 // pred_check_branch
        %2381 = sbr.rel (%p2379) target = $region68
      $region67: #{unet_double_conv_block.3} parent=63 // pred_region
        %s2382 = smul.u32 8, %s28
        %p2383 = scmp.lt.s32.totalorder %s27, 1
        %s2384 = scalar_select %p2383, %s27, 1
        %p2385 = scmp.lt.s32.totalorder %s2382, 15
        %s2386 = scalar_select %p2385, %s2382, 15
        %s2387 = smul.addr %s2386, 2
        %s2388 = smul.addr %s2384, 32
        %s2389 = sadd.s32 %s2387, %s2388
        %s2390 = smul.addr %s2389, 8
        %s2391 = scalar_lea.vmem %s7, %s2390
      $region68: #{unet_double_conv_block.3} parent=63 // pred_fallthru
        _
      // Predicated region
      $region69: #{unet_double_conv_block.3} parent=63 // pred_check
        %p2392 = pneg %p271
      $region70: #{unet_double_conv_block.3} parent=63 // pred_check_branch
        %2394 = sbr.rel (%p2392) target = $region72
      $region71: #{unet_double_conv_block.3} parent=63 // pred_region
        %p2395 = scmp.lt.s32.totalorder %s27, 1
        %s2396 = scalar_select %p2395, %s27, 1
        %p2397 = scmp.lt.s32.totalorder %s28, 1
        %s2398 = scalar_select %p2397, %s28, 1
        %s2399 = smul.addr %s2396, 2
        %s2400 = sadd.s32 %s2398, %s2399
        %s2401 = scalar_lea.vmem %s8, %s2400
      $region72: #{unet_double_conv_block.3} parent=63 // pred_fallthru
        _
      // Predicated region
      $region73: #{unet_double_conv_block.3} parent=63 // pred_check
        %p2402 = pneg %p299
      $region74: #{unet_double_conv_block.3} parent=63 // pred_check_branch
        %2404 = sbr.rel (%p2402) target = $region76
      $region75: #{unet_double_conv_block.3} parent=63 // pred_region
        %p2405 = scmp.lt.s32.totalorder %s27, 1
        %s2406 = scalar_select %p2405, %s27, 1
        %p2407 = scmp.lt.s32.totalorder %s28, 1
        %s2408 = scalar_select %p2407, %s28, 1
        %s2409 = smul.addr %s2406, 2
        %s2410 = sadd.s32 %s2408, %s2409
        %s2411 = scalar_lea.vmem %s9, %s2410
      $region76: #{unet_double_conv_block.3} parent=63 // pred_fallthru
        _
    $region64: #{unet_double_conv_block.3} parent=5 // pred_fallthru
      _
  $region6: #{unet_double_conv_block.3} parent=0 // loop_footer
    %s20 = sadd.s32 1, %s16
  $region7: #{unet_double_conv_block.3} parent=0 // loop_footer_branch
    %15 = sbr.rel target = $region3
  $region8: #{unet_double_conv_block.3} parent=0 // loop_exit
    _

// kernel: unet_double_conv_block.4
$region0: #{unet_double_conv_block.4}
  #allocation0 [shape = 'u32[]', space=smem, size = 0x4, offset = 0x4, fixed_abs, tag = 'smem constant byte address 0x4 - core index']
  #allocation1 [shape = 'u32[144,128]{1,0:T(1,128)}', space=vmem, size = 0x12000, scoped, tag = 'internal scratch']
  #allocation2 [shape = 'f32[10,18,128]{2,1,0:T(8,128)}', space=vmem, size = 0x1e000, scoped, tag = 'scratch operand']
  %s0 = inlined_call_operand.vmem [shape: f32[2,16,16,128], index: 0, kind: input, shape index: {}, may-alias: {0,1,2}]
  %s1 = inlined_call_operand.vmem [shape: f32[2,16,16,128], index: 1, kind: input, shape index: {}, may-alias: {0,1,2}]
  %s2 = inlined_call_operand.vmem [shape: f32[2,16,16,128], index: 2, kind: input, shape index: {}, may-alias: {0,1,2}]
  %s3 = inlined_call_operand.vmem [shape: f32[3,3,128,128], index: 3, kind: input, shape index: {}]
  %s4 = inlined_call_operand.vmem [shape: f32[1,128], index: 4, kind: input, shape index: {}]
  %s5 = inlined_call_operand.vmem [shape: f32[1,128], index: 5, kind: input, shape index: {}]
  %s6 = inlined_call_operand.vmem [shape: f32[1,128], index: 6, kind: input, shape index: {}]
  %s7 = inlined_call_operand.vmem [shape: f32[2,16,16,128], index: 7, kind: output, shape index: {0}]
  %s8 = inlined_call_operand.vmem [shape: f32[2,2,1,128], index: 8, kind: output, shape index: {1}]
  %s9 = inlined_call_operand.vmem [shape: f32[2,2,1,128], index: 9, kind: output, shape index: {2}]
  %10 = xla_tuple %s7, %s8, %s9
  %s11 = sld [smem:[#allocation0]]
  $region77: #{unet_double_conv_block.4} parent=0
    _
  %s13 = ssub.s32 1, %s11
  %s14 = scalar_select 0, %s13, %s11
  loop: start=0, step=1, limit=6
  $region2: #{unet_double_conv_block.4} parent=0 // loop_pre_header
    _
  $region3: #{unet_double_conv_block.4} parent=0 // loop_header
    %s16 = sphi 0, %s20
    %p17 = scmp.ge.s32.totalorder %s16, 6
    %s23 = sphi 0, %s35
    %s24 = sphi 0, %s31
    %s25 = sphi 0, %s23
    %s26 = sphi 0, %s24
    %s27 = sphi 0, %s25
    %s28 = sphi 0, %s26
    %s40 = sphi 0, %s42
    %s43 = sphi 0, %s40
    %s44 = sphi 0, %s43
    %s60 = sphi 0, %s44
    %s76 = sphi 0, %s78
    %s79 = sphi 0, %s76
    %s80 = sphi 0, %s79
    %s96 = sphi 0, %s80
    %s112 = sphi 0, %s114
    %s115 = sphi 0, %s112
    %s116 = sphi 0, %s115
    %s132 = sphi 0, %s116
    %s136 = sphi 0, %s136
    %s138 = sphi 0, %s136
    %s139 = sphi 0, %s138
    %s153 = sphi 0, %s139
    %s157 = sphi 0, %s157
    %s159 = sphi 0, %s157
    %s160 = sphi 0, %s159
    %s174 = sphi 0, %s160
    %s178 = sphi 0, %s178
    %s180 = sphi 0, %s178
    %s181 = sphi 0, %s180
    %s195 = sphi 0, %s181
    %s199 = sphi 0, %s199
    %s201 = sphi 0, %s199
    %s202 = sphi 0, %s201
    %s216 = sphi 0, %s202
    %s224 = sphi 0, %s226
    %s227 = sphi 0, %s224
    %s228 = sphi 0, %s227
    %s244 = sphi 0, %s228
    %s252 = sphi 0, %s254
    %s255 = sphi 0, %s252
    %s256 = sphi 0, %s255
    %s272 = sphi 0, %s256
    %s280 = sphi 0, %s282
    %s283 = sphi 0, %s280
    %s284 = sphi 0, %s283
    %s300 = sphi 0, %s284
  $region4: #{unet_double_conv_block.4} parent=0 // loop_header_branch
    %19 = sbr.rel (%p17) target = $region8
  $region5: #{unet_double_conv_block.4} parent=0 // loop_body
    %s21 = ssub.s32 %s16, 1
    %s22 = ssub.s32 %s16, 2
    %s29 = sadd.s32 1, %s24
    %p30 = scmp.ge.s32.totalorder %s29, 2
    %s31 = scalar_select %p30, 0, %s29
    %s32 = sadd.s32 1, %s23
    %s33 = scalar_select %p30, %s32, %s23
    %p34 = scmp.ge.s32.totalorder %s33, 2
    %s35 = scalar_select %p34, 0, %s33
    %s36 = ssub.s32 %s23, %s35
    %s37 = ssub.s32 %s24, %s31
    %s38 = sor.u32 %s36, %s37
    %p39 = scmp.eq.s32.totalorder %s38, 0
    %s41 = sadd.s32 %s40, 1
    %s42 = scalar_select %p39, %s40, %s41
    %p45 = pneg %p39
    %p46 = scmp.eq.s32.totalorder %s16, 3
    %p47 = por %p45, %p46
    %p48 = scmp.ne.s32.totalorder %s40, %s43
    %p49 = scmp.eq.s32.totalorder %s16, 0
    %p50 = por %p48, %p49
    %p51 = scmp.ne.s32.totalorder %s40, %s43
    %p52 = scmp.eq.s32.totalorder %s21, 3
    %p53 = por %p51, %p52
    %p54 = scmp.ne.s32.totalorder %s43, %s44
    %p55 = scmp.eq.s32.totalorder %s21, 0
    %p56 = por %p54, %p55
    %p57 = scmp.ne.s32.totalorder %s43, %s44
    %p58 = scmp.eq.s32.totalorder %s22, 3
    %p59 = por %p57, %p58
    %p61 = scmp.ne.s32.totalorder %s44, %s60
    %p62 = scmp.eq.s32.totalorder %s22, 0
    %p63 = por %p61, %p62
    %s64 = smul.u32 %s24, 8
    %s65 = ssub.s32 %s64, 1
    %p66 = scmp.gt.s32.totalorder %s65, 0
    %s67 = scalar_select %p66, %s65, 0
    %s68 = smul.u32 %s31, 8
    %s69 = ssub.s32 %s68, 1
    %p70 = scmp.gt.s32.totalorder %s69, 0
    %s71 = scalar_select %p70, %s69, 0
    %s72 = ssub.s32 %s23, %s35
    %s73 = ssub.s32 %s67, %s71
    %s74 = sor.u32 %s72, %s73
    %p75 = scmp.eq.s32.totalorder %s74, 0
    %s77 = sadd.s32 %s76, 1
    %s78 = scalar_select %p75, %s76, %s77
    %p81 = pneg %p75
    %p82 = scmp.eq.s32.totalorder %s16, 3
    %p83 = por %p81, %p82
    %p84 = scmp.ne.s32.totalorder %s76, %s79
    %p85 = scmp.eq.s32.totalorder %s16, 0
    %p86 = por %p84, %p85
    %p87 = scmp.ne.s32.totalorder %s76, %s79
    %p88 = scmp.eq.s32.totalorder %s21, 3
    %p89 = por %p87, %p88
    %p90 = scmp.ne.s32.totalorder %s79, %s80
    %p91 = scmp.eq.s32.totalorder %s21, 0
    %p92 = por %p90, %p91
    %p93 = scmp.ne.s32.totalorder %s79, %s80
    %p94 = scmp.eq.s32.totalorder %s22, 3
    %p95 = por %p93, %p94
    %p97 = scmp.ne.s32.totalorder %s80, %s96
    %p98 = scmp.eq.s32.totalorder %s22, 0
    %p99 = por %p97, %p98
    %s100 = smul.u32 %s24, 8
    %s101 = sadd.s32 %s100, 8
    %p102 = scmp.lt.s32.totalorder %s101, 15
    %s103 = scalar_select %p102, %s101, 15
    %s104 = smul.u32 %s31, 8
    %s105 = sadd.s32 %s104, 8
    %p106 = scmp.lt.s32.totalorder %s105, 15
    %s107 = scalar_select %p106, %s105, 15
    %s108 = ssub.s32 %s23, %s35
    %s109 = ssub.s32 %s103, %s107
    %s110 = sor.u32 %s108, %s109
    %p111 = scmp.eq.s32.totalorder %s110, 0
    %s113 = sadd.s32 %s112, 1
    %s114 = scalar_select %p111, %s112, %s113
    %p117 = pneg %p111
    %p118 = scmp.eq.s32.totalorder %s16, 3
    %p119 = por %p117, %p118
    %p120 = scmp.ne.s32.totalorder %s112, %s115
    %p121 = scmp.eq.s32.totalorder %s16, 0
    %p122 = por %p120, %p121
    %p123 = scmp.ne.s32.totalorder %s112, %s115
    %p124 = scmp.eq.s32.totalorder %s21, 3
    %p125 = por %p123, %p124
    %p126 = scmp.ne.s32.totalorder %s115, %s116
    %p127 = scmp.eq.s32.totalorder %s21, 0
    %p128 = por %p126, %p127
    %p129 = scmp.ne.s32.totalorder %s115, %s116
    %p130 = scmp.eq.s32.totalorder %s22, 3
    %p131 = por %p129, %p130
    %p133 = scmp.ne.s32.totalorder %s116, %s132
    %p134 = scmp.eq.s32.totalorder %s22, 0
    %p135 = por %p133, %p134
    %s137 = sadd.s32 %s136, 1
    %p140 = scmp.eq.s32.totalorder %s16, 3
    %p141 = scmp.ne.s32.totalorder %s136, %s138
    %p142 = scmp.eq.s32.totalorder %s16, 0
    %p143 = por %p141, %p142
    %p144 = scmp.ne.s32.totalorder %s136, %s138
    %p145 = scmp.eq.s32.totalorder %s21, 3
    %p146 = por %p144, %p145
    %p147 = scmp.ne.s32.totalorder %s138, %s139
    %p148 = scmp.eq.s32.totalorder %s21, 0
    %p149 = por %p147, %p148
    %p150 = scmp.ne.s32.totalorder %s138, %s139
    %p151 = scmp.eq.s32.totalorder %s22, 3
    %p152 = por %p150, %p151
    %p154 = scmp.ne.s32.totalorder %s139, %s153
    %p155 = scmp.eq.s32.totalorder %s22, 0
    %p156 = por %p154, %p155
    %s158 = sadd.s32 %s157, 1
    %p161 = scmp.eq.s32.totalorder %s16, 3
    %p162 = scmp.ne.s32.totalorder %s157, %s159
    %p163 = scmp.eq.s32.totalorder %s16, 0
    %p164 = por %p162, %p163
    %p165 = scmp.ne.s32.totalorder %s157, %s159
    %p166 = scmp.eq.s32.totalorder %s21, 3
    %p167 = por %p165, %p166
    %p168 = scmp.ne.s32.totalorder %s159, %s160
    %p169 = scmp.eq.s32.totalorder %s21, 0
    %p170 = por %p168, %p169
    %p171 = scmp.ne.s32.totalorder %s159, %s160
    %p172 = scmp.eq.s32.totalorder %s22, 3
    %p173 = por %p171, %p172
    %p175 = scmp.ne.s32.totalorder %s160, %s174
    %p176 = scmp.eq.s32.totalorder %s22, 0
    %p177 = por %p175, %p176
    %s179 = sadd.s32 %s178, 1
    %p182 = scmp.eq.s32.totalorder %s16, 3
    %p183 = scmp.ne.s32.totalorder %s178, %s180
    %p184 = scmp.eq.s32.totalorder %s16, 0
    %p185 = por %p183, %p184
    %p186 = scmp.ne.s32.totalorder %s178, %s180
    %p187 = scmp.eq.s32.totalorder %s21, 3
    %p188 = por %p186, %p187
    %p189 = scmp.ne.s32.totalorder %s180, %s181
    %p190 = scmp.eq.s32.totalorder %s21, 0
    %p191 = por %p189, %p190
    %p192 = scmp.ne.s32.totalorder %s180, %s181
    %p193 = scmp.eq.s32.totalorder %s22, 3
    %p194 = por %p192, %p193
    %p196 = scmp.ne.s32.totalorder %s181, %s195
    %p197 = scmp.eq.s32.totalorder %s22, 0
    %p198 = por %p196, %p197
    %s200 = sadd.s32 %s199, 1
    %p203 = scmp.eq.s32.totalorder %s16, 3
    %p204 = scmp.ne.s32.totalorder %s199, %s201
    %p205 = scmp.eq.s32.totalorder %s16, 0
    %p206 = por %p204, %p205
    %p207 = scmp.ne.s32.totalorder %s199, %s201
    %p208 = scmp.eq.s32.totalorder %s21, 3
    %p209 = por %p207, %p208
    %p210 = scmp.ne.s32.totalorder %s201, %s202
    %p211 = scmp.eq.s32.totalorder %s21, 0
    %p212 = por %p210, %p211
    %p213 = scmp.ne.s32.totalorder %s201, %s202
    %p214 = scmp.eq.s32.totalorder %s22, 3
    %p215 = por %p213, %p214
    %p217 = scmp.ne.s32.totalorder %s202, %s216
    %p218 = scmp.eq.s32.totalorder %s22, 0
    %p219 = por %p217, %p218
    %s220 = ssub.s32 %s23, %s35
    %s221 = ssub.s32 %s24, %s31
    %s222 = sor.u32 %s220, %s221
    %p223 = scmp.eq.s32.totalorder %s222, 0
    %s225 = sadd.s32 %s224, 1
    %s226 = scalar_select %p223, %s224, %s225
    %p229 = pneg %p223
    %p230 = scmp.eq.s32.totalorder %s16, 3
    %p231 = por %p229, %p230
    %p232 = scmp.ne.s32.totalorder %s224, %s227
    %p233 = scmp.eq.s32.totalorder %s16, 0
    %p234 = por %p232, %p233
    %p235 = scmp.ne.s32.totalorder %s224, %s227
    %p236 = scmp.eq.s32.totalorder %s21, 3
    %p237 = por %p235, %p236
    %p238 = scmp.ne.s32.totalorder %s227, %s228
    %p239 = scmp.eq.s32.totalorder %s21, 0
    %p240 = por %p238, %p239
    %p241 = scmp.ne.s32.totalorder %s227, %s228
    %p242 = scmp.eq.s32.totalorder %s22, 3
    %p243 = por %p241, %p242
    %p245 = scmp.ne.s32.totalorder %s228, %s244
    %p246 = scmp.eq.s32.totalorder %s22, 0
    %p247 = por %p245, %p246
    %s248 = ssub.s32 %s23, %s35
    %s249 = ssub.s32 %s24, %s31
    %s250 = sor.u32 %s248, %s249
    %p251 = scmp.eq.s32.totalorder %s250, 0
    %s253 = sadd.s32 %s252, 1
    %s254 = scalar_select %p251, %s252, %s253
    %p257 = pneg %p251
    %p258 = scmp.eq.s32.totalorder %s16, 3
    %p259 = por %p257, %p258
    %p260 = scmp.ne.s32.totalorder %s252, %s255
    %p261 = scmp.eq.s32.totalorder %s16, 0
    %p262 = por %p260, %p261
    %p263 = scmp.ne.s32.totalorder %s252, %s255
    %p264 = scmp.eq.s32.totalorder %s21, 3
    %p265 = por %p263, %p264
    %p266 = scmp.ne.s32.totalorder %s255, %s256
    %p267 = scmp.eq.s32.totalorder %s21, 0
    %p268 = por %p266, %p267
    %p269 = scmp.ne.s32.totalorder %s255, %s256
    %p270 = scmp.eq.s32.totalorder %s22, 3
    %p271 = por %p269, %p270
    %p273 = scmp.ne.s32.totalorder %s256, %s272
    %p274 = scmp.eq.s32.totalorder %s22, 0
    %p275 = por %p273, %p274
    %s276 = ssub.s32 %s23, %s35
    %s277 = ssub.s32 %s24, %s31
    %s278 = sor.u32 %s276, %s277
    %p279 = scmp.eq.s32.totalorder %s278, 0
    %s281 = sadd.s32 %s280, 1
    %s282 = scalar_select %p279, %s280, %s281
    %p285 = pneg %p279
    %p286 = scmp.eq.s32.totalorder %s16, 3
    %p287 = por %p285, %p286
    %p288 = scmp.ne.s32.totalorder %s280, %s283
    %p289 = scmp.eq.s32.totalorder %s16, 0
    %p290 = por %p288, %p289
    %p291 = scmp.ne.s32.totalorder %s280, %s283
    %p292 = scmp.eq.s32.totalorder %s21, 3
    %p293 = por %p291, %p292
    %p294 = scmp.ne.s32.totalorder %s283, %s284
    %p295 = scmp.eq.s32.totalorder %s21, 0
    %p296 = por %p294, %p295
    %p297 = scmp.ne.s32.totalorder %s283, %s284
    %p298 = scmp.eq.s32.totalorder %s22, 3
    %p299 = por %p297, %p298
    %p301 = scmp.ne.s32.totalorder %s284, %s300
    %p302 = scmp.eq.s32.totalorder %s22, 0
    %p303 = por %p301, %p302
    %p304 = scmp.le.s32.totalorder 1, %s16
    %p305 = scmp.lt.s32.totalorder %s16, 5
    %p306 = pnand %p304, %p305
    %p307 = pneg %p306
    // Predicated region
    $region9: #{unet_double_conv_block.4} parent=5 // pred_check
      _
    $region10: #{unet_double_conv_block.4} parent=5 // pred_check_branch
      %309 = sbr.rel (%p306) target = $region12
    $region11: #{unet_double_conv_block.4} parent=5 // pred_region
      %s310 = ssub.s32 %s16, 1
      // Predicated region
      $region13: #{unet_double_conv_block.4} parent=11 // pred_check
        %p311 = pneg %p149
      $region14: #{unet_double_conv_block.4} parent=11 // pred_check_branch
        %313 = sbr.rel (%p311) target = $region16
      $region15: #{unet_double_conv_block.4} parent=11 // pred_region
        _
      $region16: #{unet_double_conv_block.4} parent=11 // pred_fallthru
        _
      // Predicated region
      $region17: #{unet_double_conv_block.4} parent=11 // pred_check
        %p314 = pneg %p170
      $region18: #{unet_double_conv_block.4} parent=11 // pred_check_branch
        %316 = sbr.rel (%p314) target = $region20
      $region19: #{unet_double_conv_block.4} parent=11 // pred_region
        _
      $region20: #{unet_double_conv_block.4} parent=11 // pred_fallthru
        _
      // Predicated region
      $region21: #{unet_double_conv_block.4} parent=11 // pred_check
        %p317 = pneg %p191
      $region22: #{unet_double_conv_block.4} parent=11 // pred_check_branch
        %319 = sbr.rel (%p317) target = $region24
      $region23: #{unet_double_conv_block.4} parent=11 // pred_region
        _
      $region24: #{unet_double_conv_block.4} parent=11 // pred_fallthru
        _
      // Predicated region
      $region25: #{unet_double_conv_block.4} parent=11 // pred_check
        %p320 = pneg %p212
      $region26: #{unet_double_conv_block.4} parent=11 // pred_check_branch
        %322 = sbr.rel (%p320) target = $region28
      $region27: #{unet_double_conv_block.4} parent=11 // pred_region
        _
      $region28: #{unet_double_conv_block.4} parent=11 // pred_fallthru
        _
    $region12: #{unet_double_conv_block.4} parent=5 // pred_fallthru
      _
    %p323 = scmp.lt.s32.totalorder %s16, 4
    // Predicated region
    $region29: #{unet_double_conv_block.4} parent=5 // pred_check
      %p324 = pneg %p323
    $region30: #{unet_double_conv_block.4} parent=5 // pred_check_branch
      %326 = sbr.rel (%p324) target = $region32
    $region31: #{unet_double_conv_block.4} parent=5 // pred_region
      // Predicated region
      $region33: #{unet_double_conv_block.4} parent=31 // pred_check
        %p327 = pneg %p50
      $region34: #{unet_double_conv_block.4} parent=31 // pred_check_branch
        %329 = sbr.rel (%p327) target = $region36
      $region35: #{unet_double_conv_block.4} parent=31 // pred_region
        %s330 = smul.u32 8, %s24
        %p331 = scmp.lt.s32.totalorder %s23, 1
        %s332 = scalar_select %p331, %s23, 1
        %p333 = scmp.lt.s32.totalorder %s330, 15
        %s334 = scalar_select %p333, %s330, 15
        %s335 = smul.addr %s334, 2
        %s336 = smul.addr %s332, 32
        %s337 = sadd.s32 %s335, %s336
        %s338 = smul.addr %s337, 8
        %s339 = scalar_lea.vmem %s0, %s338
        %s340 = smul.u32 8, %s24
      $region36: #{unet_double_conv_block.4} parent=31 // pred_fallthru
        _
      // Predicated region
      $region37: #{unet_double_conv_block.4} parent=31 // pred_check
        %p341 = pneg %p86
      $region38: #{unet_double_conv_block.4} parent=31 // pred_check_branch
        %343 = sbr.rel (%p341) target = $region40
      $region39: #{unet_double_conv_block.4} parent=31 // pred_region
        %s344 = smul.u32 %s24, 8
        %s345 = ssub.s32 %s344, 1
        %p346 = scmp.gt.s32.totalorder %s345, 0
        %s347 = scalar_select %p346, %s345, 0
        %p348 = scmp.lt.s32.totalorder %s23, 1
        %s349 = scalar_select %p348, %s23, 1
        %p350 = scmp.lt.s32.totalorder %s347, 15
        %s351 = scalar_select %p350, %s347, 15
        %s352 = smul.addr %s351, 2
        %s353 = smul.addr %s349, 32
        %s354 = sadd.s32 %s352, %s353
        %s355 = smul.addr %s354, 8
        %s356 = scalar_lea.vmem %s1, %s355
        %s357 = smul.u32 %s24, 8
        %s358 = ssub.s32 %s357, 1
        %p359 = scmp.gt.s32.totalorder %s358, 0
        %s360 = scalar_select %p359, %s358, 0
      $region40: #{unet_double_conv_block.4} parent=31 // pred_fallthru
        _
      // Predicated region
      $region41: #{unet_double_conv_block.4} parent=31 // pred_check
        %p361 = pneg %p122
      $region42: #{unet_double_conv_block.4} parent=31 // pred_check_branch
        %363 = sbr.rel (%p361) target = $region44
      $region43: #{unet_double_conv_block.4} parent=31 // pred_region
        %s364 = smul.u32 %s24, 8
        %s365 = sadd.s32 %s364, 8
        %p366 = scmp.lt.s32.totalorder %s365, 15
        %s367 = scalar_select %p366, %s365, 15
        %p368 = scmp.lt.s32.totalorder %s23, 1
        %s369 = scalar_select %p368, %s23, 1
        %p370 = scmp.lt.s32.totalorder %s367, 15
        %s371 = scalar_select %p370, %s367, 15
        %s372 = smul.addr %s371, 2
        %s373 = smul.addr %s369, 32
        %s374 = sadd.s32 %s372, %s373
        %s375 = smul.addr %s374, 8
        %s376 = scalar_lea.vmem %s2, %s375
        %s377 = smul.u32 %s24, 8
        %s378 = sadd.s32 %s377, 8
        %p379 = scmp.lt.s32.totalorder %s378, 15
        %s380 = scalar_select %p379, %s378, 15
      $region44: #{unet_double_conv_block.4} parent=31 // pred_fallthru
        _
    $region32: #{unet_double_conv_block.4} parent=5 // pred_fallthru
      _
    %p381 = scmp.le.s32.totalorder 1, %s16
    %p382 = scmp.lt.s32.totalorder %s16, 5
    %p383 = pnand %p381, %p382
    %p384 = pneg %p383
    // Predicated region
    $region45: #{unet_double_conv_block.4} parent=5 // pred_check
      _
    $region46: #{unet_double_conv_block.4} parent=5 // pred_check_branch
      %386 = sbr.rel (%p383) target = $region48
    $region47: #{unet_double_conv_block.4} parent=5 // pred_region
      %s387 = ssub.s32 %s16, 1
      %s388 = smul.u32 8, %s26
      %p389 = scmp.lt.s32.totalorder %s25, 1
      %s390 = scalar_select %p389, %s25, 1
      %p391 = scmp.lt.s32.totalorder %s388, 15
      %s392 = scalar_select %p391, %s388, 15
      %s393 = smul.addr %s392, 2
      %s394 = smul.addr %s390, 32
      %s395 = sadd.s32 %s393, %s394
      %s396 = smul.addr %s395, 8
      %s397 = scalar_lea.vmem %s0, %s396
      %p398 = pneg %p56
      %p399 = pneg %p53
      %s400 = smul.u32 %s26, 8
      %s401 = ssub.s32 %s400, 1
      %p402 = scmp.gt.s32.totalorder %s401, 0
      %s403 = scalar_select %p402, %s401, 0
      %p404 = scmp.lt.s32.totalorder %s25, 1
      %s405 = scalar_select %p404, %s25, 1
      %p406 = scmp.lt.s32.totalorder %s403, 15
      %s407 = scalar_select %p406, %s403, 15
      %s408 = smul.addr %s407, 2
      %s409 = smul.addr %s405, 32
      %s410 = sadd.s32 %s408, %s409
      %s411 = smul.addr %s410, 8
      %s412 = scalar_lea.vmem %s1, %s411
      %p413 = pneg %p92
      %p414 = pneg %p89
      %s415 = smul.u32 %s26, 8
      %s416 = sadd.s32 %s415, 8
      %p417 = scmp.lt.s32.totalorder %s416, 15
      %s418 = scalar_select %p417, %s416, 15
      %p419 = scmp.lt.s32.totalorder %s25, 1
      %s420 = scalar_select %p419, %s25, 1
      %p421 = scmp.lt.s32.totalorder %s418, 15
      %s422 = scalar_select %p421, %s418, 15
      %s423 = smul.addr %s422, 2
      %s424 = smul.addr %s420, 32
      %s425 = sadd.s32 %s423, %s424
      %s426 = smul.addr %s425, 8
      %s427 = scalar_lea.vmem %s2, %s426
      %p428 = pneg %p128
      %p429 = pneg %p125
      %p430 = pneg %p149
      %p431 = pneg %p146
      %p432 = pneg %p170
      %p433 = pneg %p167
      %p434 = pneg %p191
      %p435 = pneg %p188
      %p436 = pneg %p212
      %p437 = pneg %p209
      %p438 = pneg %p240
      %p439 = pneg %p237
      %s440 = smul.u32 8, %s26
      %p441 = scmp.lt.s32.totalorder %s25, 1
      %s442 = scalar_select %p441, %s25, 1
      %p443 = scmp.lt.s32.totalorder %s440, 15
      %s444 = scalar_select %p443, %s440, 15
      %s445 = smul.addr %s444, 2
      %s446 = smul.addr %s442, 32
      %s447 = sadd.s32 %s445, %s446
      %s448 = smul.addr %s447, 8
      %s449 = scalar_lea.vmem %s7, %s448
      %p450 = pneg %p268
      %p451 = pneg %p265
      %p452 = scmp.lt.s32.totalorder %s25, 1
      %s453 = scalar_select %p452, %s25, 1
      %p454 = scmp.lt.s32.totalorder %s26, 1
      %s455 = scalar_select %p454, %s26, 1
      %s456 = smul.addr %s453, 2
      %s457 = sadd.s32 %s455, %s456
      %s458 = scalar_lea.vmem %s8, %s457
      %p459 = pneg %p296
      %p460 = pneg %p293
      %p461 = scmp.lt.s32.totalorder %s25, 1
      %s462 = scalar_select %p461, %s25, 1
      %p463 = scmp.lt.s32.totalorder %s26, 1
      %s464 = scalar_select %p463, %s26, 1
      %s465 = smul.addr %s462, 2
      %s466 = sadd.s32 %s464, %s465
      %s467 = scalar_lea.vmem %s9, %s466
      %s468 = smul.u32 8, %s26
      %p469 = scmp.lt.s32.totalorder %s25, 1
      %s470 = scalar_select %p469, %s25, 1
      %p471 = scmp.lt.s32.totalorder %s468, 15
      %s472 = scalar_select %p471, %s468, 15
      %s473 = smul.addr %s472, 2
      %s474 = smul.addr %s470, 32
      %s475 = sadd.s32 %s473, %s474
      %s476 = smul.addr %s475, 8
      %s477 = scalar_lea.vmem %s0, %s476
      %s478 = smul.u32 8, %s26
      %s479 = smul.u32 %s26, 8
      %s480 = ssub.s32 %s479, 1
      %p481 = scmp.gt.s32.totalorder %s480, 0
      %s482 = scalar_select %p481, %s480, 0
      %p483 = scmp.lt.s32.totalorder %s25, 1
      %s484 = scalar_select %p483, %s25, 1
      %p485 = scmp.lt.s32.totalorder %s482, 15
      %s486 = scalar_select %p485, %s482, 15
      %s487 = smul.addr %s486, 2
      %s488 = smul.addr %s484, 32
      %s489 = sadd.s32 %s487, %s488
      %s490 = smul.addr %s489, 8
      %s491 = scalar_lea.vmem %s1, %s490
      %s492 = smul.u32 %s26, 8
      %s493 = ssub.s32 %s492, 1
      %p494 = scmp.gt.s32.totalorder %s493, 0
      %s495 = scalar_select %p494, %s493, 0
      %s496 = smul.u32 %s26, 8
      %s497 = sadd.s32 %s496, 8
      %p498 = scmp.lt.s32.totalorder %s497, 15
      %s499 = scalar_select %p498, %s497, 15
      %p500 = scmp.lt.s32.totalorder %s25, 1
      %s501 = scalar_select %p500, %s25, 1
      %p502 = scmp.lt.s32.totalorder %s499, 15
      %s503 = scalar_select %p502, %s499, 15
      %s504 = smul.addr %s503, 2
      %s505 = smul.addr %s501, 32
      %s506 = sadd.s32 %s504, %s505
      %s507 = smul.addr %s506, 8
      %s508 = scalar_lea.vmem %s2, %s507
      %s509 = smul.u32 %s26, 8
      %s510 = sadd.s32 %s509, 8
      %p511 = scmp.lt.s32.totalorder %s510, 15
      %s512 = scalar_select %p511, %s510, 15
      %s513 = smul.u32 8, %s26
      %p514 = scmp.lt.s32.totalorder %s25, 1
      %s515 = scalar_select %p514, %s25, 1
      %p516 = scmp.lt.s32.totalorder %s513, 15
      %s517 = scalar_select %p516, %s513, 15
      %s518 = smul.addr %s517, 2
      %s519 = smul.addr %s515, 32
      %s520 = sadd.s32 %s518, %s519
      %s521 = smul.addr %s520, 8
      %s522 = scalar_lea.vmem %s7, %s521
      %s523 = smul.u32 8, %s26
      %p524 = scmp.lt.s32.totalorder %s25, 1
      %s525 = scalar_select %p524, %s25, 1
      %p526 = scmp.lt.s32.totalorder %s26, 1
      %s527 = scalar_select %p526, %s26, 1
      %s528 = smul.addr %s525, 2
      %s529 = sadd.s32 %s527, %s528
      %s530 = scalar_lea.vmem %s8, %s529
      %p531 = scmp.lt.s32.totalorder %s25, 1
      %s532 = scalar_select %p531, %s25, 1
      %p533 = scmp.lt.s32.totalorder %s26, 1
      %s534 = scalar_select %p533, %s26, 1
      %s535 = smul.addr %s532, 2
      %s536 = sadd.s32 %s534, %s535
      %s537 = scalar_lea.vmem %s9, %s536
      %v538 = vld [vmem:[%s477] sm:$0xff]
      %v539 = vld [vmem:[%s477 + $0x8] sm:$0xff]
      %v540 = vld [vmem:[%s477 + $0x10] sm:$0xff]
      %v541 = vld [vmem:[%s477 + $0x18] sm:$0xff]
      %v542 = vld [vmem:[%s477 + $0x20] sm:$0xff]
      %v543 = vld [vmem:[%s477 + $0x28] sm:$0xff]
      %v544 = vld [vmem:[%s477 + $0x30] sm:$0xff]
      %v545 = vld [vmem:[%s477 + $0x38] sm:$0xff]
      %v546 = vld [vmem:[%s477 + $0x40] sm:$0xff]
      %v547 = vld [vmem:[%s477 + $0x48] sm:$0xff]
      %v548 = vld [vmem:[%s477 + $0x50] sm:$0xff]
      %v549 = vld [vmem:[%s477 + $0x58] sm:$0xff]
      %v550 = vld [vmem:[%s477 + $0x60] sm:$0xff]
      %v551 = vld [vmem:[%s477 + $0x68] sm:$0xff]
      %v552 = vld [vmem:[%s477 + $0x70] sm:$0xff]
      %v553 = vld [vmem:[%s477 + $0x78] sm:$0xff]
      %v554 = vld [vmem:[%s5] sm:$0x1]
      %v556 = vlaneseq
      %v557 = vshrl.u32 %v556, 7
      %v558 = vsub.s32 0, %v557
      %v559 = vrot.slane %v554, %v558
      %v561 = vmul.f32 %v538, %v559
      %v562 = vmul.f32 %v539, %v559
      %v563 = vmul.f32 %v540, %v559
      %v564 = vmul.f32 %v541, %v559
      %v565 = vmul.f32 %v542, %v559
      %v566 = vmul.f32 %v543, %v559
      %v567 = vmul.f32 %v544, %v559
      %v568 = vmul.f32 %v545, %v559
      %v569 = vmul.f32 %v546, %v559
      %v570 = vmul.f32 %v547, %v559
      %v571 = vmul.f32 %v548, %v559
      %v572 = vmul.f32 %v549, %v559
      %v573 = vmul.f32 %v550, %v559
      %v574 = vmul.f32 %v551, %v559
      %v575 = vmul.f32 %v552, %v559
      %v576 = vmul.f32 %v553, %v559
      %v577 = vld [vmem:[%s6] sm:$0x1]
      %v579 = vlaneseq
      %v580 = vshrl.u32 %v579, 7
      %v581 = vsub.s32 0, %v580
      %v582 = vrot.slane %v577, %v581
      %v584 = vadd.f32 %v561, %v582
      %v585 = vadd.f32 %v562, %v582
      %v586 = vadd.f32 %v563, %v582
      %v587 = vadd.f32 %v564, %v582
      %v588 = vadd.f32 %v565, %v582
      %v589 = vadd.f32 %v566, %v582
      %v590 = vadd.f32 %v567, %v582
      %v591 = vadd.f32 %v568, %v582
      %v592 = vadd.f32 %v569, %v582
      %v593 = vadd.f32 %v570, %v582
      %v594 = vadd.f32 %v571, %v582
      %v595 = vadd.f32 %v572, %v582
      %v596 = vadd.f32 %v573, %v582
      %v597 = vadd.f32 %v574, %v582
      %v598 = vadd.f32 %v575, %v582
      %v599 = vadd.f32 %v576, %v582
      %v600 = vmax.f32 %v584, 0.0
      %v601 = vmax.f32 %v585, 0.0
      %v602 = vmax.f32 %v586, 0.0
      %v603 = vmax.f32 %v587, 0.0
      %v604 = vmax.f32 %v588, 0.0
      %v605 = vmax.f32 %v589, 0.0
      %v606 = vmax.f32 %v590, 0.0
      %v607 = vmax.f32 %v591, 0.0
      %v608 = vmax.f32 %v592, 0.0
      %v609 = vmax.f32 %v593, 0.0
      %v610 = vmax.f32 %v594, 0.0
      %v611 = vmax.f32 %v595, 0.0
      %v612 = vmax.f32 %v596, 0.0
      %v613 = vmax.f32 %v597, 0.0
      %v614 = vmax.f32 %v598, 0.0
      %v615 = vmax.f32 %v599, 0.0
      %v616 = vld [vmem:[%s491] sm:$0xff]
      %v617 = vld [vmem:[%s491 + $0x8] sm:$0xff]
      %v618 = vmul.f32 %v616, %v559
      %v619 = vmul.f32 %v617, %v559
      %v620 = vadd.f32 %v618, %v582
      %v621 = vadd.f32 %v619, %v582
      %v622 = vmax.f32 %v620, 0.0
      %v623 = vmax.f32 %v621, 0.0
      %v624 = vld [vmem:[%s508] sm:$0xff]
      %v625 = vld [vmem:[%s508 + $0x8] sm:$0xff]
      %v626 = vmul.f32 %v624, %v559
      %v627 = vmul.f32 %v625, %v559
      %v628 = vadd.f32 %v626, %v582
      %v629 = vadd.f32 %v627, %v582
      %v630 = vmax.f32 %v628, 0.0
      %v631 = vmax.f32 %v629, 0.0
      %p632 = scmp.gt.s32.totalorder %s26, 0
      %s633 = scalar_select %p632, 1, 0
      %v634 = vstv %s633
      %vm635 = vcmp.eq.s32.totalorder %v634, 1
      %v636 = vsel %vm635, %v622, 0.0
      %v637 = vsel %vm635, %v623, 0.0
      %p638 = scmp.lt.s32.totalorder %s26, 1
      %s639 = scalar_select %p638, 1, 0
      %v640 = vstv %s639
      %vm641 = vcmp.eq.s32.totalorder %v640, 1
      %v642 = vsel %vm641, %v630, 0.0
      %v643 = vsel %vm641, %v631, 0.0
      %644 = vst [vmem:[#allocation2] sm:$0x1] 0.0
      %645 = vst [vmem:[#allocation2 + $0x18] sm:$0x1] 0.0
      %646 = vst [vmem:[#allocation2 + $0x30] sm:$0x1] 0.0
      %647 = vst [vmem:[#allocation2 + $0x48] sm:$0x1] 0.0
      %648 = vst [vmem:[#allocation2 + $0x60] sm:$0x1] 0.0
      %649 = vst [vmem:[#allocation2 + $0x78] sm:$0x1] 0.0
      %650 = vst [vmem:[#allocation2 + $0x90] sm:$0x1] 0.0
      %651 = vst [vmem:[#allocation2 + $0xa8] sm:$0x1] 0.0
      %652 = vst [vmem:[#allocation2 + $0xc0] sm:$0x1] 0.0
      %653 = vst [vmem:[#allocation2 + $0xd8] sm:$0x1] 0.0
      %654 = vst [vmem:[#allocation2 + $0x11] sm:$0x1] 0.0
      %655 = vst [vmem:[#allocation2 + $0x29] sm:$0x1] 0.0
      %656 = vst [vmem:[#allocation2 + $0x41] sm:$0x1] 0.0
      %657 = vst [vmem:[#allocation2 + $0x59] sm:$0x1] 0.0
      %658 = vst [vmem:[#allocation2 + $0x71] sm:$0x1] 0.0
      %659 = vst [vmem:[#allocation2 + $0x89] sm:$0x1] 0.0
      %660 = vst [vmem:[#allocation2 + $0xa1] sm:$0x1] 0.0
      %661 = vst [vmem:[#allocation2 + $0xb9] sm:$0x1] 0.0
      %662 = vst [vmem:[#allocation2 + $0xd1] sm:$0x1] 0.0
      %663 = vst [vmem:[#allocation2 + $0xe9] sm:$0x1] 0.0
      %664 = vst [vmem:[#allocation2 + $0x1] sm:$0xff] %v636
      %665 = vst [vmem:[#allocation2 + $0x9] sm:$0xff] %v637
      %s666 = scalar_lea.vmem [#allocation2], 216
      %667 = vst [vmem:[%s666 + $0x1] sm:$0xff] %v642
      %668 = vst [vmem:[%s666 + $0x9] sm:$0xff] %v643
      %s669 = scalar_lea.vmem [#allocation2], 24
      %670 = vst [vmem:[%s669 + $0x1] sm:$0xff] %v600
      %671 = vst [vmem:[%s669 + $0x9] sm:$0xff] %v601
      %672 = vst [vmem:[%s669 + $0x19] sm:$0xff] %v602
      %673 = vst [vmem:[%s669 + $0x21] sm:$0xff] %v603
      %674 = vst [vmem:[%s669 + $0x31] sm:$0xff] %v604
      %675 = vst [vmem:[%s669 + $0x39] sm:$0xff] %v605
      %676 = vst [vmem:[%s669 + $0x49] sm:$0xff] %v606
      %677 = vst [vmem:[%s669 + $0x51] sm:$0xff] %v607
      %678 = vst [vmem:[%s669 + $0x61] sm:$0xff] %v608
      %679 = vst [vmem:[%s669 + $0x69] sm:$0xff] %v609
      %680 = vst [vmem:[%s669 + $0x79] sm:$0xff] %v610
      %681 = vst [vmem:[%s669 + $0x81] sm:$0xff] %v611
      %682 = vst [vmem:[%s669 + $0x91] sm:$0xff] %v612
      %683 = vst [vmem:[%s669 + $0x99] sm:$0xff] %v613
      %684 = vst [vmem:[%s669 + $0xa9] sm:$0xff] %v614
      %685 = vst [vmem:[%s669 + $0xb1] sm:$0xff] %v615
      %v686 = vld [vmem:[#allocation2] sm:$0xff]
      %v687 = vld [vmem:[#allocation2 + $0x8] sm:$0xff]
      %v688 = vld [vmem:[#allocation2 + $0x18] sm:$0xff]
      %v689 = vld [vmem:[#allocation2 + $0x20] sm:$0xff]
      %v690 = vld [vmem:[#allocation2 + $0x30] sm:$0xff]
      %v691 = vld [vmem:[#allocation2 + $0x38] sm:$0xff]
      %v692 = vld [vmem:[#allocation2 + $0x48] sm:$0xff]
      %v693 = vld [vmem:[#allocation2 + $0x50] sm:$0xff]
      %v694 = vld [vmem:[#allocation2 + $0x60] sm:$0xff]
      %v695 = vld [vmem:[#allocation2 + $0x68] sm:$0xff]
      %v696 = vld [vmem:[#allocation2 + $0x78] sm:$0xff]
      %v697 = vld [vmem:[#allocation2 + $0x80] sm:$0xff]
      %v698 = vld [vmem:[#allocation2 + $0x90] sm:$0xff]
      %v699 = vld [vmem:[#allocation2 + $0x98] sm:$0xff]
      %v700 = vld [vmem:[#allocation2 + $0xa8] sm:$0xff]
      %v701 = vld [vmem:[#allocation2 + $0xb0] sm:$0xff]
      %v702 = vld [vmem:[#allocation2 + $0xc0] sm:$0xff]
      %v703 = vld [vmem:[#allocation2 + $0xc8] sm:$0xff]
      %v704 = vld [vmem:[#allocation2 + $0xd8] sm:$0xff]
      %v705 = vld [vmem:[#allocation2 + $0xe0] sm:$0xff]
      %v706 = vld [vmem:[%s3] sm:$0xff]
      %v707 = vld [vmem:[%s3 + $0x8] sm:$0xff]
      %v708 = vld [vmem:[%s3 + $0x10] sm:$0xff]
      %v709 = vld [vmem:[%s3 + $0x18] sm:$0xff]
      %v710 = vld [vmem:[%s3 + $0x20] sm:$0xff]
      %v711 = vld [vmem:[%s3 + $0x28] sm:$0xff]
      %v712 = vld [vmem:[%s3 + $0x30] sm:$0xff]
      %v713 = vld [vmem:[%s3 + $0x38] sm:$0xff]
      %v714 = vld [vmem:[%s3 + $0x40] sm:$0xff]
      %v715 = vld [vmem:[%s3 + $0x48] sm:$0xff]
      %v716 = vld [vmem:[%s3 + $0x50] sm:$0xff]
      %v717 = vld [vmem:[%s3 + $0x58] sm:$0xff]
      %v718 = vld [vmem:[%s3 + $0x60] sm:$0xff]
      %v719 = vld [vmem:[%s3 + $0x68] sm:$0xff]
      %v720 = vld [vmem:[%s3 + $0x70] sm:$0xff]
      %v721 = vld [vmem:[%s3 + $0x78] sm:$0xff]
      %s722 = scalar_lea.vmem %s3, 384
      %v723 = vld [vmem:[%s722] sm:$0xff]
      %v724 = vld [vmem:[%s722 + $0x8] sm:$0xff]
      %v725 = vld [vmem:[%s722 + $0x10] sm:$0xff]
      %v726 = vld [vmem:[%s722 + $0x18] sm:$0xff]
      %v727 = vld [vmem:[%s722 + $0x20] sm:$0xff]
      %v728 = vld [vmem:[%s722 + $0x28] sm:$0xff]
      %v729 = vld [vmem:[%s722 + $0x30] sm:$0xff]
      %v730 = vld [vmem:[%s722 + $0x38] sm:$0xff]
      %v731 = vld [vmem:[%s722 + $0x40] sm:$0xff]
      %v732 = vld [vmem:[%s722 + $0x48] sm:$0xff]
      %v733 = vld [vmem:[%s722 + $0x50] sm:$0xff]
      %v734 = vld [vmem:[%s722 + $0x58] sm:$0xff]
      %v735 = vld [vmem:[%s722 + $0x60] sm:$0xff]
      %v736 = vld [vmem:[%s722 + $0x68] sm:$0xff]
      %v737 = vld [vmem:[%s722 + $0x70] sm:$0xff]
      %v738 = vld [vmem:[%s722 + $0x78] sm:$0xff]
      %739 = vmatprep.subr.mxu0 0.0
      %740 = vmatpush1.msra.mxu0 %v738
      %741 = vmatprep.subr.mxu0 0.0
      %742 = vmatpush1.msra.mxu0 %v737
      %743 = vmatprep.subr.mxu0 0.0
      %744 = vmatpush1.msra.mxu0 %v736
      %745 = vmatprep.subr.mxu0 0.0
      %746 = vmatpush1.msra.mxu0 %v735
      %747 = vmatprep.subr.mxu0 0.0
      %748 = vmatpush1.msra.mxu0 %v734
      %749 = vmatprep.subr.mxu0 0.0
      %750 = vmatpush1.msra.mxu0 %v733
      %751 = vmatprep.subr.mxu0 0.0
      %752 = vmatpush1.msra.mxu0 %v732
      %753 = vmatprep.subr.mxu0 0.0
      %754 = vmatpush1.msra.mxu0 %v731
      %755 = vmatprep.subr.mxu0 0.0
      %756 = vmatpush1.msra.mxu0 %v730
      %757 = vmatprep.subr.mxu0 0.0
      %758 = vmatpush1.msra.mxu0 %v729
      %759 = vmatprep.subr.mxu0 0.0
      %760 = vmatpush1.msra.mxu0 %v728
      %761 = vmatprep.subr.mxu0 0.0
      %762 = vmatpush1.msra.mxu0 %v727
      %763 = vmatprep.subr.mxu0 0.0
      %764 = vmatpush1.msra.mxu0 %v726
      %765 = vmatprep.subr.mxu0 0.0
      %766 = vmatpush1.msra.mxu0 %v725
      %767 = vmatprep.subr.mxu0 0.0
      %768 = vmatpush1.msra.mxu0 %v724
      %769 = vmatprep.subr.mxu0 0.0
      %770 = vmatpush1.msra.mxu0 %v723
      %771 = vmatprep.subr.mxu0 0.0
      %772 = vmatpush2.msra.mxu0 0.0
      %773 = vmatprep.subr.mxu0 0.0
      %774 = vmatpush2.msra.mxu0 0.0
      %775 = vmatprep.subr.mxu0 0.0
      %776 = vmatpush2.msra.mxu0 0.0
      %777 = vmatprep.subr.mxu0 0.0
      %778 = vmatpush2.msra.mxu0 0.0
      %779 = vmatprep.subr.mxu0 0.0
      %780 = vmatpush2.msra.mxu0 0.0
      %781 = vmatprep.subr.mxu0 0.0
      %782 = vmatpush2.msra.mxu0 0.0
      %783 = vmatprep.subr.mxu0 0.0
      %784 = vmatpush2.msra.mxu0 0.0
      %785 = vmatprep.subr.mxu0 0.0
      %786 = vmatpush2.msra.mxu0 0.0
      %787 = vmatprep.subr.mxu0 0.0
      %788 = vmatpush2.msra.mxu0 0.0
      %789 = vmatprep.subr.mxu0 0.0
      %790 = vmatpush2.msra.mxu0 0.0
      %791 = vmatprep.subr.mxu0 0.0
      %792 = vmatpush2.msra.mxu0 0.0
      %793 = vmatprep.subr.mxu0 0.0
      %794 = vmatpush2.msra.mxu0 0.0
      %795 = vmatprep.subr.mxu0 0.0
      %796 = vmatpush2.msra.mxu0 0.0
      %797 = vmatprep.subr.mxu0 0.0
      %798 = vmatpush2.msra.mxu0 0.0
      %799 = vmatprep.subr.mxu0 0.0
      %800 = vmatpush2.msra.mxu0 0.0
      %801 = vmatprep.subr.mxu0 0.0
      %802 = vmatpush2.msra.mxu0 0.0
      %803 = vmatprep.mubr.f32.mxu0 0.0
      %804 = vmatmul.mubr.f32.gmra.mxu0 %v688
      %v805 = vpop.f32.mrf.mxu0
      %v806 = vadd.f32 0.0, %v805
      %v807 = vpop.f32.mrf.mxu0
      %808 = vmatprep.mubr.f32.mxu0 0.0
      %809 = vmatmul.mubr.f32.gmra.mxu0 %v689
      %v810 = vpop.f32.mrf.mxu0
      %v811 = vadd.f32 0.0, %v810
      %v812 = vpop.f32.mrf.mxu0
      %813 = vmatprep.mubr.f32.mxu0 0.0
      %814 = vmatmul.mubr.f32.gmra.mxu0 %v690
      %v815 = vpop.f32.mrf.mxu0
      %v816 = vadd.f32 0.0, %v815
      %v817 = vpop.f32.mrf.mxu0
      %818 = vmatprep.mubr.f32.mxu0 0.0
      %819 = vmatmul.mubr.f32.gmra.mxu0 %v691
      %v820 = vpop.f32.mrf.mxu0
      %v821 = vadd.f32 0.0, %v820
      %v822 = vpop.f32.mrf.mxu0
      %823 = vmatprep.mubr.f32.mxu0 0.0
      %824 = vmatmul.mubr.f32.gmra.mxu0 %v692
      %v825 = vpop.f32.mrf.mxu0
      %v826 = vadd.f32 0.0, %v825
      %v827 = vpop.f32.mrf.mxu0
      %828 = vmatprep.mubr.f32.mxu0 0.0
      %829 = vmatmul.mubr.f32.gmra.mxu0 %v693
      %v830 = vpop.f32.mrf.mxu0
      %v831 = vadd.f32 0.0, %v830
      %v832 = vpop.f32.mrf.mxu0
      %833 = vmatprep.mubr.f32.mxu0 0.0
      %834 = vmatmul.mubr.f32.gmra.mxu0 %v694
      %v835 = vpop.f32.mrf.mxu0
      %v836 = vadd.f32 0.0, %v835
      %v837 = vpop.f32.mrf.mxu0
      %838 = vmatprep.mubr.f32.mxu0 0.0
      %839 = vmatmul.mubr.f32.gmra.mxu0 %v695
      %v840 = vpop.f32.mrf.mxu0
      %v841 = vadd.f32 0.0, %v840
      %v842 = vpop.f32.mrf.mxu0
      %843 = vmatprep.mubr.f32.mxu0 0.0
      %844 = vmatmul.mubr.f32.gmra.mxu0 %v696
      %v845 = vpop.f32.mrf.mxu0
      %v846 = vadd.f32 0.0, %v845
      %v847 = vpop.f32.mrf.mxu0
      %848 = vmatprep.mubr.f32.mxu0 0.0
      %849 = vmatmul.mubr.f32.gmra.mxu0 %v697
      %v850 = vpop.f32.mrf.mxu0
      %v851 = vadd.f32 0.0, %v850
      %v852 = vpop.f32.mrf.mxu0
      %853 = vmatprep.mubr.f32.mxu0 0.0
      %854 = vmatmul.mubr.f32.gmra.mxu0 %v698
      %v855 = vpop.f32.mrf.mxu0
      %v856 = vadd.f32 0.0, %v855
      %v857 = vpop.f32.mrf.mxu0
      %858 = vmatprep.mubr.f32.mxu0 0.0
      %859 = vmatmul.mubr.f32.gmra.mxu0 %v699
      %v860 = vpop.f32.mrf.mxu0
      %v861 = vadd.f32 0.0, %v860
      %v862 = vpop.f32.mrf.mxu0
      %863 = vmatprep.mubr.f32.mxu0 0.0
      %864 = vmatmul.mubr.f32.gmra.mxu0 %v700
      %v865 = vpop.f32.mrf.mxu0
      %v866 = vadd.f32 0.0, %v865
      %v867 = vpop.f32.mrf.mxu0
      %868 = vmatprep.mubr.f32.mxu0 0.0
      %869 = vmatmul.mubr.f32.gmra.mxu0 %v701
      %v870 = vpop.f32.mrf.mxu0
      %v871 = vadd.f32 0.0, %v870
      %v872 = vpop.f32.mrf.mxu0
      %873 = vmatprep.mubr.f32.mxu0 0.0
      %874 = vmatmul.mubr.f32.gmra.mxu0 %v702
      %v875 = vpop.f32.mrf.mxu0
      %v876 = vadd.f32 0.0, %v875
      %v877 = vpop.f32.mrf.mxu0
      %878 = vmatprep.mubr.f32.mxu0 0.0
      %879 = vmatmul.mubr.f32.gmra.mxu0 %v703
      %v880 = vpop.f32.mrf.mxu0
      %v881 = vadd.f32 0.0, %v880
      %v882 = vpop.f32.mrf.mxu0
      %883 = vdwg.mxu0
      %884 = vmatprep.subr.mxu0 0.0
      %885 = vmatpush1.msra.mxu0 %v721
      %886 = vmatprep.subr.mxu0 0.0
      %887 = vmatpush1.msra.mxu0 %v720
      %888 = vmatprep.subr.mxu0 0.0
      %889 = vmatpush1.msra.mxu0 %v719
      %890 = vmatprep.subr.mxu0 0.0
      %891 = vmatpush1.msra.mxu0 %v718
      %892 = vmatprep.subr.mxu0 0.0
      %893 = vmatpush1.msra.mxu0 %v717
      %894 = vmatprep.subr.mxu0 0.0
      %895 = vmatpush1.msra.mxu0 %v716
      %896 = vmatprep.subr.mxu0 0.0
      %897 = vmatpush1.msra.mxu0 %v715
      %898 = vmatprep.subr.mxu0 0.0
      %899 = vmatpush1.msra.mxu0 %v714
      %900 = vmatprep.subr.mxu0 0.0
      %901 = vmatpush1.msra.mxu0 %v713
      %902 = vmatprep.subr.mxu0 0.0
      %903 = vmatpush1.msra.mxu0 %v712
      %904 = vmatprep.subr.mxu0 0.0
      %905 = vmatpush1.msra.mxu0 %v711
      %906 = vmatprep.subr.mxu0 0.0
      %907 = vmatpush1.msra.mxu0 %v710
      %908 = vmatprep.subr.mxu0 0.0
      %909 = vmatpush1.msra.mxu0 %v709
      %910 = vmatprep.subr.mxu0 0.0
      %911 = vmatpush1.msra.mxu0 %v708
      %912 = vmatprep.subr.mxu0 0.0
      %913 = vmatpush1.msra.mxu0 %v707
      %914 = vmatprep.subr.mxu0 0.0
      %915 = vmatpush1.msra.mxu0 %v706
      %916 = vmatprep.subr.mxu0 0.0
      %917 = vmatpush2.msra.mxu0 0.0
      %918 = vmatprep.subr.mxu0 0.0
      %919 = vmatpush2.msra.mxu0 0.0
      %920 = vmatprep.subr.mxu0 0.0
      %921 = vmatpush2.msra.mxu0 0.0
      %922 = vmatprep.subr.mxu0 0.0
      %923 = vmatpush2.msra.mxu0 0.0
      %924 = vmatprep.subr.mxu0 0.0
      %925 = vmatpush2.msra.mxu0 0.0
      %926 = vmatprep.subr.mxu0 0.0
      %927 = vmatpush2.msra.mxu0 0.0
      %928 = vmatprep.subr.mxu0 0.0
      %929 = vmatpush2.msra.mxu0 0.0
      %930 = vmatprep.subr.mxu0 0.0
      %931 = vmatpush2.msra.mxu0 0.0
      %932 = vmatprep.subr.mxu0 0.0
      %933 = vmatpush2.msra.mxu0 0.0
      %934 = vmatprep.subr.mxu0 0.0
      %935 = vmatpush2.msra.mxu0 0.0
      %936 = vmatprep.subr.mxu0 0.0
      %937 = vmatpush2.msra.mxu0 0.0
      %938 = vmatprep.subr.mxu0 0.0
      %939 = vmatpush2.msra.mxu0 0.0
      %940 = vmatprep.subr.mxu0 0.0
      %941 = vmatpush2.msra.mxu0 0.0
      %942 = vmatprep.subr.mxu0 0.0
      %943 = vmatpush2.msra.mxu0 0.0
      %944 = vmatprep.subr.mxu0 0.0
      %945 = vmatpush2.msra.mxu0 0.0
      %946 = vmatprep.subr.mxu0 0.0
      %947 = vmatpush2.msra.mxu0 0.0
      %948 = vmatprep.mubr.f32.mxu0 0.0
      %949 = vmatmul.mubr.f32.gmra.mxu0 %v686
      %v950 = vpop.f32.mrf.mxu0
      %v951 = vadd.f32 %v806, %v950
      %v952 = vpop.f32.mrf.mxu0
      %953 = vmatprep.mubr.f32.mxu0 0.0
      %954 = vmatmul.mubr.f32.gmra.mxu0 %v687
      %v955 = vpop.f32.mrf.mxu0
      %v956 = vadd.f32 %v811, %v955
      %v957 = vpop.f32.mrf.mxu0
      %958 = vmatprep.mubr.f32.mxu0 0.0
      %959 = vmatmul.mubr.f32.gmra.mxu0 %v688
      %v960 = vpop.f32.mrf.mxu0
      %v961 = vadd.f32 %v816, %v960
      %v962 = vpop.f32.mrf.mxu0
      %963 = vmatprep.mubr.f32.mxu0 0.0
      %964 = vmatmul.mubr.f32.gmra.mxu0 %v689
      %v965 = vpop.f32.mrf.mxu0
      %v966 = vadd.f32 %v821, %v965
      %v967 = vpop.f32.mrf.mxu0
      %968 = vmatprep.mubr.f32.mxu0 0.0
      %969 = vmatmul.mubr.f32.gmra.mxu0 %v690
      %v970 = vpop.f32.mrf.mxu0
      %v971 = vadd.f32 %v826, %v970
      %v972 = vpop.f32.mrf.mxu0
      %973 = vmatprep.mubr.f32.mxu0 0.0
      %974 = vmatmul.mubr.f32.gmra.mxu0 %v691
      %v975 = vpop.f32.mrf.mxu0
      %v976 = vadd.f32 %v831, %v975
      %v977 = vpop.f32.mrf.mxu0
      %978 = vmatprep.mubr.f32.mxu0 0.0
      %979 = vmatmul.mubr.f32.gmra.mxu0 %v692
      %v980 = vpop.f32.mrf.mxu0
      %v981 = vadd.f32 %v836, %v980
      %v982 = vpop.f32.mrf.mxu0
      %983 = vmatprep.mubr.f32.mxu0 0.0
      %984 = vmatmul.mubr.f32.gmra.mxu0 %v693
      %v985 = vpop.f32.mrf.mxu0
      %v986 = vadd.f32 %v841, %v985
      %v987 = vpop.f32.mrf.mxu0
      %988 = vmatprep.mubr.f32.mxu0 0.0
      %989 = vmatmul.mubr.f32.gmra.mxu0 %v694
      %v990 = vpop.f32.mrf.mxu0
      %v991 = vadd.f32 %v846, %v990
      %v992 = vpop.f32.mrf.mxu0
      %993 = vmatprep.mubr.f32.mxu0 0.0
      %994 = vmatmul.mubr.f32.gmra.mxu0 %v695
      %v995 = vpop.f32.mrf.mxu0
      %v996 = vadd.f32 %v851, %v995
      %v997 = vpop.f32.mrf.mxu0
      %998 = vmatprep.mubr.f32.mxu0 0.0
      %999 = vmatmul.mubr.f32.gmra.mxu0 %v696
      %v1000 = vpop.f32.mrf.mxu0
      %v1001 = vadd.f32 %v856, %v1000
      %v1002 = vpop.f32.mrf.mxu0
      %1003 = vmatprep.mubr.f32.mxu0 0.0
      %1004 = vmatmul.mubr.f32.gmra.mxu0 %v697
      %v1005 = vpop.f32.mrf.mxu0
      %v1006 = vadd.f32 %v861, %v1005
      %v1007 = vpop.f32.mrf.mxu0
      %1008 = vmatprep.mubr.f32.mxu0 0.0
      %1009 = vmatmul.mubr.f32.gmra.mxu0 %v698
      %v1010 = vpop.f32.mrf.mxu0
      %v1011 = vadd.f32 %v866, %v1010
      %v1012 = vpop.f32.mrf.mxu0
      %1013 = vmatprep.mubr.f32.mxu0 0.0
      %1014 = vmatmul.mubr.f32.gmra.mxu0 %v699
      %v1015 = vpop.f32.mrf.mxu0
      %v1016 = vadd.f32 %v871, %v1015
      %v1017 = vpop.f32.mrf.mxu0
      %1018 = vmatprep.mubr.f32.mxu0 0.0
      %1019 = vmatmul.mubr.f32.gmra.mxu0 %v700
      %v1020 = vpop.f32.mrf.mxu0
      %v1021 = vadd.f32 %v876, %v1020
      %v1022 = vpop.f32.mrf.mxu0
      %1023 = vmatprep.mubr.f32.mxu0 0.0
      %1024 = vmatmul.mubr.f32.gmra.mxu0 %v701
      %v1025 = vpop.f32.mrf.mxu0
      %v1026 = vadd.f32 %v881, %v1025
      %v1027 = vpop.f32.mrf.mxu0
      %1028 = vdwg.mxu0
      %s1029 = scalar_lea.vmem %s3, 768
      %v1030 = vld [vmem:[%s1029] sm:$0xff]
      %v1031 = vld [vmem:[%s1029 + $0x8] sm:$0xff]
      %v1032 = vld [vmem:[%s1029 + $0x10] sm:$0xff]
      %v1033 = vld [vmem:[%s1029 + $0x18] sm:$0xff]
      %v1034 = vld [vmem:[%s1029 + $0x20] sm:$0xff]
      %v1035 = vld [vmem:[%s1029 + $0x28] sm:$0xff]
      %v1036 = vld [vmem:[%s1029 + $0x30] sm:$0xff]
      %v1037 = vld [vmem:[%s1029 + $0x38] sm:$0xff]
      %v1038 = vld [vmem:[%s1029 + $0x40] sm:$0xff]
      %v1039 = vld [vmem:[%s1029 + $0x48] sm:$0xff]
      %v1040 = vld [vmem:[%s1029 + $0x50] sm:$0xff]
      %v1041 = vld [vmem:[%s1029 + $0x58] sm:$0xff]
      %v1042 = vld [vmem:[%s1029 + $0x60] sm:$0xff]
      %v1043 = vld [vmem:[%s1029 + $0x68] sm:$0xff]
      %v1044 = vld [vmem:[%s1029 + $0x70] sm:$0xff]
      %v1045 = vld [vmem:[%s1029 + $0x78] sm:$0xff]
      %1046 = vmatprep.subr.mxu0 0.0
      %1047 = vmatpush1.msra.mxu0 %v1045
      %1048 = vmatprep.subr.mxu0 0.0
      %1049 = vmatpush1.msra.mxu0 %v1044
      %1050 = vmatprep.subr.mxu0 0.0
      %1051 = vmatpush1.msra.mxu0 %v1043
      %1052 = vmatprep.subr.mxu0 0.0
      %1053 = vmatpush1.msra.mxu0 %v1042
      %1054 = vmatprep.subr.mxu0 0.0
      %1055 = vmatpush1.msra.mxu0 %v1041
      %1056 = vmatprep.subr.mxu0 0.0
      %1057 = vmatpush1.msra.mxu0 %v1040
      %1058 = vmatprep.subr.mxu0 0.0
      %1059 = vmatpush1.msra.mxu0 %v1039
      %1060 = vmatprep.subr.mxu0 0.0
      %1061 = vmatpush1.msra.mxu0 %v1038
      %1062 = vmatprep.subr.mxu0 0.0
      %1063 = vmatpush1.msra.mxu0 %v1037
      %1064 = vmatprep.subr.mxu0 0.0
      %1065 = vmatpush1.msra.mxu0 %v1036
      %1066 = vmatprep.subr.mxu0 0.0
      %1067 = vmatpush1.msra.mxu0 %v1035
      %1068 = vmatprep.subr.mxu0 0.0
      %1069 = vmatpush1.msra.mxu0 %v1034
      %1070 = vmatprep.subr.mxu0 0.0
      %1071 = vmatpush1.msra.mxu0 %v1033
      %1072 = vmatprep.subr.mxu0 0.0
      %1073 = vmatpush1.msra.mxu0 %v1032
      %1074 = vmatprep.subr.mxu0 0.0
      %1075 = vmatpush1.msra.mxu0 %v1031
      %1076 = vmatprep.subr.mxu0 0.0
      %1077 = vmatpush1.msra.mxu0 %v1030
      %1078 = vmatprep.subr.mxu0 0.0
      %1079 = vmatpush2.msra.mxu0 0.0
      %1080 = vmatprep.subr.mxu0 0.0
      %1081 = vmatpush2.msra.mxu0 0.0
      %1082 = vmatprep.subr.mxu0 0.0
      %1083 = vmatpush2.msra.mxu0 0.0
      %1084 = vmatprep.subr.mxu0 0.0
      %1085 = vmatpush2.msra.mxu0 0.0
      %1086 = vmatprep.subr.mxu0 0.0
      %1087 = vmatpush2.msra.mxu0 0.0
      %1088 = vmatprep.subr.mxu0 0.0
      %1089 = vmatpush2.msra.mxu0 0.0
      %1090 = vmatprep.subr.mxu0 0.0
      %1091 = vmatpush2.msra.mxu0 0.0
      %1092 = vmatprep.subr.mxu0 0.0
      %1093 = vmatpush2.msra.mxu0 0.0
      %1094 = vmatprep.subr.mxu0 0.0
      %1095 = vmatpush2.msra.mxu0 0.0
      %1096 = vmatprep.subr.mxu0 0.0
      %1097 = vmatpush2.msra.mxu0 0.0
      %1098 = vmatprep.subr.mxu0 0.0
      %1099 = vmatpush2.msra.mxu0 0.0
      %1100 = vmatprep.subr.mxu0 0.0
      %1101 = vmatpush2.msra.mxu0 0.0
      %1102 = vmatprep.subr.mxu0 0.0
      %1103 = vmatpush2.msra.mxu0 0.0
      %1104 = vmatprep.subr.mxu0 0.0
      %1105 = vmatpush2.msra.mxu0 0.0
      %1106 = vmatprep.subr.mxu0 0.0
      %1107 = vmatpush2.msra.mxu0 0.0
      %1108 = vmatprep.subr.mxu0 0.0
      %1109 = vmatpush2.msra.mxu0 0.0
      %1110 = vmatprep.mubr.f32.mxu0 0.0
      %1111 = vmatmul.mubr.f32.gmra.mxu0 %v690
      %v1112 = vpop.f32.mrf.mxu0
      %v1113 = vadd.f32 0.0, %v1112
      %v1114 = vpop.f32.mrf.mxu0
      %1115 = vmatprep.mubr.f32.mxu0 0.0
      %1116 = vmatmul.mubr.f32.gmra.mxu0 %v691
      %v1117 = vpop.f32.mrf.mxu0
      %v1118 = vadd.f32 0.0, %v1117
      %v1119 = vpop.f32.mrf.mxu0
      %1120 = vmatprep.mubr.f32.mxu0 0.0
      %1121 = vmatmul.mubr.f32.gmra.mxu0 %v692
      %v1122 = vpop.f32.mrf.mxu0
      %v1123 = vadd.f32 0.0, %v1122
      %v1124 = vpop.f32.mrf.mxu0
      %1125 = vmatprep.mubr.f32.mxu0 0.0
      %1126 = vmatmul.mubr.f32.gmra.mxu0 %v693
      %v1127 = vpop.f32.mrf.mxu0
      %v1128 = vadd.f32 0.0, %v1127
      %v1129 = vpop.f32.mrf.mxu0
      %1130 = vmatprep.mubr.f32.mxu0 0.0
      %1131 = vmatmul.mubr.f32.gmra.mxu0 %v694
      %v1132 = vpop.f32.mrf.mxu0
      %v1133 = vadd.f32 0.0, %v1132
      %v1134 = vpop.f32.mrf.mxu0
      %1135 = vmatprep.mubr.f32.mxu0 0.0
      %1136 = vmatmul.mubr.f32.gmra.mxu0 %v695
      %v1137 = vpop.f32.mrf.mxu0
      %v1138 = vadd.f32 0.0, %v1137
      %v1139 = vpop.f32.mrf.mxu0
      %1140 = vmatprep.mubr.f32.mxu0 0.0
      %1141 = vmatmul.mubr.f32.gmra.mxu0 %v696
      %v1142 = vpop.f32.mrf.mxu0
      %v1143 = vadd.f32 0.0, %v1142
      %v1144 = vpop.f32.mrf.mxu0
      %1145 = vmatprep.mubr.f32.mxu0 0.0
      %1146 = vmatmul.mubr.f32.gmra.mxu0 %v697
      %v1147 = vpop.f32.mrf.mxu0
      %v1148 = vadd.f32 0.0, %v1147
      %v1149 = vpop.f32.mrf.mxu0
      %1150 = vmatprep.mubr.f32.mxu0 0.0
      %1151 = vmatmul.mubr.f32.gmra.mxu0 %v698
      %v1152 = vpop.f32.mrf.mxu0
      %v1153 = vadd.f32 0.0, %v1152
      %v1154 = vpop.f32.mrf.mxu0
      %1155 = vmatprep.mubr.f32.mxu0 0.0
      %1156 = vmatmul.mubr.f32.gmra.mxu0 %v699
      %v1157 = vpop.f32.mrf.mxu0
      %v1158 = vadd.f32 0.0, %v1157
      %v1159 = vpop.f32.mrf.mxu0
      %1160 = vmatprep.mubr.f32.mxu0 0.0
      %1161 = vmatmul.mubr.f32.gmra.mxu0 %v700
      %v1162 = vpop.f32.mrf.mxu0
      %v1163 = vadd.f32 0.0, %v1162
      %v1164 = vpop.f32.mrf.mxu0
      %1165 = vmatprep.mubr.f32.mxu0 0.0
      %1166 = vmatmul.mubr.f32.gmra.mxu0 %v701
      %v1167 = vpop.f32.mrf.mxu0
      %v1168 = vadd.f32 0.0, %v1167
      %v1169 = vpop.f32.mrf.mxu0
      %1170 = vmatprep.mubr.f32.mxu0 0.0
      %1171 = vmatmul.mubr.f32.gmra.mxu0 %v702
      %v1172 = vpop.f32.mrf.mxu0
      %v1173 = vadd.f32 0.0, %v1172
      %v1174 = vpop.f32.mrf.mxu0
      %1175 = vmatprep.mubr.f32.mxu0 0.0
      %1176 = vmatmul.mubr.f32.gmra.mxu0 %v703
      %v1177 = vpop.f32.mrf.mxu0
      %v1178 = vadd.f32 0.0, %v1177
      %v1179 = vpop.f32.mrf.mxu0
      %1180 = vmatprep.mubr.f32.mxu0 0.0
      %1181 = vmatmul.mubr.f32.gmra.mxu0 %v704
      %v1182 = vpop.f32.mrf.mxu0
      %v1183 = vadd.f32 0.0, %v1182
      %v1184 = vpop.f32.mrf.mxu0
      %1185 = vmatprep.mubr.f32.mxu0 0.0
      %1186 = vmatmul.mubr.f32.gmra.mxu0 %v705
      %v1187 = vpop.f32.mrf.mxu0
      %v1188 = vadd.f32 0.0, %v1187
      %v1189 = vpop.f32.mrf.mxu0
      %1190 = vdwg.mxu0
      %v1191 = vadd.f32 %v951, %v1113
      %v1192 = vadd.f32 %v956, %v1118
      %v1193 = vadd.f32 %v961, %v1123
      %v1194 = vadd.f32 %v966, %v1128
      %v1195 = vadd.f32 %v971, %v1133
      %v1196 = vadd.f32 %v976, %v1138
      %v1197 = vadd.f32 %v981, %v1143
      %v1198 = vadd.f32 %v986, %v1148
      %v1199 = vadd.f32 %v991, %v1153
      %v1200 = vadd.f32 %v996, %v1158
      %v1201 = vadd.f32 %v1001, %v1163
      %v1202 = vadd.f32 %v1006, %v1168
      %v1203 = vadd.f32 %v1011, %v1173
      %v1204 = vadd.f32 %v1016, %v1178
      %v1205 = vadd.f32 %v1021, %v1183
      %v1206 = vadd.f32 %v1026, %v1188
      %v1207 = vld [vmem:[#allocation2 + $0x1] sm:$0xff]
      %v1208 = vld [vmem:[#allocation2 + $0x9] sm:$0xff]
      %v1209 = vld [vmem:[#allocation2 + $0x19] sm:$0xff]
      %v1210 = vld [vmem:[#allocation2 + $0x21] sm:$0xff]
      %v1211 = vld [vmem:[#allocation2 + $0x31] sm:$0xff]
      %v1212 = vld [vmem:[#allocation2 + $0x39] sm:$0xff]
      %v1213 = vld [vmem:[#allocation2 + $0x49] sm:$0xff]
      %v1214 = vld [vmem:[#allocation2 + $0x51] sm:$0xff]
      %v1215 = vld [vmem:[#allocation2 + $0x61] sm:$0xff]
      %v1216 = vld [vmem:[#allocation2 + $0x69] sm:$0xff]
      %v1217 = vld [vmem:[#allocation2 + $0x79] sm:$0xff]
      %v1218 = vld [vmem:[#allocation2 + $0x81] sm:$0xff]
      %v1219 = vld [vmem:[#allocation2 + $0x91] sm:$0xff]
      %v1220 = vld [vmem:[#allocation2 + $0x99] sm:$0xff]
      %v1221 = vld [vmem:[#allocation2 + $0xa9] sm:$0xff]
      %v1222 = vld [vmem:[#allocation2 + $0xb1] sm:$0xff]
      %v1223 = vld [vmem:[#allocation2 + $0xc1] sm:$0xff]
      %v1224 = vld [vmem:[#allocation2 + $0xc9] sm:$0xff]
      %v1225 = vld [vmem:[#allocation2 + $0xd9] sm:$0xff]
      %v1226 = vld [vmem:[#allocation2 + $0xe1] sm:$0xff]
      %s1227 = scalar_lea.vmem %s3, 128
      %v1228 = vld [vmem:[%s1227] sm:$0xff]
      %v1229 = vld [vmem:[%s1227 + $0x8] sm:$0xff]
      %v1230 = vld [vmem:[%s1227 + $0x10] sm:$0xff]
      %v1231 = vld [vmem:[%s1227 + $0x18] sm:$0xff]
      %v1232 = vld [vmem:[%s1227 + $0x20] sm:$0xff]
      %v1233 = vld [vmem:[%s1227 + $0x28] sm:$0xff]
      %v1234 = vld [vmem:[%s1227 + $0x30] sm:$0xff]
      %v1235 = vld [vmem:[%s1227 + $0x38] sm:$0xff]
      %v1236 = vld [vmem:[%s1227 + $0x40] sm:$0xff]
      %v1237 = vld [vmem:[%s1227 + $0x48] sm:$0xff]
      %v1238 = vld [vmem:[%s1227 + $0x50] sm:$0xff]
      %v1239 = vld [vmem:[%s1227 + $0x58] sm:$0xff]
      %v1240 = vld [vmem:[%s1227 + $0x60] sm:$0xff]
      %v1241 = vld [vmem:[%s1227 + $0x68] sm:$0xff]
      %v1242 = vld [vmem:[%s1227 + $0x70] sm:$0xff]
      %v1243 = vld [vmem:[%s1227 + $0x78] sm:$0xff]
      %1244 = vmatprep.subr.mxu0 0.0
      %1245 = vmatpush1.msra.mxu0 %v1243
      %1246 = vmatprep.subr.mxu0 0.0
      %1247 = vmatpush1.msra.mxu0 %v1242
      %1248 = vmatprep.subr.mxu0 0.0
      %1249 = vmatpush1.msra.mxu0 %v1241
      %1250 = vmatprep.subr.mxu0 0.0
      %1251 = vmatpush1.msra.mxu0 %v1240
      %1252 = vmatprep.subr.mxu0 0.0
      %1253 = vmatpush1.msra.mxu0 %v1239
      %1254 = vmatprep.subr.mxu0 0.0
      %1255 = vmatpush1.msra.mxu0 %v1238
      %1256 = vmatprep.subr.mxu0 0.0
      %1257 = vmatpush1.msra.mxu0 %v1237
      %1258 = vmatprep.subr.mxu0 0.0
      %1259 = vmatpush1.msra.mxu0 %v1236
      %1260 = vmatprep.subr.mxu0 0.0
      %1261 = vmatpush1.msra.mxu0 %v1235
      %1262 = vmatprep.subr.mxu0 0.0
      %1263 = vmatpush1.msra.mxu0 %v1234
      %1264 = vmatprep.subr.mxu0 0.0
      %1265 = vmatpush1.msra.mxu0 %v1233
      %1266 = vmatprep.subr.mxu0 0.0
      %1267 = vmatpush1.msra.mxu0 %v1232
      %1268 = vmatprep.subr.mxu0 0.0
      %1269 = vmatpush1.msra.mxu0 %v1231
      %1270 = vmatprep.subr.mxu0 0.0
      %1271 = vmatpush1.msra.mxu0 %v1230
      %1272 = vmatprep.subr.mxu0 0.0
      %1273 = vmatpush1.msra.mxu0 %v1229
      %1274 = vmatprep.subr.mxu0 0.0
      %1275 = vmatpush1.msra.mxu0 %v1228
      %1276 = vmatprep.subr.mxu0 0.0
      %1277 = vmatpush2.msra.mxu0 0.0
      %1278 = vmatprep.subr.mxu0 0.0
      %1279 = vmatpush2.msra.mxu0 0.0
      %1280 = vmatprep.subr.mxu0 0.0
      %1281 = vmatpush2.msra.mxu0 0.0
      %1282 = vmatprep.subr.mxu0 0.0
      %1283 = vmatpush2.msra.mxu0 0.0
      %1284 = vmatprep.subr.mxu0 0.0
      %1285 = vmatpush2.msra.mxu0 0.0
      %1286 = vmatprep.subr.mxu0 0.0
      %1287 = vmatpush2.msra.mxu0 0.0
      %1288 = vmatprep.subr.mxu0 0.0
      %1289 = vmatpush2.msra.mxu0 0.0
      %1290 = vmatprep.subr.mxu0 0.0
      %1291 = vmatpush2.msra.mxu0 0.0
      %1292 = vmatprep.subr.mxu0 0.0
      %1293 = vmatpush2.msra.mxu0 0.0
      %1294 = vmatprep.subr.mxu0 0.0
      %1295 = vmatpush2.msra.mxu0 0.0
      %1296 = vmatprep.subr.mxu0 0.0
      %1297 = vmatpush2.msra.mxu0 0.0
      %1298 = vmatprep.subr.mxu0 0.0
      %1299 = vmatpush2.msra.mxu0 0.0
      %1300 = vmatprep.subr.mxu0 0.0
      %1301 = vmatpush2.msra.mxu0 0.0
      %1302 = vmatprep.subr.mxu0 0.0
      %1303 = vmatpush2.msra.mxu0 0.0
      %1304 = vmatprep.subr.mxu0 0.0
      %1305 = vmatpush2.msra.mxu0 0.0
      %1306 = vmatprep.subr.mxu0 0.0
      %1307 = vmatpush2.msra.mxu0 0.0
      %1308 = vmatprep.mubr.f32.mxu0 0.0
      %1309 = vmatmul.mubr.f32.gmra.mxu0 %v1207
      %v1310 = vpop.f32.mrf.mxu0
      %v1311 = vadd.f32 0.0, %v1310
      %v1312 = vpop.f32.mrf.mxu0
      %1313 = vmatprep.mubr.f32.mxu0 0.0
      %1314 = vmatmul.mubr.f32.gmra.mxu0 %v1208
      %v1315 = vpop.f32.mrf.mxu0
      %v1316 = vadd.f32 0.0, %v1315
      %v1317 = vpop.f32.mrf.mxu0
      %1318 = vmatprep.mubr.f32.mxu0 0.0
      %1319 = vmatmul.mubr.f32.gmra.mxu0 %v1209
      %v1320 = vpop.f32.mrf.mxu0
      %v1321 = vadd.f32 0.0, %v1320
      %v1322 = vpop.f32.mrf.mxu0
      %1323 = vmatprep.mubr.f32.mxu0 0.0
      %1324 = vmatmul.mubr.f32.gmra.mxu0 %v1210
      %v1325 = vpop.f32.mrf.mxu0
      %v1326 = vadd.f32 0.0, %v1325
      %v1327 = vpop.f32.mrf.mxu0
      %1328 = vmatprep.mubr.f32.mxu0 0.0
      %1329 = vmatmul.mubr.f32.gmra.mxu0 %v1211
      %v1330 = vpop.f32.mrf.mxu0
      %v1331 = vadd.f32 0.0, %v1330
      %v1332 = vpop.f32.mrf.mxu0
      %1333 = vmatprep.mubr.f32.mxu0 0.0
      %1334 = vmatmul.mubr.f32.gmra.mxu0 %v1212
      %v1335 = vpop.f32.mrf.mxu0
      %v1336 = vadd.f32 0.0, %v1335
      %v1337 = vpop.f32.mrf.mxu0
      %1338 = vmatprep.mubr.f32.mxu0 0.0
      %1339 = vmatmul.mubr.f32.gmra.mxu0 %v1213
      %v1340 = vpop.f32.mrf.mxu0
      %v1341 = vadd.f32 0.0, %v1340
      %v1342 = vpop.f32.mrf.mxu0
      %1343 = vmatprep.mubr.f32.mxu0 0.0
      %1344 = vmatmul.mubr.f32.gmra.mxu0 %v1214
      %v1345 = vpop.f32.mrf.mxu0
      %v1346 = vadd.f32 0.0, %v1345
      %v1347 = vpop.f32.mrf.mxu0
      %1348 = vmatprep.mubr.f32.mxu0 0.0
      %1349 = vmatmul.mubr.f32.gmra.mxu0 %v1215
      %v1350 = vpop.f32.mrf.mxu0
      %v1351 = vadd.f32 0.0, %v1350
      %v1352 = vpop.f32.mrf.mxu0
      %1353 = vmatprep.mubr.f32.mxu0 0.0
      %1354 = vmatmul.mubr.f32.gmra.mxu0 %v1216
      %v1355 = vpop.f32.mrf.mxu0
      %v1356 = vadd.f32 0.0, %v1355
      %v1357 = vpop.f32.mrf.mxu0
      %1358 = vmatprep.mubr.f32.mxu0 0.0
      %1359 = vmatmul.mubr.f32.gmra.mxu0 %v1217
      %v1360 = vpop.f32.mrf.mxu0
      %v1361 = vadd.f32 0.0, %v1360
      %v1362 = vpop.f32.mrf.mxu0
      %1363 = vmatprep.mubr.f32.mxu0 0.0
      %1364 = vmatmul.mubr.f32.gmra.mxu0 %v1218
      %v1365 = vpop.f32.mrf.mxu0
      %v1366 = vadd.f32 0.0, %v1365
      %v1367 = vpop.f32.mrf.mxu0
      %1368 = vmatprep.mubr.f32.mxu0 0.0
      %1369 = vmatmul.mubr.f32.gmra.mxu0 %v1219
      %v1370 = vpop.f32.mrf.mxu0
      %v1371 = vadd.f32 0.0, %v1370
      %v1372 = vpop.f32.mrf.mxu0
      %1373 = vmatprep.mubr.f32.mxu0 0.0
      %1374 = vmatmul.mubr.f32.gmra.mxu0 %v1220
      %v1375 = vpop.f32.mrf.mxu0
      %v1376 = vadd.f32 0.0, %v1375
      %v1377 = vpop.f32.mrf.mxu0
      %1378 = vmatprep.mubr.f32.mxu0 0.0
      %1379 = vmatmul.mubr.f32.gmra.mxu0 %v1221
      %v1380 = vpop.f32.mrf.mxu0
      %v1381 = vadd.f32 0.0, %v1380
      %v1382 = vpop.f32.mrf.mxu0
      %1383 = vmatprep.mubr.f32.mxu0 0.0
      %1384 = vmatmul.mubr.f32.gmra.mxu0 %v1222
      %v1385 = vpop.f32.mrf.mxu0
      %v1386 = vadd.f32 0.0, %v1385
      %v1387 = vpop.f32.mrf.mxu0
      %1388 = vdwg.mxu0
      %v1389 = vadd.f32 %v1191, %v1311
      %v1390 = vadd.f32 %v1192, %v1316
      %v1391 = vadd.f32 %v1193, %v1321
      %v1392 = vadd.f32 %v1194, %v1326
      %v1393 = vadd.f32 %v1195, %v1331
      %v1394 = vadd.f32 %v1196, %v1336
      %v1395 = vadd.f32 %v1197, %v1341
      %v1396 = vadd.f32 %v1198, %v1346
      %v1397 = vadd.f32 %v1199, %v1351
      %v1398 = vadd.f32 %v1200, %v1356
      %v1399 = vadd.f32 %v1201, %v1361
      %v1400 = vadd.f32 %v1202, %v1366
      %v1401 = vadd.f32 %v1203, %v1371
      %v1402 = vadd.f32 %v1204, %v1376
      %v1403 = vadd.f32 %v1205, %v1381
      %v1404 = vadd.f32 %v1206, %v1386
      %s1405 = scalar_lea.vmem %s3, 512
      %v1406 = vld [vmem:[%s1405] sm:$0xff]
      %v1407 = vld [vmem:[%s1405 + $0x8] sm:$0xff]
      %v1408 = vld [vmem:[%s1405 + $0x10] sm:$0xff]
      %v1409 = vld [vmem:[%s1405 + $0x18] sm:$0xff]
      %v1410 = vld [vmem:[%s1405 + $0x20] sm:$0xff]
      %v1411 = vld [vmem:[%s1405 + $0x28] sm:$0xff]
      %v1412 = vld [vmem:[%s1405 + $0x30] sm:$0xff]
      %v1413 = vld [vmem:[%s1405 + $0x38] sm:$0xff]
      %v1414 = vld [vmem:[%s1405 + $0x40] sm:$0xff]
      %v1415 = vld [vmem:[%s1405 + $0x48] sm:$0xff]
      %v1416 = vld [vmem:[%s1405 + $0x50] sm:$0xff]
      %v1417 = vld [vmem:[%s1405 + $0x58] sm:$0xff]
      %v1418 = vld [vmem:[%s1405 + $0x60] sm:$0xff]
      %v1419 = vld [vmem:[%s1405 + $0x68] sm:$0xff]
      %v1420 = vld [vmem:[%s1405 + $0x70] sm:$0xff]
      %v1421 = vld [vmem:[%s1405 + $0x78] sm:$0xff]
      %1422 = vmatprep.subr.mxu0 0.0
      %1423 = vmatpush1.msra.mxu0 %v1421
      %1424 = vmatprep.subr.mxu0 0.0
      %1425 = vmatpush1.msra.mxu0 %v1420
      %1426 = vmatprep.subr.mxu0 0.0
      %1427 = vmatpush1.msra.mxu0 %v1419
      %1428 = vmatprep.subr.mxu0 0.0
      %1429 = vmatpush1.msra.mxu0 %v1418
      %1430 = vmatprep.subr.mxu0 0.0
      %1431 = vmatpush1.msra.mxu0 %v1417
      %1432 = vmatprep.subr.mxu0 0.0
      %1433 = vmatpush1.msra.mxu0 %v1416
      %1434 = vmatprep.subr.mxu0 0.0
      %1435 = vmatpush1.msra.mxu0 %v1415
      %1436 = vmatprep.subr.mxu0 0.0
      %1437 = vmatpush1.msra.mxu0 %v1414
      %1438 = vmatprep.subr.mxu0 0.0
      %1439 = vmatpush1.msra.mxu0 %v1413
      %1440 = vmatprep.subr.mxu0 0.0
      %1441 = vmatpush1.msra.mxu0 %v1412
      %1442 = vmatprep.subr.mxu0 0.0
      %1443 = vmatpush1.msra.mxu0 %v1411
      %1444 = vmatprep.subr.mxu0 0.0
      %1445 = vmatpush1.msra.mxu0 %v1410
      %1446 = vmatprep.subr.mxu0 0.0
      %1447 = vmatpush1.msra.mxu0 %v1409
      %1448 = vmatprep.subr.mxu0 0.0
      %1449 = vmatpush1.msra.mxu0 %v1408
      %1450 = vmatprep.subr.mxu0 0.0
      %1451 = vmatpush1.msra.mxu0 %v1407
      %1452 = vmatprep.subr.mxu0 0.0
      %1453 = vmatpush1.msra.mxu0 %v1406
      %1454 = vmatprep.subr.mxu0 0.0
      %1455 = vmatpush2.msra.mxu0 0.0
      %1456 = vmatprep.subr.mxu0 0.0
      %1457 = vmatpush2.msra.mxu0 0.0
      %1458 = vmatprep.subr.mxu0 0.0
      %1459 = vmatpush2.msra.mxu0 0.0
      %1460 = vmatprep.subr.mxu0 0.0
      %1461 = vmatpush2.msra.mxu0 0.0
      %1462 = vmatprep.subr.mxu0 0.0
      %1463 = vmatpush2.msra.mxu0 0.0
      %1464 = vmatprep.subr.mxu0 0.0
      %1465 = vmatpush2.msra.mxu0 0.0
      %1466 = vmatprep.subr.mxu0 0.0
      %1467 = vmatpush2.msra.mxu0 0.0
      %1468 = vmatprep.subr.mxu0 0.0
      %1469 = vmatpush2.msra.mxu0 0.0
      %1470 = vmatprep.subr.mxu0 0.0
      %1471 = vmatpush2.msra.mxu0 0.0
      %1472 = vmatprep.subr.mxu0 0.0
      %1473 = vmatpush2.msra.mxu0 0.0
      %1474 = vmatprep.subr.mxu0 0.0
      %1475 = vmatpush2.msra.mxu0 0.0
      %1476 = vmatprep.subr.mxu0 0.0
      %1477 = vmatpush2.msra.mxu0 0.0
      %1478 = vmatprep.subr.mxu0 0.0
      %1479 = vmatpush2.msra.mxu0 0.0
      %1480 = vmatprep.subr.mxu0 0.0
      %1481 = vmatpush2.msra.mxu0 0.0
      %1482 = vmatprep.subr.mxu0 0.0
      %1483 = vmatpush2.msra.mxu0 0.0
      %1484 = vmatprep.subr.mxu0 0.0
      %1485 = vmatpush2.msra.mxu0 0.0
      %1486 = vmatprep.mubr.f32.mxu0 0.0
      %1487 = vmatmul.mubr.f32.gmra.mxu0 %v1209
      %v1488 = vpop.f32.mrf.mxu0
      %v1489 = vadd.f32 0.0, %v1488
      %v1490 = vpop.f32.mrf.mxu0
      %1491 = vmatprep.mubr.f32.mxu0 0.0
      %1492 = vmatmul.mubr.f32.gmra.mxu0 %v1210
      %v1493 = vpop.f32.mrf.mxu0
      %v1494 = vadd.f32 0.0, %v1493
      %v1495 = vpop.f32.mrf.mxu0
      %1496 = vmatprep.mubr.f32.mxu0 0.0
      %1497 = vmatmul.mubr.f32.gmra.mxu0 %v1211
      %v1498 = vpop.f32.mrf.mxu0
      %v1499 = vadd.f32 0.0, %v1498
      %v1500 = vpop.f32.mrf.mxu0
      %1501 = vmatprep.mubr.f32.mxu0 0.0
      %1502 = vmatmul.mubr.f32.gmra.mxu0 %v1212
      %v1503 = vpop.f32.mrf.mxu0
      %v1504 = vadd.f32 0.0, %v1503
      %v1505 = vpop.f32.mrf.mxu0
      %1506 = vmatprep.mubr.f32.mxu0 0.0
      %1507 = vmatmul.mubr.f32.gmra.mxu0 %v1213
      %v1508 = vpop.f32.mrf.mxu0
      %v1509 = vadd.f32 0.0, %v1508
      %v1510 = vpop.f32.mrf.mxu0
      %1511 = vmatprep.mubr.f32.mxu0 0.0
      %1512 = vmatmul.mubr.f32.gmra.mxu0 %v1214
      %v1513 = vpop.f32.mrf.mxu0
      %v1514 = vadd.f32 0.0, %v1513
      %v1515 = vpop.f32.mrf.mxu0
      %1516 = vmatprep.mubr.f32.mxu0 0.0
      %1517 = vmatmul.mubr.f32.gmra.mxu0 %v1215
      %v1518 = vpop.f32.mrf.mxu0
      %v1519 = vadd.f32 0.0, %v1518
      %v1520 = vpop.f32.mrf.mxu0
      %1521 = vmatprep.mubr.f32.mxu0 0.0
      %1522 = vmatmul.mubr.f32.gmra.mxu0 %v1216
      %v1523 = vpop.f32.mrf.mxu0
      %v1524 = vadd.f32 0.0, %v1523
      %v1525 = vpop.f32.mrf.mxu0
      %1526 = vmatprep.mubr.f32.mxu0 0.0
      %1527 = vmatmul.mubr.f32.gmra.mxu0 %v1217
      %v1528 = vpop.f32.mrf.mxu0
      %v1529 = vadd.f32 0.0, %v1528
      %v1530 = vpop.f32.mrf.mxu0
      %1531 = vmatprep.mubr.f32.mxu0 0.0
      %1532 = vmatmul.mubr.f32.gmra.mxu0 %v1218
      %v1533 = vpop.f32.mrf.mxu0
      %v1534 = vadd.f32 0.0, %v1533
      %v1535 = vpop.f32.mrf.mxu0
      %1536 = vmatprep.mubr.f32.mxu0 0.0
      %1537 = vmatmul.mubr.f32.gmra.mxu0 %v1219
      %v1538 = vpop.f32.mrf.mxu0
      %v1539 = vadd.f32 0.0, %v1538
      %v1540 = vpop.f32.mrf.mxu0
      %1541 = vmatprep.mubr.f32.mxu0 0.0
      %1542 = vmatmul.mubr.f32.gmra.mxu0 %v1220
      %v1543 = vpop.f32.mrf.mxu0
      %v1544 = vadd.f32 0.0, %v1543
      %v1545 = vpop.f32.mrf.mxu0
      %1546 = vmatprep.mubr.f32.mxu0 0.0
      %1547 = vmatmul.mubr.f32.gmra.mxu0 %v1221
      %v1548 = vpop.f32.mrf.mxu0
      %v1549 = vadd.f32 0.0, %v1548
      %v1550 = vpop.f32.mrf.mxu0
      %1551 = vmatprep.mubr.f32.mxu0 0.0
      %1552 = vmatmul.mubr.f32.gmra.mxu0 %v1222
      %v1553 = vpop.f32.mrf.mxu0
      %v1554 = vadd.f32 0.0, %v1553
      %v1555 = vpop.f32.mrf.mxu0
      %1556 = vmatprep.mubr.f32.mxu0 0.0
      %1557 = vmatmul.mubr.f32.gmra.mxu0 %v1223
      %v1558 = vpop.f32.mrf.mxu0
      %v1559 = vadd.f32 0.0, %v1558
      %v1560 = vpop.f32.mrf.mxu0
      %1561 = vmatprep.mubr.f32.mxu0 0.0
      %1562 = vmatmul.mubr.f32.gmra.mxu0 %v1224
      %v1563 = vpop.f32.mrf.mxu0
      %v1564 = vadd.f32 0.0, %v1563
      %v1565 = vpop.f32.mrf.mxu0
      %1566 = vdwg.mxu0
      %v1567 = vadd.f32 %v1389, %v1489
      %v1568 = vadd.f32 %v1390, %v1494
      %v1569 = vadd.f32 %v1391, %v1499
      %v1570 = vadd.f32 %v1392, %v1504
      %v1571 = vadd.f32 %v1393, %v1509
      %v1572 = vadd.f32 %v1394, %v1514
      %v1573 = vadd.f32 %v1395, %v1519
      %v1574 = vadd.f32 %v1396, %v1524
      %v1575 = vadd.f32 %v1397, %v1529
      %v1576 = vadd.f32 %v1398, %v1534
      %v1577 = vadd.f32 %v1399, %v1539
      %v1578 = vadd.f32 %v1400, %v1544
      %v1579 = vadd.f32 %v1401, %v1549
      %v1580 = vadd.f32 %v1402, %v1554
      %v1581 = vadd.f32 %v1403, %v1559
      %v1582 = vadd.f32 %v1404, %v1564
      %s1583 = scalar_lea.vmem %s3, 896
      %v1584 = vld [vmem:[%s1583] sm:$0xff]
      %v1585 = vld [vmem:[%s1583 + $0x8] sm:$0xff]
      %v1586 = vld [vmem:[%s1583 + $0x10] sm:$0xff]
      %v1587 = vld [vmem:[%s1583 + $0x18] sm:$0xff]
      %v1588 = vld [vmem:[%s1583 + $0x20] sm:$0xff]
      %v1589 = vld [vmem:[%s1583 + $0x28] sm:$0xff]
      %v1590 = vld [vmem:[%s1583 + $0x30] sm:$0xff]
      %v1591 = vld [vmem:[%s1583 + $0x38] sm:$0xff]
      %v1592 = vld [vmem:[%s1583 + $0x40] sm:$0xff]
      %v1593 = vld [vmem:[%s1583 + $0x48] sm:$0xff]
      %v1594 = vld [vmem:[%s1583 + $0x50] sm:$0xff]
      %v1595 = vld [vmem:[%s1583 + $0x58] sm:$0xff]
      %v1596 = vld [vmem:[%s1583 + $0x60] sm:$0xff]
      %v1597 = vld [vmem:[%s1583 + $0x68] sm:$0xff]
      %v1598 = vld [vmem:[%s1583 + $0x70] sm:$0xff]
      %v1599 = vld [vmem:[%s1583 + $0x78] sm:$0xff]
      %1600 = vmatprep.subr.mxu0 0.0
      %1601 = vmatpush1.msra.mxu0 %v1599
      %1602 = vmatprep.subr.mxu0 0.0
      %1603 = vmatpush1.msra.mxu0 %v1598
      %1604 = vmatprep.subr.mxu0 0.0
      %1605 = vmatpush1.msra.mxu0 %v1597
      %1606 = vmatprep.subr.mxu0 0.0
      %1607 = vmatpush1.msra.mxu0 %v1596
      %1608 = vmatprep.subr.mxu0 0.0
      %1609 = vmatpush1.msra.mxu0 %v1595
      %1610 = vmatprep.subr.mxu0 0.0
      %1611 = vmatpush1.msra.mxu0 %v1594
      %1612 = vmatprep.subr.mxu0 0.0
      %1613 = vmatpush1.msra.mxu0 %v1593
      %1614 = vmatprep.subr.mxu0 0.0
      %1615 = vmatpush1.msra.mxu0 %v1592
      %1616 = vmatprep.subr.mxu0 0.0
      %1617 = vmatpush1.msra.mxu0 %v1591
      %1618 = vmatprep.subr.mxu0 0.0
      %1619 = vmatpush1.msra.mxu0 %v1590
      %1620 = vmatprep.subr.mxu0 0.0
      %1621 = vmatpush1.msra.mxu0 %v1589
      %1622 = vmatprep.subr.mxu0 0.0
      %1623 = vmatpush1.msra.mxu0 %v1588
      %1624 = vmatprep.subr.mxu0 0.0
      %1625 = vmatpush1.msra.mxu0 %v1587
      %1626 = vmatprep.subr.mxu0 0.0
      %1627 = vmatpush1.msra.mxu0 %v1586
      %1628 = vmatprep.subr.mxu0 0.0
      %1629 = vmatpush1.msra.mxu0 %v1585
      %1630 = vmatprep.subr.mxu0 0.0
      %1631 = vmatpush1.msra.mxu0 %v1584
      %1632 = vmatprep.subr.mxu0 0.0
      %1633 = vmatpush2.msra.mxu0 0.0
      %1634 = vmatprep.subr.mxu0 0.0
      %1635 = vmatpush2.msra.mxu0 0.0
      %1636 = vmatprep.subr.mxu0 0.0
      %1637 = vmatpush2.msra.mxu0 0.0
      %1638 = vmatprep.subr.mxu0 0.0
      %1639 = vmatpush2.msra.mxu0 0.0
      %1640 = vmatprep.subr.mxu0 0.0
      %1641 = vmatpush2.msra.mxu0 0.0
      %1642 = vmatprep.subr.mxu0 0.0
      %1643 = vmatpush2.msra.mxu0 0.0
      %1644 = vmatprep.subr.mxu0 0.0
      %1645 = vmatpush2.msra.mxu0 0.0
      %1646 = vmatprep.subr.mxu0 0.0
      %1647 = vmatpush2.msra.mxu0 0.0
      %1648 = vmatprep.subr.mxu0 0.0
      %1649 = vmatpush2.msra.mxu0 0.0
      %1650 = vmatprep.subr.mxu0 0.0
      %1651 = vmatpush2.msra.mxu0 0.0
      %1652 = vmatprep.subr.mxu0 0.0
      %1653 = vmatpush2.msra.mxu0 0.0
      %1654 = vmatprep.subr.mxu0 0.0
      %1655 = vmatpush2.msra.mxu0 0.0
      %1656 = vmatprep.subr.mxu0 0.0
      %1657 = vmatpush2.msra.mxu0 0.0
      %1658 = vmatprep.subr.mxu0 0.0
      %1659 = vmatpush2.msra.mxu0 0.0
      %1660 = vmatprep.subr.mxu0 0.0
      %1661 = vmatpush2.msra.mxu0 0.0
      %1662 = vmatprep.subr.mxu0 0.0
      %1663 = vmatpush2.msra.mxu0 0.0
      %1664 = vmatprep.mubr.f32.mxu0 0.0
      %1665 = vmatmul.mubr.f32.gmra.mxu0 %v1211
      %v1666 = vpop.f32.mrf.mxu0
      %v1667 = vadd.f32 0.0, %v1666
      %v1668 = vpop.f32.mrf.mxu0
      %1669 = vmatprep.mubr.f32.mxu0 0.0
      %1670 = vmatmul.mubr.f32.gmra.mxu0 %v1212
      %v1671 = vpop.f32.mrf.mxu0
      %v1672 = vadd.f32 0.0, %v1671
      %v1673 = vpop.f32.mrf.mxu0
      %1674 = vmatprep.mubr.f32.mxu0 0.0
      %1675 = vmatmul.mubr.f32.gmra.mxu0 %v1213
      %v1676 = vpop.f32.mrf.mxu0
      %v1677 = vadd.f32 0.0, %v1676
      %v1678 = vpop.f32.mrf.mxu0
      %1679 = vmatprep.mubr.f32.mxu0 0.0
      %1680 = vmatmul.mubr.f32.gmra.mxu0 %v1214
      %v1681 = vpop.f32.mrf.mxu0
      %v1682 = vadd.f32 0.0, %v1681
      %v1683 = vpop.f32.mrf.mxu0
      %1684 = vmatprep.mubr.f32.mxu0 0.0
      %1685 = vmatmul.mubr.f32.gmra.mxu0 %v1215
      %v1686 = vpop.f32.mrf.mxu0
      %v1687 = vadd.f32 0.0, %v1686
      %v1688 = vpop.f32.mrf.mxu0
      %1689 = vmatprep.mubr.f32.mxu0 0.0
      %1690 = vmatmul.mubr.f32.gmra.mxu0 %v1216
      %v1691 = vpop.f32.mrf.mxu0
      %v1692 = vadd.f32 0.0, %v1691
      %v1693 = vpop.f32.mrf.mxu0
      %1694 = vmatprep.mubr.f32.mxu0 0.0
      %1695 = vmatmul.mubr.f32.gmra.mxu0 %v1217
      %v1696 = vpop.f32.mrf.mxu0
      %v1697 = vadd.f32 0.0, %v1696
      %v1698 = vpop.f32.mrf.mxu0
      %1699 = vmatprep.mubr.f32.mxu0 0.0
      %1700 = vmatmul.mubr.f32.gmra.mxu0 %v1218
      %v1701 = vpop.f32.mrf.mxu0
      %v1702 = vadd.f32 0.0, %v1701
      %v1703 = vpop.f32.mrf.mxu0
      %1704 = vmatprep.mubr.f32.mxu0 0.0
      %1705 = vmatmul.mubr.f32.gmra.mxu0 %v1219
      %v1706 = vpop.f32.mrf.mxu0
      %v1707 = vadd.f32 0.0, %v1706
      %v1708 = vpop.f32.mrf.mxu0
      %1709 = vmatprep.mubr.f32.mxu0 0.0
      %1710 = vmatmul.mubr.f32.gmra.mxu0 %v1220
      %v1711 = vpop.f32.mrf.mxu0
      %v1712 = vadd.f32 0.0, %v1711
      %v1713 = vpop.f32.mrf.mxu0
      %1714 = vmatprep.mubr.f32.mxu0 0.0
      %1715 = vmatmul.mubr.f32.gmra.mxu0 %v1221
      %v1716 = vpop.f32.mrf.mxu0
      %v1717 = vadd.f32 0.0, %v1716
      %v1718 = vpop.f32.mrf.mxu0
      %1719 = vmatprep.mubr.f32.mxu0 0.0
      %1720 = vmatmul.mubr.f32.gmra.mxu0 %v1222
      %v1721 = vpop.f32.mrf.mxu0
      %v1722 = vadd.f32 0.0, %v1721
      %v1723 = vpop.f32.mrf.mxu0
      %1724 = vmatprep.mubr.f32.mxu0 0.0
      %1725 = vmatmul.mubr.f32.gmra.mxu0 %v1223
      %v1726 = vpop.f32.mrf.mxu0
      %v1727 = vadd.f32 0.0, %v1726
      %v1728 = vpop.f32.mrf.mxu0
      %1729 = vmatprep.mubr.f32.mxu0 0.0
      %1730 = vmatmul.mubr.f32.gmra.mxu0 %v1224
      %v1731 = vpop.f32.mrf.mxu0
      %v1732 = vadd.f32 0.0, %v1731
      %v1733 = vpop.f32.mrf.mxu0
      %1734 = vmatprep.mubr.f32.mxu0 0.0
      %1735 = vmatmul.mubr.f32.gmra.mxu0 %v1225
      %v1736 = vpop.f32.mrf.mxu0
      %v1737 = vadd.f32 0.0, %v1736
      %v1738 = vpop.f32.mrf.mxu0
      %1739 = vmatprep.mubr.f32.mxu0 0.0
      %1740 = vmatmul.mubr.f32.gmra.mxu0 %v1226
      %v1741 = vpop.f32.mrf.mxu0
      %v1742 = vadd.f32 0.0, %v1741
      %v1743 = vpop.f32.mrf.mxu0
      %1744 = vdwg.mxu0
      %v1745 = vadd.f32 %v1567, %v1667
      %v1746 = vadd.f32 %v1568, %v1672
      %v1747 = vadd.f32 %v1569, %v1677
      %v1748 = vadd.f32 %v1570, %v1682
      %v1749 = vadd.f32 %v1571, %v1687
      %v1750 = vadd.f32 %v1572, %v1692
      %v1751 = vadd.f32 %v1573, %v1697
      %v1752 = vadd.f32 %v1574, %v1702
      %v1753 = vadd.f32 %v1575, %v1707
      %v1754 = vadd.f32 %v1576, %v1712
      %v1755 = vadd.f32 %v1577, %v1717
      %v1756 = vadd.f32 %v1578, %v1722
      %v1757 = vadd.f32 %v1579, %v1727
      %v1758 = vadd.f32 %v1580, %v1732
      %v1759 = vadd.f32 %v1581, %v1737
      %v1760 = vadd.f32 %v1582, %v1742
      %v1761 = vld [vmem:[#allocation2 + $0x2] sm:$0xff]
      %v1762 = vld [vmem:[#allocation2 + $0xa] sm:$0xff]
      %v1763 = vld [vmem:[#allocation2 + $0x1a] sm:$0xff]
      %v1764 = vld [vmem:[#allocation2 + $0x22] sm:$0xff]
      %v1765 = vld [vmem:[#allocation2 + $0x32] sm:$0xff]
      %v1766 = vld [vmem:[#allocation2 + $0x3a] sm:$0xff]
      %v1767 = vld [vmem:[#allocation2 + $0x4a] sm:$0xff]
      %v1768 = vld [vmem:[#allocation2 + $0x52] sm:$0xff]
      %v1769 = vld [vmem:[#allocation2 + $0x62] sm:$0xff]
      %v1770 = vld [vmem:[#allocation2 + $0x6a] sm:$0xff]
      %v1771 = vld [vmem:[#allocation2 + $0x7a] sm:$0xff]
      %v1772 = vld [vmem:[#allocation2 + $0x82] sm:$0xff]
      %v1773 = vld [vmem:[#allocation2 + $0x92] sm:$0xff]
      %v1774 = vld [vmem:[#allocation2 + $0x9a] sm:$0xff]
      %v1775 = vld [vmem:[#allocation2 + $0xaa] sm:$0xff]
      %v1776 = vld [vmem:[#allocation2 + $0xb2] sm:$0xff]
      %v1777 = vld [vmem:[#allocation2 + $0xc2] sm:$0xff]
      %v1778 = vld [vmem:[#allocation2 + $0xca] sm:$0xff]
      %v1779 = vld [vmem:[#allocation2 + $0xda] sm:$0xff]
      %v1780 = vld [vmem:[#allocation2 + $0xe2] sm:$0xff]
      %s1781 = scalar_lea.vmem %s3, 256
      %v1782 = vld [vmem:[%s1781] sm:$0xff]
      %v1783 = vld [vmem:[%s1781 + $0x8] sm:$0xff]
      %v1784 = vld [vmem:[%s1781 + $0x10] sm:$0xff]
      %v1785 = vld [vmem:[%s1781 + $0x18] sm:$0xff]
      %v1786 = vld [vmem:[%s1781 + $0x20] sm:$0xff]
      %v1787 = vld [vmem:[%s1781 + $0x28] sm:$0xff]
      %v1788 = vld [vmem:[%s1781 + $0x30] sm:$0xff]
      %v1789 = vld [vmem:[%s1781 + $0x38] sm:$0xff]
      %v1790 = vld [vmem:[%s1781 + $0x40] sm:$0xff]
      %v1791 = vld [vmem:[%s1781 + $0x48] sm:$0xff]
      %v1792 = vld [vmem:[%s1781 + $0x50] sm:$0xff]
      %v1793 = vld [vmem:[%s1781 + $0x58] sm:$0xff]
      %v1794 = vld [vmem:[%s1781 + $0x60] sm:$0xff]
      %v1795 = vld [vmem:[%s1781 + $0x68] sm:$0xff]
      %v1796 = vld [vmem:[%s1781 + $0x70] sm:$0xff]
      %v1797 = vld [vmem:[%s1781 + $0x78] sm:$0xff]
      %1798 = vmatprep.subr.mxu0 0.0
      %1799 = vmatpush1.msra.mxu0 %v1797
      %1800 = vmatprep.subr.mxu0 0.0
      %1801 = vmatpush1.msra.mxu0 %v1796
      %1802 = vmatprep.subr.mxu0 0.0
      %1803 = vmatpush1.msra.mxu0 %v1795
      %1804 = vmatprep.subr.mxu0 0.0
      %1805 = vmatpush1.msra.mxu0 %v1794
      %1806 = vmatprep.subr.mxu0 0.0
      %1807 = vmatpush1.msra.mxu0 %v1793
      %1808 = vmatprep.subr.mxu0 0.0
      %1809 = vmatpush1.msra.mxu0 %v1792
      %1810 = vmatprep.subr.mxu0 0.0
      %1811 = vmatpush1.msra.mxu0 %v1791
      %1812 = vmatprep.subr.mxu0 0.0
      %1813 = vmatpush1.msra.mxu0 %v1790
      %1814 = vmatprep.subr.mxu0 0.0
      %1815 = vmatpush1.msra.mxu0 %v1789
      %1816 = vmatprep.subr.mxu0 0.0
      %1817 = vmatpush1.msra.mxu0 %v1788
      %1818 = vmatprep.subr.mxu0 0.0
      %1819 = vmatpush1.msra.mxu0 %v1787
      %1820 = vmatprep.subr.mxu0 0.0
      %1821 = vmatpush1.msra.mxu0 %v1786
      %1822 = vmatprep.subr.mxu0 0.0
      %1823 = vmatpush1.msra.mxu0 %v1785
      %1824 = vmatprep.subr.mxu0 0.0
      %1825 = vmatpush1.msra.mxu0 %v1784
      %1826 = vmatprep.subr.mxu0 0.0
      %1827 = vmatpush1.msra.mxu0 %v1783
      %1828 = vmatprep.subr.mxu0 0.0
      %1829 = vmatpush1.msra.mxu0 %v1782
      %1830 = vmatprep.subr.mxu0 0.0
      %1831 = vmatpush2.msra.mxu0 0.0
      %1832 = vmatprep.subr.mxu0 0.0
      %1833 = vmatpush2.msra.mxu0 0.0
      %1834 = vmatprep.subr.mxu0 0.0
      %1835 = vmatpush2.msra.mxu0 0.0
      %1836 = vmatprep.subr.mxu0 0.0
      %1837 = vmatpush2.msra.mxu0 0.0
      %1838 = vmatprep.subr.mxu0 0.0
      %1839 = vmatpush2.msra.mxu0 0.0
      %1840 = vmatprep.subr.mxu0 0.0
      %1841 = vmatpush2.msra.mxu0 0.0
      %1842 = vmatprep.subr.mxu0 0.0
      %1843 = vmatpush2.msra.mxu0 0.0
      %1844 = vmatprep.subr.mxu0 0.0
      %1845 = vmatpush2.msra.mxu0 0.0
      %1846 = vmatprep.subr.mxu0 0.0
      %1847 = vmatpush2.msra.mxu0 0.0
      %1848 = vmatprep.subr.mxu0 0.0
      %1849 = vmatpush2.msra.mxu0 0.0
      %1850 = vmatprep.subr.mxu0 0.0
      %1851 = vmatpush2.msra.mxu0 0.0
      %1852 = vmatprep.subr.mxu0 0.0
      %1853 = vmatpush2.msra.mxu0 0.0
      %1854 = vmatprep.subr.mxu0 0.0
      %1855 = vmatpush2.msra.mxu0 0.0
      %1856 = vmatprep.subr.mxu0 0.0
      %1857 = vmatpush2.msra.mxu0 0.0
      %1858 = vmatprep.subr.mxu0 0.0
      %1859 = vmatpush2.msra.mxu0 0.0
      %1860 = vmatprep.subr.mxu0 0.0
      %1861 = vmatpush2.msra.mxu0 0.0
      %1862 = vmatprep.mubr.f32.mxu0 0.0
      %1863 = vmatmul.mubr.f32.gmra.mxu0 %v1761
      %v1864 = vpop.f32.mrf.mxu0
      %v1865 = vadd.f32 0.0, %v1864
      %v1866 = vpop.f32.mrf.mxu0
      %1867 = vmatprep.mubr.f32.mxu0 0.0
      %1868 = vmatmul.mubr.f32.gmra.mxu0 %v1762
      %v1869 = vpop.f32.mrf.mxu0
      %v1870 = vadd.f32 0.0, %v1869
      %v1871 = vpop.f32.mrf.mxu0
      %1872 = vmatprep.mubr.f32.mxu0 0.0
      %1873 = vmatmul.mubr.f32.gmra.mxu0 %v1763
      %v1874 = vpop.f32.mrf.mxu0
      %v1875 = vadd.f32 0.0, %v1874
      %v1876 = vpop.f32.mrf.mxu0
      %1877 = vmatprep.mubr.f32.mxu0 0.0
      %1878 = vmatmul.mubr.f32.gmra.mxu0 %v1764
      %v1879 = vpop.f32.mrf.mxu0
      %v1880 = vadd.f32 0.0, %v1879
      %v1881 = vpop.f32.mrf.mxu0
      %1882 = vmatprep.mubr.f32.mxu0 0.0
      %1883 = vmatmul.mubr.f32.gmra.mxu0 %v1765
      %v1884 = vpop.f32.mrf.mxu0
      %v1885 = vadd.f32 0.0, %v1884
      %v1886 = vpop.f32.mrf.mxu0
      %1887 = vmatprep.mubr.f32.mxu0 0.0
      %1888 = vmatmul.mubr.f32.gmra.mxu0 %v1766
      %v1889 = vpop.f32.mrf.mxu0
      %v1890 = vadd.f32 0.0, %v1889
      %v1891 = vpop.f32.mrf.mxu0
      %1892 = vmatprep.mubr.f32.mxu0 0.0
      %1893 = vmatmul.mubr.f32.gmra.mxu0 %v1767
      %v1894 = vpop.f32.mrf.mxu0
      %v1895 = vadd.f32 0.0, %v1894
      %v1896 = vpop.f32.mrf.mxu0
      %1897 = vmatprep.mubr.f32.mxu0 0.0
      %1898 = vmatmul.mubr.f32.gmra.mxu0 %v1768
      %v1899 = vpop.f32.mrf.mxu0
      %v1900 = vadd.f32 0.0, %v1899
      %v1901 = vpop.f32.mrf.mxu0
      %1902 = vmatprep.mubr.f32.mxu0 0.0
      %1903 = vmatmul.mubr.f32.gmra.mxu0 %v1769
      %v1904 = vpop.f32.mrf.mxu0
      %v1905 = vadd.f32 0.0, %v1904
      %v1906 = vpop.f32.mrf.mxu0
      %1907 = vmatprep.mubr.f32.mxu0 0.0
      %1908 = vmatmul.mubr.f32.gmra.mxu0 %v1770
      %v1909 = vpop.f32.mrf.mxu0
      %v1910 = vadd.f32 0.0, %v1909
      %v1911 = vpop.f32.mrf.mxu0
      %1912 = vmatprep.mubr.f32.mxu0 0.0
      %1913 = vmatmul.mubr.f32.gmra.mxu0 %v1771
      %v1914 = vpop.f32.mrf.mxu0
      %v1915 = vadd.f32 0.0, %v1914
      %v1916 = vpop.f32.mrf.mxu0
      %1917 = vmatprep.mubr.f32.mxu0 0.0
      %1918 = vmatmul.mubr.f32.gmra.mxu0 %v1772
      %v1919 = vpop.f32.mrf.mxu0
      %v1920 = vadd.f32 0.0, %v1919
      %v1921 = vpop.f32.mrf.mxu0
      %1922 = vmatprep.mubr.f32.mxu0 0.0
      %1923 = vmatmul.mubr.f32.gmra.mxu0 %v1773
      %v1924 = vpop.f32.mrf.mxu0
      %v1925 = vadd.f32 0.0, %v1924
      %v1926 = vpop.f32.mrf.mxu0
      %1927 = vmatprep.mubr.f32.mxu0 0.0
      %1928 = vmatmul.mubr.f32.gmra.mxu0 %v1774
      %v1929 = vpop.f32.mrf.mxu0
      %v1930 = vadd.f32 0.0, %v1929
      %v1931 = vpop.f32.mrf.mxu0
      %1932 = vmatprep.mubr.f32.mxu0 0.0
      %1933 = vmatmul.mubr.f32.gmra.mxu0 %v1775
      %v1934 = vpop.f32.mrf.mxu0
      %v1935 = vadd.f32 0.0, %v1934
      %v1936 = vpop.f32.mrf.mxu0
      %1937 = vmatprep.mubr.f32.mxu0 0.0
      %1938 = vmatmul.mubr.f32.gmra.mxu0 %v1776
      %v1939 = vpop.f32.mrf.mxu0
      %v1940 = vadd.f32 0.0, %v1939
      %v1941 = vpop.f32.mrf.mxu0
      %1942 = vdwg.mxu0
      %v1943 = vadd.f32 %v1745, %v1865
      %v1944 = vadd.f32 %v1746, %v1870
      %v1945 = vadd.f32 %v1747, %v1875
      %v1946 = vadd.f32 %v1748, %v1880
      %v1947 = vadd.f32 %v1749, %v1885
      %v1948 = vadd.f32 %v1750, %v1890
      %v1949 = vadd.f32 %v1751, %v1895
      %v1950 = vadd.f32 %v1752, %v1900
      %v1951 = vadd.f32 %v1753, %v1905
      %v1952 = vadd.f32 %v1754, %v1910
      %v1953 = vadd.f32 %v1755, %v1915
      %v1954 = vadd.f32 %v1756, %v1920
      %v1955 = vadd.f32 %v1757, %v1925
      %v1956 = vadd.f32 %v1758, %v1930
      %v1957 = vadd.f32 %v1759, %v1935
      %v1958 = vadd.f32 %v1760, %v1940
      %s1959 = scalar_lea.vmem %s3, 640
      %v1960 = vld [vmem:[%s1959] sm:$0xff]
      %v1961 = vld [vmem:[%s1959 + $0x8] sm:$0xff]
      %v1962 = vld [vmem:[%s1959 + $0x10] sm:$0xff]
      %v1963 = vld [vmem:[%s1959 + $0x18] sm:$0xff]
      %v1964 = vld [vmem:[%s1959 + $0x20] sm:$0xff]
      %v1965 = vld [vmem:[%s1959 + $0x28] sm:$0xff]
      %v1966 = vld [vmem:[%s1959 + $0x30] sm:$0xff]
      %v1967 = vld [vmem:[%s1959 + $0x38] sm:$0xff]
      %v1968 = vld [vmem:[%s1959 + $0x40] sm:$0xff]
      %v1969 = vld [vmem:[%s1959 + $0x48] sm:$0xff]
      %v1970 = vld [vmem:[%s1959 + $0x50] sm:$0xff]
      %v1971 = vld [vmem:[%s1959 + $0x58] sm:$0xff]
      %v1972 = vld [vmem:[%s1959 + $0x60] sm:$0xff]
      %v1973 = vld [vmem:[%s1959 + $0x68] sm:$0xff]
      %v1974 = vld [vmem:[%s1959 + $0x70] sm:$0xff]
      %v1975 = vld [vmem:[%s1959 + $0x78] sm:$0xff]
      %1976 = vmatprep.subr.mxu0 0.0
      %1977 = vmatpush1.msra.mxu0 %v1975
      %1978 = vmatprep.subr.mxu0 0.0
      %1979 = vmatpush1.msra.mxu0 %v1974
      %1980 = vmatprep.subr.mxu0 0.0
      %1981 = vmatpush1.msra.mxu0 %v1973
      %1982 = vmatprep.subr.mxu0 0.0
      %1983 = vmatpush1.msra.mxu0 %v1972
      %1984 = vmatprep.subr.mxu0 0.0
      %1985 = vmatpush1.msra.mxu0 %v1971
      %1986 = vmatprep.subr.mxu0 0.0
      %1987 = vmatpush1.msra.mxu0 %v1970
      %1988 = vmatprep.subr.mxu0 0.0
      %1989 = vmatpush1.msra.mxu0 %v1969
      %1990 = vmatprep.subr.mxu0 0.0
      %1991 = vmatpush1.msra.mxu0 %v1968
      %1992 = vmatprep.subr.mxu0 0.0
      %1993 = vmatpush1.msra.mxu0 %v1967
      %1994 = vmatprep.subr.mxu0 0.0
      %1995 = vmatpush1.msra.mxu0 %v1966
      %1996 = vmatprep.subr.mxu0 0.0
      %1997 = vmatpush1.msra.mxu0 %v1965
      %1998 = vmatprep.subr.mxu0 0.0
      %1999 = vmatpush1.msra.mxu0 %v1964
      %2000 = vmatprep.subr.mxu0 0.0
      %2001 = vmatpush1.msra.mxu0 %v1963
      %2002 = vmatprep.subr.mxu0 0.0
      %2003 = vmatpush1.msra.mxu0 %v1962
      %2004 = vmatprep.subr.mxu0 0.0
      %2005 = vmatpush1.msra.mxu0 %v1961
      %2006 = vmatprep.subr.mxu0 0.0
      %2007 = vmatpush1.msra.mxu0 %v1960
      %2008 = vmatprep.subr.mxu0 0.0
      %2009 = vmatpush2.msra.mxu0 0.0
      %2010 = vmatprep.subr.mxu0 0.0
      %2011 = vmatpush2.msra.mxu0 0.0
      %2012 = vmatprep.subr.mxu0 0.0
      %2013 = vmatpush2.msra.mxu0 0.0
      %2014 = vmatprep.subr.mxu0 0.0
      %2015 = vmatpush2.msra.mxu0 0.0
      %2016 = vmatprep.subr.mxu0 0.0
      %2017 = vmatpush2.msra.mxu0 0.0
      %2018 = vmatprep.subr.mxu0 0.0
      %2019 = vmatpush2.msra.mxu0 0.0
      %2020 = vmatprep.subr.mxu0 0.0
      %2021 = vmatpush2.msra.mxu0 0.0
      %2022 = vmatprep.subr.mxu0 0.0
      %2023 = vmatpush2.msra.mxu0 0.0
      %2024 = vmatprep.subr.mxu0 0.0
      %2025 = vmatpush2.msra.mxu0 0.0
      %2026 = vmatprep.subr.mxu0 0.0
      %2027 = vmatpush2.msra.mxu0 0.0
      %2028 = vmatprep.subr.mxu0 0.0
      %2029 = vmatpush2.msra.mxu0 0.0
      %2030 = vmatprep.subr.mxu0 0.0
      %2031 = vmatpush2.msra.mxu0 0.0
      %2032 = vmatprep.subr.mxu0 0.0
      %2033 = vmatpush2.msra.mxu0 0.0
      %2034 = vmatprep.subr.mxu0 0.0
      %2035 = vmatpush2.msra.mxu0 0.0
      %2036 = vmatprep.subr.mxu0 0.0
      %2037 = vmatpush2.msra.mxu0 0.0
      %2038 = vmatprep.subr.mxu0 0.0
      %2039 = vmatpush2.msra.mxu0 0.0
      %2040 = vmatprep.mubr.f32.mxu0 0.0
      %2041 = vmatmul.mubr.f32.gmra.mxu0 %v1763
      %v2042 = vpop.f32.mrf.mxu0
      %v2043 = vadd.f32 0.0, %v2042
      %v2044 = vpop.f32.mrf.mxu0
      %2045 = vmatprep.mubr.f32.mxu0 0.0
      %2046 = vmatmul.mubr.f32.gmra.mxu0 %v1764
      %v2047 = vpop.f32.mrf.mxu0
      %v2048 = vadd.f32 0.0, %v2047
      %v2049 = vpop.f32.mrf.mxu0
      %2050 = vmatprep.mubr.f32.mxu0 0.0
      %2051 = vmatmul.mubr.f32.gmra.mxu0 %v1765
      %v2052 = vpop.f32.mrf.mxu0
      %v2053 = vadd.f32 0.0, %v2052
      %v2054 = vpop.f32.mrf.mxu0
      %2055 = vmatprep.mubr.f32.mxu0 0.0
      %2056 = vmatmul.mubr.f32.gmra.mxu0 %v1766
      %v2057 = vpop.f32.mrf.mxu0
      %v2058 = vadd.f32 0.0, %v2057
      %v2059 = vpop.f32.mrf.mxu0
      %2060 = vmatprep.mubr.f32.mxu0 0.0
      %2061 = vmatmul.mubr.f32.gmra.mxu0 %v1767
      %v2062 = vpop.f32.mrf.mxu0
      %v2063 = vadd.f32 0.0, %v2062
      %v2064 = vpop.f32.mrf.mxu0
      %2065 = vmatprep.mubr.f32.mxu0 0.0
      %2066 = vmatmul.mubr.f32.gmra.mxu0 %v1768
      %v2067 = vpop.f32.mrf.mxu0
      %v2068 = vadd.f32 0.0, %v2067
      %v2069 = vpop.f32.mrf.mxu0
      %2070 = vmatprep.mubr.f32.mxu0 0.0
      %2071 = vmatmul.mubr.f32.gmra.mxu0 %v1769
      %v2072 = vpop.f32.mrf.mxu0
      %v2073 = vadd.f32 0.0, %v2072
      %v2074 = vpop.f32.mrf.mxu0
      %2075 = vmatprep.mubr.f32.mxu0 0.0
      %2076 = vmatmul.mubr.f32.gmra.mxu0 %v1770
      %v2077 = vpop.f32.mrf.mxu0
      %v2078 = vadd.f32 0.0, %v2077
      %v2079 = vpop.f32.mrf.mxu0
      %2080 = vmatprep.mubr.f32.mxu0 0.0
      %2081 = vmatmul.mubr.f32.gmra.mxu0 %v1771
      %v2082 = vpop.f32.mrf.mxu0
      %v2083 = vadd.f32 0.0, %v2082
      %v2084 = vpop.f32.mrf.mxu0
      %2085 = vmatprep.mubr.f32.mxu0 0.0
      %2086 = vmatmul.mubr.f32.gmra.mxu0 %v1772
      %v2087 = vpop.f32.mrf.mxu0
      %v2088 = vadd.f32 0.0, %v2087
      %v2089 = vpop.f32.mrf.mxu0
      %2090 = vmatprep.mubr.f32.mxu0 0.0
      %2091 = vmatmul.mubr.f32.gmra.mxu0 %v1773
      %v2092 = vpop.f32.mrf.mxu0
      %v2093 = vadd.f32 0.0, %v2092
      %v2094 = vpop.f32.mrf.mxu0
      %2095 = vmatprep.mubr.f32.mxu0 0.0
      %2096 = vmatmul.mubr.f32.gmra.mxu0 %v1774
      %v2097 = vpop.f32.mrf.mxu0
      %v2098 = vadd.f32 0.0, %v2097
      %v2099 = vpop.f32.mrf.mxu0
      %2100 = vmatprep.mubr.f32.mxu0 0.0
      %2101 = vmatmul.mubr.f32.gmra.mxu0 %v1775
      %v2102 = vpop.f32.mrf.mxu0
      %v2103 = vadd.f32 0.0, %v2102
      %v2104 = vpop.f32.mrf.mxu0
      %2105 = vmatprep.mubr.f32.mxu0 0.0
      %2106 = vmatmul.mubr.f32.gmra.mxu0 %v1776
      %v2107 = vpop.f32.mrf.mxu0
      %v2108 = vadd.f32 0.0, %v2107
      %v2109 = vpop.f32.mrf.mxu0
      %2110 = vmatprep.mubr.f32.mxu0 0.0
      %2111 = vmatmul.mubr.f32.gmra.mxu0 %v1777
      %v2112 = vpop.f32.mrf.mxu0
      %v2113 = vadd.f32 0.0, %v2112
      %v2114 = vpop.f32.mrf.mxu0
      %2115 = vmatprep.mubr.f32.mxu0 0.0
      %2116 = vmatmul.mubr.f32.gmra.mxu0 %v1778
      %v2117 = vpop.f32.mrf.mxu0
      %v2118 = vadd.f32 0.0, %v2117
      %v2119 = vpop.f32.mrf.mxu0
      %2120 = vdwg.mxu0
      %v2121 = vadd.f32 %v1943, %v2043
      %v2122 = vadd.f32 %v1944, %v2048
      %v2123 = vadd.f32 %v1945, %v2053
      %v2124 = vadd.f32 %v1946, %v2058
      %v2125 = vadd.f32 %v1947, %v2063
      %v2126 = vadd.f32 %v1948, %v2068
      %v2127 = vadd.f32 %v1949, %v2073
      %v2128 = vadd.f32 %v1950, %v2078
      %v2129 = vadd.f32 %v1951, %v2083
      %v2130 = vadd.f32 %v1952, %v2088
      %v2131 = vadd.f32 %v1953, %v2093
      %v2132 = vadd.f32 %v1954, %v2098
      %v2133 = vadd.f32 %v1955, %v2103
      %v2134 = vadd.f32 %v1956, %v2108
      %v2135 = vadd.f32 %v1957, %v2113
      %v2136 = vadd.f32 %v1958, %v2118
      %s2137 = scalar_lea.vmem %s3, 1024
      %v2138 = vld [vmem:[%s2137] sm:$0xff]
      %v2139 = vld [vmem:[%s2137 + $0x8] sm:$0xff]
      %v2140 = vld [vmem:[%s2137 + $0x10] sm:$0xff]
      %v2141 = vld [vmem:[%s2137 + $0x18] sm:$0xff]
      %v2142 = vld [vmem:[%s2137 + $0x20] sm:$0xff]
      %v2143 = vld [vmem:[%s2137 + $0x28] sm:$0xff]
      %v2144 = vld [vmem:[%s2137 + $0x30] sm:$0xff]
      %v2145 = vld [vmem:[%s2137 + $0x38] sm:$0xff]
      %v2146 = vld [vmem:[%s2137 + $0x40] sm:$0xff]
      %v2147 = vld [vmem:[%s2137 + $0x48] sm:$0xff]
      %v2148 = vld [vmem:[%s2137 + $0x50] sm:$0xff]
      %v2149 = vld [vmem:[%s2137 + $0x58] sm:$0xff]
      %v2150 = vld [vmem:[%s2137 + $0x60] sm:$0xff]
      %v2151 = vld [vmem:[%s2137 + $0x68] sm:$0xff]
      %v2152 = vld [vmem:[%s2137 + $0x70] sm:$0xff]
      %v2153 = vld [vmem:[%s2137 + $0x78] sm:$0xff]
      %2154 = vmatprep.subr.mxu0 0.0
      %2155 = vmatpush1.msra.mxu0 %v2153
      %2156 = vmatprep.subr.mxu0 0.0
      %2157 = vmatpush1.msra.mxu0 %v2152
      %2158 = vmatprep.subr.mxu0 0.0
      %2159 = vmatpush1.msra.mxu0 %v2151
      %2160 = vmatprep.subr.mxu0 0.0
      %2161 = vmatpush1.msra.mxu0 %v2150
      %2162 = vmatprep.subr.mxu0 0.0
      %2163 = vmatpush1.msra.mxu0 %v2149
      %2164 = vmatprep.subr.mxu0 0.0
      %2165 = vmatpush1.msra.mxu0 %v2148
      %2166 = vmatprep.subr.mxu0 0.0
      %2167 = vmatpush1.msra.mxu0 %v2147
      %2168 = vmatprep.subr.mxu0 0.0
      %2169 = vmatpush1.msra.mxu0 %v2146
      %2170 = vmatprep.subr.mxu0 0.0
      %2171 = vmatpush1.msra.mxu0 %v2145
      %2172 = vmatprep.subr.mxu0 0.0
      %2173 = vmatpush1.msra.mxu0 %v2144
      %2174 = vmatprep.subr.mxu0 0.0
      %2175 = vmatpush1.msra.mxu0 %v2143
      %2176 = vmatprep.subr.mxu0 0.0
      %2177 = vmatpush1.msra.mxu0 %v2142
      %2178 = vmatprep.subr.mxu0 0.0
      %2179 = vmatpush1.msra.mxu0 %v2141
      %2180 = vmatprep.subr.mxu0 0.0
      %2181 = vmatpush1.msra.mxu0 %v2140
      %2182 = vmatprep.subr.mxu0 0.0
      %2183 = vmatpush1.msra.mxu0 %v2139
      %2184 = vmatprep.subr.mxu0 0.0
      %2185 = vmatpush1.msra.mxu0 %v2138
      %2186 = vmatprep.subr.mxu0 0.0
      %2187 = vmatpush2.msra.mxu0 0.0
      %2188 = vmatprep.subr.mxu0 0.0
      %2189 = vmatpush2.msra.mxu0 0.0
      %2190 = vmatprep.subr.mxu0 0.0
      %2191 = vmatpush2.msra.mxu0 0.0
      %2192 = vmatprep.subr.mxu0 0.0
      %2193 = vmatpush2.msra.mxu0 0.0
      %2194 = vmatprep.subr.mxu0 0.0
      %2195 = vmatpush2.msra.mxu0 0.0
      %2196 = vmatprep.subr.mxu0 0.0
      %2197 = vmatpush2.msra.mxu0 0.0
      %2198 = vmatprep.subr.mxu0 0.0
      %2199 = vmatpush2.msra.mxu0 0.0
      %2200 = vmatprep.subr.mxu0 0.0
      %2201 = vmatpush2.msra.mxu0 0.0
      %2202 = vmatprep.subr.mxu0 0.0
      %2203 = vmatpush2.msra.mxu0 0.0
      %2204 = vmatprep.subr.mxu0 0.0
      %2205 = vmatpush2.msra.mxu0 0.0
      %2206 = vmatprep.subr.mxu0 0.0
      %2207 = vmatpush2.msra.mxu0 0.0
      %2208 = vmatprep.subr.mxu0 0.0
      %2209 = vmatpush2.msra.mxu0 0.0
      %2210 = vmatprep.subr.mxu0 0.0
      %2211 = vmatpush2.msra.mxu0 0.0
      %2212 = vmatprep.subr.mxu0 0.0
      %2213 = vmatpush2.msra.mxu0 0.0
      %2214 = vmatprep.subr.mxu0 0.0
      %2215 = vmatpush2.msra.mxu0 0.0
      %2216 = vmatprep.subr.mxu0 0.0
      %2217 = vmatpush2.msra.mxu0 0.0
      %2218 = vmatprep.mubr.f32.mxu0 0.0
      %2219 = vmatmul.mubr.f32.gmra.mxu0 %v1765
      %v2220 = vpop.f32.mrf.mxu0
      %v2221 = vadd.f32 0.0, %v2220
      %v2222 = vpop.f32.mrf.mxu0
      %2223 = vmatprep.mubr.f32.mxu0 0.0
      %2224 = vmatmul.mubr.f32.gmra.mxu0 %v1766
      %v2225 = vpop.f32.mrf.mxu0
      %v2226 = vadd.f32 0.0, %v2225
      %v2227 = vpop.f32.mrf.mxu0
      %2228 = vmatprep.mubr.f32.mxu0 0.0
      %2229 = vmatmul.mubr.f32.gmra.mxu0 %v1767
      %v2230 = vpop.f32.mrf.mxu0
      %v2231 = vadd.f32 0.0, %v2230
      %v2232 = vpop.f32.mrf.mxu0
      %2233 = vmatprep.mubr.f32.mxu0 0.0
      %2234 = vmatmul.mubr.f32.gmra.mxu0 %v1768
      %v2235 = vpop.f32.mrf.mxu0
      %v2236 = vadd.f32 0.0, %v2235
      %v2237 = vpop.f32.mrf.mxu0
      %2238 = vmatprep.mubr.f32.mxu0 0.0
      %2239 = vmatmul.mubr.f32.gmra.mxu0 %v1769
      %v2240 = vpop.f32.mrf.mxu0
      %v2241 = vadd.f32 0.0, %v2240
      %v2242 = vpop.f32.mrf.mxu0
      %2243 = vmatprep.mubr.f32.mxu0 0.0
      %2244 = vmatmul.mubr.f32.gmra.mxu0 %v1770
      %v2245 = vpop.f32.mrf.mxu0
      %v2246 = vadd.f32 0.0, %v2245
      %v2247 = vpop.f32.mrf.mxu0
      %2248 = vmatprep.mubr.f32.mxu0 0.0
      %2249 = vmatmul.mubr.f32.gmra.mxu0 %v1771
      %v2250 = vpop.f32.mrf.mxu0
      %v2251 = vadd.f32 0.0, %v2250
      %v2252 = vpop.f32.mrf.mxu0
      %2253 = vmatprep.mubr.f32.mxu0 0.0
      %2254 = vmatmul.mubr.f32.gmra.mxu0 %v1772
      %v2255 = vpop.f32.mrf.mxu0
      %v2256 = vadd.f32 0.0, %v2255
      %v2257 = vpop.f32.mrf.mxu0
      %2258 = vmatprep.mubr.f32.mxu0 0.0
      %2259 = vmatmul.mubr.f32.gmra.mxu0 %v1773
      %v2260 = vpop.f32.mrf.mxu0
      %v2261 = vadd.f32 0.0, %v2260
      %v2262 = vpop.f32.mrf.mxu0
      %2263 = vmatprep.mubr.f32.mxu0 0.0
      %2264 = vmatmul.mubr.f32.gmra.mxu0 %v1774
      %v2265 = vpop.f32.mrf.mxu0
      %v2266 = vadd.f32 0.0, %v2265
      %v2267 = vpop.f32.mrf.mxu0
      %2268 = vmatprep.mubr.f32.mxu0 0.0
      %2269 = vmatmul.mubr.f32.gmra.mxu0 %v1775
      %v2270 = vpop.f32.mrf.mxu0
      %v2271 = vadd.f32 0.0, %v2270
      %v2272 = vpop.f32.mrf.mxu0
      %2273 = vmatprep.mubr.f32.mxu0 0.0
      %2274 = vmatmul.mubr.f32.gmra.mxu0 %v1776
      %v2275 = vpop.f32.mrf.mxu0
      %v2276 = vadd.f32 0.0, %v2275
      %v2277 = vpop.f32.mrf.mxu0
      %2278 = vmatprep.mubr.f32.mxu0 0.0
      %2279 = vmatmul.mubr.f32.gmra.mxu0 %v1777
      %v2280 = vpop.f32.mrf.mxu0
      %v2281 = vadd.f32 0.0, %v2280
      %v2282 = vpop.f32.mrf.mxu0
      %2283 = vmatprep.mubr.f32.mxu0 0.0
      %2284 = vmatmul.mubr.f32.gmra.mxu0 %v1778
      %v2285 = vpop.f32.mrf.mxu0
      %v2286 = vadd.f32 0.0, %v2285
      %v2287 = vpop.f32.mrf.mxu0
      %2288 = vmatprep.mubr.f32.mxu0 0.0
      %2289 = vmatmul.mubr.f32.gmra.mxu0 %v1779
      %v2290 = vpop.f32.mrf.mxu0
      %v2291 = vadd.f32 0.0, %v2290
      %v2292 = vpop.f32.mrf.mxu0
      %2293 = vmatprep.mubr.f32.mxu0 0.0
      %2294 = vmatmul.mubr.f32.gmra.mxu0 %v1780
      %v2295 = vpop.f32.mrf.mxu0
      %v2296 = vadd.f32 0.0, %v2295
      %v2297 = vpop.f32.mrf.mxu0
      %2298 = vdwg.mxu0
      %v2299 = vadd.f32 %v2121, %v2221
      %v2300 = vadd.f32 %v2122, %v2226
      %v2301 = vadd.f32 %v2123, %v2231
      %v2302 = vadd.f32 %v2124, %v2236
      %v2303 = vadd.f32 %v2125, %v2241
      %v2304 = vadd.f32 %v2126, %v2246
      %v2305 = vadd.f32 %v2127, %v2251
      %v2306 = vadd.f32 %v2128, %v2256
      %v2307 = vadd.f32 %v2129, %v2261
      %v2308 = vadd.f32 %v2130, %v2266
      %v2309 = vadd.f32 %v2131, %v2271
      %v2310 = vadd.f32 %v2132, %v2276
      %v2311 = vadd.f32 %v2133, %v2281
      %v2312 = vadd.f32 %v2134, %v2286
      %v2313 = vadd.f32 %v2135, %v2291
      %v2314 = vadd.f32 %v2136, %v2296
      %v2315 = vld [vmem:[%s4] sm:$0x1]
      %v2317 = vlaneseq
      %v2318 = vshrl.u32 %v2317, 7
      %v2319 = vsub.s32 0, %v2318
      %v2320 = vrot.slane %v2315, %v2319
      %v2322 = vadd.f32 %v2299, %v2320
      %v2323 = vadd.f32 %v2300, %v2320
      %v2324 = vadd.f32 %v2301, %v2320
      %v2325 = vadd.f32 %v2302, %v2320
      %v2326 = vadd.f32 %v2303, %v2320
      %v2327 = vadd.f32 %v2304, %v2320
      %v2328 = vadd.f32 %v2305, %v2320
      %v2329 = vadd.f32 %v2306, %v2320
      %v2330 = vadd.f32 %v2307, %v2320
      %v2331 = vadd.f32 %v2308, %v2320
      %v2332 = vadd.f32 %v2309, %v2320
      %v2333 = vadd.f32 %v2310, %v2320
      %v2334 = vadd.f32 %v2311, %v2320
      %v2335 = vadd.f32 %v2312, %v2320
      %v2336 = vadd.f32 %v2313, %v2320
      %v2337 = vadd.f32 %v2314, %v2320
      %2338 = vst [vmem:[%s522] sm:$0xff] %v2322
      %2339 = vst [vmem:[%s522 + $0x8] sm:$0xff] %v2323
      %2340 = vst [vmem:[%s522 + $0x10] sm:$0xff] %v2324
      %2341 = vst [vmem:[%s522 + $0x18] sm:$0xff] %v2325
      %2342 = vst [vmem:[%s522 + $0x20] sm:$0xff] %v2326
      %2343 = vst [vmem:[%s522 + $0x28] sm:$0xff] %v2327
      %2344 = vst [vmem:[%s522 + $0x30] sm:$0xff] %v2328
      %2345 = vst [vmem:[%s522 + $0x38] sm:$0xff] %v2329
      %2346 = vst [vmem:[%s522 + $0x40] sm:$0xff] %v2330
      %2347 = vst [vmem:[%s522 + $0x48] sm:$0xff] %v2331
      %2348 = vst [vmem:[%s522 + $0x50] sm:$0xff] %v2332
      %2349 = vst [vmem:[%s522 + $0x58] sm:$0xff] %v2333
      %2350 = vst [vmem:[%s522 + $0x60] sm:$0xff] %v2334
      %2351 = vst [vmem:[%s522 + $0x68] sm:$0xff] %v2335
      %2352 = vst [vmem:[%s522 + $0x70] sm:$0xff] %v2336
      %2353 = vst [vmem:[%s522 + $0x78] sm:$0xff] %v2337
      %v2354 = vadd.f32 %v2322, %v2323
      %v2355 = vadd.f32 %v2354, %v2324
      %v2356 = vadd.f32 %v2355, %v2325
      %v2357 = vadd.f32 %v2356, %v2326
      %v2358 = vadd.f32 %v2357, %v2327
      %v2359 = vadd.f32 %v2358, %v2328
      %v2360 = vadd.f32 %v2359, %v2329
      %v2361 = vadd.f32 %v2360, %v2330
      %v2362 = vadd.f32 %v2361, %v2331
      %v2363 = vadd.f32 %v2362, %v2332
      %v2364 = vadd.f32 %v2363, %v2333
      %v2365 = vadd.f32 %v2364, %v2334
      %v2366 = vadd.f32 %v2365, %v2335
      %v2367 = vadd.f32 %v2366, %v2336
      %v2368 = vadd.f32 %v2367, %v2337
      %v2369 = vrot.slane %v2368, 4
      %v2370 = vadd.f32 %v2368, %v2369
      %v2371 = vrot.slane %v2370, 2
      %v2372 = vadd.f32 %v2370, %v2371
      %v2373 = vrot.slane %v2372, 1
      %v2374 = vadd.f32 %v2372, %v2373
      %2375 = vst [vmem:[%s530] sm:$0x1] %v2374
      %v2376 = vmul.f32 %v2322, %v2322
      %v2377 = vmul.f32 %v2323, %v2323
      %v2378 = vmul.f32 %v2324, %v2324
      %v2379 = vmul.f32 %v2325, %v2325
      %v2380 = vmul.f32 %v2326, %v2326
      %v2381 = vmul.f32 %v2327, %v2327
      %v2382 = vmul.f32 %v2328, %v2328
      %v2383 = vmul.f32 %v2329, %v2329
      %v2384 = vmul.f32 %v2330, %v2330
      %v2385 = vmul.f32 %v2331, %v2331
      %v2386 = vmul.f32 %v2332, %v2332
      %v2387 = vmul.f32 %v2333, %v2333
      %v2388 = vmul.f32 %v2334, %v2334
      %v2389 = vmul.f32 %v2335, %v2335
      %v2390 = vmul.f32 %v2336, %v2336
      %v2391 = vmul.f32 %v2337, %v2337
      %v2392 = vadd.f32 %v2376, %v2377
      %v2393 = vadd.f32 %v2392, %v2378
      %v2394 = vadd.f32 %v2393, %v2379
      %v2395 = vadd.f32 %v2394, %v2380
      %v2396 = vadd.f32 %v2395, %v2381
      %v2397 = vadd.f32 %v2396, %v2382
      %v2398 = vadd.f32 %v2397, %v2383
      %v2399 = vadd.f32 %v2398, %v2384
      %v2400 = vadd.f32 %v2399, %v2385
      %v2401 = vadd.f32 %v2400, %v2386
      %v2402 = vadd.f32 %v2401, %v2387
      %v2403 = vadd.f32 %v2402, %v2388
      %v2404 = vadd.f32 %v2403, %v2389
      %v2405 = vadd.f32 %v2404, %v2390
      %v2406 = vadd.f32 %v2405, %v2391
      %v2407 = vrot.slane %v2406, 4
      %v2408 = vadd.f32 %v2406, %v2407
      %v2409 = vrot.slane %v2408, 2
      %v2410 = vadd.f32 %v2408, %v2409
      %v2411 = vrot.slane %v2410, 1
      %v2412 = vadd.f32 %v2410, %v2411
      %2413 = vst [vmem:[%s537] sm:$0x1] %v2412
      %s2414 = smul.u32 8, %s26
      %p2415 = scmp.lt.s32.totalorder %s25, 1
      %s2416 = scalar_select %p2415, %s25, 1
      %p2417 = scmp.lt.s32.totalorder %s2414, 15
      %s2418 = scalar_select %p2417, %s2414, 15
      %s2419 = smul.addr %s2418, 2
      %s2420 = smul.addr %s2416, 32
      %s2421 = sadd.s32 %s2419, %s2420
      %s2422 = smul.addr %s2421, 8
      %s2423 = scalar_lea.vmem %s7, %s2422
      %p2424 = scmp.lt.s32.totalorder %s25, 1
      %s2425 = scalar_select %p2424, %s25, 1
      %p2426 = scmp.lt.s32.totalorder %s26, 1
      %s2427 = scalar_select %p2426, %s26, 1
      %s2428 = smul.addr %s2425, 2
      %s2429 = sadd.s32 %s2427, %s2428
      %s2430 = scalar_lea.vmem %s8, %s2429
      %p2431 = scmp.lt.s32.totalorder %s25, 1
      %s2432 = scalar_select %p2431, %s25, 1
      %p2433 = scmp.lt.s32.totalorder %s26, 1
      %s2434 = scalar_select %p2433, %s26, 1
      %s2435 = smul.addr %s2432, 2
      %s2436 = sadd.s32 %s2434, %s2435
      %s2437 = scalar_lea.vmem %s9, %s2436
      // Predicated region
      $region49: #{unet_double_conv_block.4} parent=47 // pred_check
        %p2438 = pneg %p237
      $region50: #{unet_double_conv_block.4} parent=47 // pred_check_branch
        %2440 = sbr.rel (%p2438) target = $region52
      $region51: #{unet_double_conv_block.4} parent=47 // pred_region
        %s2441 = smul.u32 8, %s26
      $region52: #{unet_double_conv_block.4} parent=47 // pred_fallthru
        _
      // Predicated region
      $region53: #{unet_double_conv_block.4} parent=47 // pred_check
        %p2442 = pneg %p265
      $region54: #{unet_double_conv_block.4} parent=47 // pred_check_branch
        %2444 = sbr.rel (%p2442) target = $region56
      $region55: #{unet_double_conv_block.4} parent=47 // pred_region
        _
      $region56: #{unet_double_conv_block.4} parent=47 // pred_fallthru
        _
      // Predicated region
      $region57: #{unet_double_conv_block.4} parent=47 // pred_check
        %p2445 = pneg %p293
      $region58: #{unet_double_conv_block.4} parent=47 // pred_check_branch
        %2447 = sbr.rel (%p2445) target = $region60
      $region59: #{unet_double_conv_block.4} parent=47 // pred_region
        _
      $region60: #{unet_double_conv_block.4} parent=47 // pred_fallthru
        _
    $region48: #{unet_double_conv_block.4} parent=5 // pred_fallthru
      _
    %p2448 = scmp.le.s32.totalorder 2, %s16
    // Predicated region
    $region61: #{unet_double_conv_block.4} parent=5 // pred_check
      %p2449 = pneg %p2448
    $region62: #{unet_double_conv_block.4} parent=5 // pred_check_branch
      %2451 = sbr.rel (%p2449) target = $region64
    $region63: #{unet_double_conv_block.4} parent=5 // pred_region
      %s2452 = ssub.s32 %s16, 2
      // Predicated region
      $region65: #{unet_double_conv_block.4} parent=63 // pred_check
        %p2453 = pneg %p243
      $region66: #{unet_double_conv_block.4} parent=63 // pred_check_branch
        %2455 = sbr.rel (%p2453) target = $region68
      $region67: #{unet_double_conv_block.4} parent=63 // pred_region
        %s2456 = smul.u32 8, %s28
        %p2457 = scmp.lt.s32.totalorder %s27, 1
        %s2458 = scalar_select %p2457, %s27, 1
        %p2459 = scmp.lt.s32.totalorder %s2456, 15
        %s2460 = scalar_select %p2459, %s2456, 15
        %s2461 = smul.addr %s2460, 2
        %s2462 = smul.addr %s2458, 32
        %s2463 = sadd.s32 %s2461, %s2462
        %s2464 = smul.addr %s2463, 8
        %s2465 = scalar_lea.vmem %s7, %s2464
      $region68: #{unet_double_conv_block.4} parent=63 // pred_fallthru
        _
      // Predicated region
      $region69: #{unet_double_conv_block.4} parent=63 // pred_check
        %p2466 = pneg %p271
      $region70: #{unet_double_conv_block.4} parent=63 // pred_check_branch
        %2468 = sbr.rel (%p2466) target = $region72
      $region71: #{unet_double_conv_block.4} parent=63 // pred_region
        %p2469 = scmp.lt.s32.totalorder %s27, 1
        %s2470 = scalar_select %p2469, %s27, 1
        %p2471 = scmp.lt.s32.totalorder %s28, 1
        %s2472 = scalar_select %p2471, %s28, 1
        %s2473 = smul.addr %s2470, 2
        %s2474 = sadd.s32 %s2472, %s2473
        %s2475 = scalar_lea.vmem %s8, %s2474
      $region72: #{unet_double_conv_block.4} parent=63 // pred_fallthru
        _
      // Predicated region
      $region73: #{unet_double_conv_block.4} parent=63 // pred_check
        %p2476 = pneg %p299
      $region74: #{unet_double_conv_block.4} parent=63 // pred_check_branch
        %2478 = sbr.rel (%p2476) target = $region76
      $region75: #{unet_double_conv_block.4} parent=63 // pred_region
        %p2479 = scmp.lt.s32.totalorder %s27, 1
        %s2480 = scalar_select %p2479, %s27, 1
        %p2481 = scmp.lt.s32.totalorder %s28, 1
        %s2482 = scalar_select %p2481, %s28, 1
        %s2483 = smul.addr %s2480, 2
        %s2484 = sadd.s32 %s2482, %s2483
        %s2485 = scalar_lea.vmem %s9, %s2484
      $region76: #{unet_double_conv_block.4} parent=63 // pred_fallthru
        _
    $region64: #{unet_double_conv_block.4} parent=5 // pred_fallthru
      _
  $region6: #{unet_double_conv_block.4} parent=0 // loop_footer
    %s20 = sadd.s32 1, %s16
  $region7: #{unet_double_conv_block.4} parent=0 // loop_footer_branch
    %15 = sbr.rel target = $region3
  $region8: #{unet_double_conv_block.4} parent=0 // loop_exit
    _

</llo_original>
